<compile_context>
chip_gen: v5e
topology: v5e:2x2
jax: 0.10.0
libtpu: 0.0.40
codegen_flags: <defaults>
</compile_context>

<pallas_src>
import functools

import numpy as np
import jax
import jax.numpy as jnp
from jax.experimental import pallas as pl
from jax.experimental.pallas import tpu as pltpu

EPS = 1e-5          # nn.BatchNorm2d default eps
OUT_PAD = 128       # logits padded to a full lane width inside the kernel
P_TAPS = 25         # 5x5 pooled map == 5x5 conv2 footprint -> 1x1 output


# ----------------------------- fused Pallas kernel --------------------------
def _aux_kernel(x_ref, mp_ref, w1_ref, b1_ref, w2_ref, b2_ref, wl_ref, bl_ref,
                o_ref, pool_ref, y_ref, *, nb):
    """One grid step = one batch block; the whole InceptionAux chain runs here."""
    # --- AvgPool2d(5, 3): all 25 taps of image n in one (25,HW)@(HW,C) matmul.
    mp = mp_ref[...]                                        # (25, H*W) bf16
    for n in range(nb):                                     # nb small, static unroll
        pool_ref[pl.ds(n * P_TAPS, P_TAPS), :] = jnp.dot(
            mp, x_ref[n], preferred_element_type=jnp.float32)        # (25, C) f32

    # --- conv1 (1x1) + folded BN + ReLU for the whole block in one matmul.
    y_ref[...] = jnp.maximum(
        jnp.dot(pool_ref[...].astype(jnp.bfloat16), w1_ref[...],
                preferred_element_type=jnp.float32) + b1_ref[...],
        0.0)                                                # (nb*25, 128) f32

    # --- conv2 (5x5 over the 5x5 pooled map -> 1x1): accumulate the 25 taps.
    z = jnp.zeros((nb, w2_ref.shape[2]), jnp.float32)       # (nb, 768)
    for p in range(P_TAPS):                                 # static unroll
        y_p = y_ref[pl.ds(p, nb, stride=P_TAPS), :]         # rows p, p+25, ... -> (nb, 128)
        z = z + jnp.dot(y_p.astype(jnp.bfloat16), w2_ref[p],
                        preferred_element_type=jnp.float32)
    z = jnp.maximum(z + b2_ref[...], 0.0)                   # folded BN2 + ReLU

    # --- Dropout(p=0.7) is the identity at inference; final Linear (padded lanes).
    out = jnp.dot(z.astype(jnp.bfloat16), wl_ref[...],
                  preferred_element_type=jnp.float32) + bl_ref[...]
    o_ref[...] = out.astype(o_ref.dtype)


def _aux_fused(x_t, fp, *, nb):
    """x_t: (N, H*W, C) bf16.  Returns (N, OUT_PAD) f32 padded logits."""
    N, HW, C = x_t.shape
    P, _, F = fp["w2"].shape
    OUT = fp["wl"].shape[1]
    assert P == P_TAPS
    assert N % nb == 0 and (nb == N or nb % 8 == 0)
    kernel = functools.partial(_aux_kernel, nb=nb)
    return pl.pallas_call(
        kernel,
        out_shape=jax.ShapeDtypeStruct((N, OUT), jnp.float32),
        grid_spec=pltpu.PrefetchScalarGridSpec(
            num_scalar_prefetch=0,
            grid=(N // nb,),
            in_specs=[
                pl.BlockSpec((nb, HW, C), lambda b: (b, 0, 0)),    # x (per batch block)
                pl.BlockSpec((P, HW), lambda b: (0, 0)),           # pooling matrix
                pl.BlockSpec((C, 128), lambda b: (0, 0)),          # conv1 weight (folded)
                pl.BlockSpec((1, 128), lambda b: (0, 0)),          # conv1 bias  (folded)
                pl.BlockSpec((P, 128, F), lambda b: (0, 0, 0)),    # conv2 weight (folded, resident)
                pl.BlockSpec((1, F), lambda b: (0, 0)),            # conv2 bias  (folded)
                pl.BlockSpec((F, OUT), lambda b: (0, 0)),          # linear weight (padded)
                pl.BlockSpec((1, OUT), lambda b: (0, 0)),          # linear bias   (padded)
            ],
            out_specs=pl.BlockSpec((nb, OUT), lambda b: (b, 0)),
            scratch_shapes=[
                pltpu.VMEM((nb * P_TAPS, C), jnp.float32),     # pooled rows (batch-major)
                pltpu.VMEM((nb * P_TAPS, 128), jnp.float32),   # conv1 activations
            ],
        ),
        compiler_params=pltpu.CompilerParams(
            dimension_semantics=("parallel",),
            vmem_limit_bytes=48 * 1024 * 1024,   # w2 + linear weights ~10 MiB incl. buffers
        ),
    )(x_t, fp["mpool"], fp["w1"], fp["b1"], fp["w2"], fp["b2"],
      fp["wl"], fp["bl"])


# ------------------------------ parameters ---------------------------------
def init_params(key, in_channels, out_channels):
    ks = jax.random.split(key, 14)
    nrm = lambda k, s, sc: sc * jax.random.normal(k, s, jnp.float32)
    p = {}
    # conv1: 1x1, in_channels -> 128
    p["w1"] = nrm(ks[0], (128, in_channels, 1, 1), 0.2)
    p["b1"] = nrm(ks[1], (128,), 0.1)
    p["bn1_gamma"] = 1.0 + 0.1 * jax.random.normal(ks[2], (128,), jnp.float32)
    p["bn1_beta"] = nrm(ks[3], (128,), 0.1)
    p["bn1_mean"] = nrm(ks[4], (128,), 0.1)
    p["bn1_var"] = 1.0 + jax.random.uniform(ks[5], (128,), jnp.float32)
    # conv2: 5x5, 128 -> 768
    p["w2"] = nrm(ks[6], (768, 128, 5, 5), 0.03)
    p["b2"] = nrm(ks[7], (768,), 0.1)
    p["bn2_gamma"] = 1.0 + 0.1 * jax.random.normal(ks[8], (768,), jnp.float32)
    p["bn2_beta"] = nrm(ks[9], (768,), 0.1)
    p["bn2_mean"] = nrm(ks[10], (768,), 0.1)
    p["bn2_var"] = 1.0 + jax.random.uniform(ks[11], (768,), jnp.float32)
    # linear: 768 -> out_channels
    p["wl"] = nrm(ks[12], (out_channels, 768), 0.05)
    p["bl"] = nrm(ks[13], (out_channels,), 0.1)
    return p


def build_pool_matrix(H, W, k, s):
    """AvgPool2d(k, s) expressed as a (OH*OW, H*W) matrix."""
    OH, OW = (H - k) // s + 1, (W - k) // s + 1
    M = np.zeros((OH * OW, H * W), np.float32)
    for i in range(OH):
        for j in range(OW):
            for di in range(k):
                for dj in range(k):
                    M[i * OW + j, (i * s + di) * W + (j * s + dj)] = 1.0 / (k * k)
    return jnp.asarray(M), OH, OW


def fold_params(p, H, W):
    """One-time: fold BN into conv weights, pad/transpose for the kernel."""
    # conv1 (1x1) + BN1
    s1 = p["bn1_gamma"] / jnp.sqrt(p["bn1_var"] + EPS)
    w1 = (p["w1"][:, :, 0, 0] * s1[:, None]).T.astype(jnp.bfloat16)          # (C, 128)
    b1 = (s1 * (p["b1"] - p["bn1_mean"]) + p["bn1_beta"])[None, :]           # (1, 128) f32

    # conv2 (5x5) + BN2 -> per-tap slabs (kh*kw, 128, 768)
    s2 = p["bn2_gamma"] / jnp.sqrt(p["bn2_var"] + EPS)
    kh, kw = p["w2"].shape[2], p["w2"].shape[3]
    w2 = (p["w2"].transpose(2, 3, 1, 0).reshape(kh * kw * 128, 768) * s2[None, :])
    w2 = w2.reshape(kh * kw, 128, 768).astype(jnp.bfloat16)
    b2 = (s2 * (p["b2"] - p["bn2_mean"]) + p["bn2_beta"])[None, :]           # (1, 768) f32

    # linear: pad out_channels up to a full 128-lane width (sliced outside)
    out_ch = p["wl"].shape[0]
    wl = jnp.zeros((768, OUT_PAD), jnp.float32).at[:, :out_ch].set(p["wl"].T)
    wl = wl.astype(jnp.bfloat16)
    bl = jnp.zeros((1, OUT_PAD), jnp.float32).at[0, :out_ch].set(p["bl"])

    mpool, OH, OW = build_pool_matrix(H, W, 5, 3)
    assert OH * OW == kh * kw == P_TAPS, "pooled map must be 5x5 to feed the 5x5 conv2"
    mpool = mpool.astype(jnp.bfloat16)                                       # (25, H*W)

    return dict(w1=w1, b1=b1, w2=w2, b2=b2, wl=wl, bl=bl, mpool=mpool)


# ----------------------- InceptionAux forward (Pallas) ----------------------
@functools.partial(jax.jit, static_argnames=("out_channels",))
def inception_aux_forward(x, fp, out_channels):
    N, C, H, W = x.shape
    # NCHW -> (N, H*W, C): channels on lanes for the whole fused chain.
    x_t = x.transpose(0, 2, 3, 1).reshape(N, H * W, C).astype(jnp.bfloat16)
    # Batch blocking: 8-row blocks when possible (megacore-parallel outer grid).
    # TODO(synk): for very large N not divisible by 8, pad the batch instead of nb=N.
    nb = 8 if N % 8 == 0 else N
    out_pad = _aux_fused(x_t, fp, nb=nb)
    return out_pad[:, :out_channels]


# ----------------------------- pure-JAX reference ---------------------------
def reference_forward(x, p):
    pooled = jax.lax.reduce_window(
        x, 0.0, jax.lax.add, (1, 1, 5, 5), (1, 1, 3, 3), "VALID") / 25.0

    def conv_bn_relu(v, w, b, gamma, beta, mean, var):
        c = jax.lax.conv_general_dilated(
            v, w, (1, 1), "VALID", dimension_numbers=("NCHW", "OIHW", "NCHW"))
        c = c + b[None, :, None, None]
        c = (gamma[None, :, None, None] * (c - mean[None, :, None, None])
             / jnp.sqrt(var[None, :, None, None] + EPS)
             + beta[None, :, None, None])
        return jnp.maximum(c, 0.0)

    y = conv_bn_relu(pooled, p["w1"], p["b1"], p["bn1_gamma"], p["bn1_beta"],
                     p["bn1_mean"], p["bn1_var"])
    z = conv_bn_relu(y, p["w2"], p["b2"], p["bn2_gamma"], p["bn2_beta"],
                     p["bn2_mean"], p["bn2_var"])
    zf = z.reshape(z.shape[0], -1)
    return zf @ p["wl"].T + p["bl"][None, :]


# ----------------------------------- main -----------------------------------
if __name__ == "__main__":
    key = jax.random.PRNGKey(0)
    kx, kp = jax.random.split(key)

    # 17x17 spatial: AvgPool(5,3) -> 5x5, conv2(5x5) -> 1x1, flatten -> (N, 768)
    N, C, H, W = 2, 4, 17, 17
    out_channels = 10

    x = jax.random.normal(kx, (N, C, H, W), jnp.float32)
    params = init_params(kp, C, out_channels)
    fp = fold_params(params, H, W)      # one-time BN folding / padding / pool matrix

    out = jax.block_until_ready(inception_aux_forward(x, fp, out_channels))
    assert out.shape == (N, out_channels)

    ref = jax.block_until_ready(reference_forward(x, params))
    # bf16 MXU operands with f32 accumulation vs. f32 reference -> loosen atol a bit.
    if not np.allclose(np.asarray(out), np.asarray(ref), rtol=2e-2, atol=1e-2):
        diff = np.max(np.abs(np.asarray(out) - np.asarray(ref)))
        raise AssertionError(f"Pallas output mismatch, max abs diff = {diff}")

    print("KERNEL_OK")
</pallas_src>

<mosaic_0001>
module attributes {stable_mosaic.version = 11 : i64} {
  func.func @_aux_kernel(%arg0: i32, %arg1: memref<2x289x4xbf16, #tpu.memory_space<vmem>>, %arg2: memref<25x289xbf16, #tpu.memory_space<vmem>>, %arg3: memref<4x128xbf16, #tpu.memory_space<vmem>>, %arg4: memref<1x128xf32, #tpu.memory_space<vmem>>, %arg5: memref<25x128x768xbf16, #tpu.memory_space<vmem>>, %arg6: memref<1x768xf32, #tpu.memory_space<vmem>>, %arg7: memref<768x128xbf16, #tpu.memory_space<vmem>>, %arg8: memref<1x128xf32, #tpu.memory_space<vmem>>, %arg9: memref<2x128xf32, #tpu.memory_space<vmem>>, %arg10: memref<50x4xf32, #tpu.memory_space<vmem>>, %arg11: memref<50x128xf32, #tpu.memory_space<vmem>>) attributes {dimension_semantics = [#tpu.dimension_semantics<parallel>], iteration_bounds = array<i64: 1>, scalar_prefetch = 0 : i64, scratch_operands = 2 : i64, tpu.core_type = #tpu.core_type<tc>, window_params = [{transform_indices = @transform_0, window_bounds = array<i64: 2, 289, 4>}, {pipeline_mode = #tpu.pipeline_mode<synchronous>, transform_indices = @transform_1, window_bounds = array<i64: 25, 289>}, {pipeline_mode = #tpu.pipeline_mode<synchronous>, transform_indices = @transform_2, window_bounds = array<i64: 4, 128>}, {pipeline_mode = #tpu.pipeline_mode<synchronous>, transform_indices = @transform_3, window_bounds = array<i64: 1, 128>}, {pipeline_mode = #tpu.pipeline_mode<synchronous>, transform_indices = @transform_4, window_bounds = array<i64: 25, 128, 768>}, {pipeline_mode = #tpu.pipeline_mode<synchronous>, transform_indices = @transform_5, window_bounds = array<i64: 1, 768>}, {pipeline_mode = #tpu.pipeline_mode<synchronous>, transform_indices = @transform_6, window_bounds = array<i64: 768, 128>}, {pipeline_mode = #tpu.pipeline_mode<synchronous>, transform_indices = @transform_7, window_bounds = array<i64: 1, 128>}, {transform_indices = @transform_8, window_bounds = array<i64: 2, 128>}]} {
    %c0 = arith.constant 0 : index
    %c0_0 = arith.constant 0 : index
    %0 = vector.load %arg2[%c0, %c0_0] : memref<25x289xbf16, #tpu.memory_space<vmem>>, vector<25x289xbf16>
    %c0_1 = arith.constant 0 : index
    %c0_2 = arith.constant 0 : index
    %c0_3 = arith.constant 0 : index
    %1 = vector.load %arg1[%c0_1, %c0_2, %c0_3] : memref<2x289x4xbf16, #tpu.memory_space<vmem>>, vector<1x289x4xbf16>
    %2 = vector.shape_cast %1 : vector<1x289x4xbf16> to vector<289x4xbf16>
    %cst = arith.constant dense<0.000000e+00> : vector<25x4xf32>
    %3 = tpu.matmul %0, %2, %cst {dimension_numbers = #tpu.dot_dimension_numbers<[1], [0], [0], [1], [0, 0, 1, 1], [], []>} : vector<25x289xbf16>, vector<289x4xbf16>, vector<25x4xf32> -> vector<25x4xf32>
    %c0_4 = arith.constant 0 : index
    %c0_5 = arith.constant 0 : index
    %4 = vector.load %arg10[%c0_4, %c0_5] : memref<50x4xf32, #tpu.memory_space<vmem>>, vector<25x4xf32>
    tpu.vector_store %arg10[%c0_4, %c0_5], %3 {strides = array<i32>} : memref<50x4xf32, #tpu.memory_space<vmem>>, vector<25x4xf32>,
    %c1 = arith.constant 1 : index
    %c0_6 = arith.constant 0 : index
    %c0_7 = arith.constant 0 : index
    %5 = vector.load %arg1[%c1, %c0_6, %c0_7] : memref<2x289x4xbf16, #tpu.memory_space<vmem>>, vector<1x289x4xbf16>
    %6 = vector.shape_cast %5 : vector<1x289x4xbf16> to vector<289x4xbf16>
    %cst_8 = arith.constant dense<0.000000e+00> : vector<25x4xf32>
    %7 = tpu.matmul %0, %6, %cst_8 {dimension_numbers = #tpu.dot_dimension_numbers<[1], [0], [0], [1], [0, 0, 1, 1], [], []>} : vector<25x289xbf16>, vector<289x4xbf16>, vector<25x4xf32> -> vector<25x4xf32>
    %c25 = arith.constant 25 : index
    %c0_9 = arith.constant 0 : index
    %8 = vector.load %arg10[%c25, %c0_9] : memref<50x4xf32, #tpu.memory_space<vmem>>, vector<25x4xf32>
    tpu.vector_store %arg10[%c25, %c0_9], %7 {strides = array<i32>} : memref<50x4xf32, #tpu.memory_space<vmem>>, vector<25x4xf32>,
    %c0_10 = arith.constant 0 : index
    %c0_11 = arith.constant 0 : index
    %9 = vector.load %arg10[%c0_10, %c0_11] : memref<50x4xf32, #tpu.memory_space<vmem>>, vector<50x4xf32>
    %10 = arith.truncf %9 : vector<50x4xf32> to vector<50x4xbf16>
    %c0_12 = arith.constant 0 : index
    %c0_13 = arith.constant 0 : index
    %11 = vector.load %arg3[%c0_12, %c0_13] : memref<4x128xbf16, #tpu.memory_space<vmem>>, vector<4x128xbf16>
    %cst_14 = arith.constant dense<0.000000e+00> : vector<50x128xf32>
    %12 = tpu.matmul %10, %11, %cst_14 {dimension_numbers = #tpu.dot_dimension_numbers<[1], [0], [0], [1], [0, 0, 1, 1], [], []>} : vector<50x4xbf16>, vector<4x128xbf16>, vector<50x128xf32> -> vector<50x128xf32>
    %c0_15 = arith.constant 0 : index
    %c0_16 = arith.constant 0 : index
    %13 = vector.load %arg4[%c0_15, %c0_16] : memref<1x128xf32, #tpu.memory_space<vmem>>, vector<1x128xf32>
    %14 = vector.broadcast %13 : vector<1x128xf32> to vector<50x128xf32>
    %15 = arith.addf %12, %14 : vector<50x128xf32>
    %cst_17 = arith.constant 0.000000e+00 : f32
    %16 = vector.broadcast %cst_17 : f32 to vector<50x128xf32>
    %17 = arith.maximumf %15, %16 : vector<50x128xf32>
    %c0_18 = arith.constant 0 : index
    %c0_19 = arith.constant 0 : index
    %18 = vector.load %arg11[%c0_18, %c0_19] : memref<50x128xf32, #tpu.memory_space<vmem>>, vector<50x128xf32>
    tpu.vector_store %arg11[%c0_18, %c0_19], %17 {strides = array<i32>} : memref<50x128xf32, #tpu.memory_space<vmem>>, vector<50x128xf32>,
    %cst_20 = arith.constant 0.000000e+00 : f32
    %19 = vector.broadcast %cst_20 : f32 to vector<2x768xf32>
    %c0_21 = arith.constant 0 : index
    %c0_22 = arith.constant 0 : index
    %20 = tpu.strided_load %arg11[%c0_21, %c0_22] {strides = array<i32: 25, 1>} : memref<50x128xf32, #tpu.memory_space<vmem>>, vector<2x128xf32>
    %21 = arith.truncf %20 : vector<2x128xf32> to vector<2x128xbf16>
    %c0_23 = arith.constant 0 : index
    %c0_24 = arith.constant 0 : index
    %c0_25 = arith.constant 0 : index
    %22 = vector.load %arg5[%c0_23, %c0_24, %c0_25] : memref<25x128x768xbf16, #tpu.memory_space<vmem>>, vector<1x128x768xbf16>
    %23 = vector.shape_cast %22 : vector<1x128x768xbf16> to vector<128x768xbf16>
    %cst_26 = arith.constant dense<0.000000e+00> : vector<2x768xf32>
    %24 = tpu.matmul %21, %23, %cst_26 {dimension_numbers = #tpu.dot_dimension_numbers<[1], [0], [0], [1], [0, 0, 1, 1], [], []>} : vector<2x128xbf16>, vector<128x768xbf16>, vector<2x768xf32> -> vector<2x768xf32>
    %25 = arith.addf %19, %24 : vector<2x768xf32>
    %c1_27 = arith.constant 1 : index
    %c0_28 = arith.constant 0 : index
    %26 = tpu.strided_load %arg11[%c1_27, %c0_28] {strides = array<i32: 25, 1>} : memref<50x128xf32, #tpu.memory_space<vmem>>, vector<2x128xf32>
    %27 = arith.truncf %26 : vector<2x128xf32> to vector<2x128xbf16>
    %c1_29 = arith.constant 1 : index
    %c0_30 = arith.constant 0 : index
    %c0_31 = arith.constant 0 : index
    %28 = vector.load %arg5[%c1_29, %c0_30, %c0_31] : memref<25x128x768xbf16, #tpu.memory_space<vmem>>, vector<1x128x768xbf16>
    %29 = vector.shape_cast %28 : vector<1x128x768xbf16> to vector<128x768xbf16>
    %cst_32 = arith.constant dense<0.000000e+00> : vector<2x768xf32>
    %30 = tpu.matmul %27, %29, %cst_32 {dimension_numbers = #tpu.dot_dimension_numbers<[1], [0], [0], [1], [0, 0, 1, 1], [], []>} : vector<2x128xbf16>, vector<128x768xbf16>, vector<2x768xf32> -> vector<2x768xf32>
    %31 = arith.addf %25, %30 : vector<2x768xf32>
    %c2 = arith.constant 2 : index
    %c0_33 = arith.constant 0 : index
    %32 = tpu.strided_load %arg11[%c2, %c0_33] {strides = array<i32: 25, 1>} : memref<50x128xf32, #tpu.memory_space<vmem>>, vector<2x128xf32>
    %33 = arith.truncf %32 : vector<2x128xf32> to vector<2x128xbf16>
    %c2_34 = arith.constant 2 : index
    %c0_35 = arith.constant 0 : index
    %c0_36 = arith.constant 0 : index
    %34 = vector.load %arg5[%c2_34, %c0_35, %c0_36] : memref<25x128x768xbf16, #tpu.memory_space<vmem>>, vector<1x128x768xbf16>
    %35 = vector.shape_cast %34 : vector<1x128x768xbf16> to vector<128x768xbf16>
    %cst_37 = arith.constant dense<0.000000e+00> : vector<2x768xf32>
    %36 = tpu.matmul %33, %35, %cst_37 {dimension_numbers = #tpu.dot_dimension_numbers<[1], [0], [0], [1], [0, 0, 1, 1], [], []>} : vector<2x128xbf16>, vector<128x768xbf16>, vector<2x768xf32> -> vector<2x768xf32>
    %37 = arith.addf %31, %36 : vector<2x768xf32>
    %c3 = arith.constant 3 : index
    %c0_38 = arith.constant 0 : index
    %38 = tpu.strided_load %arg11[%c3, %c0_38] {strides = array<i32: 25, 1>} : memref<50x128xf32, #tpu.memory_space<vmem>>, vector<2x128xf32>
    %39 = arith.truncf %38 : vector<2x128xf32> to vector<2x128xbf16>
    %c3_39 = arith.constant 3 : index
    %c0_40 = arith.constant 0 : index
    %c0_41 = arith.constant 0 : index
    %40 = vector.load %arg5[%c3_39, %c0_40, %c0_41] : memref<25x128x768xbf16, #tpu.memory_space<vmem>>, vector<1x128x768xbf16>
    %41 = vector.shape_cast %40 : vector<1x128x768xbf16> to vector<128x768xbf16>
    %cst_42 = arith.constant dense<0.000000e+00> : vector<2x768xf32>
    %42 = tpu.matmul %39, %41, %cst_42 {dimension_numbers = #tpu.dot_dimension_numbers<[1], [0], [0], [1], [0, 0, 1, 1], [], []>} : vector<2x128xbf16>, vector<128x768xbf16>, vector<2x768xf32> -> vector<2x768xf32>
    %43 = arith.addf %37, %42 : vector<2x768xf32>
    %c4 = arith.constant 4 : index
    %c0_43 = arith.constant 0 : index
    %44 = tpu.strided_load %arg11[%c4, %c0_43] {strides = array<i32: 25, 1>} : memref<50x128xf32, #tpu.memory_space<vmem>>, vector<2x128xf32>
    %45 = arith.truncf %44 : vector<2x128xf32> to vector<2x128xbf16>
    %c4_44 = arith.constant 4 : index
    %c0_45 = arith.constant 0 : index
    %c0_46 = arith.constant 0 : index
    %46 = vector.load %arg5[%c4_44, %c0_45, %c0_46] : memref<25x128x768xbf16, #tpu.memory_space<vmem>>, vector<1x128x768xbf16>
    %47 = vector.shape_cast %46 : vector<1x128x768xbf16> to vector<128x768xbf16>
    %cst_47 = arith.constant dense<0.000000e+00> : vector<2x768xf32>
    %48 = tpu.matmul %45, %47, %cst_47 {dimension_numbers = #tpu.dot_dimension_numbers<[1], [0], [0], [1], [0, 0, 1, 1], [], []>} : vector<2x128xbf16>, vector<128x768xbf16>, vector<2x768xf32> -> vector<2x768xf32>
    %49 = arith.addf %43, %48 : vector<2x768xf32>
    %c5 = arith.constant 5 : index
    %c0_48 = arith.constant 0 : index
    %50 = tpu.strided_load %arg11[%c5, %c0_48] {strides = array<i32: 25, 1>} : memref<50x128xf32, #tpu.memory_space<vmem>>, vector<2x128xf32>
    %51 = arith.truncf %50 : vector<2x128xf32> to vector<2x128xbf16>
    %c5_49 = arith.constant 5 : index
    %c0_50 = arith.constant 0 : index
    %c0_51 = arith.constant 0 : index
    %52 = vector.load %arg5[%c5_49, %c0_50, %c0_51] : memref<25x128x768xbf16, #tpu.memory_space<vmem>>, vector<1x128x768xbf16>
    %53 = vector.shape_cast %52 : vector<1x128x768xbf16> to vector<128x768xbf16>
    %cst_52 = arith.constant dense<0.000000e+00> : vector<2x768xf32>
    %54 = tpu.matmul %51, %53, %cst_52 {dimension_numbers = #tpu.dot_dimension_numbers<[1], [0], [0], [1], [0, 0, 1, 1], [], []>} : vector<2x128xbf16>, vector<128x768xbf16>, vector<2x768xf32> -> vector<2x768xf32>
    %55 = arith.addf %49, %54 : vector<2x768xf32>
    %c6 = arith.constant 6 : index
    %c0_53 = arith.constant 0 : index
    %56 = tpu.strided_load %arg11[%c6, %c0_53] {strides = array<i32: 25, 1>} : memref<50x128xf32, #tpu.memory_space<vmem>>, vector<2x128xf32>
    %57 = arith.truncf %56 : vector<2x128xf32> to vector<2x128xbf16>
    %c6_54 = arith.constant 6 : index
    %c0_55 = arith.constant 0 : index
    %c0_56 = arith.constant 0 : index
    %58 = vector.load %arg5[%c6_54, %c0_55, %c0_56] : memref<25x128x768xbf16, #tpu.memory_space<vmem>>, vector<1x128x768xbf16>
    %59 = vector.shape_cast %58 : vector<1x128x768xbf16> to vector<128x768xbf16>
    %cst_57 = arith.constant dense<0.000000e+00> : vector<2x768xf32>
    %60 = tpu.matmul %57, %59, %cst_57 {dimension_numbers = #tpu.dot_dimension_numbers<[1], [0], [0], [1], [0, 0, 1, 1], [], []>} : vector<2x128xbf16>, vector<128x768xbf16>, vector<2x768xf32> -> vector<2x768xf32>
    %61 = arith.addf %55, %60 : vector<2x768xf32>
    %c7 = arith.constant 7 : index
    %c0_58 = arith.constant 0 : index
    %62 = tpu.strided_load %arg11[%c7, %c0_58] {strides = array<i32: 25, 1>} : memref<50x128xf32, #tpu.memory_space<vmem>>, vector<2x128xf32>
    %63 = arith.truncf %62 : vector<2x128xf32> to vector<2x128xbf16>
    %c7_59 = arith.constant 7 : index
    %c0_60 = arith.constant 0 : index
    %c0_61 = arith.constant 0 : index
    %64 = vector.load %arg5[%c7_59, %c0_60, %c0_61] : memref<25x128x768xbf16, #tpu.memory_space<vmem>>, vector<1x128x768xbf16>
    %65 = vector.shape_cast %64 : vector<1x128x768xbf16> to vector<128x768xbf16>
    %cst_62 = arith.constant dense<0.000000e+00> : vector<2x768xf32>
    %66 = tpu.matmul %63, %65, %cst_62 {dimension_numbers = #tpu.dot_dimension_numbers<[1], [0], [0], [1], [0, 0, 1, 1], [], []>} : vector<2x128xbf16>, vector<128x768xbf16>, vector<2x768xf32> -> vector<2x768xf32>
    %67 = arith.addf %61, %66 : vector<2x768xf32>
    %c8 = arith.constant 8 : index
    %c0_63 = arith.constant 0 : index
    %68 = tpu.strided_load %arg11[%c8, %c0_63] {strides = array<i32: 25, 1>} : memref<50x128xf32, #tpu.memory_space<vmem>>, vector<2x128xf32>
    %69 = arith.truncf %68 : vector<2x128xf32> to vector<2x128xbf16>
    %c8_64 = arith.constant 8 : index
    %c0_65 = arith.constant 0 : index
    %c0_66 = arith.constant 0 : index
    %70 = vector.load %arg5[%c8_64, %c0_65, %c0_66] : memref<25x128x768xbf16, #tpu.memory_space<vmem>>, vector<1x128x768xbf16>
    %71 = vector.shape_cast %70 : vector<1x128x768xbf16> to vector<128x768xbf16>
    %cst_67 = arith.constant dense<0.000000e+00> : vector<2x768xf32>
    %72 = tpu.matmul %69, %71, %cst_67 {dimension_numbers = #tpu.dot_dimension_numbers<[1], [0], [0], [1], [0, 0, 1, 1], [], []>} : vector<2x128xbf16>, vector<128x768xbf16>, vector<2x768xf32> -> vector<2x768xf32>
    %73 = arith.addf %67, %72 : vector<2x768xf32>
    %c9 = arith.constant 9 : index
    %c0_68 = arith.constant 0 : index
    %74 = tpu.strided_load %arg11[%c9, %c0_68] {strides = array<i32: 25, 1>} : memref<50x128xf32, #tpu.memory_space<vmem>>, vector<2x128xf32>
    %75 = arith.truncf %74 : vector<2x128xf32> to vector<2x128xbf16>
    %c9_69 = arith.constant 9 : index
    %c0_70 = arith.constant 0 : index
    %c0_71 = arith.constant 0 : index
    %76 = vector.load %arg5[%c9_69, %c0_70, %c0_71] : memref<25x128x768xbf16, #tpu.memory_space<vmem>>, vector<1x128x768xbf16>
    %77 = vector.shape_cast %76 : vector<1x128x768xbf16> to vector<128x768xbf16>
    %cst_72 = arith.constant dense<0.000000e+00> : vector<2x768xf32>
    %78 = tpu.matmul %75, %77, %cst_72 {dimension_numbers = #tpu.dot_dimension_numbers<[1], [0], [0], [1], [0, 0, 1, 1], [], []>} : vector<2x128xbf16>, vector<128x768xbf16>, vector<2x768xf32> -> vector<2x768xf32>
    %79 = arith.addf %73, %78 : vector<2x768xf32>
    %c10 = arith.constant 10 : index
    %c0_73 = arith.constant 0 : index
    %80 = tpu.strided_load %arg11[%c10, %c0_73] {strides = array<i32: 25, 1>} : memref<50x128xf32, #tpu.memory_space<vmem>>, vector<2x128xf32>
    %81 = arith.truncf %80 : vector<2x128xf32> to vector<2x128xbf16>
    %c10_74 = arith.constant 10 : index
    %c0_75 = arith.constant 0 : index
    %c0_76 = arith.constant 0 : index
    %82 = vector.load %arg5[%c10_74, %c0_75, %c0_76] : memref<25x128x768xbf16, #tpu.memory_space<vmem>>, vector<1x128x768xbf16>
    %83 = vector.shape_cast %82 : vector<1x128x768xbf16> to vector<128x768xbf16>
    %cst_77 = arith.constant dense<0.000000e+00> : vector<2x768xf32>
    %84 = tpu.matmul %81, %83, %cst_77 {dimension_numbers = #tpu.dot_dimension_numbers<[1], [0], [0], [1], [0, 0, 1, 1], [], []>} : vector<2x128xbf16>, vector<128x768xbf16>, vector<2x768xf32> -> vector<2x768xf32>
    %85 = arith.addf %79, %84 : vector<2x768xf32>
    %c11 = arith.constant 11 : index
    %c0_78 = arith.constant 0 : index
    %86 = tpu.strided_load %arg11[%c11, %c0_78] {strides = array<i32: 25, 1>} : memref<50x128xf32, #tpu.memory_space<vmem>>, vector<2x128xf32>
    %87 = arith.truncf %86 : vector<2x128xf32> to vector<2x128xbf16>
    %c11_79 = arith.constant 11 : index
    %c0_80 = arith.constant 0 : index
    %c0_81 = arith.constant 0 : index
    %88 = vector.load %arg5[%c11_79, %c0_80, %c0_81] : memref<25x128x768xbf16, #tpu.memory_space<vmem>>, vector<1x128x768xbf16>
    %89 = vector.shape_cast %88 : vector<1x128x768xbf16> to vector<128x768xbf16>
    %cst_82 = arith.constant dense<0.000000e+00> : vector<2x768xf32>
    %90 = tpu.matmul %87, %89, %cst_82 {dimension_numbers = #tpu.dot_dimension_numbers<[1], [0], [0], [1], [0, 0, 1, 1], [], []>} : vector<2x128xbf16>, vector<128x768xbf16>, vector<2x768xf32> -> vector<2x768xf32>
    %91 = arith.addf %85, %90 : vector<2x768xf32>
    %c12 = arith.constant 12 : index
    %c0_83 = arith.constant 0 : index
    %92 = tpu.strided_load %arg11[%c12, %c0_83] {strides = array<i32: 25, 1>} : memref<50x128xf32, #tpu.memory_space<vmem>>, vector<2x128xf32>
    %93 = arith.truncf %92 : vector<2x128xf32> to vector<2x128xbf16>
    %c12_84 = arith.constant 12 : index
    %c0_85 = arith.constant 0 : index
    %c0_86 = arith.constant 0 : index
    %94 = vector.load %arg5[%c12_84, %c0_85, %c0_86] : memref<25x128x768xbf16, #tpu.memory_space<vmem>>, vector<1x128x768xbf16>
    %95 = vector.shape_cast %94 : vector<1x128x768xbf16> to vector<128x768xbf16>
    %cst_87 = arith.constant dense<0.000000e+00> : vector<2x768xf32>
    %96 = tpu.matmul %93, %95, %cst_87 {dimension_numbers = #tpu.dot_dimension_numbers<[1], [0], [0], [1], [0, 0, 1, 1], [], []>} : vector<2x128xbf16>, vector<128x768xbf16>, vector<2x768xf32> -> vector<2x768xf32>
    %97 = arith.addf %91, %96 : vector<2x768xf32>
    %c13 = arith.constant 13 : index
    %c0_88 = arith.constant 0 : index
    %98 = tpu.strided_load %arg11[%c13, %c0_88] {strides = array<i32: 25, 1>} : memref<50x128xf32, #tpu.memory_space<vmem>>, vector<2x128xf32>
    %99 = arith.truncf %98 : vector<2x128xf32> to vector<2x128xbf16>
    %c13_89 = arith.constant 13 : index
    %c0_90 = arith.constant 0 : index
    %c0_91 = arith.constant 0 : index
    %100 = vector.load %arg5[%c13_89, %c0_90, %c0_91] : memref<25x128x768xbf16, #tpu.memory_space<vmem>>, vector<1x128x768xbf16>
    %101 = vector.shape_cast %100 : vector<1x128x768xbf16> to vector<128x768xbf16>
    %cst_92 = arith.constant dense<0.000000e+00> : vector<2x768xf32>
    %102 = tpu.matmul %99, %101, %cst_92 {dimension_numbers = #tpu.dot_dimension_numbers<[1], [0], [0], [1], [0, 0, 1, 1], [], []>} : vector<2x128xbf16>, vector<128x768xbf16>, vector<2x768xf32> -> vector<2x768xf32>
    %103 = arith.addf %97, %102 : vector<2x768xf32>
    %c14 = arith.constant 14 : index
    %c0_93 = arith.constant 0 : index
    %104 = tpu.strided_load %arg11[%c14, %c0_93] {strides = array<i32: 25, 1>} : memref<50x128xf32, #tpu.memory_space<vmem>>, vector<2x128xf32>
    %105 = arith.truncf %104 : vector<2x128xf32> to vector<2x128xbf16>
    %c14_94 = arith.constant 14 : index
    %c0_95 = arith.constant 0 : index
    %c0_96 = arith.constant 0 : index
    %106 = vector.load %arg5[%c14_94, %c0_95, %c0_96] : memref<25x128x768xbf16, #tpu.memory_space<vmem>>, vector<1x128x768xbf16>
    %107 = vector.shape_cast %106 : vector<1x128x768xbf16> to vector<128x768xbf16>
    %cst_97 = arith.constant dense<0.000000e+00> : vector<2x768xf32>
    %108 = tpu.matmul %105, %107, %cst_97 {dimension_numbers = #tpu.dot_dimension_numbers<[1], [0], [0], [1], [0, 0, 1, 1], [], []>} : vector<2x128xbf16>, vector<128x768xbf16>, vector<2x768xf32> -> vector<2x768xf32>
    %109 = arith.addf %103, %108 : vector<2x768xf32>
    %c15 = arith.constant 15 : index
    %c0_98 = arith.constant 0 : index
    %110 = tpu.strided_load %arg11[%c15, %c0_98] {strides = array<i32: 25, 1>} : memref<50x128xf32, #tpu.memory_space<vmem>>, vector<2x128xf32>
    %111 = arith.truncf %110 : vector<2x128xf32> to vector<2x128xbf16>
    %c15_99 = arith.constant 15 : index
    %c0_100 = arith.constant 0 : index
    %c0_101 = arith.constant 0 : index
    %112 = vector.load %arg5[%c15_99, %c0_100, %c0_101] : memref<25x128x768xbf16, #tpu.memory_space<vmem>>, vector<1x128x768xbf16>
    %113 = vector.shape_cast %112 : vector<1x128x768xbf16> to vector<128x768xbf16>
    %cst_102 = arith.constant dense<0.000000e+00> : vector<2x768xf32>
    %114 = tpu.matmul %111, %113, %cst_102 {dimension_numbers = #tpu.dot_dimension_numbers<[1], [0], [0], [1], [0, 0, 1, 1], [], []>} : vector<2x128xbf16>, vector<128x768xbf16>, vector<2x768xf32> -> vector<2x768xf32>
    %115 = arith.addf %109, %114 : vector<2x768xf32>
    %c16 = arith.constant 16 : index
    %c0_103 = arith.constant 0 : index
    %116 = tpu.strided_load %arg11[%c16, %c0_103] {strides = array<i32: 25, 1>} : memref<50x128xf32, #tpu.memory_space<vmem>>, vector<2x128xf32>
    %117 = arith.truncf %116 : vector<2x128xf32> to vector<2x128xbf16>
    %c16_104 = arith.constant 16 : index
    %c0_105 = arith.constant 0 : index
    %c0_106 = arith.constant 0 : index
    %118 = vector.load %arg5[%c16_104, %c0_105, %c0_106] : memref<25x128x768xbf16, #tpu.memory_space<vmem>>, vector<1x128x768xbf16>
    %119 = vector.shape_cast %118 : vector<1x128x768xbf16> to vector<128x768xbf16>
    %cst_107 = arith.constant dense<0.000000e+00> : vector<2x768xf32>
    %120 = tpu.matmul %117, %119, %cst_107 {dimension_numbers = #tpu.dot_dimension_numbers<[1], [0], [0], [1], [0, 0, 1, 1], [], []>} : vector<2x128xbf16>, vector<128x768xbf16>, vector<2x768xf32> -> vector<2x768xf32>
    %121 = arith.addf %115, %120 : vector<2x768xf32>
    %c17 = arith.constant 17 : index
    %c0_108 = arith.constant 0 : index
    %122 = tpu.strided_load %arg11[%c17, %c0_108] {strides = array<i32: 25, 1>} : memref<50x128xf32, #tpu.memory_space<vmem>>, vector<2x128xf32>
    %123 = arith.truncf %122 : vector<2x128xf32> to vector<2x128xbf16>
    %c17_109 = arith.constant 17 : index
    %c0_110 = arith.constant 0 : index
    %c0_111 = arith.constant 0 : index
    %124 = vector.load %arg5[%c17_109, %c0_110, %c0_111] : memref<25x128x768xbf16, #tpu.memory_space<vmem>>, vector<1x128x768xbf16>
    %125 = vector.shape_cast %124 : vector<1x128x768xbf16> to vector<128x768xbf16>
    %cst_112 = arith.constant dense<0.000000e+00> : vector<2x768xf32>
    %126 = tpu.matmul %123, %125, %cst_112 {dimension_numbers = #tpu.dot_dimension_numbers<[1], [0], [0], [1], [0, 0, 1, 1], [], []>} : vector<2x128xbf16>, vector<128x768xbf16>, vector<2x768xf32> -> vector<2x768xf32>
    %127 = arith.addf %121, %126 : vector<2x768xf32>
    %c18 = arith.constant 18 : index
    %c0_113 = arith.constant 0 : index
    %128 = tpu.strided_load %arg11[%c18, %c0_113] {strides = array<i32: 25, 1>} : memref<50x128xf32, #tpu.memory_space<vmem>>, vector<2x128xf32>
    %129 = arith.truncf %128 : vector<2x128xf32> to vector<2x128xbf16>
    %c18_114 = arith.constant 18 : index
    %c0_115 = arith.constant 0 : index
    %c0_116 = arith.constant 0 : index
    %130 = vector.load %arg5[%c18_114, %c0_115, %c0_116] : memref<25x128x768xbf16, #tpu.memory_space<vmem>>, vector<1x128x768xbf16>
    %131 = vector.shape_cast %130 : vector<1x128x768xbf16> to vector<128x768xbf16>
    %cst_117 = arith.constant dense<0.000000e+00> : vector<2x768xf32>
    %132 = tpu.matmul %129, %131, %cst_117 {dimension_numbers = #tpu.dot_dimension_numbers<[1], [0], [0], [1], [0, 0, 1, 1], [], []>} : vector<2x128xbf16>, vector<128x768xbf16>, vector<2x768xf32> -> vector<2x768xf32>
    %133 = arith.addf %127, %132 : vector<2x768xf32>
    %c19 = arith.constant 19 : index
    %c0_118 = arith.constant 0 : index
    %134 = tpu.strided_load %arg11[%c19, %c0_118] {strides = array<i32: 25, 1>} : memref<50x128xf32, #tpu.memory_space<vmem>>, vector<2x128xf32>
    %135 = arith.truncf %134 : vector<2x128xf32> to vector<2x128xbf16>
    %c19_119 = arith.constant 19 : index
    %c0_120 = arith.constant 0 : index
    %c0_121 = arith.constant 0 : index
    %136 = vector.load %arg5[%c19_119, %c0_120, %c0_121] : memref<25x128x768xbf16, #tpu.memory_space<vmem>>, vector<1x128x768xbf16>
    %137 = vector.shape_cast %136 : vector<1x128x768xbf16> to vector<128x768xbf16>
    %cst_122 = arith.constant dense<0.000000e+00> : vector<2x768xf32>
    %138 = tpu.matmul %135, %137, %cst_122 {dimension_numbers = #tpu.dot_dimension_numbers<[1], [0], [0], [1], [0, 0, 1, 1], [], []>} : vector<2x128xbf16>, vector<128x768xbf16>, vector<2x768xf32> -> vector<2x768xf32>
    %139 = arith.addf %133, %138 : vector<2x768xf32>
    %c20 = arith.constant 20 : index
    %c0_123 = arith.constant 0 : index
    %140 = tpu.strided_load %arg11[%c20, %c0_123] {strides = array<i32: 25, 1>} : memref<50x128xf32, #tpu.memory_space<vmem>>, vector<2x128xf32>
    %141 = arith.truncf %140 : vector<2x128xf32> to vector<2x128xbf16>
    %c20_124 = arith.constant 20 : index
    %c0_125 = arith.constant 0 : index
    %c0_126 = arith.constant 0 : index
    %142 = vector.load %arg5[%c20_124, %c0_125, %c0_126] : memref<25x128x768xbf16, #tpu.memory_space<vmem>>, vector<1x128x768xbf16>
    %143 = vector.shape_cast %142 : vector<1x128x768xbf16> to vector<128x768xbf16>
    %cst_127 = arith.constant dense<0.000000e+00> : vector<2x768xf32>
    %144 = tpu.matmul %141, %143, %cst_127 {dimension_numbers = #tpu.dot_dimension_numbers<[1], [0], [0], [1], [0, 0, 1, 1], [], []>} : vector<2x128xbf16>, vector<128x768xbf16>, vector<2x768xf32> -> vector<2x768xf32>
    %145 = arith.addf %139, %144 : vector<2x768xf32>
    %c21 = arith.constant 21 : index
    %c0_128 = arith.constant 0 : index
    %146 = tpu.strided_load %arg11[%c21, %c0_128] {strides = array<i32: 25, 1>} : memref<50x128xf32, #tpu.memory_space<vmem>>, vector<2x128xf32>
    %147 = arith.truncf %146 : vector<2x128xf32> to vector<2x128xbf16>
    %c21_129 = arith.constant 21 : index
    %c0_130 = arith.constant 0 : index
    %c0_131 = arith.constant 0 : index
    %148 = vector.load %arg5[%c21_129, %c0_130, %c0_131] : memref<25x128x768xbf16, #tpu.memory_space<vmem>>, vector<1x128x768xbf16>
    %149 = vector.shape_cast %148 : vector<1x128x768xbf16> to vector<128x768xbf16>
    %cst_132 = arith.constant dense<0.000000e+00> : vector<2x768xf32>
    %150 = tpu.matmul %147, %149, %cst_132 {dimension_numbers = #tpu.dot_dimension_numbers<[1], [0], [0], [1], [0, 0, 1, 1], [], []>} : vector<2x128xbf16>, vector<128x768xbf16>, vector<2x768xf32> -> vector<2x768xf32>
    %151 = arith.addf %145, %150 : vector<2x768xf32>
    %c22 = arith.constant 22 : index
    %c0_133 = arith.constant 0 : index
    %152 = tpu.strided_load %arg11[%c22, %c0_133] {strides = array<i32: 25, 1>} : memref<50x128xf32, #tpu.memory_space<vmem>>, vector<2x128xf32>
    %153 = arith.truncf %152 : vector<2x128xf32> to vector<2x128xbf16>
    %c22_134 = arith.constant 22 : index
    %c0_135 = arith.constant 0 : index
    %c0_136 = arith.constant 0 : index
    %154 = vector.load %arg5[%c22_134, %c0_135, %c0_136] : memref<25x128x768xbf16, #tpu.memory_space<vmem>>, vector<1x128x768xbf16>
    %155 = vector.shape_cast %154 : vector<1x128x768xbf16> to vector<128x768xbf16>
    %cst_137 = arith.constant dense<0.000000e+00> : vector<2x768xf32>
    %156 = tpu.matmul %153, %155, %cst_137 {dimension_numbers = #tpu.dot_dimension_numbers<[1], [0], [0], [1], [0, 0, 1, 1], [], []>} : vector<2x128xbf16>, vector<128x768xbf16>, vector<2x768xf32> -> vector<2x768xf32>
    %157 = arith.addf %151, %156 : vector<2x768xf32>
    %c23 = arith.constant 23 : index
    %c0_138 = arith.constant 0 : index
    %158 = tpu.strided_load %arg11[%c23, %c0_138] {strides = array<i32: 25, 1>} : memref<50x128xf32, #tpu.memory_space<vmem>>, vector<2x128xf32>
    %159 = arith.truncf %158 : vector<2x128xf32> to vector<2x128xbf16>
    %c23_139 = arith.constant 23 : index
    %c0_140 = arith.constant 0 : index
    %c0_141 = arith.constant 0 : index
    %160 = vector.load %arg5[%c23_139, %c0_140, %c0_141] : memref<25x128x768xbf16, #tpu.memory_space<vmem>>, vector<1x128x768xbf16>
    %161 = vector.shape_cast %160 : vector<1x128x768xbf16> to vector<128x768xbf16>
    %cst_142 = arith.constant dense<0.000000e+00> : vector<2x768xf32>
    %162 = tpu.matmul %159, %161, %cst_142 {dimension_numbers = #tpu.dot_dimension_numbers<[1], [0], [0], [1], [0, 0, 1, 1], [], []>} : vector<2x128xbf16>, vector<128x768xbf16>, vector<2x768xf32> -> vector<2x768xf32>
    %163 = arith.addf %157, %162 : vector<2x768xf32>
    %c24 = arith.constant 24 : index
    %c0_143 = arith.constant 0 : index
    %164 = tpu.strided_load %arg11[%c24, %c0_143] {strides = array<i32: 25, 1>} : memref<50x128xf32, #tpu.memory_space<vmem>>, vector<2x128xf32>
    %165 = arith.truncf %164 : vector<2x128xf32> to vector<2x128xbf16>
    %c24_144 = arith.constant 24 : index
    %c0_145 = arith.constant 0 : index
    %c0_146 = arith.constant 0 : index
    %166 = vector.load %arg5[%c24_144, %c0_145, %c0_146] : memref<25x128x768xbf16, #tpu.memory_space<vmem>>, vector<1x128x768xbf16>
    %167 = vector.shape_cast %166 : vector<1x128x768xbf16> to vector<128x768xbf16>
    %cst_147 = arith.constant dense<0.000000e+00> : vector<2x768xf32>
    %168 = tpu.matmul %165, %167, %cst_147 {dimension_numbers = #tpu.dot_dimension_numbers<[1], [0], [0], [1], [0, 0, 1, 1], [], []>} : vector<2x128xbf16>, vector<128x768xbf16>, vector<2x768xf32> -> vector<2x768xf32>
    %169 = arith.addf %163, %168 : vector<2x768xf32>
    %c0_148 = arith.constant 0 : index
    %c0_149 = arith.constant 0 : index
    %170 = vector.load %arg6[%c0_148, %c0_149] : memref<1x768xf32, #tpu.memory_space<vmem>>, vector<1x768xf32>
    %171 = vector.broadcast %170 : vector<1x768xf32> to vector<2x768xf32>
    %172 = arith.addf %169, %171 : vector<2x768xf32>
    %cst_150 = arith.constant 0.000000e+00 : f32
    %173 = vector.broadcast %cst_150 : f32 to vector<2x768xf32>
    %174 = arith.maximumf %172, %173 : vector<2x768xf32>
    %175 = arith.truncf %174 : vector<2x768xf32> to vector<2x768xbf16>
    %c0_151 = arith.constant 0 : index
    %c0_152 = arith.constant 0 : index
    %176 = vector.load %arg7[%c0_151, %c0_152] : memref<768x128xbf16, #tpu.memory_space<vmem>>, vector<768x128xbf16>
    %cst_153 = arith.constant dense<0.000000e+00> : vector<2x128xf32>
    %177 = tpu.matmul %175, %176, %cst_153 {dimension_numbers = #tpu.dot_dimension_numbers<[1], [0], [0], [1], [0, 0, 1, 1], [], []>} : vector<2x768xbf16>, vector<768x128xbf16>, vector<2x128xf32> -> vector<2x128xf32>
    %c0_154 = arith.constant 0 : index
    %c0_155 = arith.constant 0 : index
    %178 = vector.load %arg8[%c0_154, %c0_155] : memref<1x128xf32, #tpu.memory_space<vmem>>, vector<1x128xf32>
    %179 = vector.broadcast %178 : vector<1x128xf32> to vector<2x128xf32>
    %180 = arith.addf %177, %179 : vector<2x128xf32>
    %c0_156 = arith.constant 0 : index
    %c0_157 = arith.constant 0 : index
    %181 = vector.load %arg9[%c0_156, %c0_157] : memref<2x128xf32, #tpu.memory_space<vmem>>, vector<2x128xf32>
    tpu.vector_store %arg9[%c0_156, %c0_157], %180 {strides = array<i32>} : memref<2x128xf32, #tpu.memory_space<vmem>>, vector<2x128xf32>,
    return
  }
  func.func @transform_0(%arg0: i32) -> (i32, i32, i32) {
    %c0_i32 = arith.constant 0 : i32
    %c0_i32_0 = arith.constant 0 : i32
    %c0_i32_1 = arith.constant 0 : i32
    return %arg0, %c0_i32, %c0_i32_0 : i32, i32, i32
  }
  func.func @transform_1(%arg0: i32) -> (i32, i32) {
    %c0_i32 = arith.constant 0 : i32
    %c0_i32_0 = arith.constant 0 : i32
    %c0_i32_1 = arith.constant 0 : i32
    return %c0_i32, %c0_i32_0 : i32, i32
  }
  func.func @transform_2(%arg0: i32) -> (i32, i32) {
    %c0_i32 = arith.constant 0 : i32
    %c0_i32_0 = arith.constant 0 : i32
    %c0_i32_1 = arith.constant 0 : i32
    return %c0_i32, %c0_i32_0 : i32, i32
  }
  func.func @transform_3(%arg0: i32) -> (i32, i32) {
    %c0_i32 = arith.constant 0 : i32
    %c0_i32_0 = arith.constant 0 : i32
    %c0_i32_1 = arith.constant 0 : i32
    return %c0_i32, %c0_i32_0 : i32, i32
  }
  func.func @transform_4(%arg0: i32) -> (i32, i32, i32) {
    %c0_i32 = arith.constant 0 : i32
    %c0_i32_0 = arith.constant 0 : i32
    %c0_i32_1 = arith.constant 0 : i32
    %c0_i32_2 = arith.constant 0 : i32
    return %c0_i32, %c0_i32_0, %c0_i32_1 : i32, i32, i32
  }
  func.func @transform_5(%arg0: i32) -> (i32, i32) {
    %c0_i32 = arith.constant 0 : i32
    %c0_i32_0 = arith.constant 0 : i32
    %c0_i32_1 = arith.constant 0 : i32
    return %c0_i32, %c0_i32_0 : i32, i32
  }
  func.func @transform_6(%arg0: i32) -> (i32, i32) {
    %c0_i32 = arith.constant 0 : i32
    %c0_i32_0 = arith.constant 0 : i32
    %c0_i32_1 = arith.constant 0 : i32
    return %c0_i32, %c0_i32_0 : i32, i32
  }
  func.func @transform_7(%arg0: i32) -> (i32, i32) {
    %c0_i32 = arith.constant 0 : i32
    %c0_i32_0 = arith.constant 0 : i32
    %c0_i32_1 = arith.constant 0 : i32
    return %c0_i32, %c0_i32_0 : i32, i32
  }
  func.func @transform_8(%arg0: i32) -> (i32, i32) {
    %c0_i32 = arith.constant 0 : i32
    %c0_i32_0 = arith.constant 0 : i32
    return %arg0, %c0_i32 : i32, i32
  }
}

</mosaic_0001>

<llo_original>
// kernel: inception_aux_forward.1
$region0: #{inception_aux_forward.1}
  #allocation0 [shape = 'u32[]', space=smem, size = 0x4, offset = 0x4, fixed_abs, tag = 'smem constant byte address 0x4 - core index']
  #allocation1 [shape = 'u32[72,128]{1,0:T(1,128)}', space=vmem, size = 0x9000, scoped, tag = 'internal scratch']
  #allocation2 [shape = 'f32[50,4]{1,0:T(8,128)}', space=vmem, size = 0x7000, scoped, tag = 'scratch operand']
  #allocation3 [shape = 'f32[50,128]{1,0:T(8,128)}', space=vmem, size = 0x7000, scoped, tag = 'scratch operand']
  %s0 = inlined_call_operand.vmem [shape: bf16[2,289,4], index: 0, kind: input, shape index: {}]
  %s1 = inlined_call_operand.hbm [shape: bf16[25,289], index: 1, kind: input, shape index: {}]
  %s2 = inlined_call_operand.hbm [shape: bf16[4,128], index: 2, kind: input, shape index: {}]
  %s3 = inlined_call_operand.hbm [shape: f32[1,128], index: 3, kind: input, shape index: {}]
  %s4 = inlined_call_operand.hbm [shape: bf16[25,128,768], index: 4, kind: input, shape index: {}]
  %s5 = inlined_call_operand.hbm [shape: f32[1,768], index: 5, kind: input, shape index: {}]
  %s6 = inlined_call_operand.hbm [shape: bf16[768,128], index: 6, kind: input, shape index: {}]
  %s7 = inlined_call_operand.hbm [shape: f32[1,128], index: 7, kind: input, shape index: {}]
  %s8 = inlined_call_operand.hbm [shape: f32[2,128], index: 8, kind: output, shape index: {}]
  %s9 = sld [smem:[#allocation0]]
  $region70: #{inception_aux_forward.1} parent=0
    _
  %s11 = ssub.s32 1, %s9
  %s12 = scalar_select 0, %s11, %s9
  $region1: #{inception_aux_forward.1} parent=0
    #allocation4 [shape = 'u8[24576]{0}', space=vmem, size = 0x6000, scoped, tag = 'input window, operand 1, single buffered']
    #allocation5 [shape = 's32[1]{0}', space=sflag, size = 0x4, scoped, tag = 'scoped memory for inception_aux_forward.1']
    #allocation6 [shape = 's32[1]{0}', space=sflag, size = 0x4, scoped, tag = 'scoped memory for inception_aux_forward.1']
    #allocation7 [shape = 'u8[1024]{0}', space=vmem, size = 0x400, scoped, tag = 'input window, operand 2, single buffered']
    #allocation8 [shape = 's32[1]{0}', space=sflag, size = 0x4, scoped, tag = 'scoped memory for inception_aux_forward.1']
    #allocation9 [shape = 'u8[512]{0}', space=vmem, size = 0x400, scoped, tag = 'input window, operand 3, single buffered']
    #allocation10 [shape = 'u8[4915200]{0}', space=vmem, size = 0x4b0000, scoped, tag = 'input window, operand 4, single buffered']
    #allocation11 [shape = 's32[1]{0}', space=sflag, size = 0x4, scoped, tag = 'scoped memory for inception_aux_forward.1']
    #allocation12 [shape = 'u8[3072]{0}', space=vmem, size = 0xc00, scoped, tag = 'input window, operand 5, single buffered']
    #allocation13 [shape = 'u8[196608]{0}', space=vmem, size = 0x30000, scoped, tag = 'input window, operand 6, single buffered']
    #allocation14 [shape = 's32[1]{0}', space=sflag, size = 0x4, scoped, tag = 'scoped memory for inception_aux_forward.1']
    #allocation15 [shape = 'u8[512]{0}', space=vmem, size = 0x400, scoped, tag = 'input window, operand 7, single buffered']
    #allocation16 [shape = 'u8[1024]{0}', space=vmem, size = 0x400, scoped, tag = 'output window, operand 0, single buffered']
    %13 = vsyncpa [#allocation5], 0
    %14 = vsyncpa [#allocation8], 0
    %15 = vsyncpa [#allocation11], 0
    %16 = vsyncpa [#allocation14], 0
    %17 = vsyncpa [#allocation6], 0
    // Predicated region
    $region2: #{inception_aux_forward.1} parent=1 // pred_check
      _
    $region3: #{inception_aux_forward.1} parent=1 // pred_check_branch
      %19 = sbr.rel (0) target = $region5
    $region4: #{inception_aux_forward.1} parent=1 // pred_region
      _
    $region5: #{inception_aux_forward.1} parent=1 // pred_fallthru
      _
    // Predicated region
    $region6: #{inception_aux_forward.1} parent=1 // pred_check
      _
    $region7: #{inception_aux_forward.1} parent=1 // pred_check_branch
      %21 = sbr.rel (0) target = $region9
    $region8: #{inception_aux_forward.1} parent=1 // pred_region
      %23 = vsyncadd [#allocation5], 0
      %s24 = sshll.u32 %s1, 4
      %s25 = int_to_ptr.hbm [resolvable:$true] %s24
      %s26 = sshll.u32 [#allocation4], 4
      %s27 = int_to_ptr.vmem [resolvable:$true] %s26
      %32 = dma.hbm_to_vmem [thread:$0]  %s25, 768, %s27, [#allocation5], 192, 192, 12
    $region9: #{inception_aux_forward.1} parent=1 // pred_fallthru
      _
    // Predicated region
    $region10: #{inception_aux_forward.1} parent=1 // pred_check
      _
    $region11: #{inception_aux_forward.1} parent=1 // pred_check_branch
      %34 = sbr.rel (0) target = $region13
    $region12: #{inception_aux_forward.1} parent=1 // pred_region
      %36 = vsyncadd [#allocation8], 0
      %s38 = sshll.u32 %s2, 4
      %s39 = int_to_ptr.hbm [resolvable:$true] %s38
      %s40 = sshll.u32 [#allocation7], 4
      %s41 = int_to_ptr.vmem [resolvable:$true] %s40
      %43 = dma.hbm_to_vmem [thread:$0]  %s39, 32, %s41, [#allocation8]
    $region13: #{inception_aux_forward.1} parent=1 // pred_fallthru
      _
    // Predicated region
    $region14: #{inception_aux_forward.1} parent=1 // pred_check
      _
    $region15: #{inception_aux_forward.1} parent=1 // pred_check_branch
      %45 = sbr.rel (0) target = $region17
    $region16: #{inception_aux_forward.1} parent=1 // pred_region
      %47 = vsyncadd [#allocation8], 0
      %s49 = sshll.u32 %s3, 4
      %s50 = int_to_ptr.hbm [resolvable:$true] %s49
      %s51 = sshll.u32 [#allocation9], 4
      %s52 = int_to_ptr.vmem [resolvable:$true] %s51
      %54 = dma.hbm_to_vmem [thread:$0]  %s50, 16, %s52, [#allocation8]
    $region17: #{inception_aux_forward.1} parent=1 // pred_fallthru
      _
    // Predicated region
    $region18: #{inception_aux_forward.1} parent=1 // pred_check
      _
    $region19: #{inception_aux_forward.1} parent=1 // pred_check_branch
      %56 = sbr.rel (0) target = $region21
    $region20: #{inception_aux_forward.1} parent=1 // pred_region
      %58 = vsyncadd [#allocation11], 0
      %s59 = sshll.u32 %s4, 4
      %s60 = int_to_ptr.hbm [resolvable:$true] %s59
      %s61 = sshll.u32 [#allocation10], 4
      %s62 = int_to_ptr.vmem [resolvable:$true] %s61
      %67 = dma.hbm_to_vmem [thread:$0]  %s60, 153600, %s62, [#allocation11], 384, 384, 24
    $region21: #{inception_aux_forward.1} parent=1 // pred_fallthru
      _
    // Predicated region
    $region22: #{inception_aux_forward.1} parent=1 // pred_check
      _
    $region23: #{inception_aux_forward.1} parent=1 // pred_check_branch
      %69 = sbr.rel (0) target = $region25
    $region24: #{inception_aux_forward.1} parent=1 // pred_region
      %71 = vsyncadd [#allocation11], 0
      %s73 = sshll.u32 %s5, 4
      %s74 = int_to_ptr.hbm [resolvable:$true] %s73
      %s75 = sshll.u32 [#allocation12], 4
      %s76 = int_to_ptr.vmem [resolvable:$true] %s75
      %78 = dma.hbm_to_vmem [thread:$0]  %s74, 96, %s76, [#allocation11]
    $region25: #{inception_aux_forward.1} parent=1 // pred_fallthru
      _
    // Predicated region
    $region26: #{inception_aux_forward.1} parent=1 // pred_check
      _
    $region27: #{inception_aux_forward.1} parent=1 // pred_check_branch
      %80 = sbr.rel (0) target = $region29
    $region28: #{inception_aux_forward.1} parent=1 // pred_region
      %82 = vsyncadd [#allocation14], 0
      %s83 = sshll.u32 %s6, 4
      %s84 = int_to_ptr.hbm [resolvable:$true] %s83
      %s85 = sshll.u32 [#allocation13], 4
      %s86 = int_to_ptr.vmem [resolvable:$true] %s85
      %91 = dma.hbm_to_vmem [thread:$0]  %s84, 6144, %s86, [#allocation14], 64, 64, 4
    $region29: #{inception_aux_forward.1} parent=1 // pred_fallthru
      _
    // Predicated region
    $region30: #{inception_aux_forward.1} parent=1 // pred_check
      _
    $region31: #{inception_aux_forward.1} parent=1 // pred_check_branch
      %93 = sbr.rel (0) target = $region33
    $region32: #{inception_aux_forward.1} parent=1 // pred_region
      %95 = vsyncadd [#allocation14], 0
      %s97 = sshll.u32 %s7, 4
      %s98 = int_to_ptr.hbm [resolvable:$true] %s97
      %s99 = sshll.u32 [#allocation15], 4
      %s100 = int_to_ptr.vmem [resolvable:$true] %s99
      %102 = dma.hbm_to_vmem [thread:$0]  %s98, 16, %s100, [#allocation14]
    $region33: #{inception_aux_forward.1} parent=1 // pred_fallthru
      _
    // Predicated region
    $region34: #{inception_aux_forward.1} parent=1 // pred_check
      _
    $region35: #{inception_aux_forward.1} parent=1 // pred_check_branch
      %104 = sbr.rel (0) target = $region37
    $region36: #{inception_aux_forward.1} parent=1 // pred_region
      %106 = dma.done [#allocation5], 768
    $region37: #{inception_aux_forward.1} parent=1 // pred_fallthru
      _
    // Predicated region
    $region38: #{inception_aux_forward.1} parent=1 // pred_check
      _
    $region39: #{inception_aux_forward.1} parent=1 // pred_check_branch
      %108 = sbr.rel (0) target = $region41
    $region40: #{inception_aux_forward.1} parent=1 // pred_region
      %110 = dma.done [#allocation8], 32
    $region41: #{inception_aux_forward.1} parent=1 // pred_fallthru
      _
    // Predicated region
    $region42: #{inception_aux_forward.1} parent=1 // pred_check
      _
    $region43: #{inception_aux_forward.1} parent=1 // pred_check_branch
      %112 = sbr.rel (0) target = $region45
    $region44: #{inception_aux_forward.1} parent=1 // pred_region
      %114 = dma.done [#allocation8], 16
    $region45: #{inception_aux_forward.1} parent=1 // pred_fallthru
      _
    // Predicated region
    $region46: #{inception_aux_forward.1} parent=1 // pred_check
      _
    $region47: #{inception_aux_forward.1} parent=1 // pred_check_branch
      %116 = sbr.rel (0) target = $region49
    $region48: #{inception_aux_forward.1} parent=1 // pred_region
      %118 = dma.done [#allocation11], 153600
    $region49: #{inception_aux_forward.1} parent=1 // pred_fallthru
      _
    // Predicated region
    $region50: #{inception_aux_forward.1} parent=1 // pred_check
      _
    $region51: #{inception_aux_forward.1} parent=1 // pred_check_branch
      %120 = sbr.rel (0) target = $region53
    $region52: #{inception_aux_forward.1} parent=1 // pred_region
      %122 = dma.done [#allocation11], 96
    $region53: #{inception_aux_forward.1} parent=1 // pred_fallthru
      _
    // Predicated region
    $region54: #{inception_aux_forward.1} parent=1 // pred_check
      _
    $region55: #{inception_aux_forward.1} parent=1 // pred_check_branch
      %124 = sbr.rel (0) target = $region57
    $region56: #{inception_aux_forward.1} parent=1 // pred_region
      %126 = dma.done [#allocation14], 6144
    $region57: #{inception_aux_forward.1} parent=1 // pred_fallthru
      _
    // Predicated region
    $region58: #{inception_aux_forward.1} parent=1 // pred_check
      _
    $region59: #{inception_aux_forward.1} parent=1 // pred_check_branch
      %128 = sbr.rel (0) target = $region61
    $region60: #{inception_aux_forward.1} parent=1 // pred_region
      %130 = dma.done [#allocation14], 16
    $region61: #{inception_aux_forward.1} parent=1 // pred_fallthru
      _
    %v132 = vld [vmem:[#allocation4] sm:$0xff]
    %v133 = vld [vmem:[#allocation4 + $0x8] sm:$0xf]
    %v134 = vld [vmem:[#allocation4 + $0xc] sm:$0xff]
    %v135 = vld [vmem:[#allocation4 + $0x14] sm:$0xf]
    %v136 = vld [vmem:[#allocation4 + $0x18] sm:$0xff]
    %v137 = vld [vmem:[#allocation4 + $0x20] sm:$0xf]
    %v138 = vld [vmem:[#allocation4 + $0x24] sm:$0x11]
    %v139 = vld [vmem:[#allocation4 + $0x2c] sm:$0x1]
    %v140 = vld [vmem:[%s0] sm:$0xf]
    %v141 = vld [vmem:[%s0 + $0x4] sm:$0xf]
    %v142 = vld [vmem:[%s0 + $0x8] sm:$0xf]
    %v143 = vld [vmem:[%s0 + $0xc] sm:$0xf]
    %v144 = vld [vmem:[%s0 + $0x10] sm:$0xf]
    %v145 = vld [vmem:[%s0 + $0x14] sm:$0xf]
    %v146 = vld [vmem:[%s0 + $0x18] sm:$0xf]
    %v147 = vld [vmem:[%s0 + $0x1c] sm:$0xf]
    %v148 = vld [vmem:[%s0 + $0x20] sm:$0xf]
    %v149 = vld [vmem:[%s0 + $0x24] sm:$0xf]
    %v150 = vld [vmem:[%s0 + $0x28] sm:$0xf]
    %v151 = vld [vmem:[%s0 + $0x2c] sm:$0xf]
    %v152 = vld [vmem:[%s0 + $0x30] sm:$0xf]
    %v153 = vld [vmem:[%s0 + $0x34] sm:$0xf]
    %v154 = vld [vmem:[%s0 + $0x38] sm:$0xf]
    %v155 = vld [vmem:[%s0 + $0x3c] sm:$0xf]
    %v156 = vld [vmem:[%s0 + $0x40] sm:$0xf]
    %v157 = vld [vmem:[%s0 + $0x44] sm:$0xf]
    %v158 = vld [vmem:[%s0 + $0x48] sm:$0xf]
    %v159 = vld [vmem:[%s0 + $0x4c] sm:$0xf]
    %v160 = vld [vmem:[%s0 + $0x50] sm:$0xf]
    %v161 = vld [vmem:[%s0 + $0x54] sm:$0xf]
    %v162 = vld [vmem:[%s0 + $0x58] sm:$0xf]
    %v163 = vld [vmem:[%s0 + $0x5c] sm:$0xf]
    %v164 = vld [vmem:[%s0 + $0x60] sm:$0xf]
    %v165 = vld [vmem:[%s0 + $0x64] sm:$0xf]
    %v166 = vld [vmem:[%s0 + $0x68] sm:$0xf]
    %v167 = vld [vmem:[%s0 + $0x6c] sm:$0xf]
    %v168 = vld [vmem:[%s0 + $0x70] sm:$0xf]
    %v169 = vld [vmem:[%s0 + $0x74] sm:$0xf]
    %v170 = vld [vmem:[%s0 + $0x78] sm:$0xf]
    %v171 = vld [vmem:[%s0 + $0x7c] sm:$0xf]
    %v172 = vld [vmem:[%s0 + $0x80] sm:$0xf]
    %v173 = vld [vmem:[%s0 + $0x84] sm:$0xf]
    %v174 = vld [vmem:[%s0 + $0x88] sm:$0xf]
    %v175 = vld [vmem:[%s0 + $0x8c] sm:$0xf]
    %v176 = vld [vmem:[%s0 + $0x90] sm:$0x1]
    %v185 = vunpack.c.l.b16 %v132
    %v186 = vunpack.c.h.b16 %v132
    %v187 = vunpack.c.l.b16 %v133
    %v188 = vunpack.c.l.b16 %v134
    %v189 = vunpack.c.h.b16 %v134
    %v190 = vunpack.c.l.b16 %v135
    %v191 = vunpack.c.l.b16 %v136
    %v192 = vunpack.c.h.b16 %v136
    %v193 = vunpack.c.l.b16 %v137
    %v194 = vunpack.c.l.b16 %v138
    %v195 = vunpack.c.h.b16 %v138
    %v196 = vunpack.c.l.b16 %v139
    %v197 = vpack.c.b16 %v188, %v185
    %v198 = vpack.c.b16 %v189, %v186
    %v199 = vpack.c.b16 %v190, %v187
    %v200 = vpack.c.b16 %v194, %v191
    %v201 = vpack.c.b16 %v195, %v192
    %v202 = vpack.c.b16 %v196, %v193
    %v244 = vunpack.c.l.b16 %v140
    %v245 = vunpack.c.l.b16 %v141
    %v246 = vunpack.c.l.b16 %v142
    %v247 = vunpack.c.l.b16 %v143
    %v248 = vunpack.c.l.b16 %v144
    %v249 = vunpack.c.l.b16 %v145
    %v250 = vunpack.c.l.b16 %v146
    %v251 = vunpack.c.l.b16 %v147
    %v252 = vunpack.c.l.b16 %v148
    %v253 = vunpack.c.l.b16 %v149
    %v254 = vunpack.c.l.b16 %v150
    %v255 = vunpack.c.l.b16 %v151
    %v256 = vunpack.c.l.b16 %v152
    %v257 = vunpack.c.l.b16 %v153
    %v258 = vunpack.c.l.b16 %v154
    %v259 = vunpack.c.l.b16 %v155
    %v260 = vunpack.c.l.b16 %v156
    %v261 = vunpack.c.l.b16 %v157
    %v262 = vunpack.c.l.b16 %v158
    %v263 = vunpack.c.l.b16 %v159
    %v264 = vunpack.c.l.b16 %v160
    %v265 = vunpack.c.l.b16 %v161
    %v266 = vunpack.c.l.b16 %v162
    %v267 = vunpack.c.l.b16 %v163
    %v268 = vunpack.c.l.b16 %v164
    %v269 = vunpack.c.l.b16 %v165
    %v270 = vunpack.c.l.b16 %v166
    %v271 = vunpack.c.l.b16 %v167
    %v272 = vunpack.c.l.b16 %v168
    %v273 = vunpack.c.l.b16 %v169
    %v274 = vunpack.c.l.b16 %v170
    %v275 = vunpack.c.l.b16 %v171
    %v276 = vunpack.c.l.b16 %v172
    %v277 = vunpack.c.l.b16 %v173
    %v278 = vunpack.c.l.b16 %v174
    %v279 = vunpack.c.l.b16 %v175
    %v280 = vunpack.c.l.b16 %v176
    %v281 = vpack.c.b16 %v245, %v244
    %v282 = vpack.c.b16 %v247, %v246
    %v283 = vpack.c.b16 %v249, %v248
    %v284 = vpack.c.b16 %v251, %v250
    %v285 = vpack.c.b16 %v253, %v252
    %v286 = vpack.c.b16 %v255, %v254
    %v287 = vpack.c.b16 %v257, %v256
    %v288 = vpack.c.b16 %v259, %v258
    %v289 = vpack.c.b16 %v261, %v260
    %v290 = vpack.c.b16 %v263, %v262
    %v291 = vpack.c.b16 %v265, %v264
    %v292 = vpack.c.b16 %v267, %v266
    %v293 = vpack.c.b16 %v269, %v268
    %v294 = vpack.c.b16 %v271, %v270
    %v295 = vpack.c.b16 %v273, %v272
    %v296 = vpack.c.b16 %v275, %v274
    %v297 = vpack.c.b16 %v277, %v276
    %v298 = vpack.c.b16 %v279, %v278
    %v299 = vpack.c.b16 %v280, %v280
    %vm318 = vcmask 269312
    %v320 = vsel %vm318, %v199, 0
    %v323 = vsel %vm318, %v202, 0
    %vm325 = vcmask 1040384
    %v326 = vsel 0, 4294967295, 65535
    %v327 = vsel %vm325, %v326, 0
    %v329 = vand.u32 %v299, %v327
    %331 = vmatpush.bf16.msra.mxu0 %v288
    %332 = vmatpush.bf16.msra.mxu0 %v287
    %333 = vmatpush.bf16.msra.mxu0 %v286
    %334 = vmatpush.bf16.msra.mxu0 %v285
    %335 = vmatpush.bf16.msra.mxu0 %v284
    %336 = vmatpush.bf16.msra.mxu0 %v283
    %337 = vmatpush.bf16.msra.mxu0 %v282
    %338 = vmatpush.bf16.msra.mxu0 %v281
    %339 = vmatmul.bf16.gmra.mxu0 %v197
    %v340 = vpop.f32.mrf.mxu0
    %v341 = vadd.f32 0.0, %v340
    %v342 = vpop.f32.mrf.mxu0
    %v343 = vadd.f32 0.0, %v342
    %344 = vmatmul.bf16.gmra.mxu0 %v200
    %v345 = vpop.f32.mrf.mxu0
    %v346 = vadd.f32 0.0, %v345
    %v347 = vpop.f32.mrf.mxu0
    %v348 = vadd.f32 0.0, %v347
    %349 = vdwg.mxu0
    %350 = vmatpush.bf16.msra.mxu0 %v296
    %351 = vmatpush.bf16.msra.mxu0 %v295
    %352 = vmatpush.bf16.msra.mxu0 %v294
    %353 = vmatpush.bf16.msra.mxu0 %v293
    %354 = vmatpush.bf16.msra.mxu0 %v292
    %355 = vmatpush.bf16.msra.mxu0 %v291
    %356 = vmatpush.bf16.msra.mxu0 %v290
    %357 = vmatpush.bf16.msra.mxu0 %v289
    %358 = vmatmul.bf16.gmra.mxu0 %v198
    %v359 = vpop.f32.mrf.mxu0
    %v360 = vadd.f32 %v341, %v359
    %v361 = vpop.f32.mrf.mxu0
    %v362 = vadd.f32 %v343, %v361
    %363 = vmatmul.bf16.gmra.mxu0 %v201
    %v364 = vpop.f32.mrf.mxu0
    %v365 = vadd.f32 %v346, %v364
    %v366 = vpop.f32.mrf.mxu0
    %v367 = vadd.f32 %v348, %v366
    %368 = vdwg.mxu0
    %369 = vmatpush.bf16.msra.mxu0 0
    %370 = vmatpush.bf16.msra.mxu0 0
    %371 = vmatpush.bf16.msra.mxu0 0
    %372 = vmatpush.bf16.msra.mxu0 0
    %373 = vmatpush.bf16.msra.mxu0 0
    %374 = vmatpush.bf16.msra.mxu0 %v329
    %375 = vmatpush.bf16.msra.mxu0 %v298
    %376 = vmatpush.bf16.msra.mxu0 %v297
    %377 = vmatmul.bf16.gmra.mxu0 %v320
    %v378 = vpop.f32.mrf.mxu0
    %v379 = vadd.f32 %v360, %v378
    %v380 = vpop.f32.mrf.mxu0
    %v381 = vadd.f32 %v362, %v380
    %382 = vmatmul.bf16.gmra.mxu0 %v323
    %v383 = vpop.f32.mrf.mxu0
    %v384 = vadd.f32 %v365, %v383
    %v385 = vpop.f32.mrf.mxu0
    %v386 = vadd.f32 %v367, %v385
    %387 = vdwg.mxu0
    %vm388 = vcmask 31744
    %389 = vst.msk [vmem:[#allocation2] sm:$0xff] %vm388, %v379
    %390 = vst.msk [vmem:[#allocation2 + $0x8] sm:$0xff] %vm388, %v381
    %391 = vst.msk [vmem:[#allocation2 + $0x10] sm:$0xff] %vm388, %v384
    %vm392 = vcmask 24576
    %393 = vst.msk [vmem:[#allocation2 + $0x18] sm:$0x1] %vm392, %v386
    %s394 = scalar_lea.vmem %s0, 148
    %v395 = vld [vmem:[%s394] sm:$0xf]
    %v396 = vld [vmem:[%s394 + $0x4] sm:$0xf]
    %v397 = vld [vmem:[%s394 + $0x8] sm:$0xf]
    %v398 = vld [vmem:[%s394 + $0xc] sm:$0xf]
    %v399 = vld [vmem:[%s394 + $0x10] sm:$0xf]
    %v400 = vld [vmem:[%s394 + $0x14] sm:$0xf]
    %v401 = vld [vmem:[%s394 + $0x18] sm:$0xf]
    %v402 = vld [vmem:[%s394 + $0x1c] sm:$0xf]
    %v403 = vld [vmem:[%s394 + $0x20] sm:$0xf]
    %v404 = vld [vmem:[%s394 + $0x24] sm:$0xf]
    %v405 = vld [vmem:[%s394 + $0x28] sm:$0xf]
    %v406 = vld [vmem:[%s394 + $0x2c] sm:$0xf]
    %v407 = vld [vmem:[%s394 + $0x30] sm:$0xf]
    %v408 = vld [vmem:[%s394 + $0x34] sm:$0xf]
    %v409 = vld [vmem:[%s394 + $0x38] sm:$0xf]
    %v410 = vld [vmem:[%s394 + $0x3c] sm:$0xf]
    %v411 = vld [vmem:[%s394 + $0x40] sm:$0xf]
    %v412 = vld [vmem:[%s394 + $0x44] sm:$0xf]
    %v413 = vld [vmem:[%s394 + $0x48] sm:$0xf]
    %v414 = vld [vmem:[%s394 + $0x4c] sm:$0xf]
    %v415 = vld [vmem:[%s394 + $0x50] sm:$0xf]
    %v416 = vld [vmem:[%s394 + $0x54] sm:$0xf]
    %v417 = vld [vmem:[%s394 + $0x58] sm:$0xf]
    %v418 = vld [vmem:[%s394 + $0x5c] sm:$0xf]
    %v419 = vld [vmem:[%s394 + $0x60] sm:$0xf]
    %v420 = vld [vmem:[%s394 + $0x64] sm:$0xf]
    %v421 = vld [vmem:[%s394 + $0x68] sm:$0xf]
    %v422 = vld [vmem:[%s394 + $0x6c] sm:$0xf]
    %v423 = vld [vmem:[%s394 + $0x70] sm:$0xf]
    %v424 = vld [vmem:[%s394 + $0x74] sm:$0xf]
    %v425 = vld [vmem:[%s394 + $0x78] sm:$0xf]
    %v426 = vld [vmem:[%s394 + $0x7c] sm:$0xf]
    %v427 = vld [vmem:[%s394 + $0x80] sm:$0xf]
    %v428 = vld [vmem:[%s394 + $0x84] sm:$0xf]
    %v429 = vld [vmem:[%s394 + $0x88] sm:$0xf]
    %v430 = vld [vmem:[%s394 + $0x8c] sm:$0xf]
    %v431 = vld [vmem:[%s394 + $0x90] sm:$0x1]
    %v469 = vunpack.c.l.b16 %v395
    %v470 = vunpack.c.l.b16 %v396
    %v471 = vunpack.c.l.b16 %v397
    %v472 = vunpack.c.l.b16 %v398
    %v473 = vunpack.c.l.b16 %v399
    %v474 = vunpack.c.l.b16 %v400
    %v475 = vunpack.c.l.b16 %v401
    %v476 = vunpack.c.l.b16 %v402
    %v477 = vunpack.c.l.b16 %v403
    %v478 = vunpack.c.l.b16 %v404
    %v479 = vunpack.c.l.b16 %v405
    %v480 = vunpack.c.l.b16 %v406
    %v481 = vunpack.c.l.b16 %v407
    %v482 = vunpack.c.l.b16 %v408
    %v483 = vunpack.c.l.b16 %v409
    %v484 = vunpack.c.l.b16 %v410
    %v485 = vunpack.c.l.b16 %v411
    %v486 = vunpack.c.l.b16 %v412
    %v487 = vunpack.c.l.b16 %v413
    %v488 = vunpack.c.l.b16 %v414
    %v489 = vunpack.c.l.b16 %v415
    %v490 = vunpack.c.l.b16 %v416
    %v491 = vunpack.c.l.b16 %v417
    %v492 = vunpack.c.l.b16 %v418
    %v493 = vunpack.c.l.b16 %v419
    %v494 = vunpack.c.l.b16 %v420
    %v495 = vunpack.c.l.b16 %v421
    %v496 = vunpack.c.l.b16 %v422
    %v497 = vunpack.c.l.b16 %v423
    %v498 = vunpack.c.l.b16 %v424
    %v499 = vunpack.c.l.b16 %v425
    %v500 = vunpack.c.l.b16 %v426
    %v501 = vunpack.c.l.b16 %v427
    %v502 = vunpack.c.l.b16 %v428
    %v503 = vunpack.c.l.b16 %v429
    %v504 = vunpack.c.l.b16 %v430
    %v505 = vunpack.c.l.b16 %v431
    %v506 = vpack.c.b16 %v470, %v469
    %v507 = vpack.c.b16 %v472, %v471
    %v508 = vpack.c.b16 %v474, %v473
    %v509 = vpack.c.b16 %v476, %v475
    %v510 = vpack.c.b16 %v478, %v477
    %v511 = vpack.c.b16 %v480, %v479
    %v512 = vpack.c.b16 %v482, %v481
    %v513 = vpack.c.b16 %v484, %v483
    %v514 = vpack.c.b16 %v486, %v485
    %v515 = vpack.c.b16 %v488, %v487
    %v516 = vpack.c.b16 %v490, %v489
    %v517 = vpack.c.b16 %v492, %v491
    %v518 = vpack.c.b16 %v494, %v493
    %v519 = vpack.c.b16 %v496, %v495
    %v520 = vpack.c.b16 %v498, %v497
    %v521 = vpack.c.b16 %v500, %v499
    %v522 = vpack.c.b16 %v502, %v501
    %v523 = vpack.c.b16 %v504, %v503
    %v524 = vpack.c.b16 %v505, %v505
    %v544 = vand.u32 %v524, %v327
    %546 = vmatpush.bf16.msra.mxu0 %v513
    %547 = vmatpush.bf16.msra.mxu0 %v512
    %548 = vmatpush.bf16.msra.mxu0 %v511
    %549 = vmatpush.bf16.msra.mxu0 %v510
    %550 = vmatpush.bf16.msra.mxu0 %v509
    %551 = vmatpush.bf16.msra.mxu0 %v508
    %552 = vmatpush.bf16.msra.mxu0 %v507
    %553 = vmatpush.bf16.msra.mxu0 %v506
    %554 = vmatmul.bf16.gmra.mxu0 %v197
    %v555 = vpop.f32.mrf.mxu0
    %v556 = vadd.f32 0.0, %v555
    %v557 = vpop.f32.mrf.mxu0
    %v558 = vadd.f32 0.0, %v557
    %559 = vmatmul.bf16.gmra.mxu0 %v200
    %v560 = vpop.f32.mrf.mxu0
    %v561 = vadd.f32 0.0, %v560
    %v562 = vpop.f32.mrf.mxu0
    %v563 = vadd.f32 0.0, %v562
    %564 = vdwg.mxu0
    %565 = vmatpush.bf16.msra.mxu0 %v521
    %566 = vmatpush.bf16.msra.mxu0 %v520
    %567 = vmatpush.bf16.msra.mxu0 %v519
    %568 = vmatpush.bf16.msra.mxu0 %v518
    %569 = vmatpush.bf16.msra.mxu0 %v517
    %570 = vmatpush.bf16.msra.mxu0 %v516
    %571 = vmatpush.bf16.msra.mxu0 %v515
    %572 = vmatpush.bf16.msra.mxu0 %v514
    %573 = vmatmul.bf16.gmra.mxu0 %v198
    %v574 = vpop.f32.mrf.mxu0
    %v575 = vadd.f32 %v556, %v574
    %v576 = vpop.f32.mrf.mxu0
    %v577 = vadd.f32 %v558, %v576
    %578 = vmatmul.bf16.gmra.mxu0 %v201
    %v579 = vpop.f32.mrf.mxu0
    %v580 = vadd.f32 %v561, %v579
    %v581 = vpop.f32.mrf.mxu0
    %v582 = vadd.f32 %v563, %v581
    %583 = vdwg.mxu0
    %584 = vmatpush.bf16.msra.mxu0 0
    %585 = vmatpush.bf16.msra.mxu0 0
    %586 = vmatpush.bf16.msra.mxu0 0
    %587 = vmatpush.bf16.msra.mxu0 0
    %588 = vmatpush.bf16.msra.mxu0 0
    %589 = vmatpush.bf16.msra.mxu0 %v544
    %590 = vmatpush.bf16.msra.mxu0 %v523
    %591 = vmatpush.bf16.msra.mxu0 %v522
    %592 = vmatmul.bf16.gmra.mxu0 %v320
    %v593 = vpop.f32.mrf.mxu0
    %v594 = vadd.f32 %v575, %v593
    %v595 = vpop.f32.mrf.mxu0
    %v596 = vadd.f32 %v577, %v595
    %597 = vmatmul.bf16.gmra.mxu0 %v323
    %v598 = vpop.f32.mrf.mxu0
    %v599 = vadd.f32 %v580, %v598
    %v600 = vpop.f32.mrf.mxu0
    %v601 = vadd.f32 %v582, %v600
    %602 = vdwg.mxu0
    %603 = vst.msk [vmem:[#allocation2 + $0x19] sm:$0xff] %vm388, %v594
    %604 = vst.msk [vmem:[#allocation2 + $0x21] sm:$0xff] %vm388, %v596
    %605 = vst.msk [vmem:[#allocation2 + $0x29] sm:$0xff] %vm388, %v599
    %606 = vst.msk [vmem:[#allocation2 + $0x31] sm:$0x1] %vm392, %v601
    %v607 = vld [vmem:[#allocation2] sm:$0xff]
    %v608 = vld [vmem:[#allocation2 + $0x8] sm:$0xff]
    %v609 = vld [vmem:[#allocation2 + $0x10] sm:$0xff]
    %v610 = vld [vmem:[#allocation2 + $0x18] sm:$0xff]
    %v611 = vld [vmem:[#allocation2 + $0x20] sm:$0xff]
    %v612 = vld [vmem:[#allocation2 + $0x28] sm:$0xff]
    %v613 = vld [vmem:[#allocation2 + $0x30] sm:$0x3]
    %v614 = vpack.c.bf16 %v608, %v607
    %v615 = vpack.c.bf16 %v610, %v609
    %v616 = vpack.c.bf16 %v612, %v611
    %v617 = vpack.c.bf16 %v613, %v613
    %v618 = vld [vmem:[#allocation7] sm:$0x3]
    %v619 = vld [vmem:[#allocation9] sm:$0x1]
    %v621 = vperm.slane %v619, 0
    %v624 = vsel %vm388, %v614, 0
    %v627 = vsel %vm388, %v615, 0
    %v630 = vsel %vm388, %v616, 0
    %v633 = vsel %vm388, %v617, 0
    %vm635 = vcmask 1041408
    %v637 = vsel %vm635, %v618, 0
    %639 = vmatpush.bf16.msra.mxu0 0
    %640 = vmatpush.bf16.msra.mxu0 0
    %641 = vmatpush.bf16.msra.mxu0 0
    %642 = vmatpush.bf16.msra.mxu0 0
    %643 = vmatpush.bf16.msra.mxu0 0
    %644 = vmatpush.bf16.msra.mxu0 0
    %645 = vmatpush.bf16.msra.mxu0 0
    %646 = vmatpush.bf16.msra.mxu0 %v637
    %647 = vmatmul.bf16.gmra.mxu0 %v624
    %v648 = vpop.f32.mrf.mxu0
    %v649 = vadd.f32 %v621, %v648
    %v650 = vpop.f32.mrf.mxu0
    %v651 = vadd.f32 %v621, %v650
    %652 = vmatmul.bf16.gmra.mxu0 %v627
    %v653 = vpop.f32.mrf.mxu0
    %v654 = vadd.f32 %v621, %v653
    %v655 = vpop.f32.mrf.mxu0
    %v656 = vadd.f32 %v621, %v655
    %657 = vmatmul.bf16.gmra.mxu0 %v630
    %v658 = vpop.f32.mrf.mxu0
    %v659 = vadd.f32 %v621, %v658
    %v660 = vpop.f32.mrf.mxu0
    %v661 = vadd.f32 %v621, %v660
    %662 = vmatmul.bf16.gmra.mxu0 %v633
    %v663 = vpop.f32.mrf.mxu0
    %v664 = vadd.f32 %v621, %v663
    %v665 = vpop.f32.mrf.mxu0
    %666 = vdwg.mxu0
    %v667 = vmax.f32 %v649, 0.0
    %v668 = vmax.f32 %v651, 0.0
    %v669 = vmax.f32 %v654, 0.0
    %v670 = vmax.f32 %v656, 0.0
    %v671 = vmax.f32 %v659, 0.0
    %v672 = vmax.f32 %v661, 0.0
    %v673 = vmax.f32 %v664, 0.0
    %674 = vst [vmem:[#allocation3] sm:$0xff] %v667
    %675 = vst [vmem:[#allocation3 + $0x8] sm:$0xff] %v668
    %676 = vst [vmem:[#allocation3 + $0x10] sm:$0xff] %v669
    %677 = vst [vmem:[#allocation3 + $0x18] sm:$0xff] %v670
    %678 = vst [vmem:[#allocation3 + $0x20] sm:$0xff] %v671
    %679 = vst [vmem:[#allocation3 + $0x28] sm:$0xff] %v672
    %680 = vst [vmem:[#allocation3 + $0x30] sm:$0x3] %v673
    %v681 = vld [vmem:[#allocation3] ss:$25 sm:$0x3]
    %v682 = vpack.c.bf16 %v681, %v681
    %v683 = vld [vmem:[#allocation10] sm:$0xff]
    %v684 = vld [vmem:[#allocation10 + $0x8] sm:$0xff]
    %v685 = vld [vmem:[#allocation10 + $0x10] sm:$0xff]
    %v686 = vld [vmem:[#allocation10 + $0x18] sm:$0xff]
    %v687 = vld [vmem:[#allocation10 + $0x20] sm:$0xff]
    %v688 = vld [vmem:[#allocation10 + $0x28] sm:$0xff]
    %v689 = vld [vmem:[#allocation10 + $0x30] sm:$0xff]
    %v690 = vld [vmem:[#allocation10 + $0x38] sm:$0xff]
    %v691 = vld [vmem:[#allocation10 + $0x40] sm:$0xff]
    %v692 = vld [vmem:[#allocation10 + $0x48] sm:$0xff]
    %v693 = vld [vmem:[#allocation10 + $0x50] sm:$0xff]
    %v694 = vld [vmem:[#allocation10 + $0x58] sm:$0xff]
    %v695 = vld [vmem:[#allocation10 + $0x60] sm:$0xff]
    %v696 = vld [vmem:[#allocation10 + $0x68] sm:$0xff]
    %v697 = vld [vmem:[#allocation10 + $0x70] sm:$0xff]
    %v698 = vld [vmem:[#allocation10 + $0x78] sm:$0xff]
    %v699 = vld [vmem:[#allocation10 + $0x80] sm:$0xff]
    %v700 = vld [vmem:[#allocation10 + $0x88] sm:$0xff]
    %v701 = vld [vmem:[#allocation10 + $0x90] sm:$0xff]
    %v702 = vld [vmem:[#allocation10 + $0x98] sm:$0xff]
    %v703 = vld [vmem:[#allocation10 + $0xa0] sm:$0xff]
    %v704 = vld [vmem:[#allocation10 + $0xa8] sm:$0xff]
    %v705 = vld [vmem:[#allocation10 + $0xb0] sm:$0xff]
    %v706 = vld [vmem:[#allocation10 + $0xb8] sm:$0xff]
    %v707 = vld [vmem:[#allocation10 + $0xc0] sm:$0xff]
    %v708 = vld [vmem:[#allocation10 + $0xc8] sm:$0xff]
    %v709 = vld [vmem:[#allocation10 + $0xd0] sm:$0xff]
    %v710 = vld [vmem:[#allocation10 + $0xd8] sm:$0xff]
    %v711 = vld [vmem:[#allocation10 + $0xe0] sm:$0xff]
    %v712 = vld [vmem:[#allocation10 + $0xe8] sm:$0xff]
    %v713 = vld [vmem:[#allocation10 + $0xf0] sm:$0xff]
    %v714 = vld [vmem:[#allocation10 + $0xf8] sm:$0xff]
    %v715 = vld [vmem:[#allocation10 + $0x100] sm:$0xff]
    %v716 = vld [vmem:[#allocation10 + $0x108] sm:$0xff]
    %v717 = vld [vmem:[#allocation10 + $0x110] sm:$0xff]
    %v718 = vld [vmem:[#allocation10 + $0x118] sm:$0xff]
    %v719 = vld [vmem:[#allocation10 + $0x120] sm:$0xff]
    %v720 = vld [vmem:[#allocation10 + $0x128] sm:$0xff]
    %v721 = vld [vmem:[#allocation10 + $0x130] sm:$0xff]
    %v722 = vld [vmem:[#allocation10 + $0x138] sm:$0xff]
    %v723 = vld [vmem:[#allocation10 + $0x140] sm:$0xff]
    %v724 = vld [vmem:[#allocation10 + $0x148] sm:$0xff]
    %v725 = vld [vmem:[#allocation10 + $0x150] sm:$0xff]
    %v726 = vld [vmem:[#allocation10 + $0x158] sm:$0xff]
    %v727 = vld [vmem:[#allocation10 + $0x160] sm:$0xff]
    %v728 = vld [vmem:[#allocation10 + $0x168] sm:$0xff]
    %v729 = vld [vmem:[#allocation10 + $0x170] sm:$0xff]
    %v730 = vld [vmem:[#allocation10 + $0x178] sm:$0xff]
    %s731 = scalar_lea.vmem [#allocation3], 1
    %v732 = vld [vmem:[%s731] ss:$25 sm:$0x3]
    %v733 = vpack.c.bf16 %v732, %v732
    %s734 = scalar_lea.vmem [#allocation10], 384
    %v735 = vld [vmem:[%s734] sm:$0xff]
    %v736 = vld [vmem:[%s734 + $0x8] sm:$0xff]
    %v737 = vld [vmem:[%s734 + $0x10] sm:$0xff]
    %v738 = vld [vmem:[%s734 + $0x18] sm:$0xff]
    %v739 = vld [vmem:[%s734 + $0x20] sm:$0xff]
    %v740 = vld [vmem:[%s734 + $0x28] sm:$0xff]
    %v741 = vld [vmem:[%s734 + $0x30] sm:$0xff]
    %v742 = vld [vmem:[%s734 + $0x38] sm:$0xff]
    %v743 = vld [vmem:[%s734 + $0x40] sm:$0xff]
    %v744 = vld [vmem:[%s734 + $0x48] sm:$0xff]
    %v745 = vld [vmem:[%s734 + $0x50] sm:$0xff]
    %v746 = vld [vmem:[%s734 + $0x58] sm:$0xff]
    %v747 = vld [vmem:[%s734 + $0x60] sm:$0xff]
    %v748 = vld [vmem:[%s734 + $0x68] sm:$0xff]
    %v749 = vld [vmem:[%s734 + $0x70] sm:$0xff]
    %v750 = vld [vmem:[%s734 + $0x78] sm:$0xff]
    %v751 = vld [vmem:[%s734 + $0x80] sm:$0xff]
    %v752 = vld [vmem:[%s734 + $0x88] sm:$0xff]
    %v753 = vld [vmem:[%s734 + $0x90] sm:$0xff]
    %v754 = vld [vmem:[%s734 + $0x98] sm:$0xff]
    %v755 = vld [vmem:[%s734 + $0xa0] sm:$0xff]
    %v756 = vld [vmem:[%s734 + $0xa8] sm:$0xff]
    %v757 = vld [vmem:[%s734 + $0xb0] sm:$0xff]
    %v758 = vld [vmem:[%s734 + $0xb8] sm:$0xff]
    %v759 = vld [vmem:[%s734 + $0xc0] sm:$0xff]
    %v760 = vld [vmem:[%s734 + $0xc8] sm:$0xff]
    %v761 = vld [vmem:[%s734 + $0xd0] sm:$0xff]
    %v762 = vld [vmem:[%s734 + $0xd8] sm:$0xff]
    %v763 = vld [vmem:[%s734 + $0xe0] sm:$0xff]
    %v764 = vld [vmem:[%s734 + $0xe8] sm:$0xff]
    %v765 = vld [vmem:[%s734 + $0xf0] sm:$0xff]
    %v766 = vld [vmem:[%s734 + $0xf8] sm:$0xff]
    %v767 = vld [vmem:[%s734 + $0x100] sm:$0xff]
    %v768 = vld [vmem:[%s734 + $0x108] sm:$0xff]
    %v769 = vld [vmem:[%s734 + $0x110] sm:$0xff]
    %v770 = vld [vmem:[%s734 + $0x118] sm:$0xff]
    %v771 = vld [vmem:[%s734 + $0x120] sm:$0xff]
    %v772 = vld [vmem:[%s734 + $0x128] sm:$0xff]
    %v773 = vld [vmem:[%s734 + $0x130] sm:$0xff]
    %v774 = vld [vmem:[%s734 + $0x138] sm:$0xff]
    %v775 = vld [vmem:[%s734 + $0x140] sm:$0xff]
    %v776 = vld [vmem:[%s734 + $0x148] sm:$0xff]
    %v777 = vld [vmem:[%s734 + $0x150] sm:$0xff]
    %v778 = vld [vmem:[%s734 + $0x158] sm:$0xff]
    %v779 = vld [vmem:[%s734 + $0x160] sm:$0xff]
    %v780 = vld [vmem:[%s734 + $0x168] sm:$0xff]
    %v781 = vld [vmem:[%s734 + $0x170] sm:$0xff]
    %v782 = vld [vmem:[%s734 + $0x178] sm:$0xff]
    %v831 = vunpack.c.l.b16 %v735
    %v832 = vunpack.c.h.b16 %v735
    %v833 = vunpack.c.l.b16 %v736
    %v834 = vunpack.c.h.b16 %v736
    %v835 = vunpack.c.l.b16 %v737
    %v836 = vunpack.c.h.b16 %v737
    %v837 = vunpack.c.l.b16 %v738
    %v838 = vunpack.c.h.b16 %v738
    %v839 = vunpack.c.l.b16 %v739
    %v840 = vunpack.c.h.b16 %v739
    %v841 = vunpack.c.l.b16 %v740
    %v842 = vunpack.c.h.b16 %v740
    %v843 = vunpack.c.l.b16 %v741
    %v844 = vunpack.c.h.b16 %v741
    %v845 = vunpack.c.l.b16 %v742
    %v846 = vunpack.c.h.b16 %v742
    %v847 = vunpack.c.l.b16 %v743
    %v848 = vunpack.c.h.b16 %v743
    %v849 = vunpack.c.l.b16 %v744
    %v850 = vunpack.c.h.b16 %v744
    %v851 = vunpack.c.l.b16 %v745
    %v852 = vunpack.c.h.b16 %v745
    %v853 = vunpack.c.l.b16 %v746
    %v854 = vunpack.c.h.b16 %v746
    %v855 = vunpack.c.l.b16 %v747
    %v856 = vunpack.c.h.b16 %v747
    %v857 = vunpack.c.l.b16 %v748
    %v858 = vunpack.c.h.b16 %v748
    %v859 = vunpack.c.l.b16 %v749
    %v860 = vunpack.c.h.b16 %v749
    %v861 = vunpack.c.l.b16 %v750
    %v862 = vunpack.c.h.b16 %v750
    %v863 = vunpack.c.l.b16 %v751
    %v864 = vunpack.c.h.b16 %v751
    %v865 = vunpack.c.l.b16 %v752
    %v866 = vunpack.c.h.b16 %v752
    %v867 = vunpack.c.l.b16 %v753
    %v868 = vunpack.c.h.b16 %v753
    %v869 = vunpack.c.l.b16 %v754
    %v870 = vunpack.c.h.b16 %v754
    %v871 = vunpack.c.l.b16 %v755
    %v872 = vunpack.c.h.b16 %v755
    %v873 = vunpack.c.l.b16 %v756
    %v874 = vunpack.c.h.b16 %v756
    %v875 = vunpack.c.l.b16 %v757
    %v876 = vunpack.c.h.b16 %v757
    %v877 = vunpack.c.l.b16 %v758
    %v878 = vunpack.c.h.b16 %v758
    %v879 = vunpack.c.l.b16 %v759
    %v880 = vunpack.c.h.b16 %v759
    %v881 = vunpack.c.l.b16 %v760
    %v882 = vunpack.c.h.b16 %v760
    %v883 = vunpack.c.l.b16 %v761
    %v884 = vunpack.c.h.b16 %v761
    %v885 = vunpack.c.l.b16 %v762
    %v886 = vunpack.c.h.b16 %v762
    %v887 = vunpack.c.l.b16 %v763
    %v888 = vunpack.c.h.b16 %v763
    %v889 = vunpack.c.l.b16 %v764
    %v890 = vunpack.c.h.b16 %v764
    %v891 = vunpack.c.l.b16 %v765
    %v892 = vunpack.c.h.b16 %v765
    %v893 = vunpack.c.l.b16 %v766
    %v894 = vunpack.c.h.b16 %v766
    %v895 = vunpack.c.l.b16 %v767
    %v896 = vunpack.c.h.b16 %v767
    %v897 = vunpack.c.l.b16 %v768
    %v898 = vunpack.c.h.b16 %v768
    %v899 = vunpack.c.l.b16 %v769
    %v900 = vunpack.c.h.b16 %v769
    %v901 = vunpack.c.l.b16 %v770
    %v902 = vunpack.c.h.b16 %v770
    %v903 = vunpack.c.l.b16 %v771
    %v904 = vunpack.c.h.b16 %v771
    %v905 = vunpack.c.l.b16 %v772
    %v906 = vunpack.c.h.b16 %v772
    %v907 = vunpack.c.l.b16 %v773
    %v908 = vunpack.c.h.b16 %v773
    %v909 = vunpack.c.l.b16 %v774
    %v910 = vunpack.c.h.b16 %v774
    %v911 = vunpack.c.l.b16 %v775
    %v912 = vunpack.c.h.b16 %v775
    %v913 = vunpack.c.l.b16 %v776
    %v914 = vunpack.c.h.b16 %v776
    %v915 = vunpack.c.l.b16 %v777
    %v916 = vunpack.c.h.b16 %v777
    %v917 = vunpack.c.l.b16 %v778
    %v918 = vunpack.c.h.b16 %v778
    %v919 = vunpack.c.l.b16 %v779
    %v920 = vunpack.c.h.b16 %v779
    %v921 = vunpack.c.l.b16 %v780
    %v922 = vunpack.c.h.b16 %v780
    %v923 = vunpack.c.l.b16 %v781
    %v924 = vunpack.c.h.b16 %v781
    %v925 = vunpack.c.l.b16 %v782
    %v926 = vunpack.c.h.b16 %v782
    %v927 = vpack.c.b16 %v837, %v831
    %v928 = vpack.c.b16 %v838, %v832
    %v929 = vpack.c.b16 %v839, %v833
    %v930 = vpack.c.b16 %v840, %v834
    %v931 = vpack.c.b16 %v841, %v835
    %v932 = vpack.c.b16 %v842, %v836
    %v933 = vpack.c.b16 %v849, %v843
    %v934 = vpack.c.b16 %v850, %v844
    %v935 = vpack.c.b16 %v851, %v845
    %v936 = vpack.c.b16 %v852, %v846
    %v937 = vpack.c.b16 %v853, %v847
    %v938 = vpack.c.b16 %v854, %v848
    %v939 = vpack.c.b16 %v861, %v855
    %v940 = vpack.c.b16 %v862, %v856
    %v941 = vpack.c.b16 %v863, %v857
    %v942 = vpack.c.b16 %v864, %v858
    %v943 = vpack.c.b16 %v865, %v859
    %v944 = vpack.c.b16 %v866, %v860
    %v945 = vpack.c.b16 %v873, %v867
    %v946 = vpack.c.b16 %v874, %v868
    %v947 = vpack.c.b16 %v875, %v869
    %v948 = vpack.c.b16 %v876, %v870
    %v949 = vpack.c.b16 %v877, %v871
    %v950 = vpack.c.b16 %v878, %v872
    %v951 = vpack.c.b16 %v885, %v879
    %v952 = vpack.c.b16 %v886, %v880
    %v953 = vpack.c.b16 %v887, %v881
    %v954 = vpack.c.b16 %v888, %v882
    %v955 = vpack.c.b16 %v889, %v883
    %v956 = vpack.c.b16 %v890, %v884
    %v957 = vpack.c.b16 %v897, %v891
    %v958 = vpack.c.b16 %v898, %v892
    %v959 = vpack.c.b16 %v899, %v893
    %v960 = vpack.c.b16 %v900, %v894
    %v961 = vpack.c.b16 %v901, %v895
    %v962 = vpack.c.b16 %v902, %v896
    %v963 = vpack.c.b16 %v909, %v903
    %v964 = vpack.c.b16 %v910, %v904
    %v965 = vpack.c.b16 %v911, %v905
    %v966 = vpack.c.b16 %v912, %v906
    %v967 = vpack.c.b16 %v913, %v907
    %v968 = vpack.c.b16 %v914, %v908
    %v969 = vpack.c.b16 %v921, %v915
    %v970 = vpack.c.b16 %v922, %v916
    %v971 = vpack.c.b16 %v923, %v917
    %v972 = vpack.c.b16 %v924, %v918
    %v973 = vpack.c.b16 %v925, %v919
    %v974 = vpack.c.b16 %v926, %v920
    %1023 = vmatpush.bf16.msra.mxu0 %v969
    %1024 = vmatpush.bf16.msra.mxu0 %v963
    %1025 = vmatpush.bf16.msra.mxu0 %v957
    %1026 = vmatpush.bf16.msra.mxu0 %v951
    %1027 = vmatpush.bf16.msra.mxu0 %v945
    %1028 = vmatpush.bf16.msra.mxu0 %v939
    %1029 = vmatpush.bf16.msra.mxu0 %v933
    %1030 = vmatpush.bf16.msra.mxu0 %v927
    %1031 = vmatmul.bf16.gmra.mxu0 %v733
    %v1032 = vpop.f32.mrf.mxu0
    %v1033 = vadd.f32 0.0, %v1032
    %v1034 = vpop.f32.mrf.mxu0
    %1035 = vdwg.mxu0
    %1036 = vmatpush.bf16.msra.mxu0 %v970
    %1037 = vmatpush.bf16.msra.mxu0 %v964
    %1038 = vmatpush.bf16.msra.mxu0 %v958
    %1039 = vmatpush.bf16.msra.mxu0 %v952
    %1040 = vmatpush.bf16.msra.mxu0 %v946
    %1041 = vmatpush.bf16.msra.mxu0 %v940
    %1042 = vmatpush.bf16.msra.mxu0 %v934
    %1043 = vmatpush.bf16.msra.mxu0 %v928
    %1044 = vmatmul.bf16.gmra.mxu0 %v733
    %v1045 = vpop.f32.mrf.mxu0
    %v1046 = vadd.f32 0.0, %v1045
    %v1047 = vpop.f32.mrf.mxu0
    %1048 = vdwg.mxu0
    %1049 = vmatpush.bf16.msra.mxu0 %v971
    %1050 = vmatpush.bf16.msra.mxu0 %v965
    %1051 = vmatpush.bf16.msra.mxu0 %v959
    %1052 = vmatpush.bf16.msra.mxu0 %v953
    %1053 = vmatpush.bf16.msra.mxu0 %v947
    %1054 = vmatpush.bf16.msra.mxu0 %v941
    %1055 = vmatpush.bf16.msra.mxu0 %v935
    %1056 = vmatpush.bf16.msra.mxu0 %v929
    %1057 = vmatmul.bf16.gmra.mxu0 %v733
    %v1058 = vpop.f32.mrf.mxu0
    %v1059 = vadd.f32 0.0, %v1058
    %v1060 = vpop.f32.mrf.mxu0
    %1061 = vdwg.mxu0
    %1062 = vmatpush.bf16.msra.mxu0 %v972
    %1063 = vmatpush.bf16.msra.mxu0 %v966
    %1064 = vmatpush.bf16.msra.mxu0 %v960
    %1065 = vmatpush.bf16.msra.mxu0 %v954
    %1066 = vmatpush.bf16.msra.mxu0 %v948
    %1067 = vmatpush.bf16.msra.mxu0 %v942
    %1068 = vmatpush.bf16.msra.mxu0 %v936
    %1069 = vmatpush.bf16.msra.mxu0 %v930
    %1070 = vmatmul.bf16.gmra.mxu0 %v733
    %v1071 = vpop.f32.mrf.mxu0
    %v1072 = vadd.f32 0.0, %v1071
    %v1073 = vpop.f32.mrf.mxu0
    %1074 = vdwg.mxu0
    %1075 = vmatpush.bf16.msra.mxu0 %v973
    %1076 = vmatpush.bf16.msra.mxu0 %v967
    %1077 = vmatpush.bf16.msra.mxu0 %v961
    %1078 = vmatpush.bf16.msra.mxu0 %v955
    %1079 = vmatpush.bf16.msra.mxu0 %v949
    %1080 = vmatpush.bf16.msra.mxu0 %v943
    %1081 = vmatpush.bf16.msra.mxu0 %v937
    %1082 = vmatpush.bf16.msra.mxu0 %v931
    %1083 = vmatmul.bf16.gmra.mxu0 %v733
    %v1084 = vpop.f32.mrf.mxu0
    %v1085 = vadd.f32 0.0, %v1084
    %v1086 = vpop.f32.mrf.mxu0
    %1087 = vdwg.mxu0
    %1088 = vmatpush.bf16.msra.mxu0 %v974
    %1089 = vmatpush.bf16.msra.mxu0 %v968
    %1090 = vmatpush.bf16.msra.mxu0 %v962
    %1091 = vmatpush.bf16.msra.mxu0 %v956
    %1092 = vmatpush.bf16.msra.mxu0 %v950
    %1093 = vmatpush.bf16.msra.mxu0 %v944
    %1094 = vmatpush.bf16.msra.mxu0 %v938
    %1095 = vmatpush.bf16.msra.mxu0 %v932
    %1096 = vmatmul.bf16.gmra.mxu0 %v733
    %v1097 = vpop.f32.mrf.mxu0
    %v1098 = vadd.f32 0.0, %v1097
    %v1099 = vpop.f32.mrf.mxu0
    %1100 = vdwg.mxu0
    %v1149 = vunpack.c.l.b16 %v683
    %v1150 = vunpack.c.h.b16 %v683
    %v1151 = vunpack.c.l.b16 %v684
    %v1152 = vunpack.c.h.b16 %v684
    %v1153 = vunpack.c.l.b16 %v685
    %v1154 = vunpack.c.h.b16 %v685
    %v1155 = vunpack.c.l.b16 %v686
    %v1156 = vunpack.c.h.b16 %v686
    %v1157 = vunpack.c.l.b16 %v687
    %v1158 = vunpack.c.h.b16 %v687
    %v1159 = vunpack.c.l.b16 %v688
    %v1160 = vunpack.c.h.b16 %v688
    %v1161 = vunpack.c.l.b16 %v689
    %v1162 = vunpack.c.h.b16 %v689
    %v1163 = vunpack.c.l.b16 %v690
    %v1164 = vunpack.c.h.b16 %v690
    %v1165 = vunpack.c.l.b16 %v691
    %v1166 = vunpack.c.h.b16 %v691
    %v1167 = vunpack.c.l.b16 %v692
    %v1168 = vunpack.c.h.b16 %v692
    %v1169 = vunpack.c.l.b16 %v693
    %v1170 = vunpack.c.h.b16 %v693
    %v1171 = vunpack.c.l.b16 %v694
    %v1172 = vunpack.c.h.b16 %v694
    %v1173 = vunpack.c.l.b16 %v695
    %v1174 = vunpack.c.h.b16 %v695
    %v1175 = vunpack.c.l.b16 %v696
    %v1176 = vunpack.c.h.b16 %v696
    %v1177 = vunpack.c.l.b16 %v697
    %v1178 = vunpack.c.h.b16 %v697
    %v1179 = vunpack.c.l.b16 %v698
    %v1180 = vunpack.c.h.b16 %v698
    %v1181 = vunpack.c.l.b16 %v699
    %v1182 = vunpack.c.h.b16 %v699
    %v1183 = vunpack.c.l.b16 %v700
    %v1184 = vunpack.c.h.b16 %v700
    %v1185 = vunpack.c.l.b16 %v701
    %v1186 = vunpack.c.h.b16 %v701
    %v1187 = vunpack.c.l.b16 %v702
    %v1188 = vunpack.c.h.b16 %v702
    %v1189 = vunpack.c.l.b16 %v703
    %v1190 = vunpack.c.h.b16 %v703
    %v1191 = vunpack.c.l.b16 %v704
    %v1192 = vunpack.c.h.b16 %v704
    %v1193 = vunpack.c.l.b16 %v705
    %v1194 = vunpack.c.h.b16 %v705
    %v1195 = vunpack.c.l.b16 %v706
    %v1196 = vunpack.c.h.b16 %v706
    %v1197 = vunpack.c.l.b16 %v707
    %v1198 = vunpack.c.h.b16 %v707
    %v1199 = vunpack.c.l.b16 %v708
    %v1200 = vunpack.c.h.b16 %v708
    %v1201 = vunpack.c.l.b16 %v709
    %v1202 = vunpack.c.h.b16 %v709
    %v1203 = vunpack.c.l.b16 %v710
    %v1204 = vunpack.c.h.b16 %v710
    %v1205 = vunpack.c.l.b16 %v711
    %v1206 = vunpack.c.h.b16 %v711
    %v1207 = vunpack.c.l.b16 %v712
    %v1208 = vunpack.c.h.b16 %v712
    %v1209 = vunpack.c.l.b16 %v713
    %v1210 = vunpack.c.h.b16 %v713
    %v1211 = vunpack.c.l.b16 %v714
    %v1212 = vunpack.c.h.b16 %v714
    %v1213 = vunpack.c.l.b16 %v715
    %v1214 = vunpack.c.h.b16 %v715
    %v1215 = vunpack.c.l.b16 %v716
    %v1216 = vunpack.c.h.b16 %v716
    %v1217 = vunpack.c.l.b16 %v717
    %v1218 = vunpack.c.h.b16 %v717
    %v1219 = vunpack.c.l.b16 %v718
    %v1220 = vunpack.c.h.b16 %v718
    %v1221 = vunpack.c.l.b16 %v719
    %v1222 = vunpack.c.h.b16 %v719
    %v1223 = vunpack.c.l.b16 %v720
    %v1224 = vunpack.c.h.b16 %v720
    %v1225 = vunpack.c.l.b16 %v721
    %v1226 = vunpack.c.h.b16 %v721
    %v1227 = vunpack.c.l.b16 %v722
    %v1228 = vunpack.c.h.b16 %v722
    %v1229 = vunpack.c.l.b16 %v723
    %v1230 = vunpack.c.h.b16 %v723
    %v1231 = vunpack.c.l.b16 %v724
    %v1232 = vunpack.c.h.b16 %v724
    %v1233 = vunpack.c.l.b16 %v725
    %v1234 = vunpack.c.h.b16 %v725
    %v1235 = vunpack.c.l.b16 %v726
    %v1236 = vunpack.c.h.b16 %v726
    %v1237 = vunpack.c.l.b16 %v727
    %v1238 = vunpack.c.h.b16 %v727
    %v1239 = vunpack.c.l.b16 %v728
    %v1240 = vunpack.c.h.b16 %v728
    %v1241 = vunpack.c.l.b16 %v729
    %v1242 = vunpack.c.h.b16 %v729
    %v1243 = vunpack.c.l.b16 %v730
    %v1244 = vunpack.c.h.b16 %v730
    %v1245 = vpack.c.b16 %v1155, %v1149
    %v1246 = vpack.c.b16 %v1156, %v1150
    %v1247 = vpack.c.b16 %v1157, %v1151
    %v1248 = vpack.c.b16 %v1158, %v1152
    %v1249 = vpack.c.b16 %v1159, %v1153
    %v1250 = vpack.c.b16 %v1160, %v1154
    %v1251 = vpack.c.b16 %v1167, %v1161
    %v1252 = vpack.c.b16 %v1168, %v1162
    %v1253 = vpack.c.b16 %v1169, %v1163
    %v1254 = vpack.c.b16 %v1170, %v1164
    %v1255 = vpack.c.b16 %v1171, %v1165
    %v1256 = vpack.c.b16 %v1172, %v1166
    %v1257 = vpack.c.b16 %v1179, %v1173
    %v1258 = vpack.c.b16 %v1180, %v1174
    %v1259 = vpack.c.b16 %v1181, %v1175
    %v1260 = vpack.c.b16 %v1182, %v1176
    %v1261 = vpack.c.b16 %v1183, %v1177
    %v1262 = vpack.c.b16 %v1184, %v1178
    %v1263 = vpack.c.b16 %v1191, %v1185
    %v1264 = vpack.c.b16 %v1192, %v1186
    %v1265 = vpack.c.b16 %v1193, %v1187
    %v1266 = vpack.c.b16 %v1194, %v1188
    %v1267 = vpack.c.b16 %v1195, %v1189
    %v1268 = vpack.c.b16 %v1196, %v1190
    %v1269 = vpack.c.b16 %v1203, %v1197
    %v1270 = vpack.c.b16 %v1204, %v1198
    %v1271 = vpack.c.b16 %v1205, %v1199
    %v1272 = vpack.c.b16 %v1206, %v1200
    %v1273 = vpack.c.b16 %v1207, %v1201
    %v1274 = vpack.c.b16 %v1208, %v1202
    %v1275 = vpack.c.b16 %v1215, %v1209
    %v1276 = vpack.c.b16 %v1216, %v1210
    %v1277 = vpack.c.b16 %v1217, %v1211
    %v1278 = vpack.c.b16 %v1218, %v1212
    %v1279 = vpack.c.b16 %v1219, %v1213
    %v1280 = vpack.c.b16 %v1220, %v1214
    %v1281 = vpack.c.b16 %v1227, %v1221
    %v1282 = vpack.c.b16 %v1228, %v1222
    %v1283 = vpack.c.b16 %v1229, %v1223
    %v1284 = vpack.c.b16 %v1230, %v1224
    %v1285 = vpack.c.b16 %v1231, %v1225
    %v1286 = vpack.c.b16 %v1232, %v1226
    %v1287 = vpack.c.b16 %v1239, %v1233
    %v1288 = vpack.c.b16 %v1240, %v1234
    %v1289 = vpack.c.b16 %v1241, %v1235
    %v1290 = vpack.c.b16 %v1242, %v1236
    %v1291 = vpack.c.b16 %v1243, %v1237
    %v1292 = vpack.c.b16 %v1244, %v1238
    %1341 = vmatpush.bf16.msra.mxu0 %v1287
    %1342 = vmatpush.bf16.msra.mxu0 %v1281
    %1343 = vmatpush.bf16.msra.mxu0 %v1275
    %1344 = vmatpush.bf16.msra.mxu0 %v1269
    %1345 = vmatpush.bf16.msra.mxu0 %v1263
    %1346 = vmatpush.bf16.msra.mxu0 %v1257
    %1347 = vmatpush.bf16.msra.mxu0 %v1251
    %1348 = vmatpush.bf16.msra.mxu0 %v1245
    %1349 = vmatmul.bf16.gmra.mxu0 %v682
    %v1350 = vpop.f32.mrf.mxu0
    %v1351 = vadd.f32 %v1033, %v1350
    %v1352 = vpop.f32.mrf.mxu0
    %1353 = vdwg.mxu0
    %1354 = vmatpush.bf16.msra.mxu0 %v1288
    %1355 = vmatpush.bf16.msra.mxu0 %v1282
    %1356 = vmatpush.bf16.msra.mxu0 %v1276
    %1357 = vmatpush.bf16.msra.mxu0 %v1270
    %1358 = vmatpush.bf16.msra.mxu0 %v1264
    %1359 = vmatpush.bf16.msra.mxu0 %v1258
    %1360 = vmatpush.bf16.msra.mxu0 %v1252
    %1361 = vmatpush.bf16.msra.mxu0 %v1246
    %1362 = vmatmul.bf16.gmra.mxu0 %v682
    %v1363 = vpop.f32.mrf.mxu0
    %v1364 = vadd.f32 %v1046, %v1363
    %v1365 = vpop.f32.mrf.mxu0
    %1366 = vdwg.mxu0
    %1367 = vmatpush.bf16.msra.mxu0 %v1289
    %1368 = vmatpush.bf16.msra.mxu0 %v1283
    %1369 = vmatpush.bf16.msra.mxu0 %v1277
    %1370 = vmatpush.bf16.msra.mxu0 %v1271
    %1371 = vmatpush.bf16.msra.mxu0 %v1265
    %1372 = vmatpush.bf16.msra.mxu0 %v1259
    %1373 = vmatpush.bf16.msra.mxu0 %v1253
    %1374 = vmatpush.bf16.msra.mxu0 %v1247
    %1375 = vmatmul.bf16.gmra.mxu0 %v682
    %v1376 = vpop.f32.mrf.mxu0
    %v1377 = vadd.f32 %v1059, %v1376
    %v1378 = vpop.f32.mrf.mxu0
    %1379 = vdwg.mxu0
    %1380 = vmatpush.bf16.msra.mxu0 %v1290
    %1381 = vmatpush.bf16.msra.mxu0 %v1284
    %1382 = vmatpush.bf16.msra.mxu0 %v1278
    %1383 = vmatpush.bf16.msra.mxu0 %v1272
    %1384 = vmatpush.bf16.msra.mxu0 %v1266
    %1385 = vmatpush.bf16.msra.mxu0 %v1260
    %1386 = vmatpush.bf16.msra.mxu0 %v1254
    %1387 = vmatpush.bf16.msra.mxu0 %v1248
    %1388 = vmatmul.bf16.gmra.mxu0 %v682
    %v1389 = vpop.f32.mrf.mxu0
    %v1390 = vadd.f32 %v1072, %v1389
    %v1391 = vpop.f32.mrf.mxu0
    %1392 = vdwg.mxu0
    %1393 = vmatpush.bf16.msra.mxu0 %v1291
    %1394 = vmatpush.bf16.msra.mxu0 %v1285
    %1395 = vmatpush.bf16.msra.mxu0 %v1279
    %1396 = vmatpush.bf16.msra.mxu0 %v1273
    %1397 = vmatpush.bf16.msra.mxu0 %v1267
    %1398 = vmatpush.bf16.msra.mxu0 %v1261
    %1399 = vmatpush.bf16.msra.mxu0 %v1255
    %1400 = vmatpush.bf16.msra.mxu0 %v1249
    %1401 = vmatmul.bf16.gmra.mxu0 %v682
    %v1402 = vpop.f32.mrf.mxu0
    %v1403 = vadd.f32 %v1085, %v1402
    %v1404 = vpop.f32.mrf.mxu0
    %1405 = vdwg.mxu0
    %1406 = vmatpush.bf16.msra.mxu0 %v1292
    %1407 = vmatpush.bf16.msra.mxu0 %v1286
    %1408 = vmatpush.bf16.msra.mxu0 %v1280
    %1409 = vmatpush.bf16.msra.mxu0 %v1274
    %1410 = vmatpush.bf16.msra.mxu0 %v1268
    %1411 = vmatpush.bf16.msra.mxu0 %v1262
    %1412 = vmatpush.bf16.msra.mxu0 %v1256
    %1413 = vmatpush.bf16.msra.mxu0 %v1250
    %1414 = vmatmul.bf16.gmra.mxu0 %v682
    %v1415 = vpop.f32.mrf.mxu0
    %v1416 = vadd.f32 %v1098, %v1415
    %v1417 = vpop.f32.mrf.mxu0
    %1418 = vdwg.mxu0
    %s1419 = scalar_lea.vmem [#allocation3], 2
    %v1420 = vld [vmem:[%s1419] ss:$25 sm:$0x3]
    %v1421 = vpack.c.bf16 %v1420, %v1420
    %s1422 = scalar_lea.vmem [#allocation10], 768
    %v1423 = vld [vmem:[%s1422] sm:$0xff]
    %v1424 = vld [vmem:[%s1422 + $0x8] sm:$0xff]
    %v1425 = vld [vmem:[%s1422 + $0x10] sm:$0xff]
    %v1426 = vld [vmem:[%s1422 + $0x18] sm:$0xff]
    %v1427 = vld [vmem:[%s1422 + $0x20] sm:$0xff]
    %v1428 = vld [vmem:[%s1422 + $0x28] sm:$0xff]
    %v1429 = vld [vmem:[%s1422 + $0x30] sm:$0xff]
    %v1430 = vld [vmem:[%s1422 + $0x38] sm:$0xff]
    %v1431 = vld [vmem:[%s1422 + $0x40] sm:$0xff]
    %v1432 = vld [vmem:[%s1422 + $0x48] sm:$0xff]
    %v1433 = vld [vmem:[%s1422 + $0x50] sm:$0xff]
    %v1434 = vld [vmem:[%s1422 + $0x58] sm:$0xff]
    %v1435 = vld [vmem:[%s1422 + $0x60] sm:$0xff]
    %v1436 = vld [vmem:[%s1422 + $0x68] sm:$0xff]
    %v1437 = vld [vmem:[%s1422 + $0x70] sm:$0xff]
    %v1438 = vld [vmem:[%s1422 + $0x78] sm:$0xff]
    %v1439 = vld [vmem:[%s1422 + $0x80] sm:$0xff]
    %v1440 = vld [vmem:[%s1422 + $0x88] sm:$0xff]
    %v1441 = vld [vmem:[%s1422 + $0x90] sm:$0xff]
    %v1442 = vld [vmem:[%s1422 + $0x98] sm:$0xff]
    %v1443 = vld [vmem:[%s1422 + $0xa0] sm:$0xff]
    %v1444 = vld [vmem:[%s1422 + $0xa8] sm:$0xff]
    %v1445 = vld [vmem:[%s1422 + $0xb0] sm:$0xff]
    %v1446 = vld [vmem:[%s1422 + $0xb8] sm:$0xff]
    %v1447 = vld [vmem:[%s1422 + $0xc0] sm:$0xff]
    %v1448 = vld [vmem:[%s1422 + $0xc8] sm:$0xff]
    %v1449 = vld [vmem:[%s1422 + $0xd0] sm:$0xff]
    %v1450 = vld [vmem:[%s1422 + $0xd8] sm:$0xff]
    %v1451 = vld [vmem:[%s1422 + $0xe0] sm:$0xff]
    %v1452 = vld [vmem:[%s1422 + $0xe8] sm:$0xff]
    %v1453 = vld [vmem:[%s1422 + $0xf0] sm:$0xff]
    %v1454 = vld [vmem:[%s1422 + $0xf8] sm:$0xff]
    %v1455 = vld [vmem:[%s1422 + $0x100] sm:$0xff]
    %v1456 = vld [vmem:[%s1422 + $0x108] sm:$0xff]
    %v1457 = vld [vmem:[%s1422 + $0x110] sm:$0xff]
    %v1458 = vld [vmem:[%s1422 + $0x118] sm:$0xff]
    %v1459 = vld [vmem:[%s1422 + $0x120] sm:$0xff]
    %v1460 = vld [vmem:[%s1422 + $0x128] sm:$0xff]
    %v1461 = vld [vmem:[%s1422 + $0x130] sm:$0xff]
    %v1462 = vld [vmem:[%s1422 + $0x138] sm:$0xff]
    %v1463 = vld [vmem:[%s1422 + $0x140] sm:$0xff]
    %v1464 = vld [vmem:[%s1422 + $0x148] sm:$0xff]
    %v1465 = vld [vmem:[%s1422 + $0x150] sm:$0xff]
    %v1466 = vld [vmem:[%s1422 + $0x158] sm:$0xff]
    %v1467 = vld [vmem:[%s1422 + $0x160] sm:$0xff]
    %v1468 = vld [vmem:[%s1422 + $0x168] sm:$0xff]
    %v1469 = vld [vmem:[%s1422 + $0x170] sm:$0xff]
    %v1470 = vld [vmem:[%s1422 + $0x178] sm:$0xff]
    %v1519 = vunpack.c.l.b16 %v1423
    %v1520 = vunpack.c.h.b16 %v1423
    %v1521 = vunpack.c.l.b16 %v1424
    %v1522 = vunpack.c.h.b16 %v1424
    %v1523 = vunpack.c.l.b16 %v1425
    %v1524 = vunpack.c.h.b16 %v1425
    %v1525 = vunpack.c.l.b16 %v1426
    %v1526 = vunpack.c.h.b16 %v1426
    %v1527 = vunpack.c.l.b16 %v1427
    %v1528 = vunpack.c.h.b16 %v1427
    %v1529 = vunpack.c.l.b16 %v1428
    %v1530 = vunpack.c.h.b16 %v1428
    %v1531 = vunpack.c.l.b16 %v1429
    %v1532 = vunpack.c.h.b16 %v1429
    %v1533 = vunpack.c.l.b16 %v1430
    %v1534 = vunpack.c.h.b16 %v1430
    %v1535 = vunpack.c.l.b16 %v1431
    %v1536 = vunpack.c.h.b16 %v1431
    %v1537 = vunpack.c.l.b16 %v1432
    %v1538 = vunpack.c.h.b16 %v1432
    %v1539 = vunpack.c.l.b16 %v1433
    %v1540 = vunpack.c.h.b16 %v1433
    %v1541 = vunpack.c.l.b16 %v1434
    %v1542 = vunpack.c.h.b16 %v1434
    %v1543 = vunpack.c.l.b16 %v1435
    %v1544 = vunpack.c.h.b16 %v1435
    %v1545 = vunpack.c.l.b16 %v1436
    %v1546 = vunpack.c.h.b16 %v1436
    %v1547 = vunpack.c.l.b16 %v1437
    %v1548 = vunpack.c.h.b16 %v1437
    %v1549 = vunpack.c.l.b16 %v1438
    %v1550 = vunpack.c.h.b16 %v1438
    %v1551 = vunpack.c.l.b16 %v1439
    %v1552 = vunpack.c.h.b16 %v1439
    %v1553 = vunpack.c.l.b16 %v1440
    %v1554 = vunpack.c.h.b16 %v1440
    %v1555 = vunpack.c.l.b16 %v1441
    %v1556 = vunpack.c.h.b16 %v1441
    %v1557 = vunpack.c.l.b16 %v1442
    %v1558 = vunpack.c.h.b16 %v1442
    %v1559 = vunpack.c.l.b16 %v1443
    %v1560 = vunpack.c.h.b16 %v1443
    %v1561 = vunpack.c.l.b16 %v1444
    %v1562 = vunpack.c.h.b16 %v1444
    %v1563 = vunpack.c.l.b16 %v1445
    %v1564 = vunpack.c.h.b16 %v1445
    %v1565 = vunpack.c.l.b16 %v1446
    %v1566 = vunpack.c.h.b16 %v1446
    %v1567 = vunpack.c.l.b16 %v1447
    %v1568 = vunpack.c.h.b16 %v1447
    %v1569 = vunpack.c.l.b16 %v1448
    %v1570 = vunpack.c.h.b16 %v1448
    %v1571 = vunpack.c.l.b16 %v1449
    %v1572 = vunpack.c.h.b16 %v1449
    %v1573 = vunpack.c.l.b16 %v1450
    %v1574 = vunpack.c.h.b16 %v1450
    %v1575 = vunpack.c.l.b16 %v1451
    %v1576 = vunpack.c.h.b16 %v1451
    %v1577 = vunpack.c.l.b16 %v1452
    %v1578 = vunpack.c.h.b16 %v1452
    %v1579 = vunpack.c.l.b16 %v1453
    %v1580 = vunpack.c.h.b16 %v1453
    %v1581 = vunpack.c.l.b16 %v1454
    %v1582 = vunpack.c.h.b16 %v1454
    %v1583 = vunpack.c.l.b16 %v1455
    %v1584 = vunpack.c.h.b16 %v1455
    %v1585 = vunpack.c.l.b16 %v1456
    %v1586 = vunpack.c.h.b16 %v1456
    %v1587 = vunpack.c.l.b16 %v1457
    %v1588 = vunpack.c.h.b16 %v1457
    %v1589 = vunpack.c.l.b16 %v1458
    %v1590 = vunpack.c.h.b16 %v1458
    %v1591 = vunpack.c.l.b16 %v1459
    %v1592 = vunpack.c.h.b16 %v1459
    %v1593 = vunpack.c.l.b16 %v1460
    %v1594 = vunpack.c.h.b16 %v1460
    %v1595 = vunpack.c.l.b16 %v1461
    %v1596 = vunpack.c.h.b16 %v1461
    %v1597 = vunpack.c.l.b16 %v1462
    %v1598 = vunpack.c.h.b16 %v1462
    %v1599 = vunpack.c.l.b16 %v1463
    %v1600 = vunpack.c.h.b16 %v1463
    %v1601 = vunpack.c.l.b16 %v1464
    %v1602 = vunpack.c.h.b16 %v1464
    %v1603 = vunpack.c.l.b16 %v1465
    %v1604 = vunpack.c.h.b16 %v1465
    %v1605 = vunpack.c.l.b16 %v1466
    %v1606 = vunpack.c.h.b16 %v1466
    %v1607 = vunpack.c.l.b16 %v1467
    %v1608 = vunpack.c.h.b16 %v1467
    %v1609 = vunpack.c.l.b16 %v1468
    %v1610 = vunpack.c.h.b16 %v1468
    %v1611 = vunpack.c.l.b16 %v1469
    %v1612 = vunpack.c.h.b16 %v1469
    %v1613 = vunpack.c.l.b16 %v1470
    %v1614 = vunpack.c.h.b16 %v1470
    %v1615 = vpack.c.b16 %v1525, %v1519
    %v1616 = vpack.c.b16 %v1526, %v1520
    %v1617 = vpack.c.b16 %v1527, %v1521
    %v1618 = vpack.c.b16 %v1528, %v1522
    %v1619 = vpack.c.b16 %v1529, %v1523
    %v1620 = vpack.c.b16 %v1530, %v1524
    %v1621 = vpack.c.b16 %v1537, %v1531
    %v1622 = vpack.c.b16 %v1538, %v1532
    %v1623 = vpack.c.b16 %v1539, %v1533
    %v1624 = vpack.c.b16 %v1540, %v1534
    %v1625 = vpack.c.b16 %v1541, %v1535
    %v1626 = vpack.c.b16 %v1542, %v1536
    %v1627 = vpack.c.b16 %v1549, %v1543
    %v1628 = vpack.c.b16 %v1550, %v1544
    %v1629 = vpack.c.b16 %v1551, %v1545
    %v1630 = vpack.c.b16 %v1552, %v1546
    %v1631 = vpack.c.b16 %v1553, %v1547
    %v1632 = vpack.c.b16 %v1554, %v1548
    %v1633 = vpack.c.b16 %v1561, %v1555
    %v1634 = vpack.c.b16 %v1562, %v1556
    %v1635 = vpack.c.b16 %v1563, %v1557
    %v1636 = vpack.c.b16 %v1564, %v1558
    %v1637 = vpack.c.b16 %v1565, %v1559
    %v1638 = vpack.c.b16 %v1566, %v1560
    %v1639 = vpack.c.b16 %v1573, %v1567
    %v1640 = vpack.c.b16 %v1574, %v1568
    %v1641 = vpack.c.b16 %v1575, %v1569
    %v1642 = vpack.c.b16 %v1576, %v1570
    %v1643 = vpack.c.b16 %v1577, %v1571
    %v1644 = vpack.c.b16 %v1578, %v1572
    %v1645 = vpack.c.b16 %v1585, %v1579
    %v1646 = vpack.c.b16 %v1586, %v1580
    %v1647 = vpack.c.b16 %v1587, %v1581
    %v1648 = vpack.c.b16 %v1588, %v1582
    %v1649 = vpack.c.b16 %v1589, %v1583
    %v1650 = vpack.c.b16 %v1590, %v1584
    %v1651 = vpack.c.b16 %v1597, %v1591
    %v1652 = vpack.c.b16 %v1598, %v1592
    %v1653 = vpack.c.b16 %v1599, %v1593
    %v1654 = vpack.c.b16 %v1600, %v1594
    %v1655 = vpack.c.b16 %v1601, %v1595
    %v1656 = vpack.c.b16 %v1602, %v1596
    %v1657 = vpack.c.b16 %v1609, %v1603
    %v1658 = vpack.c.b16 %v1610, %v1604
    %v1659 = vpack.c.b16 %v1611, %v1605
    %v1660 = vpack.c.b16 %v1612, %v1606
    %v1661 = vpack.c.b16 %v1613, %v1607
    %v1662 = vpack.c.b16 %v1614, %v1608
    %1711 = vmatpush.bf16.msra.mxu0 %v1657
    %1712 = vmatpush.bf16.msra.mxu0 %v1651
    %1713 = vmatpush.bf16.msra.mxu0 %v1645
    %1714 = vmatpush.bf16.msra.mxu0 %v1639
    %1715 = vmatpush.bf16.msra.mxu0 %v1633
    %1716 = vmatpush.bf16.msra.mxu0 %v1627
    %1717 = vmatpush.bf16.msra.mxu0 %v1621
    %1718 = vmatpush.bf16.msra.mxu0 %v1615
    %1719 = vmatmul.bf16.gmra.mxu0 %v1421
    %v1720 = vpop.f32.mrf.mxu0
    %v1721 = vadd.f32 0.0, %v1720
    %v1722 = vpop.f32.mrf.mxu0
    %1723 = vdwg.mxu0
    %1724 = vmatpush.bf16.msra.mxu0 %v1658
    %1725 = vmatpush.bf16.msra.mxu0 %v1652
    %1726 = vmatpush.bf16.msra.mxu0 %v1646
    %1727 = vmatpush.bf16.msra.mxu0 %v1640
    %1728 = vmatpush.bf16.msra.mxu0 %v1634
    %1729 = vmatpush.bf16.msra.mxu0 %v1628
    %1730 = vmatpush.bf16.msra.mxu0 %v1622
    %1731 = vmatpush.bf16.msra.mxu0 %v1616
    %1732 = vmatmul.bf16.gmra.mxu0 %v1421
    %v1733 = vpop.f32.mrf.mxu0
    %v1734 = vadd.f32 0.0, %v1733
    %v1735 = vpop.f32.mrf.mxu0
    %1736 = vdwg.mxu0
    %1737 = vmatpush.bf16.msra.mxu0 %v1659
    %1738 = vmatpush.bf16.msra.mxu0 %v1653
    %1739 = vmatpush.bf16.msra.mxu0 %v1647
    %1740 = vmatpush.bf16.msra.mxu0 %v1641
    %1741 = vmatpush.bf16.msra.mxu0 %v1635
    %1742 = vmatpush.bf16.msra.mxu0 %v1629
    %1743 = vmatpush.bf16.msra.mxu0 %v1623
    %1744 = vmatpush.bf16.msra.mxu0 %v1617
    %1745 = vmatmul.bf16.gmra.mxu0 %v1421
    %v1746 = vpop.f32.mrf.mxu0
    %v1747 = vadd.f32 0.0, %v1746
    %v1748 = vpop.f32.mrf.mxu0
    %1749 = vdwg.mxu0
    %1750 = vmatpush.bf16.msra.mxu0 %v1660
    %1751 = vmatpush.bf16.msra.mxu0 %v1654
    %1752 = vmatpush.bf16.msra.mxu0 %v1648
    %1753 = vmatpush.bf16.msra.mxu0 %v1642
    %1754 = vmatpush.bf16.msra.mxu0 %v1636
    %1755 = vmatpush.bf16.msra.mxu0 %v1630
    %1756 = vmatpush.bf16.msra.mxu0 %v1624
    %1757 = vmatpush.bf16.msra.mxu0 %v1618
    %1758 = vmatmul.bf16.gmra.mxu0 %v1421
    %v1759 = vpop.f32.mrf.mxu0
    %v1760 = vadd.f32 0.0, %v1759
    %v1761 = vpop.f32.mrf.mxu0
    %1762 = vdwg.mxu0
    %1763 = vmatpush.bf16.msra.mxu0 %v1661
    %1764 = vmatpush.bf16.msra.mxu0 %v1655
    %1765 = vmatpush.bf16.msra.mxu0 %v1649
    %1766 = vmatpush.bf16.msra.mxu0 %v1643
    %1767 = vmatpush.bf16.msra.mxu0 %v1637
    %1768 = vmatpush.bf16.msra.mxu0 %v1631
    %1769 = vmatpush.bf16.msra.mxu0 %v1625
    %1770 = vmatpush.bf16.msra.mxu0 %v1619
    %1771 = vmatmul.bf16.gmra.mxu0 %v1421
    %v1772 = vpop.f32.mrf.mxu0
    %v1773 = vadd.f32 0.0, %v1772
    %v1774 = vpop.f32.mrf.mxu0
    %1775 = vdwg.mxu0
    %1776 = vmatpush.bf16.msra.mxu0 %v1662
    %1777 = vmatpush.bf16.msra.mxu0 %v1656
    %1778 = vmatpush.bf16.msra.mxu0 %v1650
    %1779 = vmatpush.bf16.msra.mxu0 %v1644
    %1780 = vmatpush.bf16.msra.mxu0 %v1638
    %1781 = vmatpush.bf16.msra.mxu0 %v1632
    %1782 = vmatpush.bf16.msra.mxu0 %v1626
    %1783 = vmatpush.bf16.msra.mxu0 %v1620
    %1784 = vmatmul.bf16.gmra.mxu0 %v1421
    %v1785 = vpop.f32.mrf.mxu0
    %v1786 = vadd.f32 0.0, %v1785
    %v1787 = vpop.f32.mrf.mxu0
    %1788 = vdwg.mxu0
    %v1789 = vadd.f32 %v1351, %v1721
    %v1790 = vadd.f32 %v1364, %v1734
    %v1791 = vadd.f32 %v1377, %v1747
    %v1792 = vadd.f32 %v1390, %v1760
    %v1793 = vadd.f32 %v1403, %v1773
    %v1794 = vadd.f32 %v1416, %v1786
    %s1795 = scalar_lea.vmem [#allocation3], 3
    %v1796 = vld [vmem:[%s1795] ss:$25 sm:$0x3]
    %v1797 = vpack.c.bf16 %v1796, %v1796
    %s1798 = scalar_lea.vmem [#allocation10], 1152
    %v1799 = vld [vmem:[%s1798] sm:$0xff]
    %v1800 = vld [vmem:[%s1798 + $0x8] sm:$0xff]
    %v1801 = vld [vmem:[%s1798 + $0x10] sm:$0xff]
    %v1802 = vld [vmem:[%s1798 + $0x18] sm:$0xff]
    %v1803 = vld [vmem:[%s1798 + $0x20] sm:$0xff]
    %v1804 = vld [vmem:[%s1798 + $0x28] sm:$0xff]
    %v1805 = vld [vmem:[%s1798 + $0x30] sm:$0xff]
    %v1806 = vld [vmem:[%s1798 + $0x38] sm:$0xff]
    %v1807 = vld [vmem:[%s1798 + $0x40] sm:$0xff]
    %v1808 = vld [vmem:[%s1798 + $0x48] sm:$0xff]
    %v1809 = vld [vmem:[%s1798 + $0x50] sm:$0xff]
    %v1810 = vld [vmem:[%s1798 + $0x58] sm:$0xff]
    %v1811 = vld [vmem:[%s1798 + $0x60] sm:$0xff]
    %v1812 = vld [vmem:[%s1798 + $0x68] sm:$0xff]
    %v1813 = vld [vmem:[%s1798 + $0x70] sm:$0xff]
    %v1814 = vld [vmem:[%s1798 + $0x78] sm:$0xff]
    %v1815 = vld [vmem:[%s1798 + $0x80] sm:$0xff]
    %v1816 = vld [vmem:[%s1798 + $0x88] sm:$0xff]
    %v1817 = vld [vmem:[%s1798 + $0x90] sm:$0xff]
    %v1818 = vld [vmem:[%s1798 + $0x98] sm:$0xff]
    %v1819 = vld [vmem:[%s1798 + $0xa0] sm:$0xff]
    %v1820 = vld [vmem:[%s1798 + $0xa8] sm:$0xff]
    %v1821 = vld [vmem:[%s1798 + $0xb0] sm:$0xff]
    %v1822 = vld [vmem:[%s1798 + $0xb8] sm:$0xff]
    %v1823 = vld [vmem:[%s1798 + $0xc0] sm:$0xff]
    %v1824 = vld [vmem:[%s1798 + $0xc8] sm:$0xff]
    %v1825 = vld [vmem:[%s1798 + $0xd0] sm:$0xff]
    %v1826 = vld [vmem:[%s1798 + $0xd8] sm:$0xff]
    %v1827 = vld [vmem:[%s1798 + $0xe0] sm:$0xff]
    %v1828 = vld [vmem:[%s1798 + $0xe8] sm:$0xff]
    %v1829 = vld [vmem:[%s1798 + $0xf0] sm:$0xff]
    %v1830 = vld [vmem:[%s1798 + $0xf8] sm:$0xff]
    %v1831 = vld [vmem:[%s1798 + $0x100] sm:$0xff]
    %v1832 = vld [vmem:[%s1798 + $0x108] sm:$0xff]
    %v1833 = vld [vmem:[%s1798 + $0x110] sm:$0xff]
    %v1834 = vld [vmem:[%s1798 + $0x118] sm:$0xff]
    %v1835 = vld [vmem:[%s1798 + $0x120] sm:$0xff]
    %v1836 = vld [vmem:[%s1798 + $0x128] sm:$0xff]
    %v1837 = vld [vmem:[%s1798 + $0x130] sm:$0xff]
    %v1838 = vld [vmem:[%s1798 + $0x138] sm:$0xff]
    %v1839 = vld [vmem:[%s1798 + $0x140] sm:$0xff]
    %v1840 = vld [vmem:[%s1798 + $0x148] sm:$0xff]
    %v1841 = vld [vmem:[%s1798 + $0x150] sm:$0xff]
    %v1842 = vld [vmem:[%s1798 + $0x158] sm:$0xff]
    %v1843 = vld [vmem:[%s1798 + $0x160] sm:$0xff]
    %v1844 = vld [vmem:[%s1798 + $0x168] sm:$0xff]
    %v1845 = vld [vmem:[%s1798 + $0x170] sm:$0xff]
    %v1846 = vld [vmem:[%s1798 + $0x178] sm:$0xff]
    %v1895 = vunpack.c.l.b16 %v1799
    %v1896 = vunpack.c.h.b16 %v1799
    %v1897 = vunpack.c.l.b16 %v1800
    %v1898 = vunpack.c.h.b16 %v1800
    %v1899 = vunpack.c.l.b16 %v1801
    %v1900 = vunpack.c.h.b16 %v1801
    %v1901 = vunpack.c.l.b16 %v1802
    %v1902 = vunpack.c.h.b16 %v1802
    %v1903 = vunpack.c.l.b16 %v1803
    %v1904 = vunpack.c.h.b16 %v1803
    %v1905 = vunpack.c.l.b16 %v1804
    %v1906 = vunpack.c.h.b16 %v1804
    %v1907 = vunpack.c.l.b16 %v1805
    %v1908 = vunpack.c.h.b16 %v1805
    %v1909 = vunpack.c.l.b16 %v1806
    %v1910 = vunpack.c.h.b16 %v1806
    %v1911 = vunpack.c.l.b16 %v1807
    %v1912 = vunpack.c.h.b16 %v1807
    %v1913 = vunpack.c.l.b16 %v1808
    %v1914 = vunpack.c.h.b16 %v1808
    %v1915 = vunpack.c.l.b16 %v1809
    %v1916 = vunpack.c.h.b16 %v1809
    %v1917 = vunpack.c.l.b16 %v1810
    %v1918 = vunpack.c.h.b16 %v1810
    %v1919 = vunpack.c.l.b16 %v1811
    %v1920 = vunpack.c.h.b16 %v1811
    %v1921 = vunpack.c.l.b16 %v1812
    %v1922 = vunpack.c.h.b16 %v1812
    %v1923 = vunpack.c.l.b16 %v1813
    %v1924 = vunpack.c.h.b16 %v1813
    %v1925 = vunpack.c.l.b16 %v1814
    %v1926 = vunpack.c.h.b16 %v1814
    %v1927 = vunpack.c.l.b16 %v1815
    %v1928 = vunpack.c.h.b16 %v1815
    %v1929 = vunpack.c.l.b16 %v1816
    %v1930 = vunpack.c.h.b16 %v1816
    %v1931 = vunpack.c.l.b16 %v1817
    %v1932 = vunpack.c.h.b16 %v1817
    %v1933 = vunpack.c.l.b16 %v1818
    %v1934 = vunpack.c.h.b16 %v1818
    %v1935 = vunpack.c.l.b16 %v1819
    %v1936 = vunpack.c.h.b16 %v1819
    %v1937 = vunpack.c.l.b16 %v1820
    %v1938 = vunpack.c.h.b16 %v1820
    %v1939 = vunpack.c.l.b16 %v1821
    %v1940 = vunpack.c.h.b16 %v1821
    %v1941 = vunpack.c.l.b16 %v1822
    %v1942 = vunpack.c.h.b16 %v1822
    %v1943 = vunpack.c.l.b16 %v1823
    %v1944 = vunpack.c.h.b16 %v1823
    %v1945 = vunpack.c.l.b16 %v1824
    %v1946 = vunpack.c.h.b16 %v1824
    %v1947 = vunpack.c.l.b16 %v1825
    %v1948 = vunpack.c.h.b16 %v1825
    %v1949 = vunpack.c.l.b16 %v1826
    %v1950 = vunpack.c.h.b16 %v1826
    %v1951 = vunpack.c.l.b16 %v1827
    %v1952 = vunpack.c.h.b16 %v1827
    %v1953 = vunpack.c.l.b16 %v1828
    %v1954 = vunpack.c.h.b16 %v1828
    %v1955 = vunpack.c.l.b16 %v1829
    %v1956 = vunpack.c.h.b16 %v1829
    %v1957 = vunpack.c.l.b16 %v1830
    %v1958 = vunpack.c.h.b16 %v1830
    %v1959 = vunpack.c.l.b16 %v1831
    %v1960 = vunpack.c.h.b16 %v1831
    %v1961 = vunpack.c.l.b16 %v1832
    %v1962 = vunpack.c.h.b16 %v1832
    %v1963 = vunpack.c.l.b16 %v1833
    %v1964 = vunpack.c.h.b16 %v1833
    %v1965 = vunpack.c.l.b16 %v1834
    %v1966 = vunpack.c.h.b16 %v1834
    %v1967 = vunpack.c.l.b16 %v1835
    %v1968 = vunpack.c.h.b16 %v1835
    %v1969 = vunpack.c.l.b16 %v1836
    %v1970 = vunpack.c.h.b16 %v1836
    %v1971 = vunpack.c.l.b16 %v1837
    %v1972 = vunpack.c.h.b16 %v1837
    %v1973 = vunpack.c.l.b16 %v1838
    %v1974 = vunpack.c.h.b16 %v1838
    %v1975 = vunpack.c.l.b16 %v1839
    %v1976 = vunpack.c.h.b16 %v1839
    %v1977 = vunpack.c.l.b16 %v1840
    %v1978 = vunpack.c.h.b16 %v1840
    %v1979 = vunpack.c.l.b16 %v1841
    %v1980 = vunpack.c.h.b16 %v1841
    %v1981 = vunpack.c.l.b16 %v1842
    %v1982 = vunpack.c.h.b16 %v1842
    %v1983 = vunpack.c.l.b16 %v1843
    %v1984 = vunpack.c.h.b16 %v1843
    %v1985 = vunpack.c.l.b16 %v1844
    %v1986 = vunpack.c.h.b16 %v1844
    %v1987 = vunpack.c.l.b16 %v1845
    %v1988 = vunpack.c.h.b16 %v1845
    %v1989 = vunpack.c.l.b16 %v1846
    %v1990 = vunpack.c.h.b16 %v1846
    %v1991 = vpack.c.b16 %v1901, %v1895
    %v1992 = vpack.c.b16 %v1902, %v1896
    %v1993 = vpack.c.b16 %v1903, %v1897
    %v1994 = vpack.c.b16 %v1904, %v1898
    %v1995 = vpack.c.b16 %v1905, %v1899
    %v1996 = vpack.c.b16 %v1906, %v1900
    %v1997 = vpack.c.b16 %v1913, %v1907
    %v1998 = vpack.c.b16 %v1914, %v1908
    %v1999 = vpack.c.b16 %v1915, %v1909
    %v2000 = vpack.c.b16 %v1916, %v1910
    %v2001 = vpack.c.b16 %v1917, %v1911
    %v2002 = vpack.c.b16 %v1918, %v1912
    %v2003 = vpack.c.b16 %v1925, %v1919
    %v2004 = vpack.c.b16 %v1926, %v1920
    %v2005 = vpack.c.b16 %v1927, %v1921
    %v2006 = vpack.c.b16 %v1928, %v1922
    %v2007 = vpack.c.b16 %v1929, %v1923
    %v2008 = vpack.c.b16 %v1930, %v1924
    %v2009 = vpack.c.b16 %v1937, %v1931
    %v2010 = vpack.c.b16 %v1938, %v1932
    %v2011 = vpack.c.b16 %v1939, %v1933
    %v2012 = vpack.c.b16 %v1940, %v1934
    %v2013 = vpack.c.b16 %v1941, %v1935
    %v2014 = vpack.c.b16 %v1942, %v1936
    %v2015 = vpack.c.b16 %v1949, %v1943
    %v2016 = vpack.c.b16 %v1950, %v1944
    %v2017 = vpack.c.b16 %v1951, %v1945
    %v2018 = vpack.c.b16 %v1952, %v1946
    %v2019 = vpack.c.b16 %v1953, %v1947
    %v2020 = vpack.c.b16 %v1954, %v1948
    %v2021 = vpack.c.b16 %v1961, %v1955
    %v2022 = vpack.c.b16 %v1962, %v1956
    %v2023 = vpack.c.b16 %v1963, %v1957
    %v2024 = vpack.c.b16 %v1964, %v1958
    %v2025 = vpack.c.b16 %v1965, %v1959
    %v2026 = vpack.c.b16 %v1966, %v1960
    %v2027 = vpack.c.b16 %v1973, %v1967
    %v2028 = vpack.c.b16 %v1974, %v1968
    %v2029 = vpack.c.b16 %v1975, %v1969
    %v2030 = vpack.c.b16 %v1976, %v1970
    %v2031 = vpack.c.b16 %v1977, %v1971
    %v2032 = vpack.c.b16 %v1978, %v1972
    %v2033 = vpack.c.b16 %v1985, %v1979
    %v2034 = vpack.c.b16 %v1986, %v1980
    %v2035 = vpack.c.b16 %v1987, %v1981
    %v2036 = vpack.c.b16 %v1988, %v1982
    %v2037 = vpack.c.b16 %v1989, %v1983
    %v2038 = vpack.c.b16 %v1990, %v1984
    %2087 = vmatpush.bf16.msra.mxu0 %v2033
    %2088 = vmatpush.bf16.msra.mxu0 %v2027
    %2089 = vmatpush.bf16.msra.mxu0 %v2021
    %2090 = vmatpush.bf16.msra.mxu0 %v2015
    %2091 = vmatpush.bf16.msra.mxu0 %v2009
    %2092 = vmatpush.bf16.msra.mxu0 %v2003
    %2093 = vmatpush.bf16.msra.mxu0 %v1997
    %2094 = vmatpush.bf16.msra.mxu0 %v1991
    %2095 = vmatmul.bf16.gmra.mxu0 %v1797
    %v2096 = vpop.f32.mrf.mxu0
    %v2097 = vadd.f32 0.0, %v2096
    %v2098 = vpop.f32.mrf.mxu0
    %2099 = vdwg.mxu0
    %2100 = vmatpush.bf16.msra.mxu0 %v2034
    %2101 = vmatpush.bf16.msra.mxu0 %v2028
    %2102 = vmatpush.bf16.msra.mxu0 %v2022
    %2103 = vmatpush.bf16.msra.mxu0 %v2016
    %2104 = vmatpush.bf16.msra.mxu0 %v2010
    %2105 = vmatpush.bf16.msra.mxu0 %v2004
    %2106 = vmatpush.bf16.msra.mxu0 %v1998
    %2107 = vmatpush.bf16.msra.mxu0 %v1992
    %2108 = vmatmul.bf16.gmra.mxu0 %v1797
    %v2109 = vpop.f32.mrf.mxu0
    %v2110 = vadd.f32 0.0, %v2109
    %v2111 = vpop.f32.mrf.mxu0
    %2112 = vdwg.mxu0
    %2113 = vmatpush.bf16.msra.mxu0 %v2035
    %2114 = vmatpush.bf16.msra.mxu0 %v2029
    %2115 = vmatpush.bf16.msra.mxu0 %v2023
    %2116 = vmatpush.bf16.msra.mxu0 %v2017
    %2117 = vmatpush.bf16.msra.mxu0 %v2011
    %2118 = vmatpush.bf16.msra.mxu0 %v2005
    %2119 = vmatpush.bf16.msra.mxu0 %v1999
    %2120 = vmatpush.bf16.msra.mxu0 %v1993
    %2121 = vmatmul.bf16.gmra.mxu0 %v1797
    %v2122 = vpop.f32.mrf.mxu0
    %v2123 = vadd.f32 0.0, %v2122
    %v2124 = vpop.f32.mrf.mxu0
    %2125 = vdwg.mxu0
    %2126 = vmatpush.bf16.msra.mxu0 %v2036
    %2127 = vmatpush.bf16.msra.mxu0 %v2030
    %2128 = vmatpush.bf16.msra.mxu0 %v2024
    %2129 = vmatpush.bf16.msra.mxu0 %v2018
    %2130 = vmatpush.bf16.msra.mxu0 %v2012
    %2131 = vmatpush.bf16.msra.mxu0 %v2006
    %2132 = vmatpush.bf16.msra.mxu0 %v2000
    %2133 = vmatpush.bf16.msra.mxu0 %v1994
    %2134 = vmatmul.bf16.gmra.mxu0 %v1797
    %v2135 = vpop.f32.mrf.mxu0
    %v2136 = vadd.f32 0.0, %v2135
    %v2137 = vpop.f32.mrf.mxu0
    %2138 = vdwg.mxu0
    %2139 = vmatpush.bf16.msra.mxu0 %v2037
    %2140 = vmatpush.bf16.msra.mxu0 %v2031
    %2141 = vmatpush.bf16.msra.mxu0 %v2025
    %2142 = vmatpush.bf16.msra.mxu0 %v2019
    %2143 = vmatpush.bf16.msra.mxu0 %v2013
    %2144 = vmatpush.bf16.msra.mxu0 %v2007
    %2145 = vmatpush.bf16.msra.mxu0 %v2001
    %2146 = vmatpush.bf16.msra.mxu0 %v1995
    %2147 = vmatmul.bf16.gmra.mxu0 %v1797
    %v2148 = vpop.f32.mrf.mxu0
    %v2149 = vadd.f32 0.0, %v2148
    %v2150 = vpop.f32.mrf.mxu0
    %2151 = vdwg.mxu0
    %2152 = vmatpush.bf16.msra.mxu0 %v2038
    %2153 = vmatpush.bf16.msra.mxu0 %v2032
    %2154 = vmatpush.bf16.msra.mxu0 %v2026
    %2155 = vmatpush.bf16.msra.mxu0 %v2020
    %2156 = vmatpush.bf16.msra.mxu0 %v2014
    %2157 = vmatpush.bf16.msra.mxu0 %v2008
    %2158 = vmatpush.bf16.msra.mxu0 %v2002
    %2159 = vmatpush.bf16.msra.mxu0 %v1996
    %2160 = vmatmul.bf16.gmra.mxu0 %v1797
    %v2161 = vpop.f32.mrf.mxu0
    %v2162 = vadd.f32 0.0, %v2161
    %v2163 = vpop.f32.mrf.mxu0
    %2164 = vdwg.mxu0
    %v2165 = vadd.f32 %v1789, %v2097
    %v2166 = vadd.f32 %v1790, %v2110
    %v2167 = vadd.f32 %v1791, %v2123
    %v2168 = vadd.f32 %v1792, %v2136
    %v2169 = vadd.f32 %v1793, %v2149
    %v2170 = vadd.f32 %v1794, %v2162
    %s2171 = scalar_lea.vmem [#allocation3], 4
    %v2172 = vld [vmem:[%s2171] ss:$25 sm:$0x3]
    %v2173 = vpack.c.bf16 %v2172, %v2172
    %s2174 = scalar_lea.vmem [#allocation10], 1536
    %v2175 = vld [vmem:[%s2174] sm:$0xff]
    %v2176 = vld [vmem:[%s2174 + $0x8] sm:$0xff]
    %v2177 = vld [vmem:[%s2174 + $0x10] sm:$0xff]
    %v2178 = vld [vmem:[%s2174 + $0x18] sm:$0xff]
    %v2179 = vld [vmem:[%s2174 + $0x20] sm:$0xff]
    %v2180 = vld [vmem:[%s2174 + $0x28] sm:$0xff]
    %v2181 = vld [vmem:[%s2174 + $0x30] sm:$0xff]
    %v2182 = vld [vmem:[%s2174 + $0x38] sm:$0xff]
    %v2183 = vld [vmem:[%s2174 + $0x40] sm:$0xff]
    %v2184 = vld [vmem:[%s2174 + $0x48] sm:$0xff]
    %v2185 = vld [vmem:[%s2174 + $0x50] sm:$0xff]
    %v2186 = vld [vmem:[%s2174 + $0x58] sm:$0xff]
    %v2187 = vld [vmem:[%s2174 + $0x60] sm:$0xff]
    %v2188 = vld [vmem:[%s2174 + $0x68] sm:$0xff]
    %v2189 = vld [vmem:[%s2174 + $0x70] sm:$0xff]
    %v2190 = vld [vmem:[%s2174 + $0x78] sm:$0xff]
    %v2191 = vld [vmem:[%s2174 + $0x80] sm:$0xff]
    %v2192 = vld [vmem:[%s2174 + $0x88] sm:$0xff]
    %v2193 = vld [vmem:[%s2174 + $0x90] sm:$0xff]
    %v2194 = vld [vmem:[%s2174 + $0x98] sm:$0xff]
    %v2195 = vld [vmem:[%s2174 + $0xa0] sm:$0xff]
    %v2196 = vld [vmem:[%s2174 + $0xa8] sm:$0xff]
    %v2197 = vld [vmem:[%s2174 + $0xb0] sm:$0xff]
    %v2198 = vld [vmem:[%s2174 + $0xb8] sm:$0xff]
    %v2199 = vld [vmem:[%s2174 + $0xc0] sm:$0xff]
    %v2200 = vld [vmem:[%s2174 + $0xc8] sm:$0xff]
    %v2201 = vld [vmem:[%s2174 + $0xd0] sm:$0xff]
    %v2202 = vld [vmem:[%s2174 + $0xd8] sm:$0xff]
    %v2203 = vld [vmem:[%s2174 + $0xe0] sm:$0xff]
    %v2204 = vld [vmem:[%s2174 + $0xe8] sm:$0xff]
    %v2205 = vld [vmem:[%s2174 + $0xf0] sm:$0xff]
    %v2206 = vld [vmem:[%s2174 + $0xf8] sm:$0xff]
    %v2207 = vld [vmem:[%s2174 + $0x100] sm:$0xff]
    %v2208 = vld [vmem:[%s2174 + $0x108] sm:$0xff]
    %v2209 = vld [vmem:[%s2174 + $0x110] sm:$0xff]
    %v2210 = vld [vmem:[%s2174 + $0x118] sm:$0xff]
    %v2211 = vld [vmem:[%s2174 + $0x120] sm:$0xff]
    %v2212 = vld [vmem:[%s2174 + $0x128] sm:$0xff]
    %v2213 = vld [vmem:[%s2174 + $0x130] sm:$0xff]
    %v2214 = vld [vmem:[%s2174 + $0x138] sm:$0xff]
    %v2215 = vld [vmem:[%s2174 + $0x140] sm:$0xff]
    %v2216 = vld [vmem:[%s2174 + $0x148] sm:$0xff]
    %v2217 = vld [vmem:[%s2174 + $0x150] sm:$0xff]
    %v2218 = vld [vmem:[%s2174 + $0x158] sm:$0xff]
    %v2219 = vld [vmem:[%s2174 + $0x160] sm:$0xff]
    %v2220 = vld [vmem:[%s2174 + $0x168] sm:$0xff]
    %v2221 = vld [vmem:[%s2174 + $0x170] sm:$0xff]
    %v2222 = vld [vmem:[%s2174 + $0x178] sm:$0xff]
    %v2271 = vunpack.c.l.b16 %v2175
    %v2272 = vunpack.c.h.b16 %v2175
    %v2273 = vunpack.c.l.b16 %v2176
    %v2274 = vunpack.c.h.b16 %v2176
    %v2275 = vunpack.c.l.b16 %v2177
    %v2276 = vunpack.c.h.b16 %v2177
    %v2277 = vunpack.c.l.b16 %v2178
    %v2278 = vunpack.c.h.b16 %v2178
    %v2279 = vunpack.c.l.b16 %v2179
    %v2280 = vunpack.c.h.b16 %v2179
    %v2281 = vunpack.c.l.b16 %v2180
    %v2282 = vunpack.c.h.b16 %v2180
    %v2283 = vunpack.c.l.b16 %v2181
    %v2284 = vunpack.c.h.b16 %v2181
    %v2285 = vunpack.c.l.b16 %v2182
    %v2286 = vunpack.c.h.b16 %v2182
    %v2287 = vunpack.c.l.b16 %v2183
    %v2288 = vunpack.c.h.b16 %v2183
    %v2289 = vunpack.c.l.b16 %v2184
    %v2290 = vunpack.c.h.b16 %v2184
    %v2291 = vunpack.c.l.b16 %v2185
    %v2292 = vunpack.c.h.b16 %v2185
    %v2293 = vunpack.c.l.b16 %v2186
    %v2294 = vunpack.c.h.b16 %v2186
    %v2295 = vunpack.c.l.b16 %v2187
    %v2296 = vunpack.c.h.b16 %v2187
    %v2297 = vunpack.c.l.b16 %v2188
    %v2298 = vunpack.c.h.b16 %v2188
    %v2299 = vunpack.c.l.b16 %v2189
    %v2300 = vunpack.c.h.b16 %v2189
    %v2301 = vunpack.c.l.b16 %v2190
    %v2302 = vunpack.c.h.b16 %v2190
    %v2303 = vunpack.c.l.b16 %v2191
    %v2304 = vunpack.c.h.b16 %v2191
    %v2305 = vunpack.c.l.b16 %v2192
    %v2306 = vunpack.c.h.b16 %v2192
    %v2307 = vunpack.c.l.b16 %v2193
    %v2308 = vunpack.c.h.b16 %v2193
    %v2309 = vunpack.c.l.b16 %v2194
    %v2310 = vunpack.c.h.b16 %v2194
    %v2311 = vunpack.c.l.b16 %v2195
    %v2312 = vunpack.c.h.b16 %v2195
    %v2313 = vunpack.c.l.b16 %v2196
    %v2314 = vunpack.c.h.b16 %v2196
    %v2315 = vunpack.c.l.b16 %v2197
    %v2316 = vunpack.c.h.b16 %v2197
    %v2317 = vunpack.c.l.b16 %v2198
    %v2318 = vunpack.c.h.b16 %v2198
    %v2319 = vunpack.c.l.b16 %v2199
    %v2320 = vunpack.c.h.b16 %v2199
    %v2321 = vunpack.c.l.b16 %v2200
    %v2322 = vunpack.c.h.b16 %v2200
    %v2323 = vunpack.c.l.b16 %v2201
    %v2324 = vunpack.c.h.b16 %v2201
    %v2325 = vunpack.c.l.b16 %v2202
    %v2326 = vunpack.c.h.b16 %v2202
    %v2327 = vunpack.c.l.b16 %v2203
    %v2328 = vunpack.c.h.b16 %v2203
    %v2329 = vunpack.c.l.b16 %v2204
    %v2330 = vunpack.c.h.b16 %v2204
    %v2331 = vunpack.c.l.b16 %v2205
    %v2332 = vunpack.c.h.b16 %v2205
    %v2333 = vunpack.c.l.b16 %v2206
    %v2334 = vunpack.c.h.b16 %v2206
    %v2335 = vunpack.c.l.b16 %v2207
    %v2336 = vunpack.c.h.b16 %v2207
    %v2337 = vunpack.c.l.b16 %v2208
    %v2338 = vunpack.c.h.b16 %v2208
    %v2339 = vunpack.c.l.b16 %v2209
    %v2340 = vunpack.c.h.b16 %v2209
    %v2341 = vunpack.c.l.b16 %v2210
    %v2342 = vunpack.c.h.b16 %v2210
    %v2343 = vunpack.c.l.b16 %v2211
    %v2344 = vunpack.c.h.b16 %v2211
    %v2345 = vunpack.c.l.b16 %v2212
    %v2346 = vunpack.c.h.b16 %v2212
    %v2347 = vunpack.c.l.b16 %v2213
    %v2348 = vunpack.c.h.b16 %v2213
    %v2349 = vunpack.c.l.b16 %v2214
    %v2350 = vunpack.c.h.b16 %v2214
    %v2351 = vunpack.c.l.b16 %v2215
    %v2352 = vunpack.c.h.b16 %v2215
    %v2353 = vunpack.c.l.b16 %v2216
    %v2354 = vunpack.c.h.b16 %v2216
    %v2355 = vunpack.c.l.b16 %v2217
    %v2356 = vunpack.c.h.b16 %v2217
    %v2357 = vunpack.c.l.b16 %v2218
    %v2358 = vunpack.c.h.b16 %v2218
    %v2359 = vunpack.c.l.b16 %v2219
    %v2360 = vunpack.c.h.b16 %v2219
    %v2361 = vunpack.c.l.b16 %v2220
    %v2362 = vunpack.c.h.b16 %v2220
    %v2363 = vunpack.c.l.b16 %v2221
    %v2364 = vunpack.c.h.b16 %v2221
    %v2365 = vunpack.c.l.b16 %v2222
    %v2366 = vunpack.c.h.b16 %v2222
    %v2367 = vpack.c.b16 %v2277, %v2271
    %v2368 = vpack.c.b16 %v2278, %v2272
    %v2369 = vpack.c.b16 %v2279, %v2273
    %v2370 = vpack.c.b16 %v2280, %v2274
    %v2371 = vpack.c.b16 %v2281, %v2275
    %v2372 = vpack.c.b16 %v2282, %v2276
    %v2373 = vpack.c.b16 %v2289, %v2283
    %v2374 = vpack.c.b16 %v2290, %v2284
    %v2375 = vpack.c.b16 %v2291, %v2285
    %v2376 = vpack.c.b16 %v2292, %v2286
    %v2377 = vpack.c.b16 %v2293, %v2287
    %v2378 = vpack.c.b16 %v2294, %v2288
    %v2379 = vpack.c.b16 %v2301, %v2295
    %v2380 = vpack.c.b16 %v2302, %v2296
    %v2381 = vpack.c.b16 %v2303, %v2297
    %v2382 = vpack.c.b16 %v2304, %v2298
    %v2383 = vpack.c.b16 %v2305, %v2299
    %v2384 = vpack.c.b16 %v2306, %v2300
    %v2385 = vpack.c.b16 %v2313, %v2307
    %v2386 = vpack.c.b16 %v2314, %v2308
    %v2387 = vpack.c.b16 %v2315, %v2309
    %v2388 = vpack.c.b16 %v2316, %v2310
    %v2389 = vpack.c.b16 %v2317, %v2311
    %v2390 = vpack.c.b16 %v2318, %v2312
    %v2391 = vpack.c.b16 %v2325, %v2319
    %v2392 = vpack.c.b16 %v2326, %v2320
    %v2393 = vpack.c.b16 %v2327, %v2321
    %v2394 = vpack.c.b16 %v2328, %v2322
    %v2395 = vpack.c.b16 %v2329, %v2323
    %v2396 = vpack.c.b16 %v2330, %v2324
    %v2397 = vpack.c.b16 %v2337, %v2331
    %v2398 = vpack.c.b16 %v2338, %v2332
    %v2399 = vpack.c.b16 %v2339, %v2333
    %v2400 = vpack.c.b16 %v2340, %v2334
    %v2401 = vpack.c.b16 %v2341, %v2335
    %v2402 = vpack.c.b16 %v2342, %v2336
    %v2403 = vpack.c.b16 %v2349, %v2343
    %v2404 = vpack.c.b16 %v2350, %v2344
    %v2405 = vpack.c.b16 %v2351, %v2345
    %v2406 = vpack.c.b16 %v2352, %v2346
    %v2407 = vpack.c.b16 %v2353, %v2347
    %v2408 = vpack.c.b16 %v2354, %v2348
    %v2409 = vpack.c.b16 %v2361, %v2355
    %v2410 = vpack.c.b16 %v2362, %v2356
    %v2411 = vpack.c.b16 %v2363, %v2357
    %v2412 = vpack.c.b16 %v2364, %v2358
    %v2413 = vpack.c.b16 %v2365, %v2359
    %v2414 = vpack.c.b16 %v2366, %v2360
    %2463 = vmatpush.bf16.msra.mxu0 %v2409
    %2464 = vmatpush.bf16.msra.mxu0 %v2403
    %2465 = vmatpush.bf16.msra.mxu0 %v2397
    %2466 = vmatpush.bf16.msra.mxu0 %v2391
    %2467 = vmatpush.bf16.msra.mxu0 %v2385
    %2468 = vmatpush.bf16.msra.mxu0 %v2379
    %2469 = vmatpush.bf16.msra.mxu0 %v2373
    %2470 = vmatpush.bf16.msra.mxu0 %v2367
    %2471 = vmatmul.bf16.gmra.mxu0 %v2173
    %v2472 = vpop.f32.mrf.mxu0
    %v2473 = vadd.f32 0.0, %v2472
    %v2474 = vpop.f32.mrf.mxu0
    %2475 = vdwg.mxu0
    %2476 = vmatpush.bf16.msra.mxu0 %v2410
    %2477 = vmatpush.bf16.msra.mxu0 %v2404
    %2478 = vmatpush.bf16.msra.mxu0 %v2398
    %2479 = vmatpush.bf16.msra.mxu0 %v2392
    %2480 = vmatpush.bf16.msra.mxu0 %v2386
    %2481 = vmatpush.bf16.msra.mxu0 %v2380
    %2482 = vmatpush.bf16.msra.mxu0 %v2374
    %2483 = vmatpush.bf16.msra.mxu0 %v2368
    %2484 = vmatmul.bf16.gmra.mxu0 %v2173
    %v2485 = vpop.f32.mrf.mxu0
    %v2486 = vadd.f32 0.0, %v2485
    %v2487 = vpop.f32.mrf.mxu0
    %2488 = vdwg.mxu0
    %2489 = vmatpush.bf16.msra.mxu0 %v2411
    %2490 = vmatpush.bf16.msra.mxu0 %v2405
    %2491 = vmatpush.bf16.msra.mxu0 %v2399
    %2492 = vmatpush.bf16.msra.mxu0 %v2393
    %2493 = vmatpush.bf16.msra.mxu0 %v2387
    %2494 = vmatpush.bf16.msra.mxu0 %v2381
    %2495 = vmatpush.bf16.msra.mxu0 %v2375
    %2496 = vmatpush.bf16.msra.mxu0 %v2369
    %2497 = vmatmul.bf16.gmra.mxu0 %v2173
    %v2498 = vpop.f32.mrf.mxu0
    %v2499 = vadd.f32 0.0, %v2498
    %v2500 = vpop.f32.mrf.mxu0
    %2501 = vdwg.mxu0
    %2502 = vmatpush.bf16.msra.mxu0 %v2412
    %2503 = vmatpush.bf16.msra.mxu0 %v2406
    %2504 = vmatpush.bf16.msra.mxu0 %v2400
    %2505 = vmatpush.bf16.msra.mxu0 %v2394
    %2506 = vmatpush.bf16.msra.mxu0 %v2388
    %2507 = vmatpush.bf16.msra.mxu0 %v2382
    %2508 = vmatpush.bf16.msra.mxu0 %v2376
    %2509 = vmatpush.bf16.msra.mxu0 %v2370
    %2510 = vmatmul.bf16.gmra.mxu0 %v2173
    %v2511 = vpop.f32.mrf.mxu0
    %v2512 = vadd.f32 0.0, %v2511
    %v2513 = vpop.f32.mrf.mxu0
    %2514 = vdwg.mxu0
    %2515 = vmatpush.bf16.msra.mxu0 %v2413
    %2516 = vmatpush.bf16.msra.mxu0 %v2407
    %2517 = vmatpush.bf16.msra.mxu0 %v2401
    %2518 = vmatpush.bf16.msra.mxu0 %v2395
    %2519 = vmatpush.bf16.msra.mxu0 %v2389
    %2520 = vmatpush.bf16.msra.mxu0 %v2383
    %2521 = vmatpush.bf16.msra.mxu0 %v2377
    %2522 = vmatpush.bf16.msra.mxu0 %v2371
    %2523 = vmatmul.bf16.gmra.mxu0 %v2173
    %v2524 = vpop.f32.mrf.mxu0
    %v2525 = vadd.f32 0.0, %v2524
    %v2526 = vpop.f32.mrf.mxu0
    %2527 = vdwg.mxu0
    %2528 = vmatpush.bf16.msra.mxu0 %v2414
    %2529 = vmatpush.bf16.msra.mxu0 %v2408
    %2530 = vmatpush.bf16.msra.mxu0 %v2402
    %2531 = vmatpush.bf16.msra.mxu0 %v2396
    %2532 = vmatpush.bf16.msra.mxu0 %v2390
    %2533 = vmatpush.bf16.msra.mxu0 %v2384
    %2534 = vmatpush.bf16.msra.mxu0 %v2378
    %2535 = vmatpush.bf16.msra.mxu0 %v2372
    %2536 = vmatmul.bf16.gmra.mxu0 %v2173
    %v2537 = vpop.f32.mrf.mxu0
    %v2538 = vadd.f32 0.0, %v2537
    %v2539 = vpop.f32.mrf.mxu0
    %2540 = vdwg.mxu0
    %v2541 = vadd.f32 %v2165, %v2473
    %v2542 = vadd.f32 %v2166, %v2486
    %v2543 = vadd.f32 %v2167, %v2499
    %v2544 = vadd.f32 %v2168, %v2512
    %v2545 = vadd.f32 %v2169, %v2525
    %v2546 = vadd.f32 %v2170, %v2538
    %s2547 = scalar_lea.vmem [#allocation3], 5
    %v2548 = vld [vmem:[%s2547] ss:$25 sm:$0x3]
    %v2549 = vpack.c.bf16 %v2548, %v2548
    %s2550 = scalar_lea.vmem [#allocation10], 1920
    %v2551 = vld [vmem:[%s2550] sm:$0xff]
    %v2552 = vld [vmem:[%s2550 + $0x8] sm:$0xff]
    %v2553 = vld [vmem:[%s2550 + $0x10] sm:$0xff]
    %v2554 = vld [vmem:[%s2550 + $0x18] sm:$0xff]
    %v2555 = vld [vmem:[%s2550 + $0x20] sm:$0xff]
    %v2556 = vld [vmem:[%s2550 + $0x28] sm:$0xff]
    %v2557 = vld [vmem:[%s2550 + $0x30] sm:$0xff]
    %v2558 = vld [vmem:[%s2550 + $0x38] sm:$0xff]
    %v2559 = vld [vmem:[%s2550 + $0x40] sm:$0xff]
    %v2560 = vld [vmem:[%s2550 + $0x48] sm:$0xff]
    %v2561 = vld [vmem:[%s2550 + $0x50] sm:$0xff]
    %v2562 = vld [vmem:[%s2550 + $0x58] sm:$0xff]
    %v2563 = vld [vmem:[%s2550 + $0x60] sm:$0xff]
    %v2564 = vld [vmem:[%s2550 + $0x68] sm:$0xff]
    %v2565 = vld [vmem:[%s2550 + $0x70] sm:$0xff]
    %v2566 = vld [vmem:[%s2550 + $0x78] sm:$0xff]
    %v2567 = vld [vmem:[%s2550 + $0x80] sm:$0xff]
    %v2568 = vld [vmem:[%s2550 + $0x88] sm:$0xff]
    %v2569 = vld [vmem:[%s2550 + $0x90] sm:$0xff]
    %v2570 = vld [vmem:[%s2550 + $0x98] sm:$0xff]
    %v2571 = vld [vmem:[%s2550 + $0xa0] sm:$0xff]
    %v2572 = vld [vmem:[%s2550 + $0xa8] sm:$0xff]
    %v2573 = vld [vmem:[%s2550 + $0xb0] sm:$0xff]
    %v2574 = vld [vmem:[%s2550 + $0xb8] sm:$0xff]
    %v2575 = vld [vmem:[%s2550 + $0xc0] sm:$0xff]
    %v2576 = vld [vmem:[%s2550 + $0xc8] sm:$0xff]
    %v2577 = vld [vmem:[%s2550 + $0xd0] sm:$0xff]
    %v2578 = vld [vmem:[%s2550 + $0xd8] sm:$0xff]
    %v2579 = vld [vmem:[%s2550 + $0xe0] sm:$0xff]
    %v2580 = vld [vmem:[%s2550 + $0xe8] sm:$0xff]
    %v2581 = vld [vmem:[%s2550 + $0xf0] sm:$0xff]
    %v2582 = vld [vmem:[%s2550 + $0xf8] sm:$0xff]
    %v2583 = vld [vmem:[%s2550 + $0x100] sm:$0xff]
    %v2584 = vld [vmem:[%s2550 + $0x108] sm:$0xff]
    %v2585 = vld [vmem:[%s2550 + $0x110] sm:$0xff]
    %v2586 = vld [vmem:[%s2550 + $0x118] sm:$0xff]
    %v2587 = vld [vmem:[%s2550 + $0x120] sm:$0xff]
    %v2588 = vld [vmem:[%s2550 + $0x128] sm:$0xff]
    %v2589 = vld [vmem:[%s2550 + $0x130] sm:$0xff]
    %v2590 = vld [vmem:[%s2550 + $0x138] sm:$0xff]
    %v2591 = vld [vmem:[%s2550 + $0x140] sm:$0xff]
    %v2592 = vld [vmem:[%s2550 + $0x148] sm:$0xff]
    %v2593 = vld [vmem:[%s2550 + $0x150] sm:$0xff]
    %v2594 = vld [vmem:[%s2550 + $0x158] sm:$0xff]
    %v2595 = vld [vmem:[%s2550 + $0x160] sm:$0xff]
    %v2596 = vld [vmem:[%s2550 + $0x168] sm:$0xff]
    %v2597 = vld [vmem:[%s2550 + $0x170] sm:$0xff]
    %v2598 = vld [vmem:[%s2550 + $0x178] sm:$0xff]
    %v2647 = vunpack.c.l.b16 %v2551
    %v2648 = vunpack.c.h.b16 %v2551
    %v2649 = vunpack.c.l.b16 %v2552
    %v2650 = vunpack.c.h.b16 %v2552
    %v2651 = vunpack.c.l.b16 %v2553
    %v2652 = vunpack.c.h.b16 %v2553
    %v2653 = vunpack.c.l.b16 %v2554
    %v2654 = vunpack.c.h.b16 %v2554
    %v2655 = vunpack.c.l.b16 %v2555
    %v2656 = vunpack.c.h.b16 %v2555
    %v2657 = vunpack.c.l.b16 %v2556
    %v2658 = vunpack.c.h.b16 %v2556
    %v2659 = vunpack.c.l.b16 %v2557
    %v2660 = vunpack.c.h.b16 %v2557
    %v2661 = vunpack.c.l.b16 %v2558
    %v2662 = vunpack.c.h.b16 %v2558
    %v2663 = vunpack.c.l.b16 %v2559
    %v2664 = vunpack.c.h.b16 %v2559
    %v2665 = vunpack.c.l.b16 %v2560
    %v2666 = vunpack.c.h.b16 %v2560
    %v2667 = vunpack.c.l.b16 %v2561
    %v2668 = vunpack.c.h.b16 %v2561
    %v2669 = vunpack.c.l.b16 %v2562
    %v2670 = vunpack.c.h.b16 %v2562
    %v2671 = vunpack.c.l.b16 %v2563
    %v2672 = vunpack.c.h.b16 %v2563
    %v2673 = vunpack.c.l.b16 %v2564
    %v2674 = vunpack.c.h.b16 %v2564
    %v2675 = vunpack.c.l.b16 %v2565
    %v2676 = vunpack.c.h.b16 %v2565
    %v2677 = vunpack.c.l.b16 %v2566
    %v2678 = vunpack.c.h.b16 %v2566
    %v2679 = vunpack.c.l.b16 %v2567
    %v2680 = vunpack.c.h.b16 %v2567
    %v2681 = vunpack.c.l.b16 %v2568
    %v2682 = vunpack.c.h.b16 %v2568
    %v2683 = vunpack.c.l.b16 %v2569
    %v2684 = vunpack.c.h.b16 %v2569
    %v2685 = vunpack.c.l.b16 %v2570
    %v2686 = vunpack.c.h.b16 %v2570
    %v2687 = vunpack.c.l.b16 %v2571
    %v2688 = vunpack.c.h.b16 %v2571
    %v2689 = vunpack.c.l.b16 %v2572
    %v2690 = vunpack.c.h.b16 %v2572
    %v2691 = vunpack.c.l.b16 %v2573
    %v2692 = vunpack.c.h.b16 %v2573
    %v2693 = vunpack.c.l.b16 %v2574
    %v2694 = vunpack.c.h.b16 %v2574
    %v2695 = vunpack.c.l.b16 %v2575
    %v2696 = vunpack.c.h.b16 %v2575
    %v2697 = vunpack.c.l.b16 %v2576
    %v2698 = vunpack.c.h.b16 %v2576
    %v2699 = vunpack.c.l.b16 %v2577
    %v2700 = vunpack.c.h.b16 %v2577
    %v2701 = vunpack.c.l.b16 %v2578
    %v2702 = vunpack.c.h.b16 %v2578
    %v2703 = vunpack.c.l.b16 %v2579
    %v2704 = vunpack.c.h.b16 %v2579
    %v2705 = vunpack.c.l.b16 %v2580
    %v2706 = vunpack.c.h.b16 %v2580
    %v2707 = vunpack.c.l.b16 %v2581
    %v2708 = vunpack.c.h.b16 %v2581
    %v2709 = vunpack.c.l.b16 %v2582
    %v2710 = vunpack.c.h.b16 %v2582
    %v2711 = vunpack.c.l.b16 %v2583
    %v2712 = vunpack.c.h.b16 %v2583
    %v2713 = vunpack.c.l.b16 %v2584
    %v2714 = vunpack.c.h.b16 %v2584
    %v2715 = vunpack.c.l.b16 %v2585
    %v2716 = vunpack.c.h.b16 %v2585
    %v2717 = vunpack.c.l.b16 %v2586
    %v2718 = vunpack.c.h.b16 %v2586
    %v2719 = vunpack.c.l.b16 %v2587
    %v2720 = vunpack.c.h.b16 %v2587
    %v2721 = vunpack.c.l.b16 %v2588
    %v2722 = vunpack.c.h.b16 %v2588
    %v2723 = vunpack.c.l.b16 %v2589
    %v2724 = vunpack.c.h.b16 %v2589
    %v2725 = vunpack.c.l.b16 %v2590
    %v2726 = vunpack.c.h.b16 %v2590
    %v2727 = vunpack.c.l.b16 %v2591
    %v2728 = vunpack.c.h.b16 %v2591
    %v2729 = vunpack.c.l.b16 %v2592
    %v2730 = vunpack.c.h.b16 %v2592
    %v2731 = vunpack.c.l.b16 %v2593
    %v2732 = vunpack.c.h.b16 %v2593
    %v2733 = vunpack.c.l.b16 %v2594
    %v2734 = vunpack.c.h.b16 %v2594
    %v2735 = vunpack.c.l.b16 %v2595
    %v2736 = vunpack.c.h.b16 %v2595
    %v2737 = vunpack.c.l.b16 %v2596
    %v2738 = vunpack.c.h.b16 %v2596
    %v2739 = vunpack.c.l.b16 %v2597
    %v2740 = vunpack.c.h.b16 %v2597
    %v2741 = vunpack.c.l.b16 %v2598
    %v2742 = vunpack.c.h.b16 %v2598
    %v2743 = vpack.c.b16 %v2653, %v2647
    %v2744 = vpack.c.b16 %v2654, %v2648
    %v2745 = vpack.c.b16 %v2655, %v2649
    %v2746 = vpack.c.b16 %v2656, %v2650
    %v2747 = vpack.c.b16 %v2657, %v2651
    %v2748 = vpack.c.b16 %v2658, %v2652
    %v2749 = vpack.c.b16 %v2665, %v2659
    %v2750 = vpack.c.b16 %v2666, %v2660
    %v2751 = vpack.c.b16 %v2667, %v2661
    %v2752 = vpack.c.b16 %v2668, %v2662
    %v2753 = vpack.c.b16 %v2669, %v2663
    %v2754 = vpack.c.b16 %v2670, %v2664
    %v2755 = vpack.c.b16 %v2677, %v2671
    %v2756 = vpack.c.b16 %v2678, %v2672
    %v2757 = vpack.c.b16 %v2679, %v2673
    %v2758 = vpack.c.b16 %v2680, %v2674
    %v2759 = vpack.c.b16 %v2681, %v2675
    %v2760 = vpack.c.b16 %v2682, %v2676
    %v2761 = vpack.c.b16 %v2689, %v2683
    %v2762 = vpack.c.b16 %v2690, %v2684
    %v2763 = vpack.c.b16 %v2691, %v2685
    %v2764 = vpack.c.b16 %v2692, %v2686
    %v2765 = vpack.c.b16 %v2693, %v2687
    %v2766 = vpack.c.b16 %v2694, %v2688
    %v2767 = vpack.c.b16 %v2701, %v2695
    %v2768 = vpack.c.b16 %v2702, %v2696
    %v2769 = vpack.c.b16 %v2703, %v2697
    %v2770 = vpack.c.b16 %v2704, %v2698
    %v2771 = vpack.c.b16 %v2705, %v2699
    %v2772 = vpack.c.b16 %v2706, %v2700
    %v2773 = vpack.c.b16 %v2713, %v2707
    %v2774 = vpack.c.b16 %v2714, %v2708
    %v2775 = vpack.c.b16 %v2715, %v2709
    %v2776 = vpack.c.b16 %v2716, %v2710
    %v2777 = vpack.c.b16 %v2717, %v2711
    %v2778 = vpack.c.b16 %v2718, %v2712
    %v2779 = vpack.c.b16 %v2725, %v2719
    %v2780 = vpack.c.b16 %v2726, %v2720
    %v2781 = vpack.c.b16 %v2727, %v2721
    %v2782 = vpack.c.b16 %v2728, %v2722
    %v2783 = vpack.c.b16 %v2729, %v2723
    %v2784 = vpack.c.b16 %v2730, %v2724
    %v2785 = vpack.c.b16 %v2737, %v2731
    %v2786 = vpack.c.b16 %v2738, %v2732
    %v2787 = vpack.c.b16 %v2739, %v2733
    %v2788 = vpack.c.b16 %v2740, %v2734
    %v2789 = vpack.c.b16 %v2741, %v2735
    %v2790 = vpack.c.b16 %v2742, %v2736
    %2839 = vmatpush.bf16.msra.mxu0 %v2785
    %2840 = vmatpush.bf16.msra.mxu0 %v2779
    %2841 = vmatpush.bf16.msra.mxu0 %v2773
    %2842 = vmatpush.bf16.msra.mxu0 %v2767
    %2843 = vmatpush.bf16.msra.mxu0 %v2761
    %2844 = vmatpush.bf16.msra.mxu0 %v2755
    %2845 = vmatpush.bf16.msra.mxu0 %v2749
    %2846 = vmatpush.bf16.msra.mxu0 %v2743
    %2847 = vmatmul.bf16.gmra.mxu0 %v2549
    %v2848 = vpop.f32.mrf.mxu0
    %v2849 = vadd.f32 0.0, %v2848
    %v2850 = vpop.f32.mrf.mxu0
    %2851 = vdwg.mxu0
    %2852 = vmatpush.bf16.msra.mxu0 %v2786
    %2853 = vmatpush.bf16.msra.mxu0 %v2780
    %2854 = vmatpush.bf16.msra.mxu0 %v2774
    %2855 = vmatpush.bf16.msra.mxu0 %v2768
    %2856 = vmatpush.bf16.msra.mxu0 %v2762
    %2857 = vmatpush.bf16.msra.mxu0 %v2756
    %2858 = vmatpush.bf16.msra.mxu0 %v2750
    %2859 = vmatpush.bf16.msra.mxu0 %v2744
    %2860 = vmatmul.bf16.gmra.mxu0 %v2549
    %v2861 = vpop.f32.mrf.mxu0
    %v2862 = vadd.f32 0.0, %v2861
    %v2863 = vpop.f32.mrf.mxu0
    %2864 = vdwg.mxu0
    %2865 = vmatpush.bf16.msra.mxu0 %v2787
    %2866 = vmatpush.bf16.msra.mxu0 %v2781
    %2867 = vmatpush.bf16.msra.mxu0 %v2775
    %2868 = vmatpush.bf16.msra.mxu0 %v2769
    %2869 = vmatpush.bf16.msra.mxu0 %v2763
    %2870 = vmatpush.bf16.msra.mxu0 %v2757
    %2871 = vmatpush.bf16.msra.mxu0 %v2751
    %2872 = vmatpush.bf16.msra.mxu0 %v2745
    %2873 = vmatmul.bf16.gmra.mxu0 %v2549
    %v2874 = vpop.f32.mrf.mxu0
    %v2875 = vadd.f32 0.0, %v2874
    %v2876 = vpop.f32.mrf.mxu0
    %2877 = vdwg.mxu0
    %2878 = vmatpush.bf16.msra.mxu0 %v2788
    %2879 = vmatpush.bf16.msra.mxu0 %v2782
    %2880 = vmatpush.bf16.msra.mxu0 %v2776
    %2881 = vmatpush.bf16.msra.mxu0 %v2770
    %2882 = vmatpush.bf16.msra.mxu0 %v2764
    %2883 = vmatpush.bf16.msra.mxu0 %v2758
    %2884 = vmatpush.bf16.msra.mxu0 %v2752
    %2885 = vmatpush.bf16.msra.mxu0 %v2746
    %2886 = vmatmul.bf16.gmra.mxu0 %v2549
    %v2887 = vpop.f32.mrf.mxu0
    %v2888 = vadd.f32 0.0, %v2887
    %v2889 = vpop.f32.mrf.mxu0
    %2890 = vdwg.mxu0
    %2891 = vmatpush.bf16.msra.mxu0 %v2789
    %2892 = vmatpush.bf16.msra.mxu0 %v2783
    %2893 = vmatpush.bf16.msra.mxu0 %v2777
    %2894 = vmatpush.bf16.msra.mxu0 %v2771
    %2895 = vmatpush.bf16.msra.mxu0 %v2765
    %2896 = vmatpush.bf16.msra.mxu0 %v2759
    %2897 = vmatpush.bf16.msra.mxu0 %v2753
    %2898 = vmatpush.bf16.msra.mxu0 %v2747
    %2899 = vmatmul.bf16.gmra.mxu0 %v2549
    %v2900 = vpop.f32.mrf.mxu0
    %v2901 = vadd.f32 0.0, %v2900
    %v2902 = vpop.f32.mrf.mxu0
    %2903 = vdwg.mxu0
    %2904 = vmatpush.bf16.msra.mxu0 %v2790
    %2905 = vmatpush.bf16.msra.mxu0 %v2784
    %2906 = vmatpush.bf16.msra.mxu0 %v2778
    %2907 = vmatpush.bf16.msra.mxu0 %v2772
    %2908 = vmatpush.bf16.msra.mxu0 %v2766
    %2909 = vmatpush.bf16.msra.mxu0 %v2760
    %2910 = vmatpush.bf16.msra.mxu0 %v2754
    %2911 = vmatpush.bf16.msra.mxu0 %v2748
    %2912 = vmatmul.bf16.gmra.mxu0 %v2549
    %v2913 = vpop.f32.mrf.mxu0
    %v2914 = vadd.f32 0.0, %v2913
    %v2915 = vpop.f32.mrf.mxu0
    %2916 = vdwg.mxu0
    %v2917 = vadd.f32 %v2541, %v2849
    %v2918 = vadd.f32 %v2542, %v2862
    %v2919 = vadd.f32 %v2543, %v2875
    %v2920 = vadd.f32 %v2544, %v2888
    %v2921 = vadd.f32 %v2545, %v2901
    %v2922 = vadd.f32 %v2546, %v2914
    %s2923 = scalar_lea.vmem [#allocation3], 6
    %v2924 = vld [vmem:[%s2923] ss:$25 sm:$0x3]
    %v2925 = vpack.c.bf16 %v2924, %v2924
    %s2926 = scalar_lea.vmem [#allocation10], 2304
    %v2927 = vld [vmem:[%s2926] sm:$0xff]
    %v2928 = vld [vmem:[%s2926 + $0x8] sm:$0xff]
    %v2929 = vld [vmem:[%s2926 + $0x10] sm:$0xff]
    %v2930 = vld [vmem:[%s2926 + $0x18] sm:$0xff]
    %v2931 = vld [vmem:[%s2926 + $0x20] sm:$0xff]
    %v2932 = vld [vmem:[%s2926 + $0x28] sm:$0xff]
    %v2933 = vld [vmem:[%s2926 + $0x30] sm:$0xff]
    %v2934 = vld [vmem:[%s2926 + $0x38] sm:$0xff]
    %v2935 = vld [vmem:[%s2926 + $0x40] sm:$0xff]
    %v2936 = vld [vmem:[%s2926 + $0x48] sm:$0xff]
    %v2937 = vld [vmem:[%s2926 + $0x50] sm:$0xff]
    %v2938 = vld [vmem:[%s2926 + $0x58] sm:$0xff]
    %v2939 = vld [vmem:[%s2926 + $0x60] sm:$0xff]
    %v2940 = vld [vmem:[%s2926 + $0x68] sm:$0xff]
    %v2941 = vld [vmem:[%s2926 + $0x70] sm:$0xff]
    %v2942 = vld [vmem:[%s2926 + $0x78] sm:$0xff]
    %v2943 = vld [vmem:[%s2926 + $0x80] sm:$0xff]
    %v2944 = vld [vmem:[%s2926 + $0x88] sm:$0xff]
    %v2945 = vld [vmem:[%s2926 + $0x90] sm:$0xff]
    %v2946 = vld [vmem:[%s2926 + $0x98] sm:$0xff]
    %v2947 = vld [vmem:[%s2926 + $0xa0] sm:$0xff]
    %v2948 = vld [vmem:[%s2926 + $0xa8] sm:$0xff]
    %v2949 = vld [vmem:[%s2926 + $0xb0] sm:$0xff]
    %v2950 = vld [vmem:[%s2926 + $0xb8] sm:$0xff]
    %v2951 = vld [vmem:[%s2926 + $0xc0] sm:$0xff]
    %v2952 = vld [vmem:[%s2926 + $0xc8] sm:$0xff]
    %v2953 = vld [vmem:[%s2926 + $0xd0] sm:$0xff]
    %v2954 = vld [vmem:[%s2926 + $0xd8] sm:$0xff]
    %v2955 = vld [vmem:[%s2926 + $0xe0] sm:$0xff]
    %v2956 = vld [vmem:[%s2926 + $0xe8] sm:$0xff]
    %v2957 = vld [vmem:[%s2926 + $0xf0] sm:$0xff]
    %v2958 = vld [vmem:[%s2926 + $0xf8] sm:$0xff]
    %v2959 = vld [vmem:[%s2926 + $0x100] sm:$0xff]
    %v2960 = vld [vmem:[%s2926 + $0x108] sm:$0xff]
    %v2961 = vld [vmem:[%s2926 + $0x110] sm:$0xff]
    %v2962 = vld [vmem:[%s2926 + $0x118] sm:$0xff]
    %v2963 = vld [vmem:[%s2926 + $0x120] sm:$0xff]
    %v2964 = vld [vmem:[%s2926 + $0x128] sm:$0xff]
    %v2965 = vld [vmem:[%s2926 + $0x130] sm:$0xff]
    %v2966 = vld [vmem:[%s2926 + $0x138] sm:$0xff]
    %v2967 = vld [vmem:[%s2926 + $0x140] sm:$0xff]
    %v2968 = vld [vmem:[%s2926 + $0x148] sm:$0xff]
    %v2969 = vld [vmem:[%s2926 + $0x150] sm:$0xff]
    %v2970 = vld [vmem:[%s2926 + $0x158] sm:$0xff]
    %v2971 = vld [vmem:[%s2926 + $0x160] sm:$0xff]
    %v2972 = vld [vmem:[%s2926 + $0x168] sm:$0xff]
    %v2973 = vld [vmem:[%s2926 + $0x170] sm:$0xff]
    %v2974 = vld [vmem:[%s2926 + $0x178] sm:$0xff]
    %v3023 = vunpack.c.l.b16 %v2927
    %v3024 = vunpack.c.h.b16 %v2927
    %v3025 = vunpack.c.l.b16 %v2928
    %v3026 = vunpack.c.h.b16 %v2928
    %v3027 = vunpack.c.l.b16 %v2929
    %v3028 = vunpack.c.h.b16 %v2929
    %v3029 = vunpack.c.l.b16 %v2930
    %v3030 = vunpack.c.h.b16 %v2930
    %v3031 = vunpack.c.l.b16 %v2931
    %v3032 = vunpack.c.h.b16 %v2931
    %v3033 = vunpack.c.l.b16 %v2932
    %v3034 = vunpack.c.h.b16 %v2932
    %v3035 = vunpack.c.l.b16 %v2933
    %v3036 = vunpack.c.h.b16 %v2933
    %v3037 = vunpack.c.l.b16 %v2934
    %v3038 = vunpack.c.h.b16 %v2934
    %v3039 = vunpack.c.l.b16 %v2935
    %v3040 = vunpack.c.h.b16 %v2935
    %v3041 = vunpack.c.l.b16 %v2936
    %v3042 = vunpack.c.h.b16 %v2936
    %v3043 = vunpack.c.l.b16 %v2937
    %v3044 = vunpack.c.h.b16 %v2937
    %v3045 = vunpack.c.l.b16 %v2938
    %v3046 = vunpack.c.h.b16 %v2938
    %v3047 = vunpack.c.l.b16 %v2939
    %v3048 = vunpack.c.h.b16 %v2939
    %v3049 = vunpack.c.l.b16 %v2940
    %v3050 = vunpack.c.h.b16 %v2940
    %v3051 = vunpack.c.l.b16 %v2941
    %v3052 = vunpack.c.h.b16 %v2941
    %v3053 = vunpack.c.l.b16 %v2942
    %v3054 = vunpack.c.h.b16 %v2942
    %v3055 = vunpack.c.l.b16 %v2943
    %v3056 = vunpack.c.h.b16 %v2943
    %v3057 = vunpack.c.l.b16 %v2944
    %v3058 = vunpack.c.h.b16 %v2944
    %v3059 = vunpack.c.l.b16 %v2945
    %v3060 = vunpack.c.h.b16 %v2945
    %v3061 = vunpack.c.l.b16 %v2946
    %v3062 = vunpack.c.h.b16 %v2946
    %v3063 = vunpack.c.l.b16 %v2947
    %v3064 = vunpack.c.h.b16 %v2947
    %v3065 = vunpack.c.l.b16 %v2948
    %v3066 = vunpack.c.h.b16 %v2948
    %v3067 = vunpack.c.l.b16 %v2949
    %v3068 = vunpack.c.h.b16 %v2949
    %v3069 = vunpack.c.l.b16 %v2950
    %v3070 = vunpack.c.h.b16 %v2950
    %v3071 = vunpack.c.l.b16 %v2951
    %v3072 = vunpack.c.h.b16 %v2951
    %v3073 = vunpack.c.l.b16 %v2952
    %v3074 = vunpack.c.h.b16 %v2952
    %v3075 = vunpack.c.l.b16 %v2953
    %v3076 = vunpack.c.h.b16 %v2953
    %v3077 = vunpack.c.l.b16 %v2954
    %v3078 = vunpack.c.h.b16 %v2954
    %v3079 = vunpack.c.l.b16 %v2955
    %v3080 = vunpack.c.h.b16 %v2955
    %v3081 = vunpack.c.l.b16 %v2956
    %v3082 = vunpack.c.h.b16 %v2956
    %v3083 = vunpack.c.l.b16 %v2957
    %v3084 = vunpack.c.h.b16 %v2957
    %v3085 = vunpack.c.l.b16 %v2958
    %v3086 = vunpack.c.h.b16 %v2958
    %v3087 = vunpack.c.l.b16 %v2959
    %v3088 = vunpack.c.h.b16 %v2959
    %v3089 = vunpack.c.l.b16 %v2960
    %v3090 = vunpack.c.h.b16 %v2960
    %v3091 = vunpack.c.l.b16 %v2961
    %v3092 = vunpack.c.h.b16 %v2961
    %v3093 = vunpack.c.l.b16 %v2962
    %v3094 = vunpack.c.h.b16 %v2962
    %v3095 = vunpack.c.l.b16 %v2963
    %v3096 = vunpack.c.h.b16 %v2963
    %v3097 = vunpack.c.l.b16 %v2964
    %v3098 = vunpack.c.h.b16 %v2964
    %v3099 = vunpack.c.l.b16 %v2965
    %v3100 = vunpack.c.h.b16 %v2965
    %v3101 = vunpack.c.l.b16 %v2966
    %v3102 = vunpack.c.h.b16 %v2966
    %v3103 = vunpack.c.l.b16 %v2967
    %v3104 = vunpack.c.h.b16 %v2967
    %v3105 = vunpack.c.l.b16 %v2968
    %v3106 = vunpack.c.h.b16 %v2968
    %v3107 = vunpack.c.l.b16 %v2969
    %v3108 = vunpack.c.h.b16 %v2969
    %v3109 = vunpack.c.l.b16 %v2970
    %v3110 = vunpack.c.h.b16 %v2970
    %v3111 = vunpack.c.l.b16 %v2971
    %v3112 = vunpack.c.h.b16 %v2971
    %v3113 = vunpack.c.l.b16 %v2972
    %v3114 = vunpack.c.h.b16 %v2972
    %v3115 = vunpack.c.l.b16 %v2973
    %v3116 = vunpack.c.h.b16 %v2973
    %v3117 = vunpack.c.l.b16 %v2974
    %v3118 = vunpack.c.h.b16 %v2974
    %v3119 = vpack.c.b16 %v3029, %v3023
    %v3120 = vpack.c.b16 %v3030, %v3024
    %v3121 = vpack.c.b16 %v3031, %v3025
    %v3122 = vpack.c.b16 %v3032, %v3026
    %v3123 = vpack.c.b16 %v3033, %v3027
    %v3124 = vpack.c.b16 %v3034, %v3028
    %v3125 = vpack.c.b16 %v3041, %v3035
    %v3126 = vpack.c.b16 %v3042, %v3036
    %v3127 = vpack.c.b16 %v3043, %v3037
    %v3128 = vpack.c.b16 %v3044, %v3038
    %v3129 = vpack.c.b16 %v3045, %v3039
    %v3130 = vpack.c.b16 %v3046, %v3040
    %v3131 = vpack.c.b16 %v3053, %v3047
    %v3132 = vpack.c.b16 %v3054, %v3048
    %v3133 = vpack.c.b16 %v3055, %v3049
    %v3134 = vpack.c.b16 %v3056, %v3050
    %v3135 = vpack.c.b16 %v3057, %v3051
    %v3136 = vpack.c.b16 %v3058, %v3052
    %v3137 = vpack.c.b16 %v3065, %v3059
    %v3138 = vpack.c.b16 %v3066, %v3060
    %v3139 = vpack.c.b16 %v3067, %v3061
    %v3140 = vpack.c.b16 %v3068, %v3062
    %v3141 = vpack.c.b16 %v3069, %v3063
    %v3142 = vpack.c.b16 %v3070, %v3064
    %v3143 = vpack.c.b16 %v3077, %v3071
    %v3144 = vpack.c.b16 %v3078, %v3072
    %v3145 = vpack.c.b16 %v3079, %v3073
    %v3146 = vpack.c.b16 %v3080, %v3074
    %v3147 = vpack.c.b16 %v3081, %v3075
    %v3148 = vpack.c.b16 %v3082, %v3076
    %v3149 = vpack.c.b16 %v3089, %v3083
    %v3150 = vpack.c.b16 %v3090, %v3084
    %v3151 = vpack.c.b16 %v3091, %v3085
    %v3152 = vpack.c.b16 %v3092, %v3086
    %v3153 = vpack.c.b16 %v3093, %v3087
    %v3154 = vpack.c.b16 %v3094, %v3088
    %v3155 = vpack.c.b16 %v3101, %v3095
    %v3156 = vpack.c.b16 %v3102, %v3096
    %v3157 = vpack.c.b16 %v3103, %v3097
    %v3158 = vpack.c.b16 %v3104, %v3098
    %v3159 = vpack.c.b16 %v3105, %v3099
    %v3160 = vpack.c.b16 %v3106, %v3100
    %v3161 = vpack.c.b16 %v3113, %v3107
    %v3162 = vpack.c.b16 %v3114, %v3108
    %v3163 = vpack.c.b16 %v3115, %v3109
    %v3164 = vpack.c.b16 %v3116, %v3110
    %v3165 = vpack.c.b16 %v3117, %v3111
    %v3166 = vpack.c.b16 %v3118, %v3112
    %3215 = vmatpush.bf16.msra.mxu0 %v3161
    %3216 = vmatpush.bf16.msra.mxu0 %v3155
    %3217 = vmatpush.bf16.msra.mxu0 %v3149
    %3218 = vmatpush.bf16.msra.mxu0 %v3143
    %3219 = vmatpush.bf16.msra.mxu0 %v3137
    %3220 = vmatpush.bf16.msra.mxu0 %v3131
    %3221 = vmatpush.bf16.msra.mxu0 %v3125
    %3222 = vmatpush.bf16.msra.mxu0 %v3119
    %3223 = vmatmul.bf16.gmra.mxu0 %v2925
    %v3224 = vpop.f32.mrf.mxu0
    %v3225 = vadd.f32 0.0, %v3224
    %v3226 = vpop.f32.mrf.mxu0
    %3227 = vdwg.mxu0
    %3228 = vmatpush.bf16.msra.mxu0 %v3162
    %3229 = vmatpush.bf16.msra.mxu0 %v3156
    %3230 = vmatpush.bf16.msra.mxu0 %v3150
    %3231 = vmatpush.bf16.msra.mxu0 %v3144
    %3232 = vmatpush.bf16.msra.mxu0 %v3138
    %3233 = vmatpush.bf16.msra.mxu0 %v3132
    %3234 = vmatpush.bf16.msra.mxu0 %v3126
    %3235 = vmatpush.bf16.msra.mxu0 %v3120
    %3236 = vmatmul.bf16.gmra.mxu0 %v2925
    %v3237 = vpop.f32.mrf.mxu0
    %v3238 = vadd.f32 0.0, %v3237
    %v3239 = vpop.f32.mrf.mxu0
    %3240 = vdwg.mxu0
    %3241 = vmatpush.bf16.msra.mxu0 %v3163
    %3242 = vmatpush.bf16.msra.mxu0 %v3157
    %3243 = vmatpush.bf16.msra.mxu0 %v3151
    %3244 = vmatpush.bf16.msra.mxu0 %v3145
    %3245 = vmatpush.bf16.msra.mxu0 %v3139
    %3246 = vmatpush.bf16.msra.mxu0 %v3133
    %3247 = vmatpush.bf16.msra.mxu0 %v3127
    %3248 = vmatpush.bf16.msra.mxu0 %v3121
    %3249 = vmatmul.bf16.gmra.mxu0 %v2925
    %v3250 = vpop.f32.mrf.mxu0
    %v3251 = vadd.f32 0.0, %v3250
    %v3252 = vpop.f32.mrf.mxu0
    %3253 = vdwg.mxu0
    %3254 = vmatpush.bf16.msra.mxu0 %v3164
    %3255 = vmatpush.bf16.msra.mxu0 %v3158
    %3256 = vmatpush.bf16.msra.mxu0 %v3152
    %3257 = vmatpush.bf16.msra.mxu0 %v3146
    %3258 = vmatpush.bf16.msra.mxu0 %v3140
    %3259 = vmatpush.bf16.msra.mxu0 %v3134
    %3260 = vmatpush.bf16.msra.mxu0 %v3128
    %3261 = vmatpush.bf16.msra.mxu0 %v3122
    %3262 = vmatmul.bf16.gmra.mxu0 %v2925
    %v3263 = vpop.f32.mrf.mxu0
    %v3264 = vadd.f32 0.0, %v3263
    %v3265 = vpop.f32.mrf.mxu0
    %3266 = vdwg.mxu0
    %3267 = vmatpush.bf16.msra.mxu0 %v3165
    %3268 = vmatpush.bf16.msra.mxu0 %v3159
    %3269 = vmatpush.bf16.msra.mxu0 %v3153
    %3270 = vmatpush.bf16.msra.mxu0 %v3147
    %3271 = vmatpush.bf16.msra.mxu0 %v3141
    %3272 = vmatpush.bf16.msra.mxu0 %v3135
    %3273 = vmatpush.bf16.msra.mxu0 %v3129
    %3274 = vmatpush.bf16.msra.mxu0 %v3123
    %3275 = vmatmul.bf16.gmra.mxu0 %v2925
    %v3276 = vpop.f32.mrf.mxu0
    %v3277 = vadd.f32 0.0, %v3276
    %v3278 = vpop.f32.mrf.mxu0
    %3279 = vdwg.mxu0
    %3280 = vmatpush.bf16.msra.mxu0 %v3166
    %3281 = vmatpush.bf16.msra.mxu0 %v3160
    %3282 = vmatpush.bf16.msra.mxu0 %v3154
    %3283 = vmatpush.bf16.msra.mxu0 %v3148
    %3284 = vmatpush.bf16.msra.mxu0 %v3142
    %3285 = vmatpush.bf16.msra.mxu0 %v3136
    %3286 = vmatpush.bf16.msra.mxu0 %v3130
    %3287 = vmatpush.bf16.msra.mxu0 %v3124
    %3288 = vmatmul.bf16.gmra.mxu0 %v2925
    %v3289 = vpop.f32.mrf.mxu0
    %v3290 = vadd.f32 0.0, %v3289
    %v3291 = vpop.f32.mrf.mxu0
    %3292 = vdwg.mxu0
    %v3293 = vadd.f32 %v2917, %v3225
    %v3294 = vadd.f32 %v2918, %v3238
    %v3295 = vadd.f32 %v2919, %v3251
    %v3296 = vadd.f32 %v2920, %v3264
    %v3297 = vadd.f32 %v2921, %v3277
    %v3298 = vadd.f32 %v2922, %v3290
    %s3299 = scalar_lea.vmem [#allocation3], 7
    %v3300 = vld [vmem:[%s3299] ss:$25 sm:$0x3]
    %v3301 = vpack.c.bf16 %v3300, %v3300
    %s3302 = scalar_lea.vmem [#allocation10], 2688
    %v3303 = vld [vmem:[%s3302] sm:$0xff]
    %v3304 = vld [vmem:[%s3302 + $0x8] sm:$0xff]
    %v3305 = vld [vmem:[%s3302 + $0x10] sm:$0xff]
    %v3306 = vld [vmem:[%s3302 + $0x18] sm:$0xff]
    %v3307 = vld [vmem:[%s3302 + $0x20] sm:$0xff]
    %v3308 = vld [vmem:[%s3302 + $0x28] sm:$0xff]
    %v3309 = vld [vmem:[%s3302 + $0x30] sm:$0xff]
    %v3310 = vld [vmem:[%s3302 + $0x38] sm:$0xff]
    %v3311 = vld [vmem:[%s3302 + $0x40] sm:$0xff]
    %v3312 = vld [vmem:[%s3302 + $0x48] sm:$0xff]
    %v3313 = vld [vmem:[%s3302 + $0x50] sm:$0xff]
    %v3314 = vld [vmem:[%s3302 + $0x58] sm:$0xff]
    %v3315 = vld [vmem:[%s3302 + $0x60] sm:$0xff]
    %v3316 = vld [vmem:[%s3302 + $0x68] sm:$0xff]
    %v3317 = vld [vmem:[%s3302 + $0x70] sm:$0xff]
    %v3318 = vld [vmem:[%s3302 + $0x78] sm:$0xff]
    %v3319 = vld [vmem:[%s3302 + $0x80] sm:$0xff]
    %v3320 = vld [vmem:[%s3302 + $0x88] sm:$0xff]
    %v3321 = vld [vmem:[%s3302 + $0x90] sm:$0xff]
    %v3322 = vld [vmem:[%s3302 + $0x98] sm:$0xff]
    %v3323 = vld [vmem:[%s3302 + $0xa0] sm:$0xff]
    %v3324 = vld [vmem:[%s3302 + $0xa8] sm:$0xff]
    %v3325 = vld [vmem:[%s3302 + $0xb0] sm:$0xff]
    %v3326 = vld [vmem:[%s3302 + $0xb8] sm:$0xff]
    %v3327 = vld [vmem:[%s3302 + $0xc0] sm:$0xff]
    %v3328 = vld [vmem:[%s3302 + $0xc8] sm:$0xff]
    %v3329 = vld [vmem:[%s3302 + $0xd0] sm:$0xff]
    %v3330 = vld [vmem:[%s3302 + $0xd8] sm:$0xff]
    %v3331 = vld [vmem:[%s3302 + $0xe0] sm:$0xff]
    %v3332 = vld [vmem:[%s3302 + $0xe8] sm:$0xff]
    %v3333 = vld [vmem:[%s3302 + $0xf0] sm:$0xff]
    %v3334 = vld [vmem:[%s3302 + $0xf8] sm:$0xff]
    %v3335 = vld [vmem:[%s3302 + $0x100] sm:$0xff]
    %v3336 = vld [vmem:[%s3302 + $0x108] sm:$0xff]
    %v3337 = vld [vmem:[%s3302 + $0x110] sm:$0xff]
    %v3338 = vld [vmem:[%s3302 + $0x118] sm:$0xff]
    %v3339 = vld [vmem:[%s3302 + $0x120] sm:$0xff]
    %v3340 = vld [vmem:[%s3302 + $0x128] sm:$0xff]
    %v3341 = vld [vmem:[%s3302 + $0x130] sm:$0xff]
    %v3342 = vld [vmem:[%s3302 + $0x138] sm:$0xff]
    %v3343 = vld [vmem:[%s3302 + $0x140] sm:$0xff]
    %v3344 = vld [vmem:[%s3302 + $0x148] sm:$0xff]
    %v3345 = vld [vmem:[%s3302 + $0x150] sm:$0xff]
    %v3346 = vld [vmem:[%s3302 + $0x158] sm:$0xff]
    %v3347 = vld [vmem:[%s3302 + $0x160] sm:$0xff]
    %v3348 = vld [vmem:[%s3302 + $0x168] sm:$0xff]
    %v3349 = vld [vmem:[%s3302 + $0x170] sm:$0xff]
    %v3350 = vld [vmem:[%s3302 + $0x178] sm:$0xff]
    %v3399 = vunpack.c.l.b16 %v3303
    %v3400 = vunpack.c.h.b16 %v3303
    %v3401 = vunpack.c.l.b16 %v3304
    %v3402 = vunpack.c.h.b16 %v3304
    %v3403 = vunpack.c.l.b16 %v3305
    %v3404 = vunpack.c.h.b16 %v3305
    %v3405 = vunpack.c.l.b16 %v3306
    %v3406 = vunpack.c.h.b16 %v3306
    %v3407 = vunpack.c.l.b16 %v3307
    %v3408 = vunpack.c.h.b16 %v3307
    %v3409 = vunpack.c.l.b16 %v3308
    %v3410 = vunpack.c.h.b16 %v3308
    %v3411 = vunpack.c.l.b16 %v3309
    %v3412 = vunpack.c.h.b16 %v3309
    %v3413 = vunpack.c.l.b16 %v3310
    %v3414 = vunpack.c.h.b16 %v3310
    %v3415 = vunpack.c.l.b16 %v3311
    %v3416 = vunpack.c.h.b16 %v3311
    %v3417 = vunpack.c.l.b16 %v3312
    %v3418 = vunpack.c.h.b16 %v3312
    %v3419 = vunpack.c.l.b16 %v3313
    %v3420 = vunpack.c.h.b16 %v3313
    %v3421 = vunpack.c.l.b16 %v3314
    %v3422 = vunpack.c.h.b16 %v3314
    %v3423 = vunpack.c.l.b16 %v3315
    %v3424 = vunpack.c.h.b16 %v3315
    %v3425 = vunpack.c.l.b16 %v3316
    %v3426 = vunpack.c.h.b16 %v3316
    %v3427 = vunpack.c.l.b16 %v3317
    %v3428 = vunpack.c.h.b16 %v3317
    %v3429 = vunpack.c.l.b16 %v3318
    %v3430 = vunpack.c.h.b16 %v3318
    %v3431 = vunpack.c.l.b16 %v3319
    %v3432 = vunpack.c.h.b16 %v3319
    %v3433 = vunpack.c.l.b16 %v3320
    %v3434 = vunpack.c.h.b16 %v3320
    %v3435 = vunpack.c.l.b16 %v3321
    %v3436 = vunpack.c.h.b16 %v3321
    %v3437 = vunpack.c.l.b16 %v3322
    %v3438 = vunpack.c.h.b16 %v3322
    %v3439 = vunpack.c.l.b16 %v3323
    %v3440 = vunpack.c.h.b16 %v3323
    %v3441 = vunpack.c.l.b16 %v3324
    %v3442 = vunpack.c.h.b16 %v3324
    %v3443 = vunpack.c.l.b16 %v3325
    %v3444 = vunpack.c.h.b16 %v3325
    %v3445 = vunpack.c.l.b16 %v3326
    %v3446 = vunpack.c.h.b16 %v3326
    %v3447 = vunpack.c.l.b16 %v3327
    %v3448 = vunpack.c.h.b16 %v3327
    %v3449 = vunpack.c.l.b16 %v3328
    %v3450 = vunpack.c.h.b16 %v3328
    %v3451 = vunpack.c.l.b16 %v3329
    %v3452 = vunpack.c.h.b16 %v3329
    %v3453 = vunpack.c.l.b16 %v3330
    %v3454 = vunpack.c.h.b16 %v3330
    %v3455 = vunpack.c.l.b16 %v3331
    %v3456 = vunpack.c.h.b16 %v3331
    %v3457 = vunpack.c.l.b16 %v3332
    %v3458 = vunpack.c.h.b16 %v3332
    %v3459 = vunpack.c.l.b16 %v3333
    %v3460 = vunpack.c.h.b16 %v3333
    %v3461 = vunpack.c.l.b16 %v3334
    %v3462 = vunpack.c.h.b16 %v3334
    %v3463 = vunpack.c.l.b16 %v3335
    %v3464 = vunpack.c.h.b16 %v3335
    %v3465 = vunpack.c.l.b16 %v3336
    %v3466 = vunpack.c.h.b16 %v3336
    %v3467 = vunpack.c.l.b16 %v3337
    %v3468 = vunpack.c.h.b16 %v3337
    %v3469 = vunpack.c.l.b16 %v3338
    %v3470 = vunpack.c.h.b16 %v3338
    %v3471 = vunpack.c.l.b16 %v3339
    %v3472 = vunpack.c.h.b16 %v3339
    %v3473 = vunpack.c.l.b16 %v3340
    %v3474 = vunpack.c.h.b16 %v3340
    %v3475 = vunpack.c.l.b16 %v3341
    %v3476 = vunpack.c.h.b16 %v3341
    %v3477 = vunpack.c.l.b16 %v3342
    %v3478 = vunpack.c.h.b16 %v3342
    %v3479 = vunpack.c.l.b16 %v3343
    %v3480 = vunpack.c.h.b16 %v3343
    %v3481 = vunpack.c.l.b16 %v3344
    %v3482 = vunpack.c.h.b16 %v3344
    %v3483 = vunpack.c.l.b16 %v3345
    %v3484 = vunpack.c.h.b16 %v3345
    %v3485 = vunpack.c.l.b16 %v3346
    %v3486 = vunpack.c.h.b16 %v3346
    %v3487 = vunpack.c.l.b16 %v3347
    %v3488 = vunpack.c.h.b16 %v3347
    %v3489 = vunpack.c.l.b16 %v3348
    %v3490 = vunpack.c.h.b16 %v3348
    %v3491 = vunpack.c.l.b16 %v3349
    %v3492 = vunpack.c.h.b16 %v3349
    %v3493 = vunpack.c.l.b16 %v3350
    %v3494 = vunpack.c.h.b16 %v3350
    %v3495 = vpack.c.b16 %v3405, %v3399
    %v3496 = vpack.c.b16 %v3406, %v3400
    %v3497 = vpack.c.b16 %v3407, %v3401
    %v3498 = vpack.c.b16 %v3408, %v3402
    %v3499 = vpack.c.b16 %v3409, %v3403
    %v3500 = vpack.c.b16 %v3410, %v3404
    %v3501 = vpack.c.b16 %v3417, %v3411
    %v3502 = vpack.c.b16 %v3418, %v3412
    %v3503 = vpack.c.b16 %v3419, %v3413
    %v3504 = vpack.c.b16 %v3420, %v3414
    %v3505 = vpack.c.b16 %v3421, %v3415
    %v3506 = vpack.c.b16 %v3422, %v3416
    %v3507 = vpack.c.b16 %v3429, %v3423
    %v3508 = vpack.c.b16 %v3430, %v3424
    %v3509 = vpack.c.b16 %v3431, %v3425
    %v3510 = vpack.c.b16 %v3432, %v3426
    %v3511 = vpack.c.b16 %v3433, %v3427
    %v3512 = vpack.c.b16 %v3434, %v3428
    %v3513 = vpack.c.b16 %v3441, %v3435
    %v3514 = vpack.c.b16 %v3442, %v3436
    %v3515 = vpack.c.b16 %v3443, %v3437
    %v3516 = vpack.c.b16 %v3444, %v3438
    %v3517 = vpack.c.b16 %v3445, %v3439
    %v3518 = vpack.c.b16 %v3446, %v3440
    %v3519 = vpack.c.b16 %v3453, %v3447
    %v3520 = vpack.c.b16 %v3454, %v3448
    %v3521 = vpack.c.b16 %v3455, %v3449
    %v3522 = vpack.c.b16 %v3456, %v3450
    %v3523 = vpack.c.b16 %v3457, %v3451
    %v3524 = vpack.c.b16 %v3458, %v3452
    %v3525 = vpack.c.b16 %v3465, %v3459
    %v3526 = vpack.c.b16 %v3466, %v3460
    %v3527 = vpack.c.b16 %v3467, %v3461
    %v3528 = vpack.c.b16 %v3468, %v3462
    %v3529 = vpack.c.b16 %v3469, %v3463
    %v3530 = vpack.c.b16 %v3470, %v3464
    %v3531 = vpack.c.b16 %v3477, %v3471
    %v3532 = vpack.c.b16 %v3478, %v3472
    %v3533 = vpack.c.b16 %v3479, %v3473
    %v3534 = vpack.c.b16 %v3480, %v3474
    %v3535 = vpack.c.b16 %v3481, %v3475
    %v3536 = vpack.c.b16 %v3482, %v3476
    %v3537 = vpack.c.b16 %v3489, %v3483
    %v3538 = vpack.c.b16 %v3490, %v3484
    %v3539 = vpack.c.b16 %v3491, %v3485
    %v3540 = vpack.c.b16 %v3492, %v3486
    %v3541 = vpack.c.b16 %v3493, %v3487
    %v3542 = vpack.c.b16 %v3494, %v3488
    %3591 = vmatpush.bf16.msra.mxu0 %v3537
    %3592 = vmatpush.bf16.msra.mxu0 %v3531
    %3593 = vmatpush.bf16.msra.mxu0 %v3525
    %3594 = vmatpush.bf16.msra.mxu0 %v3519
    %3595 = vmatpush.bf16.msra.mxu0 %v3513
    %3596 = vmatpush.bf16.msra.mxu0 %v3507
    %3597 = vmatpush.bf16.msra.mxu0 %v3501
    %3598 = vmatpush.bf16.msra.mxu0 %v3495
    %3599 = vmatmul.bf16.gmra.mxu0 %v3301
    %v3600 = vpop.f32.mrf.mxu0
    %v3601 = vadd.f32 0.0, %v3600
    %v3602 = vpop.f32.mrf.mxu0
    %3603 = vdwg.mxu0
    %3604 = vmatpush.bf16.msra.mxu0 %v3538
    %3605 = vmatpush.bf16.msra.mxu0 %v3532
    %3606 = vmatpush.bf16.msra.mxu0 %v3526
    %3607 = vmatpush.bf16.msra.mxu0 %v3520
    %3608 = vmatpush.bf16.msra.mxu0 %v3514
    %3609 = vmatpush.bf16.msra.mxu0 %v3508
    %3610 = vmatpush.bf16.msra.mxu0 %v3502
    %3611 = vmatpush.bf16.msra.mxu0 %v3496
    %3612 = vmatmul.bf16.gmra.mxu0 %v3301
    %v3613 = vpop.f32.mrf.mxu0
    %v3614 = vadd.f32 0.0, %v3613
    %v3615 = vpop.f32.mrf.mxu0
    %3616 = vdwg.mxu0
    %3617 = vmatpush.bf16.msra.mxu0 %v3539
    %3618 = vmatpush.bf16.msra.mxu0 %v3533
    %3619 = vmatpush.bf16.msra.mxu0 %v3527
    %3620 = vmatpush.bf16.msra.mxu0 %v3521
    %3621 = vmatpush.bf16.msra.mxu0 %v3515
    %3622 = vmatpush.bf16.msra.mxu0 %v3509
    %3623 = vmatpush.bf16.msra.mxu0 %v3503
    %3624 = vmatpush.bf16.msra.mxu0 %v3497
    %3625 = vmatmul.bf16.gmra.mxu0 %v3301
    %v3626 = vpop.f32.mrf.mxu0
    %v3627 = vadd.f32 0.0, %v3626
    %v3628 = vpop.f32.mrf.mxu0
    %3629 = vdwg.mxu0
    %3630 = vmatpush.bf16.msra.mxu0 %v3540
    %3631 = vmatpush.bf16.msra.mxu0 %v3534
    %3632 = vmatpush.bf16.msra.mxu0 %v3528
    %3633 = vmatpush.bf16.msra.mxu0 %v3522
    %3634 = vmatpush.bf16.msra.mxu0 %v3516
    %3635 = vmatpush.bf16.msra.mxu0 %v3510
    %3636 = vmatpush.bf16.msra.mxu0 %v3504
    %3637 = vmatpush.bf16.msra.mxu0 %v3498
    %3638 = vmatmul.bf16.gmra.mxu0 %v3301
    %v3639 = vpop.f32.mrf.mxu0
    %v3640 = vadd.f32 0.0, %v3639
    %v3641 = vpop.f32.mrf.mxu0
    %3642 = vdwg.mxu0
    %3643 = vmatpush.bf16.msra.mxu0 %v3541
    %3644 = vmatpush.bf16.msra.mxu0 %v3535
    %3645 = vmatpush.bf16.msra.mxu0 %v3529
    %3646 = vmatpush.bf16.msra.mxu0 %v3523
    %3647 = vmatpush.bf16.msra.mxu0 %v3517
    %3648 = vmatpush.bf16.msra.mxu0 %v3511
    %3649 = vmatpush.bf16.msra.mxu0 %v3505
    %3650 = vmatpush.bf16.msra.mxu0 %v3499
    %3651 = vmatmul.bf16.gmra.mxu0 %v3301
    %v3652 = vpop.f32.mrf.mxu0
    %v3653 = vadd.f32 0.0, %v3652
    %v3654 = vpop.f32.mrf.mxu0
    %3655 = vdwg.mxu0
    %3656 = vmatpush.bf16.msra.mxu0 %v3542
    %3657 = vmatpush.bf16.msra.mxu0 %v3536
    %3658 = vmatpush.bf16.msra.mxu0 %v3530
    %3659 = vmatpush.bf16.msra.mxu0 %v3524
    %3660 = vmatpush.bf16.msra.mxu0 %v3518
    %3661 = vmatpush.bf16.msra.mxu0 %v3512
    %3662 = vmatpush.bf16.msra.mxu0 %v3506
    %3663 = vmatpush.bf16.msra.mxu0 %v3500
    %3664 = vmatmul.bf16.gmra.mxu0 %v3301
    %v3665 = vpop.f32.mrf.mxu0
    %v3666 = vadd.f32 0.0, %v3665
    %v3667 = vpop.f32.mrf.mxu0
    %3668 = vdwg.mxu0
    %v3669 = vadd.f32 %v3293, %v3601
    %v3670 = vadd.f32 %v3294, %v3614
    %v3671 = vadd.f32 %v3295, %v3627
    %v3672 = vadd.f32 %v3296, %v3640
    %v3673 = vadd.f32 %v3297, %v3653
    %v3674 = vadd.f32 %v3298, %v3666
    %s3675 = scalar_lea.vmem [#allocation3], 8
    %v3676 = vld [vmem:[%s3675] ss:$25 sm:$0x3]
    %v3677 = vpack.c.bf16 %v3676, %v3676
    %s3678 = scalar_lea.vmem [#allocation10], 3072
    %v3679 = vld [vmem:[%s3678] sm:$0xff]
    %v3680 = vld [vmem:[%s3678 + $0x8] sm:$0xff]
    %v3681 = vld [vmem:[%s3678 + $0x10] sm:$0xff]
    %v3682 = vld [vmem:[%s3678 + $0x18] sm:$0xff]
    %v3683 = vld [vmem:[%s3678 + $0x20] sm:$0xff]
    %v3684 = vld [vmem:[%s3678 + $0x28] sm:$0xff]
    %v3685 = vld [vmem:[%s3678 + $0x30] sm:$0xff]
    %v3686 = vld [vmem:[%s3678 + $0x38] sm:$0xff]
    %v3687 = vld [vmem:[%s3678 + $0x40] sm:$0xff]
    %v3688 = vld [vmem:[%s3678 + $0x48] sm:$0xff]
    %v3689 = vld [vmem:[%s3678 + $0x50] sm:$0xff]
    %v3690 = vld [vmem:[%s3678 + $0x58] sm:$0xff]
    %v3691 = vld [vmem:[%s3678 + $0x60] sm:$0xff]
    %v3692 = vld [vmem:[%s3678 + $0x68] sm:$0xff]
    %v3693 = vld [vmem:[%s3678 + $0x70] sm:$0xff]
    %v3694 = vld [vmem:[%s3678 + $0x78] sm:$0xff]
    %v3695 = vld [vmem:[%s3678 + $0x80] sm:$0xff]
    %v3696 = vld [vmem:[%s3678 + $0x88] sm:$0xff]
    %v3697 = vld [vmem:[%s3678 + $0x90] sm:$0xff]
    %v3698 = vld [vmem:[%s3678 + $0x98] sm:$0xff]
    %v3699 = vld [vmem:[%s3678 + $0xa0] sm:$0xff]
    %v3700 = vld [vmem:[%s3678 + $0xa8] sm:$0xff]
    %v3701 = vld [vmem:[%s3678 + $0xb0] sm:$0xff]
    %v3702 = vld [vmem:[%s3678 + $0xb8] sm:$0xff]
    %v3703 = vld [vmem:[%s3678 + $0xc0] sm:$0xff]
    %v3704 = vld [vmem:[%s3678 + $0xc8] sm:$0xff]
    %v3705 = vld [vmem:[%s3678 + $0xd0] sm:$0xff]
    %v3706 = vld [vmem:[%s3678 + $0xd8] sm:$0xff]
    %v3707 = vld [vmem:[%s3678 + $0xe0] sm:$0xff]
    %v3708 = vld [vmem:[%s3678 + $0xe8] sm:$0xff]
    %v3709 = vld [vmem:[%s3678 + $0xf0] sm:$0xff]
    %v3710 = vld [vmem:[%s3678 + $0xf8] sm:$0xff]
    %v3711 = vld [vmem:[%s3678 + $0x100] sm:$0xff]
    %v3712 = vld [vmem:[%s3678 + $0x108] sm:$0xff]
    %v3713 = vld [vmem:[%s3678 + $0x110] sm:$0xff]
    %v3714 = vld [vmem:[%s3678 + $0x118] sm:$0xff]
    %v3715 = vld [vmem:[%s3678 + $0x120] sm:$0xff]
    %v3716 = vld [vmem:[%s3678 + $0x128] sm:$0xff]
    %v3717 = vld [vmem:[%s3678 + $0x130] sm:$0xff]
    %v3718 = vld [vmem:[%s3678 + $0x138] sm:$0xff]
    %v3719 = vld [vmem:[%s3678 + $0x140] sm:$0xff]
    %v3720 = vld [vmem:[%s3678 + $0x148] sm:$0xff]
    %v3721 = vld [vmem:[%s3678 + $0x150] sm:$0xff]
    %v3722 = vld [vmem:[%s3678 + $0x158] sm:$0xff]
    %v3723 = vld [vmem:[%s3678 + $0x160] sm:$0xff]
    %v3724 = vld [vmem:[%s3678 + $0x168] sm:$0xff]
    %v3725 = vld [vmem:[%s3678 + $0x170] sm:$0xff]
    %v3726 = vld [vmem:[%s3678 + $0x178] sm:$0xff]
    %v3775 = vunpack.c.l.b16 %v3679
    %v3776 = vunpack.c.h.b16 %v3679
    %v3777 = vunpack.c.l.b16 %v3680
    %v3778 = vunpack.c.h.b16 %v3680
    %v3779 = vunpack.c.l.b16 %v3681
    %v3780 = vunpack.c.h.b16 %v3681
    %v3781 = vunpack.c.l.b16 %v3682
    %v3782 = vunpack.c.h.b16 %v3682
    %v3783 = vunpack.c.l.b16 %v3683
    %v3784 = vunpack.c.h.b16 %v3683
    %v3785 = vunpack.c.l.b16 %v3684
    %v3786 = vunpack.c.h.b16 %v3684
    %v3787 = vunpack.c.l.b16 %v3685
    %v3788 = vunpack.c.h.b16 %v3685
    %v3789 = vunpack.c.l.b16 %v3686
    %v3790 = vunpack.c.h.b16 %v3686
    %v3791 = vunpack.c.l.b16 %v3687
    %v3792 = vunpack.c.h.b16 %v3687
    %v3793 = vunpack.c.l.b16 %v3688
    %v3794 = vunpack.c.h.b16 %v3688
    %v3795 = vunpack.c.l.b16 %v3689
    %v3796 = vunpack.c.h.b16 %v3689
    %v3797 = vunpack.c.l.b16 %v3690
    %v3798 = vunpack.c.h.b16 %v3690
    %v3799 = vunpack.c.l.b16 %v3691
    %v3800 = vunpack.c.h.b16 %v3691
    %v3801 = vunpack.c.l.b16 %v3692
    %v3802 = vunpack.c.h.b16 %v3692
    %v3803 = vunpack.c.l.b16 %v3693
    %v3804 = vunpack.c.h.b16 %v3693
    %v3805 = vunpack.c.l.b16 %v3694
    %v3806 = vunpack.c.h.b16 %v3694
    %v3807 = vunpack.c.l.b16 %v3695
    %v3808 = vunpack.c.h.b16 %v3695
    %v3809 = vunpack.c.l.b16 %v3696
    %v3810 = vunpack.c.h.b16 %v3696
    %v3811 = vunpack.c.l.b16 %v3697
    %v3812 = vunpack.c.h.b16 %v3697
    %v3813 = vunpack.c.l.b16 %v3698
    %v3814 = vunpack.c.h.b16 %v3698
    %v3815 = vunpack.c.l.b16 %v3699
    %v3816 = vunpack.c.h.b16 %v3699
    %v3817 = vunpack.c.l.b16 %v3700
    %v3818 = vunpack.c.h.b16 %v3700
    %v3819 = vunpack.c.l.b16 %v3701
    %v3820 = vunpack.c.h.b16 %v3701
    %v3821 = vunpack.c.l.b16 %v3702
    %v3822 = vunpack.c.h.b16 %v3702
    %v3823 = vunpack.c.l.b16 %v3703
    %v3824 = vunpack.c.h.b16 %v3703
    %v3825 = vunpack.c.l.b16 %v3704
    %v3826 = vunpack.c.h.b16 %v3704
    %v3827 = vunpack.c.l.b16 %v3705
    %v3828 = vunpack.c.h.b16 %v3705
    %v3829 = vunpack.c.l.b16 %v3706
    %v3830 = vunpack.c.h.b16 %v3706
    %v3831 = vunpack.c.l.b16 %v3707
    %v3832 = vunpack.c.h.b16 %v3707
    %v3833 = vunpack.c.l.b16 %v3708
    %v3834 = vunpack.c.h.b16 %v3708
    %v3835 = vunpack.c.l.b16 %v3709
    %v3836 = vunpack.c.h.b16 %v3709
    %v3837 = vunpack.c.l.b16 %v3710
    %v3838 = vunpack.c.h.b16 %v3710
    %v3839 = vunpack.c.l.b16 %v3711
    %v3840 = vunpack.c.h.b16 %v3711
    %v3841 = vunpack.c.l.b16 %v3712
    %v3842 = vunpack.c.h.b16 %v3712
    %v3843 = vunpack.c.l.b16 %v3713
    %v3844 = vunpack.c.h.b16 %v3713
    %v3845 = vunpack.c.l.b16 %v3714
    %v3846 = vunpack.c.h.b16 %v3714
    %v3847 = vunpack.c.l.b16 %v3715
    %v3848 = vunpack.c.h.b16 %v3715
    %v3849 = vunpack.c.l.b16 %v3716
    %v3850 = vunpack.c.h.b16 %v3716
    %v3851 = vunpack.c.l.b16 %v3717
    %v3852 = vunpack.c.h.b16 %v3717
    %v3853 = vunpack.c.l.b16 %v3718
    %v3854 = vunpack.c.h.b16 %v3718
    %v3855 = vunpack.c.l.b16 %v3719
    %v3856 = vunpack.c.h.b16 %v3719
    %v3857 = vunpack.c.l.b16 %v3720
    %v3858 = vunpack.c.h.b16 %v3720
    %v3859 = vunpack.c.l.b16 %v3721
    %v3860 = vunpack.c.h.b16 %v3721
    %v3861 = vunpack.c.l.b16 %v3722
    %v3862 = vunpack.c.h.b16 %v3722
    %v3863 = vunpack.c.l.b16 %v3723
    %v3864 = vunpack.c.h.b16 %v3723
    %v3865 = vunpack.c.l.b16 %v3724
    %v3866 = vunpack.c.h.b16 %v3724
    %v3867 = vunpack.c.l.b16 %v3725
    %v3868 = vunpack.c.h.b16 %v3725
    %v3869 = vunpack.c.l.b16 %v3726
    %v3870 = vunpack.c.h.b16 %v3726
    %v3871 = vpack.c.b16 %v3781, %v3775
    %v3872 = vpack.c.b16 %v3782, %v3776
    %v3873 = vpack.c.b16 %v3783, %v3777
    %v3874 = vpack.c.b16 %v3784, %v3778
    %v3875 = vpack.c.b16 %v3785, %v3779
    %v3876 = vpack.c.b16 %v3786, %v3780
    %v3877 = vpack.c.b16 %v3793, %v3787
    %v3878 = vpack.c.b16 %v3794, %v3788
    %v3879 = vpack.c.b16 %v3795, %v3789
    %v3880 = vpack.c.b16 %v3796, %v3790
    %v3881 = vpack.c.b16 %v3797, %v3791
    %v3882 = vpack.c.b16 %v3798, %v3792
    %v3883 = vpack.c.b16 %v3805, %v3799
    %v3884 = vpack.c.b16 %v3806, %v3800
    %v3885 = vpack.c.b16 %v3807, %v3801
    %v3886 = vpack.c.b16 %v3808, %v3802
    %v3887 = vpack.c.b16 %v3809, %v3803
    %v3888 = vpack.c.b16 %v3810, %v3804
    %v3889 = vpack.c.b16 %v3817, %v3811
    %v3890 = vpack.c.b16 %v3818, %v3812
    %v3891 = vpack.c.b16 %v3819, %v3813
    %v3892 = vpack.c.b16 %v3820, %v3814
    %v3893 = vpack.c.b16 %v3821, %v3815
    %v3894 = vpack.c.b16 %v3822, %v3816
    %v3895 = vpack.c.b16 %v3829, %v3823
    %v3896 = vpack.c.b16 %v3830, %v3824
    %v3897 = vpack.c.b16 %v3831, %v3825
    %v3898 = vpack.c.b16 %v3832, %v3826
    %v3899 = vpack.c.b16 %v3833, %v3827
    %v3900 = vpack.c.b16 %v3834, %v3828
    %v3901 = vpack.c.b16 %v3841, %v3835
    %v3902 = vpack.c.b16 %v3842, %v3836
    %v3903 = vpack.c.b16 %v3843, %v3837
    %v3904 = vpack.c.b16 %v3844, %v3838
    %v3905 = vpack.c.b16 %v3845, %v3839
    %v3906 = vpack.c.b16 %v3846, %v3840
    %v3907 = vpack.c.b16 %v3853, %v3847
    %v3908 = vpack.c.b16 %v3854, %v3848
    %v3909 = vpack.c.b16 %v3855, %v3849
    %v3910 = vpack.c.b16 %v3856, %v3850
    %v3911 = vpack.c.b16 %v3857, %v3851
    %v3912 = vpack.c.b16 %v3858, %v3852
    %v3913 = vpack.c.b16 %v3865, %v3859
    %v3914 = vpack.c.b16 %v3866, %v3860
    %v3915 = vpack.c.b16 %v3867, %v3861
    %v3916 = vpack.c.b16 %v3868, %v3862
    %v3917 = vpack.c.b16 %v3869, %v3863
    %v3918 = vpack.c.b16 %v3870, %v3864
    %3967 = vmatpush.bf16.msra.mxu0 %v3913
    %3968 = vmatpush.bf16.msra.mxu0 %v3907
    %3969 = vmatpush.bf16.msra.mxu0 %v3901
    %3970 = vmatpush.bf16.msra.mxu0 %v3895
    %3971 = vmatpush.bf16.msra.mxu0 %v3889
    %3972 = vmatpush.bf16.msra.mxu0 %v3883
    %3973 = vmatpush.bf16.msra.mxu0 %v3877
    %3974 = vmatpush.bf16.msra.mxu0 %v3871
    %3975 = vmatmul.bf16.gmra.mxu0 %v3677
    %v3976 = vpop.f32.mrf.mxu0
    %v3977 = vadd.f32 0.0, %v3976
    %v3978 = vpop.f32.mrf.mxu0
    %3979 = vdwg.mxu0
    %3980 = vmatpush.bf16.msra.mxu0 %v3914
    %3981 = vmatpush.bf16.msra.mxu0 %v3908
    %3982 = vmatpush.bf16.msra.mxu0 %v3902
    %3983 = vmatpush.bf16.msra.mxu0 %v3896
    %3984 = vmatpush.bf16.msra.mxu0 %v3890
    %3985 = vmatpush.bf16.msra.mxu0 %v3884
    %3986 = vmatpush.bf16.msra.mxu0 %v3878
    %3987 = vmatpush.bf16.msra.mxu0 %v3872
    %3988 = vmatmul.bf16.gmra.mxu0 %v3677
    %v3989 = vpop.f32.mrf.mxu0
    %v3990 = vadd.f32 0.0, %v3989
    %v3991 = vpop.f32.mrf.mxu0
    %3992 = vdwg.mxu0
    %3993 = vmatpush.bf16.msra.mxu0 %v3915
    %3994 = vmatpush.bf16.msra.mxu0 %v3909
    %3995 = vmatpush.bf16.msra.mxu0 %v3903
    %3996 = vmatpush.bf16.msra.mxu0 %v3897
    %3997 = vmatpush.bf16.msra.mxu0 %v3891
    %3998 = vmatpush.bf16.msra.mxu0 %v3885
    %3999 = vmatpush.bf16.msra.mxu0 %v3879
    %4000 = vmatpush.bf16.msra.mxu0 %v3873
    %4001 = vmatmul.bf16.gmra.mxu0 %v3677
    %v4002 = vpop.f32.mrf.mxu0
    %v4003 = vadd.f32 0.0, %v4002
    %v4004 = vpop.f32.mrf.mxu0
    %4005 = vdwg.mxu0
    %4006 = vmatpush.bf16.msra.mxu0 %v3916
    %4007 = vmatpush.bf16.msra.mxu0 %v3910
    %4008 = vmatpush.bf16.msra.mxu0 %v3904
    %4009 = vmatpush.bf16.msra.mxu0 %v3898
    %4010 = vmatpush.bf16.msra.mxu0 %v3892
    %4011 = vmatpush.bf16.msra.mxu0 %v3886
    %4012 = vmatpush.bf16.msra.mxu0 %v3880
    %4013 = vmatpush.bf16.msra.mxu0 %v3874
    %4014 = vmatmul.bf16.gmra.mxu0 %v3677
    %v4015 = vpop.f32.mrf.mxu0
    %v4016 = vadd.f32 0.0, %v4015
    %v4017 = vpop.f32.mrf.mxu0
    %4018 = vdwg.mxu0
    %4019 = vmatpush.bf16.msra.mxu0 %v3917
    %4020 = vmatpush.bf16.msra.mxu0 %v3911
    %4021 = vmatpush.bf16.msra.mxu0 %v3905
    %4022 = vmatpush.bf16.msra.mxu0 %v3899
    %4023 = vmatpush.bf16.msra.mxu0 %v3893
    %4024 = vmatpush.bf16.msra.mxu0 %v3887
    %4025 = vmatpush.bf16.msra.mxu0 %v3881
    %4026 = vmatpush.bf16.msra.mxu0 %v3875
    %4027 = vmatmul.bf16.gmra.mxu0 %v3677
    %v4028 = vpop.f32.mrf.mxu0
    %v4029 = vadd.f32 0.0, %v4028
    %v4030 = vpop.f32.mrf.mxu0
    %4031 = vdwg.mxu0
    %4032 = vmatpush.bf16.msra.mxu0 %v3918
    %4033 = vmatpush.bf16.msra.mxu0 %v3912
    %4034 = vmatpush.bf16.msra.mxu0 %v3906
    %4035 = vmatpush.bf16.msra.mxu0 %v3900
    %4036 = vmatpush.bf16.msra.mxu0 %v3894
    %4037 = vmatpush.bf16.msra.mxu0 %v3888
    %4038 = vmatpush.bf16.msra.mxu0 %v3882
    %4039 = vmatpush.bf16.msra.mxu0 %v3876
    %4040 = vmatmul.bf16.gmra.mxu0 %v3677
    %v4041 = vpop.f32.mrf.mxu0
    %v4042 = vadd.f32 0.0, %v4041
    %v4043 = vpop.f32.mrf.mxu0
    %4044 = vdwg.mxu0
    %v4045 = vadd.f32 %v3669, %v3977
    %v4046 = vadd.f32 %v3670, %v3990
    %v4047 = vadd.f32 %v3671, %v4003
    %v4048 = vadd.f32 %v3672, %v4016
    %v4049 = vadd.f32 %v3673, %v4029
    %v4050 = vadd.f32 %v3674, %v4042
    %s4051 = scalar_lea.vmem [#allocation3], 9
    %v4052 = vld [vmem:[%s4051] ss:$25 sm:$0x3]
    %v4053 = vpack.c.bf16 %v4052, %v4052
    %s4054 = scalar_lea.vmem [#allocation10], 3456
    %v4055 = vld [vmem:[%s4054] sm:$0xff]
    %v4056 = vld [vmem:[%s4054 + $0x8] sm:$0xff]
    %v4057 = vld [vmem:[%s4054 + $0x10] sm:$0xff]
    %v4058 = vld [vmem:[%s4054 + $0x18] sm:$0xff]
    %v4059 = vld [vmem:[%s4054 + $0x20] sm:$0xff]
    %v4060 = vld [vmem:[%s4054 + $0x28] sm:$0xff]
    %v4061 = vld [vmem:[%s4054 + $0x30] sm:$0xff]
    %v4062 = vld [vmem:[%s4054 + $0x38] sm:$0xff]
    %v4063 = vld [vmem:[%s4054 + $0x40] sm:$0xff]
    %v4064 = vld [vmem:[%s4054 + $0x48] sm:$0xff]
    %v4065 = vld [vmem:[%s4054 + $0x50] sm:$0xff]
    %v4066 = vld [vmem:[%s4054 + $0x58] sm:$0xff]
    %v4067 = vld [vmem:[%s4054 + $0x60] sm:$0xff]
    %v4068 = vld [vmem:[%s4054 + $0x68] sm:$0xff]
    %v4069 = vld [vmem:[%s4054 + $0x70] sm:$0xff]
    %v4070 = vld [vmem:[%s4054 + $0x78] sm:$0xff]
    %v4071 = vld [vmem:[%s4054 + $0x80] sm:$0xff]
    %v4072 = vld [vmem:[%s4054 + $0x88] sm:$0xff]
    %v4073 = vld [vmem:[%s4054 + $0x90] sm:$0xff]
    %v4074 = vld [vmem:[%s4054 + $0x98] sm:$0xff]
    %v4075 = vld [vmem:[%s4054 + $0xa0] sm:$0xff]
    %v4076 = vld [vmem:[%s4054 + $0xa8] sm:$0xff]
    %v4077 = vld [vmem:[%s4054 + $0xb0] sm:$0xff]
    %v4078 = vld [vmem:[%s4054 + $0xb8] sm:$0xff]
    %v4079 = vld [vmem:[%s4054 + $0xc0] sm:$0xff]
    %v4080 = vld [vmem:[%s4054 + $0xc8] sm:$0xff]
    %v4081 = vld [vmem:[%s4054 + $0xd0] sm:$0xff]
    %v4082 = vld [vmem:[%s4054 + $0xd8] sm:$0xff]
    %v4083 = vld [vmem:[%s4054 + $0xe0] sm:$0xff]
    %v4084 = vld [vmem:[%s4054 + $0xe8] sm:$0xff]
    %v4085 = vld [vmem:[%s4054 + $0xf0] sm:$0xff]
    %v4086 = vld [vmem:[%s4054 + $0xf8] sm:$0xff]
    %v4087 = vld [vmem:[%s4054 + $0x100] sm:$0xff]
    %v4088 = vld [vmem:[%s4054 + $0x108] sm:$0xff]
    %v4089 = vld [vmem:[%s4054 + $0x110] sm:$0xff]
    %v4090 = vld [vmem:[%s4054 + $0x118] sm:$0xff]
    %v4091 = vld [vmem:[%s4054 + $0x120] sm:$0xff]
    %v4092 = vld [vmem:[%s4054 + $0x128] sm:$0xff]
    %v4093 = vld [vmem:[%s4054 + $0x130] sm:$0xff]
    %v4094 = vld [vmem:[%s4054 + $0x138] sm:$0xff]
    %v4095 = vld [vmem:[%s4054 + $0x140] sm:$0xff]
    %v4096 = vld [vmem:[%s4054 + $0x148] sm:$0xff]
    %v4097 = vld [vmem:[%s4054 + $0x150] sm:$0xff]
    %v4098 = vld [vmem:[%s4054 + $0x158] sm:$0xff]
    %v4099 = vld [vmem:[%s4054 + $0x160] sm:$0xff]
    %v4100 = vld [vmem:[%s4054 + $0x168] sm:$0xff]
    %v4101 = vld [vmem:[%s4054 + $0x170] sm:$0xff]
    %v4102 = vld [vmem:[%s4054 + $0x178] sm:$0xff]
    %v4151 = vunpack.c.l.b16 %v4055
    %v4152 = vunpack.c.h.b16 %v4055
    %v4153 = vunpack.c.l.b16 %v4056
    %v4154 = vunpack.c.h.b16 %v4056
    %v4155 = vunpack.c.l.b16 %v4057
    %v4156 = vunpack.c.h.b16 %v4057
    %v4157 = vunpack.c.l.b16 %v4058
    %v4158 = vunpack.c.h.b16 %v4058
    %v4159 = vunpack.c.l.b16 %v4059
    %v4160 = vunpack.c.h.b16 %v4059
    %v4161 = vunpack.c.l.b16 %v4060
    %v4162 = vunpack.c.h.b16 %v4060
    %v4163 = vunpack.c.l.b16 %v4061
    %v4164 = vunpack.c.h.b16 %v4061
    %v4165 = vunpack.c.l.b16 %v4062
    %v4166 = vunpack.c.h.b16 %v4062
    %v4167 = vunpack.c.l.b16 %v4063
    %v4168 = vunpack.c.h.b16 %v4063
    %v4169 = vunpack.c.l.b16 %v4064
    %v4170 = vunpack.c.h.b16 %v4064
    %v4171 = vunpack.c.l.b16 %v4065
    %v4172 = vunpack.c.h.b16 %v4065
    %v4173 = vunpack.c.l.b16 %v4066
    %v4174 = vunpack.c.h.b16 %v4066
    %v4175 = vunpack.c.l.b16 %v4067
    %v4176 = vunpack.c.h.b16 %v4067
    %v4177 = vunpack.c.l.b16 %v4068
    %v4178 = vunpack.c.h.b16 %v4068
    %v4179 = vunpack.c.l.b16 %v4069
    %v4180 = vunpack.c.h.b16 %v4069
    %v4181 = vunpack.c.l.b16 %v4070
    %v4182 = vunpack.c.h.b16 %v4070
    %v4183 = vunpack.c.l.b16 %v4071
    %v4184 = vunpack.c.h.b16 %v4071
    %v4185 = vunpack.c.l.b16 %v4072
    %v4186 = vunpack.c.h.b16 %v4072
    %v4187 = vunpack.c.l.b16 %v4073
    %v4188 = vunpack.c.h.b16 %v4073
    %v4189 = vunpack.c.l.b16 %v4074
    %v4190 = vunpack.c.h.b16 %v4074
    %v4191 = vunpack.c.l.b16 %v4075
    %v4192 = vunpack.c.h.b16 %v4075
    %v4193 = vunpack.c.l.b16 %v4076
    %v4194 = vunpack.c.h.b16 %v4076
    %v4195 = vunpack.c.l.b16 %v4077
    %v4196 = vunpack.c.h.b16 %v4077
    %v4197 = vunpack.c.l.b16 %v4078
    %v4198 = vunpack.c.h.b16 %v4078
    %v4199 = vunpack.c.l.b16 %v4079
    %v4200 = vunpack.c.h.b16 %v4079
    %v4201 = vunpack.c.l.b16 %v4080
    %v4202 = vunpack.c.h.b16 %v4080
    %v4203 = vunpack.c.l.b16 %v4081
    %v4204 = vunpack.c.h.b16 %v4081
    %v4205 = vunpack.c.l.b16 %v4082
    %v4206 = vunpack.c.h.b16 %v4082
    %v4207 = vunpack.c.l.b16 %v4083
    %v4208 = vunpack.c.h.b16 %v4083
    %v4209 = vunpack.c.l.b16 %v4084
    %v4210 = vunpack.c.h.b16 %v4084
    %v4211 = vunpack.c.l.b16 %v4085
    %v4212 = vunpack.c.h.b16 %v4085
    %v4213 = vunpack.c.l.b16 %v4086
    %v4214 = vunpack.c.h.b16 %v4086
    %v4215 = vunpack.c.l.b16 %v4087
    %v4216 = vunpack.c.h.b16 %v4087
    %v4217 = vunpack.c.l.b16 %v4088
    %v4218 = vunpack.c.h.b16 %v4088
    %v4219 = vunpack.c.l.b16 %v4089
    %v4220 = vunpack.c.h.b16 %v4089
    %v4221 = vunpack.c.l.b16 %v4090
    %v4222 = vunpack.c.h.b16 %v4090
    %v4223 = vunpack.c.l.b16 %v4091
    %v4224 = vunpack.c.h.b16 %v4091
    %v4225 = vunpack.c.l.b16 %v4092
    %v4226 = vunpack.c.h.b16 %v4092
    %v4227 = vunpack.c.l.b16 %v4093
    %v4228 = vunpack.c.h.b16 %v4093
    %v4229 = vunpack.c.l.b16 %v4094
    %v4230 = vunpack.c.h.b16 %v4094
    %v4231 = vunpack.c.l.b16 %v4095
    %v4232 = vunpack.c.h.b16 %v4095
    %v4233 = vunpack.c.l.b16 %v4096
    %v4234 = vunpack.c.h.b16 %v4096
    %v4235 = vunpack.c.l.b16 %v4097
    %v4236 = vunpack.c.h.b16 %v4097
    %v4237 = vunpack.c.l.b16 %v4098
    %v4238 = vunpack.c.h.b16 %v4098
    %v4239 = vunpack.c.l.b16 %v4099
    %v4240 = vunpack.c.h.b16 %v4099
    %v4241 = vunpack.c.l.b16 %v4100
    %v4242 = vunpack.c.h.b16 %v4100
    %v4243 = vunpack.c.l.b16 %v4101
    %v4244 = vunpack.c.h.b16 %v4101
    %v4245 = vunpack.c.l.b16 %v4102
    %v4246 = vunpack.c.h.b16 %v4102
    %v4247 = vpack.c.b16 %v4157, %v4151
    %v4248 = vpack.c.b16 %v4158, %v4152
    %v4249 = vpack.c.b16 %v4159, %v4153
    %v4250 = vpack.c.b16 %v4160, %v4154
    %v4251 = vpack.c.b16 %v4161, %v4155
    %v4252 = vpack.c.b16 %v4162, %v4156
    %v4253 = vpack.c.b16 %v4169, %v4163
    %v4254 = vpack.c.b16 %v4170, %v4164
    %v4255 = vpack.c.b16 %v4171, %v4165
    %v4256 = vpack.c.b16 %v4172, %v4166
    %v4257 = vpack.c.b16 %v4173, %v4167
    %v4258 = vpack.c.b16 %v4174, %v4168
    %v4259 = vpack.c.b16 %v4181, %v4175
    %v4260 = vpack.c.b16 %v4182, %v4176
    %v4261 = vpack.c.b16 %v4183, %v4177
    %v4262 = vpack.c.b16 %v4184, %v4178
    %v4263 = vpack.c.b16 %v4185, %v4179
    %v4264 = vpack.c.b16 %v4186, %v4180
    %v4265 = vpack.c.b16 %v4193, %v4187
    %v4266 = vpack.c.b16 %v4194, %v4188
    %v4267 = vpack.c.b16 %v4195, %v4189
    %v4268 = vpack.c.b16 %v4196, %v4190
    %v4269 = vpack.c.b16 %v4197, %v4191
    %v4270 = vpack.c.b16 %v4198, %v4192
    %v4271 = vpack.c.b16 %v4205, %v4199
    %v4272 = vpack.c.b16 %v4206, %v4200
    %v4273 = vpack.c.b16 %v4207, %v4201
    %v4274 = vpack.c.b16 %v4208, %v4202
    %v4275 = vpack.c.b16 %v4209, %v4203
    %v4276 = vpack.c.b16 %v4210, %v4204
    %v4277 = vpack.c.b16 %v4217, %v4211
    %v4278 = vpack.c.b16 %v4218, %v4212
    %v4279 = vpack.c.b16 %v4219, %v4213
    %v4280 = vpack.c.b16 %v4220, %v4214
    %v4281 = vpack.c.b16 %v4221, %v4215
    %v4282 = vpack.c.b16 %v4222, %v4216
    %v4283 = vpack.c.b16 %v4229, %v4223
    %v4284 = vpack.c.b16 %v4230, %v4224
    %v4285 = vpack.c.b16 %v4231, %v4225
    %v4286 = vpack.c.b16 %v4232, %v4226
    %v4287 = vpack.c.b16 %v4233, %v4227
    %v4288 = vpack.c.b16 %v4234, %v4228
    %v4289 = vpack.c.b16 %v4241, %v4235
    %v4290 = vpack.c.b16 %v4242, %v4236
    %v4291 = vpack.c.b16 %v4243, %v4237
    %v4292 = vpack.c.b16 %v4244, %v4238
    %v4293 = vpack.c.b16 %v4245, %v4239
    %v4294 = vpack.c.b16 %v4246, %v4240
    %4343 = vmatpush.bf16.msra.mxu0 %v4289
    %4344 = vmatpush.bf16.msra.mxu0 %v4283
    %4345 = vmatpush.bf16.msra.mxu0 %v4277
    %4346 = vmatpush.bf16.msra.mxu0 %v4271
    %4347 = vmatpush.bf16.msra.mxu0 %v4265
    %4348 = vmatpush.bf16.msra.mxu0 %v4259
    %4349 = vmatpush.bf16.msra.mxu0 %v4253
    %4350 = vmatpush.bf16.msra.mxu0 %v4247
    %4351 = vmatmul.bf16.gmra.mxu0 %v4053
    %v4352 = vpop.f32.mrf.mxu0
    %v4353 = vadd.f32 0.0, %v4352
    %v4354 = vpop.f32.mrf.mxu0
    %4355 = vdwg.mxu0
    %4356 = vmatpush.bf16.msra.mxu0 %v4290
    %4357 = vmatpush.bf16.msra.mxu0 %v4284
    %4358 = vmatpush.bf16.msra.mxu0 %v4278
    %4359 = vmatpush.bf16.msra.mxu0 %v4272
    %4360 = vmatpush.bf16.msra.mxu0 %v4266
    %4361 = vmatpush.bf16.msra.mxu0 %v4260
    %4362 = vmatpush.bf16.msra.mxu0 %v4254
    %4363 = vmatpush.bf16.msra.mxu0 %v4248
    %4364 = vmatmul.bf16.gmra.mxu0 %v4053
    %v4365 = vpop.f32.mrf.mxu0
    %v4366 = vadd.f32 0.0, %v4365
    %v4367 = vpop.f32.mrf.mxu0
    %4368 = vdwg.mxu0
    %4369 = vmatpush.bf16.msra.mxu0 %v4291
    %4370 = vmatpush.bf16.msra.mxu0 %v4285
    %4371 = vmatpush.bf16.msra.mxu0 %v4279
    %4372 = vmatpush.bf16.msra.mxu0 %v4273
    %4373 = vmatpush.bf16.msra.mxu0 %v4267
    %4374 = vmatpush.bf16.msra.mxu0 %v4261
    %4375 = vmatpush.bf16.msra.mxu0 %v4255
    %4376 = vmatpush.bf16.msra.mxu0 %v4249
    %4377 = vmatmul.bf16.gmra.mxu0 %v4053
    %v4378 = vpop.f32.mrf.mxu0
    %v4379 = vadd.f32 0.0, %v4378
    %v4380 = vpop.f32.mrf.mxu0
    %4381 = vdwg.mxu0
    %4382 = vmatpush.bf16.msra.mxu0 %v4292
    %4383 = vmatpush.bf16.msra.mxu0 %v4286
    %4384 = vmatpush.bf16.msra.mxu0 %v4280
    %4385 = vmatpush.bf16.msra.mxu0 %v4274
    %4386 = vmatpush.bf16.msra.mxu0 %v4268
    %4387 = vmatpush.bf16.msra.mxu0 %v4262
    %4388 = vmatpush.bf16.msra.mxu0 %v4256
    %4389 = vmatpush.bf16.msra.mxu0 %v4250
    %4390 = vmatmul.bf16.gmra.mxu0 %v4053
    %v4391 = vpop.f32.mrf.mxu0
    %v4392 = vadd.f32 0.0, %v4391
    %v4393 = vpop.f32.mrf.mxu0
    %4394 = vdwg.mxu0
    %4395 = vmatpush.bf16.msra.mxu0 %v4293
    %4396 = vmatpush.bf16.msra.mxu0 %v4287
    %4397 = vmatpush.bf16.msra.mxu0 %v4281
    %4398 = vmatpush.bf16.msra.mxu0 %v4275
    %4399 = vmatpush.bf16.msra.mxu0 %v4269
    %4400 = vmatpush.bf16.msra.mxu0 %v4263
    %4401 = vmatpush.bf16.msra.mxu0 %v4257
    %4402 = vmatpush.bf16.msra.mxu0 %v4251
    %4403 = vmatmul.bf16.gmra.mxu0 %v4053
    %v4404 = vpop.f32.mrf.mxu0
    %v4405 = vadd.f32 0.0, %v4404
    %v4406 = vpop.f32.mrf.mxu0
    %4407 = vdwg.mxu0
    %4408 = vmatpush.bf16.msra.mxu0 %v4294
    %4409 = vmatpush.bf16.msra.mxu0 %v4288
    %4410 = vmatpush.bf16.msra.mxu0 %v4282
    %4411 = vmatpush.bf16.msra.mxu0 %v4276
    %4412 = vmatpush.bf16.msra.mxu0 %v4270
    %4413 = vmatpush.bf16.msra.mxu0 %v4264
    %4414 = vmatpush.bf16.msra.mxu0 %v4258
    %4415 = vmatpush.bf16.msra.mxu0 %v4252
    %4416 = vmatmul.bf16.gmra.mxu0 %v4053
    %v4417 = vpop.f32.mrf.mxu0
    %v4418 = vadd.f32 0.0, %v4417
    %v4419 = vpop.f32.mrf.mxu0
    %4420 = vdwg.mxu0
    %v4421 = vadd.f32 %v4045, %v4353
    %v4422 = vadd.f32 %v4046, %v4366
    %v4423 = vadd.f32 %v4047, %v4379
    %v4424 = vadd.f32 %v4048, %v4392
    %v4425 = vadd.f32 %v4049, %v4405
    %v4426 = vadd.f32 %v4050, %v4418
    %s4427 = scalar_lea.vmem [#allocation3], 10
    %v4428 = vld [vmem:[%s4427] ss:$25 sm:$0x3]
    %v4429 = vpack.c.bf16 %v4428, %v4428
    %s4430 = scalar_lea.vmem [#allocation10], 3840
    %v4431 = vld [vmem:[%s4430] sm:$0xff]
    %v4432 = vld [vmem:[%s4430 + $0x8] sm:$0xff]
    %v4433 = vld [vmem:[%s4430 + $0x10] sm:$0xff]
    %v4434 = vld [vmem:[%s4430 + $0x18] sm:$0xff]
    %v4435 = vld [vmem:[%s4430 + $0x20] sm:$0xff]
    %v4436 = vld [vmem:[%s4430 + $0x28] sm:$0xff]
    %v4437 = vld [vmem:[%s4430 + $0x30] sm:$0xff]
    %v4438 = vld [vmem:[%s4430 + $0x38] sm:$0xff]
    %v4439 = vld [vmem:[%s4430 + $0x40] sm:$0xff]
    %v4440 = vld [vmem:[%s4430 + $0x48] sm:$0xff]
    %v4441 = vld [vmem:[%s4430 + $0x50] sm:$0xff]
    %v4442 = vld [vmem:[%s4430 + $0x58] sm:$0xff]
    %v4443 = vld [vmem:[%s4430 + $0x60] sm:$0xff]
    %v4444 = vld [vmem:[%s4430 + $0x68] sm:$0xff]
    %v4445 = vld [vmem:[%s4430 + $0x70] sm:$0xff]
    %v4446 = vld [vmem:[%s4430 + $0x78] sm:$0xff]
    %v4447 = vld [vmem:[%s4430 + $0x80] sm:$0xff]
    %v4448 = vld [vmem:[%s4430 + $0x88] sm:$0xff]
    %v4449 = vld [vmem:[%s4430 + $0x90] sm:$0xff]
    %v4450 = vld [vmem:[%s4430 + $0x98] sm:$0xff]
    %v4451 = vld [vmem:[%s4430 + $0xa0] sm:$0xff]
    %v4452 = vld [vmem:[%s4430 + $0xa8] sm:$0xff]
    %v4453 = vld [vmem:[%s4430 + $0xb0] sm:$0xff]
    %v4454 = vld [vmem:[%s4430 + $0xb8] sm:$0xff]
    %v4455 = vld [vmem:[%s4430 + $0xc0] sm:$0xff]
    %v4456 = vld [vmem:[%s4430 + $0xc8] sm:$0xff]
    %v4457 = vld [vmem:[%s4430 + $0xd0] sm:$0xff]
    %v4458 = vld [vmem:[%s4430 + $0xd8] sm:$0xff]
    %v4459 = vld [vmem:[%s4430 + $0xe0] sm:$0xff]
    %v4460 = vld [vmem:[%s4430 + $0xe8] sm:$0xff]
    %v4461 = vld [vmem:[%s4430 + $0xf0] sm:$0xff]
    %v4462 = vld [vmem:[%s4430 + $0xf8] sm:$0xff]
    %v4463 = vld [vmem:[%s4430 + $0x100] sm:$0xff]
    %v4464 = vld [vmem:[%s4430 + $0x108] sm:$0xff]
    %v4465 = vld [vmem:[%s4430 + $0x110] sm:$0xff]
    %v4466 = vld [vmem:[%s4430 + $0x118] sm:$0xff]
    %v4467 = vld [vmem:[%s4430 + $0x120] sm:$0xff]
    %v4468 = vld [vmem:[%s4430 + $0x128] sm:$0xff]
    %v4469 = vld [vmem:[%s4430 + $0x130] sm:$0xff]
    %v4470 = vld [vmem:[%s4430 + $0x138] sm:$0xff]
    %v4471 = vld [vmem:[%s4430 + $0x140] sm:$0xff]
    %v4472 = vld [vmem:[%s4430 + $0x148] sm:$0xff]
    %v4473 = vld [vmem:[%s4430 + $0x150] sm:$0xff]
    %v4474 = vld [vmem:[%s4430 + $0x158] sm:$0xff]
    %v4475 = vld [vmem:[%s4430 + $0x160] sm:$0xff]
    %v4476 = vld [vmem:[%s4430 + $0x168] sm:$0xff]
    %v4477 = vld [vmem:[%s4430 + $0x170] sm:$0xff]
    %v4478 = vld [vmem:[%s4430 + $0x178] sm:$0xff]
    %v4527 = vunpack.c.l.b16 %v4431
    %v4528 = vunpack.c.h.b16 %v4431
    %v4529 = vunpack.c.l.b16 %v4432
    %v4530 = vunpack.c.h.b16 %v4432
    %v4531 = vunpack.c.l.b16 %v4433
    %v4532 = vunpack.c.h.b16 %v4433
    %v4533 = vunpack.c.l.b16 %v4434
    %v4534 = vunpack.c.h.b16 %v4434
    %v4535 = vunpack.c.l.b16 %v4435
    %v4536 = vunpack.c.h.b16 %v4435
    %v4537 = vunpack.c.l.b16 %v4436
    %v4538 = vunpack.c.h.b16 %v4436
    %v4539 = vunpack.c.l.b16 %v4437
    %v4540 = vunpack.c.h.b16 %v4437
    %v4541 = vunpack.c.l.b16 %v4438
    %v4542 = vunpack.c.h.b16 %v4438
    %v4543 = vunpack.c.l.b16 %v4439
    %v4544 = vunpack.c.h.b16 %v4439
    %v4545 = vunpack.c.l.b16 %v4440
    %v4546 = vunpack.c.h.b16 %v4440
    %v4547 = vunpack.c.l.b16 %v4441
    %v4548 = vunpack.c.h.b16 %v4441
    %v4549 = vunpack.c.l.b16 %v4442
    %v4550 = vunpack.c.h.b16 %v4442
    %v4551 = vunpack.c.l.b16 %v4443
    %v4552 = vunpack.c.h.b16 %v4443
    %v4553 = vunpack.c.l.b16 %v4444
    %v4554 = vunpack.c.h.b16 %v4444
    %v4555 = vunpack.c.l.b16 %v4445
    %v4556 = vunpack.c.h.b16 %v4445
    %v4557 = vunpack.c.l.b16 %v4446
    %v4558 = vunpack.c.h.b16 %v4446
    %v4559 = vunpack.c.l.b16 %v4447
    %v4560 = vunpack.c.h.b16 %v4447
    %v4561 = vunpack.c.l.b16 %v4448
    %v4562 = vunpack.c.h.b16 %v4448
    %v4563 = vunpack.c.l.b16 %v4449
    %v4564 = vunpack.c.h.b16 %v4449
    %v4565 = vunpack.c.l.b16 %v4450
    %v4566 = vunpack.c.h.b16 %v4450
    %v4567 = vunpack.c.l.b16 %v4451
    %v4568 = vunpack.c.h.b16 %v4451
    %v4569 = vunpack.c.l.b16 %v4452
    %v4570 = vunpack.c.h.b16 %v4452
    %v4571 = vunpack.c.l.b16 %v4453
    %v4572 = vunpack.c.h.b16 %v4453
    %v4573 = vunpack.c.l.b16 %v4454
    %v4574 = vunpack.c.h.b16 %v4454
    %v4575 = vunpack.c.l.b16 %v4455
    %v4576 = vunpack.c.h.b16 %v4455
    %v4577 = vunpack.c.l.b16 %v4456
    %v4578 = vunpack.c.h.b16 %v4456
    %v4579 = vunpack.c.l.b16 %v4457
    %v4580 = vunpack.c.h.b16 %v4457
    %v4581 = vunpack.c.l.b16 %v4458
    %v4582 = vunpack.c.h.b16 %v4458
    %v4583 = vunpack.c.l.b16 %v4459
    %v4584 = vunpack.c.h.b16 %v4459
    %v4585 = vunpack.c.l.b16 %v4460
    %v4586 = vunpack.c.h.b16 %v4460
    %v4587 = vunpack.c.l.b16 %v4461
    %v4588 = vunpack.c.h.b16 %v4461
    %v4589 = vunpack.c.l.b16 %v4462
    %v4590 = vunpack.c.h.b16 %v4462
    %v4591 = vunpack.c.l.b16 %v4463
    %v4592 = vunpack.c.h.b16 %v4463
    %v4593 = vunpack.c.l.b16 %v4464
    %v4594 = vunpack.c.h.b16 %v4464
    %v4595 = vunpack.c.l.b16 %v4465
    %v4596 = vunpack.c.h.b16 %v4465
    %v4597 = vunpack.c.l.b16 %v4466
    %v4598 = vunpack.c.h.b16 %v4466
    %v4599 = vunpack.c.l.b16 %v4467
    %v4600 = vunpack.c.h.b16 %v4467
    %v4601 = vunpack.c.l.b16 %v4468
    %v4602 = vunpack.c.h.b16 %v4468
    %v4603 = vunpack.c.l.b16 %v4469
    %v4604 = vunpack.c.h.b16 %v4469
    %v4605 = vunpack.c.l.b16 %v4470
    %v4606 = vunpack.c.h.b16 %v4470
    %v4607 = vunpack.c.l.b16 %v4471
    %v4608 = vunpack.c.h.b16 %v4471
    %v4609 = vunpack.c.l.b16 %v4472
    %v4610 = vunpack.c.h.b16 %v4472
    %v4611 = vunpack.c.l.b16 %v4473
    %v4612 = vunpack.c.h.b16 %v4473
    %v4613 = vunpack.c.l.b16 %v4474
    %v4614 = vunpack.c.h.b16 %v4474
    %v4615 = vunpack.c.l.b16 %v4475
    %v4616 = vunpack.c.h.b16 %v4475
    %v4617 = vunpack.c.l.b16 %v4476
    %v4618 = vunpack.c.h.b16 %v4476
    %v4619 = vunpack.c.l.b16 %v4477
    %v4620 = vunpack.c.h.b16 %v4477
    %v4621 = vunpack.c.l.b16 %v4478
    %v4622 = vunpack.c.h.b16 %v4478
    %v4623 = vpack.c.b16 %v4533, %v4527
    %v4624 = vpack.c.b16 %v4534, %v4528
    %v4625 = vpack.c.b16 %v4535, %v4529
    %v4626 = vpack.c.b16 %v4536, %v4530
    %v4627 = vpack.c.b16 %v4537, %v4531
    %v4628 = vpack.c.b16 %v4538, %v4532
    %v4629 = vpack.c.b16 %v4545, %v4539
    %v4630 = vpack.c.b16 %v4546, %v4540
    %v4631 = vpack.c.b16 %v4547, %v4541
    %v4632 = vpack.c.b16 %v4548, %v4542
    %v4633 = vpack.c.b16 %v4549, %v4543
    %v4634 = vpack.c.b16 %v4550, %v4544
    %v4635 = vpack.c.b16 %v4557, %v4551
    %v4636 = vpack.c.b16 %v4558, %v4552
    %v4637 = vpack.c.b16 %v4559, %v4553
    %v4638 = vpack.c.b16 %v4560, %v4554
    %v4639 = vpack.c.b16 %v4561, %v4555
    %v4640 = vpack.c.b16 %v4562, %v4556
    %v4641 = vpack.c.b16 %v4569, %v4563
    %v4642 = vpack.c.b16 %v4570, %v4564
    %v4643 = vpack.c.b16 %v4571, %v4565
    %v4644 = vpack.c.b16 %v4572, %v4566
    %v4645 = vpack.c.b16 %v4573, %v4567
    %v4646 = vpack.c.b16 %v4574, %v4568
    %v4647 = vpack.c.b16 %v4581, %v4575
    %v4648 = vpack.c.b16 %v4582, %v4576
    %v4649 = vpack.c.b16 %v4583, %v4577
    %v4650 = vpack.c.b16 %v4584, %v4578
    %v4651 = vpack.c.b16 %v4585, %v4579
    %v4652 = vpack.c.b16 %v4586, %v4580
    %v4653 = vpack.c.b16 %v4593, %v4587
    %v4654 = vpack.c.b16 %v4594, %v4588
    %v4655 = vpack.c.b16 %v4595, %v4589
    %v4656 = vpack.c.b16 %v4596, %v4590
    %v4657 = vpack.c.b16 %v4597, %v4591
    %v4658 = vpack.c.b16 %v4598, %v4592
    %v4659 = vpack.c.b16 %v4605, %v4599
    %v4660 = vpack.c.b16 %v4606, %v4600
    %v4661 = vpack.c.b16 %v4607, %v4601
    %v4662 = vpack.c.b16 %v4608, %v4602
    %v4663 = vpack.c.b16 %v4609, %v4603
    %v4664 = vpack.c.b16 %v4610, %v4604
    %v4665 = vpack.c.b16 %v4617, %v4611
    %v4666 = vpack.c.b16 %v4618, %v4612
    %v4667 = vpack.c.b16 %v4619, %v4613
    %v4668 = vpack.c.b16 %v4620, %v4614
    %v4669 = vpack.c.b16 %v4621, %v4615
    %v4670 = vpack.c.b16 %v4622, %v4616
    %4719 = vmatpush.bf16.msra.mxu0 %v4665
    %4720 = vmatpush.bf16.msra.mxu0 %v4659
    %4721 = vmatpush.bf16.msra.mxu0 %v4653
    %4722 = vmatpush.bf16.msra.mxu0 %v4647
    %4723 = vmatpush.bf16.msra.mxu0 %v4641
    %4724 = vmatpush.bf16.msra.mxu0 %v4635
    %4725 = vmatpush.bf16.msra.mxu0 %v4629
    %4726 = vmatpush.bf16.msra.mxu0 %v4623
    %4727 = vmatmul.bf16.gmra.mxu0 %v4429
    %v4728 = vpop.f32.mrf.mxu0
    %v4729 = vadd.f32 0.0, %v4728
    %v4730 = vpop.f32.mrf.mxu0
    %4731 = vdwg.mxu0
    %4732 = vmatpush.bf16.msra.mxu0 %v4666
    %4733 = vmatpush.bf16.msra.mxu0 %v4660
    %4734 = vmatpush.bf16.msra.mxu0 %v4654
    %4735 = vmatpush.bf16.msra.mxu0 %v4648
    %4736 = vmatpush.bf16.msra.mxu0 %v4642
    %4737 = vmatpush.bf16.msra.mxu0 %v4636
    %4738 = vmatpush.bf16.msra.mxu0 %v4630
    %4739 = vmatpush.bf16.msra.mxu0 %v4624
    %4740 = vmatmul.bf16.gmra.mxu0 %v4429
    %v4741 = vpop.f32.mrf.mxu0
    %v4742 = vadd.f32 0.0, %v4741
    %v4743 = vpop.f32.mrf.mxu0
    %4744 = vdwg.mxu0
    %4745 = vmatpush.bf16.msra.mxu0 %v4667
    %4746 = vmatpush.bf16.msra.mxu0 %v4661
    %4747 = vmatpush.bf16.msra.mxu0 %v4655
    %4748 = vmatpush.bf16.msra.mxu0 %v4649
    %4749 = vmatpush.bf16.msra.mxu0 %v4643
    %4750 = vmatpush.bf16.msra.mxu0 %v4637
    %4751 = vmatpush.bf16.msra.mxu0 %v4631
    %4752 = vmatpush.bf16.msra.mxu0 %v4625
    %4753 = vmatmul.bf16.gmra.mxu0 %v4429
    %v4754 = vpop.f32.mrf.mxu0
    %v4755 = vadd.f32 0.0, %v4754
    %v4756 = vpop.f32.mrf.mxu0
    %4757 = vdwg.mxu0
    %4758 = vmatpush.bf16.msra.mxu0 %v4668
    %4759 = vmatpush.bf16.msra.mxu0 %v4662
    %4760 = vmatpush.bf16.msra.mxu0 %v4656
    %4761 = vmatpush.bf16.msra.mxu0 %v4650
    %4762 = vmatpush.bf16.msra.mxu0 %v4644
    %4763 = vmatpush.bf16.msra.mxu0 %v4638
    %4764 = vmatpush.bf16.msra.mxu0 %v4632
    %4765 = vmatpush.bf16.msra.mxu0 %v4626
    %4766 = vmatmul.bf16.gmra.mxu0 %v4429
    %v4767 = vpop.f32.mrf.mxu0
    %v4768 = vadd.f32 0.0, %v4767
    %v4769 = vpop.f32.mrf.mxu0
    %4770 = vdwg.mxu0
    %4771 = vmatpush.bf16.msra.mxu0 %v4669
    %4772 = vmatpush.bf16.msra.mxu0 %v4663
    %4773 = vmatpush.bf16.msra.mxu0 %v4657
    %4774 = vmatpush.bf16.msra.mxu0 %v4651
    %4775 = vmatpush.bf16.msra.mxu0 %v4645
    %4776 = vmatpush.bf16.msra.mxu0 %v4639
    %4777 = vmatpush.bf16.msra.mxu0 %v4633
    %4778 = vmatpush.bf16.msra.mxu0 %v4627
    %4779 = vmatmul.bf16.gmra.mxu0 %v4429
    %v4780 = vpop.f32.mrf.mxu0
    %v4781 = vadd.f32 0.0, %v4780
    %v4782 = vpop.f32.mrf.mxu0
    %4783 = vdwg.mxu0
    %4784 = vmatpush.bf16.msra.mxu0 %v4670
    %4785 = vmatpush.bf16.msra.mxu0 %v4664
    %4786 = vmatpush.bf16.msra.mxu0 %v4658
    %4787 = vmatpush.bf16.msra.mxu0 %v4652
    %4788 = vmatpush.bf16.msra.mxu0 %v4646
    %4789 = vmatpush.bf16.msra.mxu0 %v4640
    %4790 = vmatpush.bf16.msra.mxu0 %v4634
    %4791 = vmatpush.bf16.msra.mxu0 %v4628
    %4792 = vmatmul.bf16.gmra.mxu0 %v4429
    %v4793 = vpop.f32.mrf.mxu0
    %v4794 = vadd.f32 0.0, %v4793
    %v4795 = vpop.f32.mrf.mxu0
    %4796 = vdwg.mxu0
    %v4797 = vadd.f32 %v4421, %v4729
    %v4798 = vadd.f32 %v4422, %v4742
    %v4799 = vadd.f32 %v4423, %v4755
    %v4800 = vadd.f32 %v4424, %v4768
    %v4801 = vadd.f32 %v4425, %v4781
    %v4802 = vadd.f32 %v4426, %v4794
    %s4803 = scalar_lea.vmem [#allocation3], 11
    %v4804 = vld [vmem:[%s4803] ss:$25 sm:$0x3]
    %v4805 = vpack.c.bf16 %v4804, %v4804
    %s4806 = scalar_lea.vmem [#allocation10], 4224
    %v4807 = vld [vmem:[%s4806] sm:$0xff]
    %v4808 = vld [vmem:[%s4806 + $0x8] sm:$0xff]
    %v4809 = vld [vmem:[%s4806 + $0x10] sm:$0xff]
    %v4810 = vld [vmem:[%s4806 + $0x18] sm:$0xff]
    %v4811 = vld [vmem:[%s4806 + $0x20] sm:$0xff]
    %v4812 = vld [vmem:[%s4806 + $0x28] sm:$0xff]
    %v4813 = vld [vmem:[%s4806 + $0x30] sm:$0xff]
    %v4814 = vld [vmem:[%s4806 + $0x38] sm:$0xff]
    %v4815 = vld [vmem:[%s4806 + $0x40] sm:$0xff]
    %v4816 = vld [vmem:[%s4806 + $0x48] sm:$0xff]
    %v4817 = vld [vmem:[%s4806 + $0x50] sm:$0xff]
    %v4818 = vld [vmem:[%s4806 + $0x58] sm:$0xff]
    %v4819 = vld [vmem:[%s4806 + $0x60] sm:$0xff]
    %v4820 = vld [vmem:[%s4806 + $0x68] sm:$0xff]
    %v4821 = vld [vmem:[%s4806 + $0x70] sm:$0xff]
    %v4822 = vld [vmem:[%s4806 + $0x78] sm:$0xff]
    %v4823 = vld [vmem:[%s4806 + $0x80] sm:$0xff]
    %v4824 = vld [vmem:[%s4806 + $0x88] sm:$0xff]
    %v4825 = vld [vmem:[%s4806 + $0x90] sm:$0xff]
    %v4826 = vld [vmem:[%s4806 + $0x98] sm:$0xff]
    %v4827 = vld [vmem:[%s4806 + $0xa0] sm:$0xff]
    %v4828 = vld [vmem:[%s4806 + $0xa8] sm:$0xff]
    %v4829 = vld [vmem:[%s4806 + $0xb0] sm:$0xff]
    %v4830 = vld [vmem:[%s4806 + $0xb8] sm:$0xff]
    %v4831 = vld [vmem:[%s4806 + $0xc0] sm:$0xff]
    %v4832 = vld [vmem:[%s4806 + $0xc8] sm:$0xff]
    %v4833 = vld [vmem:[%s4806 + $0xd0] sm:$0xff]
    %v4834 = vld [vmem:[%s4806 + $0xd8] sm:$0xff]
    %v4835 = vld [vmem:[%s4806 + $0xe0] sm:$0xff]
    %v4836 = vld [vmem:[%s4806 + $0xe8] sm:$0xff]
    %v4837 = vld [vmem:[%s4806 + $0xf0] sm:$0xff]
    %v4838 = vld [vmem:[%s4806 + $0xf8] sm:$0xff]
    %v4839 = vld [vmem:[%s4806 + $0x100] sm:$0xff]
    %v4840 = vld [vmem:[%s4806 + $0x108] sm:$0xff]
    %v4841 = vld [vmem:[%s4806 + $0x110] sm:$0xff]
    %v4842 = vld [vmem:[%s4806 + $0x118] sm:$0xff]
    %v4843 = vld [vmem:[%s4806 + $0x120] sm:$0xff]
    %v4844 = vld [vmem:[%s4806 + $0x128] sm:$0xff]
    %v4845 = vld [vmem:[%s4806 + $0x130] sm:$0xff]
    %v4846 = vld [vmem:[%s4806 + $0x138] sm:$0xff]
    %v4847 = vld [vmem:[%s4806 + $0x140] sm:$0xff]
    %v4848 = vld [vmem:[%s4806 + $0x148] sm:$0xff]
    %v4849 = vld [vmem:[%s4806 + $0x150] sm:$0xff]
    %v4850 = vld [vmem:[%s4806 + $0x158] sm:$0xff]
    %v4851 = vld [vmem:[%s4806 + $0x160] sm:$0xff]
    %v4852 = vld [vmem:[%s4806 + $0x168] sm:$0xff]
    %v4853 = vld [vmem:[%s4806 + $0x170] sm:$0xff]
    %v4854 = vld [vmem:[%s4806 + $0x178] sm:$0xff]
    %v4903 = vunpack.c.l.b16 %v4807
    %v4904 = vunpack.c.h.b16 %v4807
    %v4905 = vunpack.c.l.b16 %v4808
    %v4906 = vunpack.c.h.b16 %v4808
    %v4907 = vunpack.c.l.b16 %v4809
    %v4908 = vunpack.c.h.b16 %v4809
    %v4909 = vunpack.c.l.b16 %v4810
    %v4910 = vunpack.c.h.b16 %v4810
    %v4911 = vunpack.c.l.b16 %v4811
    %v4912 = vunpack.c.h.b16 %v4811
    %v4913 = vunpack.c.l.b16 %v4812
    %v4914 = vunpack.c.h.b16 %v4812
    %v4915 = vunpack.c.l.b16 %v4813
    %v4916 = vunpack.c.h.b16 %v4813
    %v4917 = vunpack.c.l.b16 %v4814
    %v4918 = vunpack.c.h.b16 %v4814
    %v4919 = vunpack.c.l.b16 %v4815
    %v4920 = vunpack.c.h.b16 %v4815
    %v4921 = vunpack.c.l.b16 %v4816
    %v4922 = vunpack.c.h.b16 %v4816
    %v4923 = vunpack.c.l.b16 %v4817
    %v4924 = vunpack.c.h.b16 %v4817
    %v4925 = vunpack.c.l.b16 %v4818
    %v4926 = vunpack.c.h.b16 %v4818
    %v4927 = vunpack.c.l.b16 %v4819
    %v4928 = vunpack.c.h.b16 %v4819
    %v4929 = vunpack.c.l.b16 %v4820
    %v4930 = vunpack.c.h.b16 %v4820
    %v4931 = vunpack.c.l.b16 %v4821
    %v4932 = vunpack.c.h.b16 %v4821
    %v4933 = vunpack.c.l.b16 %v4822
    %v4934 = vunpack.c.h.b16 %v4822
    %v4935 = vunpack.c.l.b16 %v4823
    %v4936 = vunpack.c.h.b16 %v4823
    %v4937 = vunpack.c.l.b16 %v4824
    %v4938 = vunpack.c.h.b16 %v4824
    %v4939 = vunpack.c.l.b16 %v4825
    %v4940 = vunpack.c.h.b16 %v4825
    %v4941 = vunpack.c.l.b16 %v4826
    %v4942 = vunpack.c.h.b16 %v4826
    %v4943 = vunpack.c.l.b16 %v4827
    %v4944 = vunpack.c.h.b16 %v4827
    %v4945 = vunpack.c.l.b16 %v4828
    %v4946 = vunpack.c.h.b16 %v4828
    %v4947 = vunpack.c.l.b16 %v4829
    %v4948 = vunpack.c.h.b16 %v4829
    %v4949 = vunpack.c.l.b16 %v4830
    %v4950 = vunpack.c.h.b16 %v4830
    %v4951 = vunpack.c.l.b16 %v4831
    %v4952 = vunpack.c.h.b16 %v4831
    %v4953 = vunpack.c.l.b16 %v4832
    %v4954 = vunpack.c.h.b16 %v4832
    %v4955 = vunpack.c.l.b16 %v4833
    %v4956 = vunpack.c.h.b16 %v4833
    %v4957 = vunpack.c.l.b16 %v4834
    %v4958 = vunpack.c.h.b16 %v4834
    %v4959 = vunpack.c.l.b16 %v4835
    %v4960 = vunpack.c.h.b16 %v4835
    %v4961 = vunpack.c.l.b16 %v4836
    %v4962 = vunpack.c.h.b16 %v4836
    %v4963 = vunpack.c.l.b16 %v4837
    %v4964 = vunpack.c.h.b16 %v4837
    %v4965 = vunpack.c.l.b16 %v4838
    %v4966 = vunpack.c.h.b16 %v4838
    %v4967 = vunpack.c.l.b16 %v4839
    %v4968 = vunpack.c.h.b16 %v4839
    %v4969 = vunpack.c.l.b16 %v4840
    %v4970 = vunpack.c.h.b16 %v4840
    %v4971 = vunpack.c.l.b16 %v4841
    %v4972 = vunpack.c.h.b16 %v4841
    %v4973 = vunpack.c.l.b16 %v4842
    %v4974 = vunpack.c.h.b16 %v4842
    %v4975 = vunpack.c.l.b16 %v4843
    %v4976 = vunpack.c.h.b16 %v4843
    %v4977 = vunpack.c.l.b16 %v4844
    %v4978 = vunpack.c.h.b16 %v4844
    %v4979 = vunpack.c.l.b16 %v4845
    %v4980 = vunpack.c.h.b16 %v4845
    %v4981 = vunpack.c.l.b16 %v4846
    %v4982 = vunpack.c.h.b16 %v4846
    %v4983 = vunpack.c.l.b16 %v4847
    %v4984 = vunpack.c.h.b16 %v4847
    %v4985 = vunpack.c.l.b16 %v4848
    %v4986 = vunpack.c.h.b16 %v4848
    %v4987 = vunpack.c.l.b16 %v4849
    %v4988 = vunpack.c.h.b16 %v4849
    %v4989 = vunpack.c.l.b16 %v4850
    %v4990 = vunpack.c.h.b16 %v4850
    %v4991 = vunpack.c.l.b16 %v4851
    %v4992 = vunpack.c.h.b16 %v4851
    %v4993 = vunpack.c.l.b16 %v4852
    %v4994 = vunpack.c.h.b16 %v4852
    %v4995 = vunpack.c.l.b16 %v4853
    %v4996 = vunpack.c.h.b16 %v4853
    %v4997 = vunpack.c.l.b16 %v4854
    %v4998 = vunpack.c.h.b16 %v4854
    %v4999 = vpack.c.b16 %v4909, %v4903
    %v5000 = vpack.c.b16 %v4910, %v4904
    %v5001 = vpack.c.b16 %v4911, %v4905
    %v5002 = vpack.c.b16 %v4912, %v4906
    %v5003 = vpack.c.b16 %v4913, %v4907
    %v5004 = vpack.c.b16 %v4914, %v4908
    %v5005 = vpack.c.b16 %v4921, %v4915
    %v5006 = vpack.c.b16 %v4922, %v4916
    %v5007 = vpack.c.b16 %v4923, %v4917
    %v5008 = vpack.c.b16 %v4924, %v4918
    %v5009 = vpack.c.b16 %v4925, %v4919
    %v5010 = vpack.c.b16 %v4926, %v4920
    %v5011 = vpack.c.b16 %v4933, %v4927
    %v5012 = vpack.c.b16 %v4934, %v4928
    %v5013 = vpack.c.b16 %v4935, %v4929
    %v5014 = vpack.c.b16 %v4936, %v4930
    %v5015 = vpack.c.b16 %v4937, %v4931
    %v5016 = vpack.c.b16 %v4938, %v4932
    %v5017 = vpack.c.b16 %v4945, %v4939
    %v5018 = vpack.c.b16 %v4946, %v4940
    %v5019 = vpack.c.b16 %v4947, %v4941
    %v5020 = vpack.c.b16 %v4948, %v4942
    %v5021 = vpack.c.b16 %v4949, %v4943
    %v5022 = vpack.c.b16 %v4950, %v4944
    %v5023 = vpack.c.b16 %v4957, %v4951
    %v5024 = vpack.c.b16 %v4958, %v4952
    %v5025 = vpack.c.b16 %v4959, %v4953
    %v5026 = vpack.c.b16 %v4960, %v4954
    %v5027 = vpack.c.b16 %v4961, %v4955
    %v5028 = vpack.c.b16 %v4962, %v4956
    %v5029 = vpack.c.b16 %v4969, %v4963
    %v5030 = vpack.c.b16 %v4970, %v4964
    %v5031 = vpack.c.b16 %v4971, %v4965
    %v5032 = vpack.c.b16 %v4972, %v4966
    %v5033 = vpack.c.b16 %v4973, %v4967
    %v5034 = vpack.c.b16 %v4974, %v4968
    %v5035 = vpack.c.b16 %v4981, %v4975
    %v5036 = vpack.c.b16 %v4982, %v4976
    %v5037 = vpack.c.b16 %v4983, %v4977
    %v5038 = vpack.c.b16 %v4984, %v4978
    %v5039 = vpack.c.b16 %v4985, %v4979
    %v5040 = vpack.c.b16 %v4986, %v4980
    %v5041 = vpack.c.b16 %v4993, %v4987
    %v5042 = vpack.c.b16 %v4994, %v4988
    %v5043 = vpack.c.b16 %v4995, %v4989
    %v5044 = vpack.c.b16 %v4996, %v4990
    %v5045 = vpack.c.b16 %v4997, %v4991
    %v5046 = vpack.c.b16 %v4998, %v4992
    %5095 = vmatpush.bf16.msra.mxu0 %v5041
    %5096 = vmatpush.bf16.msra.mxu0 %v5035
    %5097 = vmatpush.bf16.msra.mxu0 %v5029
    %5098 = vmatpush.bf16.msra.mxu0 %v5023
    %5099 = vmatpush.bf16.msra.mxu0 %v5017
    %5100 = vmatpush.bf16.msra.mxu0 %v5011
    %5101 = vmatpush.bf16.msra.mxu0 %v5005
    %5102 = vmatpush.bf16.msra.mxu0 %v4999
    %5103 = vmatmul.bf16.gmra.mxu0 %v4805
    %v5104 = vpop.f32.mrf.mxu0
    %v5105 = vadd.f32 0.0, %v5104
    %v5106 = vpop.f32.mrf.mxu0
    %5107 = vdwg.mxu0
    %5108 = vmatpush.bf16.msra.mxu0 %v5042
    %5109 = vmatpush.bf16.msra.mxu0 %v5036
    %5110 = vmatpush.bf16.msra.mxu0 %v5030
    %5111 = vmatpush.bf16.msra.mxu0 %v5024
    %5112 = vmatpush.bf16.msra.mxu0 %v5018
    %5113 = vmatpush.bf16.msra.mxu0 %v5012
    %5114 = vmatpush.bf16.msra.mxu0 %v5006
    %5115 = vmatpush.bf16.msra.mxu0 %v5000
    %5116 = vmatmul.bf16.gmra.mxu0 %v4805
    %v5117 = vpop.f32.mrf.mxu0
    %v5118 = vadd.f32 0.0, %v5117
    %v5119 = vpop.f32.mrf.mxu0
    %5120 = vdwg.mxu0
    %5121 = vmatpush.bf16.msra.mxu0 %v5043
    %5122 = vmatpush.bf16.msra.mxu0 %v5037
    %5123 = vmatpush.bf16.msra.mxu0 %v5031
    %5124 = vmatpush.bf16.msra.mxu0 %v5025
    %5125 = vmatpush.bf16.msra.mxu0 %v5019
    %5126 = vmatpush.bf16.msra.mxu0 %v5013
    %5127 = vmatpush.bf16.msra.mxu0 %v5007
    %5128 = vmatpush.bf16.msra.mxu0 %v5001
    %5129 = vmatmul.bf16.gmra.mxu0 %v4805
    %v5130 = vpop.f32.mrf.mxu0
    %v5131 = vadd.f32 0.0, %v5130
    %v5132 = vpop.f32.mrf.mxu0
    %5133 = vdwg.mxu0
    %5134 = vmatpush.bf16.msra.mxu0 %v5044
    %5135 = vmatpush.bf16.msra.mxu0 %v5038
    %5136 = vmatpush.bf16.msra.mxu0 %v5032
    %5137 = vmatpush.bf16.msra.mxu0 %v5026
    %5138 = vmatpush.bf16.msra.mxu0 %v5020
    %5139 = vmatpush.bf16.msra.mxu0 %v5014
    %5140 = vmatpush.bf16.msra.mxu0 %v5008
    %5141 = vmatpush.bf16.msra.mxu0 %v5002
    %5142 = vmatmul.bf16.gmra.mxu0 %v4805
    %v5143 = vpop.f32.mrf.mxu0
    %v5144 = vadd.f32 0.0, %v5143
    %v5145 = vpop.f32.mrf.mxu0
    %5146 = vdwg.mxu0
    %5147 = vmatpush.bf16.msra.mxu0 %v5045
    %5148 = vmatpush.bf16.msra.mxu0 %v5039
    %5149 = vmatpush.bf16.msra.mxu0 %v5033
    %5150 = vmatpush.bf16.msra.mxu0 %v5027
    %5151 = vmatpush.bf16.msra.mxu0 %v5021
    %5152 = vmatpush.bf16.msra.mxu0 %v5015
    %5153 = vmatpush.bf16.msra.mxu0 %v5009
    %5154 = vmatpush.bf16.msra.mxu0 %v5003
    %5155 = vmatmul.bf16.gmra.mxu0 %v4805
    %v5156 = vpop.f32.mrf.mxu0
    %v5157 = vadd.f32 0.0, %v5156
    %v5158 = vpop.f32.mrf.mxu0
    %5159 = vdwg.mxu0
    %5160 = vmatpush.bf16.msra.mxu0 %v5046
    %5161 = vmatpush.bf16.msra.mxu0 %v5040
    %5162 = vmatpush.bf16.msra.mxu0 %v5034
    %5163 = vmatpush.bf16.msra.mxu0 %v5028
    %5164 = vmatpush.bf16.msra.mxu0 %v5022
    %5165 = vmatpush.bf16.msra.mxu0 %v5016
    %5166 = vmatpush.bf16.msra.mxu0 %v5010
    %5167 = vmatpush.bf16.msra.mxu0 %v5004
    %5168 = vmatmul.bf16.gmra.mxu0 %v4805
    %v5169 = vpop.f32.mrf.mxu0
    %v5170 = vadd.f32 0.0, %v5169
    %v5171 = vpop.f32.mrf.mxu0
    %5172 = vdwg.mxu0
    %v5173 = vadd.f32 %v4797, %v5105
    %v5174 = vadd.f32 %v4798, %v5118
    %v5175 = vadd.f32 %v4799, %v5131
    %v5176 = vadd.f32 %v4800, %v5144
    %v5177 = vadd.f32 %v4801, %v5157
    %v5178 = vadd.f32 %v4802, %v5170
    %s5179 = scalar_lea.vmem [#allocation3], 12
    %v5180 = vld [vmem:[%s5179] ss:$25 sm:$0x3]
    %v5181 = vpack.c.bf16 %v5180, %v5180
    %s5182 = scalar_lea.vmem [#allocation10], 4608
    %v5183 = vld [vmem:[%s5182] sm:$0xff]
    %v5184 = vld [vmem:[%s5182 + $0x8] sm:$0xff]
    %v5185 = vld [vmem:[%s5182 + $0x10] sm:$0xff]
    %v5186 = vld [vmem:[%s5182 + $0x18] sm:$0xff]
    %v5187 = vld [vmem:[%s5182 + $0x20] sm:$0xff]
    %v5188 = vld [vmem:[%s5182 + $0x28] sm:$0xff]
    %v5189 = vld [vmem:[%s5182 + $0x30] sm:$0xff]
    %v5190 = vld [vmem:[%s5182 + $0x38] sm:$0xff]
    %v5191 = vld [vmem:[%s5182 + $0x40] sm:$0xff]
    %v5192 = vld [vmem:[%s5182 + $0x48] sm:$0xff]
    %v5193 = vld [vmem:[%s5182 + $0x50] sm:$0xff]
    %v5194 = vld [vmem:[%s5182 + $0x58] sm:$0xff]
    %v5195 = vld [vmem:[%s5182 + $0x60] sm:$0xff]
    %v5196 = vld [vmem:[%s5182 + $0x68] sm:$0xff]
    %v5197 = vld [vmem:[%s5182 + $0x70] sm:$0xff]
    %v5198 = vld [vmem:[%s5182 + $0x78] sm:$0xff]
    %v5199 = vld [vmem:[%s5182 + $0x80] sm:$0xff]
    %v5200 = vld [vmem:[%s5182 + $0x88] sm:$0xff]
    %v5201 = vld [vmem:[%s5182 + $0x90] sm:$0xff]
    %v5202 = vld [vmem:[%s5182 + $0x98] sm:$0xff]
    %v5203 = vld [vmem:[%s5182 + $0xa0] sm:$0xff]
    %v5204 = vld [vmem:[%s5182 + $0xa8] sm:$0xff]
    %v5205 = vld [vmem:[%s5182 + $0xb0] sm:$0xff]
    %v5206 = vld [vmem:[%s5182 + $0xb8] sm:$0xff]
    %v5207 = vld [vmem:[%s5182 + $0xc0] sm:$0xff]
    %v5208 = vld [vmem:[%s5182 + $0xc8] sm:$0xff]
    %v5209 = vld [vmem:[%s5182 + $0xd0] sm:$0xff]
    %v5210 = vld [vmem:[%s5182 + $0xd8] sm:$0xff]
    %v5211 = vld [vmem:[%s5182 + $0xe0] sm:$0xff]
    %v5212 = vld [vmem:[%s5182 + $0xe8] sm:$0xff]
    %v5213 = vld [vmem:[%s5182 + $0xf0] sm:$0xff]
    %v5214 = vld [vmem:[%s5182 + $0xf8] sm:$0xff]
    %v5215 = vld [vmem:[%s5182 + $0x100] sm:$0xff]
    %v5216 = vld [vmem:[%s5182 + $0x108] sm:$0xff]
    %v5217 = vld [vmem:[%s5182 + $0x110] sm:$0xff]
    %v5218 = vld [vmem:[%s5182 + $0x118] sm:$0xff]
    %v5219 = vld [vmem:[%s5182 + $0x120] sm:$0xff]
    %v5220 = vld [vmem:[%s5182 + $0x128] sm:$0xff]
    %v5221 = vld [vmem:[%s5182 + $0x130] sm:$0xff]
    %v5222 = vld [vmem:[%s5182 + $0x138] sm:$0xff]
    %v5223 = vld [vmem:[%s5182 + $0x140] sm:$0xff]
    %v5224 = vld [vmem:[%s5182 + $0x148] sm:$0xff]
    %v5225 = vld [vmem:[%s5182 + $0x150] sm:$0xff]
    %v5226 = vld [vmem:[%s5182 + $0x158] sm:$0xff]
    %v5227 = vld [vmem:[%s5182 + $0x160] sm:$0xff]
    %v5228 = vld [vmem:[%s5182 + $0x168] sm:$0xff]
    %v5229 = vld [vmem:[%s5182 + $0x170] sm:$0xff]
    %v5230 = vld [vmem:[%s5182 + $0x178] sm:$0xff]
    %v5279 = vunpack.c.l.b16 %v5183
    %v5280 = vunpack.c.h.b16 %v5183
    %v5281 = vunpack.c.l.b16 %v5184
    %v5282 = vunpack.c.h.b16 %v5184
    %v5283 = vunpack.c.l.b16 %v5185
    %v5284 = vunpack.c.h.b16 %v5185
    %v5285 = vunpack.c.l.b16 %v5186
    %v5286 = vunpack.c.h.b16 %v5186
    %v5287 = vunpack.c.l.b16 %v5187
    %v5288 = vunpack.c.h.b16 %v5187
    %v5289 = vunpack.c.l.b16 %v5188
    %v5290 = vunpack.c.h.b16 %v5188
    %v5291 = vunpack.c.l.b16 %v5189
    %v5292 = vunpack.c.h.b16 %v5189
    %v5293 = vunpack.c.l.b16 %v5190
    %v5294 = vunpack.c.h.b16 %v5190
    %v5295 = vunpack.c.l.b16 %v5191
    %v5296 = vunpack.c.h.b16 %v5191
    %v5297 = vunpack.c.l.b16 %v5192
    %v5298 = vunpack.c.h.b16 %v5192
    %v5299 = vunpack.c.l.b16 %v5193
    %v5300 = vunpack.c.h.b16 %v5193
    %v5301 = vunpack.c.l.b16 %v5194
    %v5302 = vunpack.c.h.b16 %v5194
    %v5303 = vunpack.c.l.b16 %v5195
    %v5304 = vunpack.c.h.b16 %v5195
    %v5305 = vunpack.c.l.b16 %v5196
    %v5306 = vunpack.c.h.b16 %v5196
    %v5307 = vunpack.c.l.b16 %v5197
    %v5308 = vunpack.c.h.b16 %v5197
    %v5309 = vunpack.c.l.b16 %v5198
    %v5310 = vunpack.c.h.b16 %v5198
    %v5311 = vunpack.c.l.b16 %v5199
    %v5312 = vunpack.c.h.b16 %v5199
    %v5313 = vunpack.c.l.b16 %v5200
    %v5314 = vunpack.c.h.b16 %v5200
    %v5315 = vunpack.c.l.b16 %v5201
    %v5316 = vunpack.c.h.b16 %v5201
    %v5317 = vunpack.c.l.b16 %v5202
    %v5318 = vunpack.c.h.b16 %v5202
    %v5319 = vunpack.c.l.b16 %v5203
    %v5320 = vunpack.c.h.b16 %v5203
    %v5321 = vunpack.c.l.b16 %v5204
    %v5322 = vunpack.c.h.b16 %v5204
    %v5323 = vunpack.c.l.b16 %v5205
    %v5324 = vunpack.c.h.b16 %v5205
    %v5325 = vunpack.c.l.b16 %v5206
    %v5326 = vunpack.c.h.b16 %v5206
    %v5327 = vunpack.c.l.b16 %v5207
    %v5328 = vunpack.c.h.b16 %v5207
    %v5329 = vunpack.c.l.b16 %v5208
    %v5330 = vunpack.c.h.b16 %v5208
    %v5331 = vunpack.c.l.b16 %v5209
    %v5332 = vunpack.c.h.b16 %v5209
    %v5333 = vunpack.c.l.b16 %v5210
    %v5334 = vunpack.c.h.b16 %v5210
    %v5335 = vunpack.c.l.b16 %v5211
    %v5336 = vunpack.c.h.b16 %v5211
    %v5337 = vunpack.c.l.b16 %v5212
    %v5338 = vunpack.c.h.b16 %v5212
    %v5339 = vunpack.c.l.b16 %v5213
    %v5340 = vunpack.c.h.b16 %v5213
    %v5341 = vunpack.c.l.b16 %v5214
    %v5342 = vunpack.c.h.b16 %v5214
    %v5343 = vunpack.c.l.b16 %v5215
    %v5344 = vunpack.c.h.b16 %v5215
    %v5345 = vunpack.c.l.b16 %v5216
    %v5346 = vunpack.c.h.b16 %v5216
    %v5347 = vunpack.c.l.b16 %v5217
    %v5348 = vunpack.c.h.b16 %v5217
    %v5349 = vunpack.c.l.b16 %v5218
    %v5350 = vunpack.c.h.b16 %v5218
    %v5351 = vunpack.c.l.b16 %v5219
    %v5352 = vunpack.c.h.b16 %v5219
    %v5353 = vunpack.c.l.b16 %v5220
    %v5354 = vunpack.c.h.b16 %v5220
    %v5355 = vunpack.c.l.b16 %v5221
    %v5356 = vunpack.c.h.b16 %v5221
    %v5357 = vunpack.c.l.b16 %v5222
    %v5358 = vunpack.c.h.b16 %v5222
    %v5359 = vunpack.c.l.b16 %v5223
    %v5360 = vunpack.c.h.b16 %v5223
    %v5361 = vunpack.c.l.b16 %v5224
    %v5362 = vunpack.c.h.b16 %v5224
    %v5363 = vunpack.c.l.b16 %v5225
    %v5364 = vunpack.c.h.b16 %v5225
    %v5365 = vunpack.c.l.b16 %v5226
    %v5366 = vunpack.c.h.b16 %v5226
    %v5367 = vunpack.c.l.b16 %v5227
    %v5368 = vunpack.c.h.b16 %v5227
    %v5369 = vunpack.c.l.b16 %v5228
    %v5370 = vunpack.c.h.b16 %v5228
    %v5371 = vunpack.c.l.b16 %v5229
    %v5372 = vunpack.c.h.b16 %v5229
    %v5373 = vunpack.c.l.b16 %v5230
    %v5374 = vunpack.c.h.b16 %v5230
    %v5375 = vpack.c.b16 %v5285, %v5279
    %v5376 = vpack.c.b16 %v5286, %v5280
    %v5377 = vpack.c.b16 %v5287, %v5281
    %v5378 = vpack.c.b16 %v5288, %v5282
    %v5379 = vpack.c.b16 %v5289, %v5283
    %v5380 = vpack.c.b16 %v5290, %v5284
    %v5381 = vpack.c.b16 %v5297, %v5291
    %v5382 = vpack.c.b16 %v5298, %v5292
    %v5383 = vpack.c.b16 %v5299, %v5293
    %v5384 = vpack.c.b16 %v5300, %v5294
    %v5385 = vpack.c.b16 %v5301, %v5295
    %v5386 = vpack.c.b16 %v5302, %v5296
    %v5387 = vpack.c.b16 %v5309, %v5303
    %v5388 = vpack.c.b16 %v5310, %v5304
    %v5389 = vpack.c.b16 %v5311, %v5305
    %v5390 = vpack.c.b16 %v5312, %v5306
    %v5391 = vpack.c.b16 %v5313, %v5307
    %v5392 = vpack.c.b16 %v5314, %v5308
    %v5393 = vpack.c.b16 %v5321, %v5315
    %v5394 = vpack.c.b16 %v5322, %v5316
    %v5395 = vpack.c.b16 %v5323, %v5317
    %v5396 = vpack.c.b16 %v5324, %v5318
    %v5397 = vpack.c.b16 %v5325, %v5319
    %v5398 = vpack.c.b16 %v5326, %v5320
    %v5399 = vpack.c.b16 %v5333, %v5327
    %v5400 = vpack.c.b16 %v5334, %v5328
    %v5401 = vpack.c.b16 %v5335, %v5329
    %v5402 = vpack.c.b16 %v5336, %v5330
    %v5403 = vpack.c.b16 %v5337, %v5331
    %v5404 = vpack.c.b16 %v5338, %v5332
    %v5405 = vpack.c.b16 %v5345, %v5339
    %v5406 = vpack.c.b16 %v5346, %v5340
    %v5407 = vpack.c.b16 %v5347, %v5341
    %v5408 = vpack.c.b16 %v5348, %v5342
    %v5409 = vpack.c.b16 %v5349, %v5343
    %v5410 = vpack.c.b16 %v5350, %v5344
    %v5411 = vpack.c.b16 %v5357, %v5351
    %v5412 = vpack.c.b16 %v5358, %v5352
    %v5413 = vpack.c.b16 %v5359, %v5353
    %v5414 = vpack.c.b16 %v5360, %v5354
    %v5415 = vpack.c.b16 %v5361, %v5355
    %v5416 = vpack.c.b16 %v5362, %v5356
    %v5417 = vpack.c.b16 %v5369, %v5363
    %v5418 = vpack.c.b16 %v5370, %v5364
    %v5419 = vpack.c.b16 %v5371, %v5365
    %v5420 = vpack.c.b16 %v5372, %v5366
    %v5421 = vpack.c.b16 %v5373, %v5367
    %v5422 = vpack.c.b16 %v5374, %v5368
    %5471 = vmatpush.bf16.msra.mxu0 %v5417
    %5472 = vmatpush.bf16.msra.mxu0 %v5411
    %5473 = vmatpush.bf16.msra.mxu0 %v5405
    %5474 = vmatpush.bf16.msra.mxu0 %v5399
    %5475 = vmatpush.bf16.msra.mxu0 %v5393
    %5476 = vmatpush.bf16.msra.mxu0 %v5387
    %5477 = vmatpush.bf16.msra.mxu0 %v5381
    %5478 = vmatpush.bf16.msra.mxu0 %v5375
    %5479 = vmatmul.bf16.gmra.mxu0 %v5181
    %v5480 = vpop.f32.mrf.mxu0
    %v5481 = vadd.f32 0.0, %v5480
    %v5482 = vpop.f32.mrf.mxu0
    %5483 = vdwg.mxu0
    %5484 = vmatpush.bf16.msra.mxu0 %v5418
    %5485 = vmatpush.bf16.msra.mxu0 %v5412
    %5486 = vmatpush.bf16.msra.mxu0 %v5406
    %5487 = vmatpush.bf16.msra.mxu0 %v5400
    %5488 = vmatpush.bf16.msra.mxu0 %v5394
    %5489 = vmatpush.bf16.msra.mxu0 %v5388
    %5490 = vmatpush.bf16.msra.mxu0 %v5382
    %5491 = vmatpush.bf16.msra.mxu0 %v5376
    %5492 = vmatmul.bf16.gmra.mxu0 %v5181
    %v5493 = vpop.f32.mrf.mxu0
    %v5494 = vadd.f32 0.0, %v5493
    %v5495 = vpop.f32.mrf.mxu0
    %5496 = vdwg.mxu0
    %5497 = vmatpush.bf16.msra.mxu0 %v5419
    %5498 = vmatpush.bf16.msra.mxu0 %v5413
    %5499 = vmatpush.bf16.msra.mxu0 %v5407
    %5500 = vmatpush.bf16.msra.mxu0 %v5401
    %5501 = vmatpush.bf16.msra.mxu0 %v5395
    %5502 = vmatpush.bf16.msra.mxu0 %v5389
    %5503 = vmatpush.bf16.msra.mxu0 %v5383
    %5504 = vmatpush.bf16.msra.mxu0 %v5377
    %5505 = vmatmul.bf16.gmra.mxu0 %v5181
    %v5506 = vpop.f32.mrf.mxu0
    %v5507 = vadd.f32 0.0, %v5506
    %v5508 = vpop.f32.mrf.mxu0
    %5509 = vdwg.mxu0
    %5510 = vmatpush.bf16.msra.mxu0 %v5420
    %5511 = vmatpush.bf16.msra.mxu0 %v5414
    %5512 = vmatpush.bf16.msra.mxu0 %v5408
    %5513 = vmatpush.bf16.msra.mxu0 %v5402
    %5514 = vmatpush.bf16.msra.mxu0 %v5396
    %5515 = vmatpush.bf16.msra.mxu0 %v5390
    %5516 = vmatpush.bf16.msra.mxu0 %v5384
    %5517 = vmatpush.bf16.msra.mxu0 %v5378
    %5518 = vmatmul.bf16.gmra.mxu0 %v5181
    %v5519 = vpop.f32.mrf.mxu0
    %v5520 = vadd.f32 0.0, %v5519
    %v5521 = vpop.f32.mrf.mxu0
    %5522 = vdwg.mxu0
    %5523 = vmatpush.bf16.msra.mxu0 %v5421
    %5524 = vmatpush.bf16.msra.mxu0 %v5415
    %5525 = vmatpush.bf16.msra.mxu0 %v5409
    %5526 = vmatpush.bf16.msra.mxu0 %v5403
    %5527 = vmatpush.bf16.msra.mxu0 %v5397
    %5528 = vmatpush.bf16.msra.mxu0 %v5391
    %5529 = vmatpush.bf16.msra.mxu0 %v5385
    %5530 = vmatpush.bf16.msra.mxu0 %v5379
    %5531 = vmatmul.bf16.gmra.mxu0 %v5181
    %v5532 = vpop.f32.mrf.mxu0
    %v5533 = vadd.f32 0.0, %v5532
    %v5534 = vpop.f32.mrf.mxu0
    %5535 = vdwg.mxu0
    %5536 = vmatpush.bf16.msra.mxu0 %v5422
    %5537 = vmatpush.bf16.msra.mxu0 %v5416
    %5538 = vmatpush.bf16.msra.mxu0 %v5410
    %5539 = vmatpush.bf16.msra.mxu0 %v5404
    %5540 = vmatpush.bf16.msra.mxu0 %v5398
    %5541 = vmatpush.bf16.msra.mxu0 %v5392
    %5542 = vmatpush.bf16.msra.mxu0 %v5386
    %5543 = vmatpush.bf16.msra.mxu0 %v5380
    %5544 = vmatmul.bf16.gmra.mxu0 %v5181
    %v5545 = vpop.f32.mrf.mxu0
    %v5546 = vadd.f32 0.0, %v5545
    %v5547 = vpop.f32.mrf.mxu0
    %5548 = vdwg.mxu0
    %v5549 = vadd.f32 %v5173, %v5481
    %v5550 = vadd.f32 %v5174, %v5494
    %v5551 = vadd.f32 %v5175, %v5507
    %v5552 = vadd.f32 %v5176, %v5520
    %v5553 = vadd.f32 %v5177, %v5533
    %v5554 = vadd.f32 %v5178, %v5546
    %s5555 = scalar_lea.vmem [#allocation3], 13
    %v5556 = vld [vmem:[%s5555] ss:$25 sm:$0x3]
    %v5557 = vpack.c.bf16 %v5556, %v5556
    %s5558 = scalar_lea.vmem [#allocation10], 4992
    %v5559 = vld [vmem:[%s5558] sm:$0xff]
    %v5560 = vld [vmem:[%s5558 + $0x8] sm:$0xff]
    %v5561 = vld [vmem:[%s5558 + $0x10] sm:$0xff]
    %v5562 = vld [vmem:[%s5558 + $0x18] sm:$0xff]
    %v5563 = vld [vmem:[%s5558 + $0x20] sm:$0xff]
    %v5564 = vld [vmem:[%s5558 + $0x28] sm:$0xff]
    %v5565 = vld [vmem:[%s5558 + $0x30] sm:$0xff]
    %v5566 = vld [vmem:[%s5558 + $0x38] sm:$0xff]
    %v5567 = vld [vmem:[%s5558 + $0x40] sm:$0xff]
    %v5568 = vld [vmem:[%s5558 + $0x48] sm:$0xff]
    %v5569 = vld [vmem:[%s5558 + $0x50] sm:$0xff]
    %v5570 = vld [vmem:[%s5558 + $0x58] sm:$0xff]
    %v5571 = vld [vmem:[%s5558 + $0x60] sm:$0xff]
    %v5572 = vld [vmem:[%s5558 + $0x68] sm:$0xff]
    %v5573 = vld [vmem:[%s5558 + $0x70] sm:$0xff]
    %v5574 = vld [vmem:[%s5558 + $0x78] sm:$0xff]
    %v5575 = vld [vmem:[%s5558 + $0x80] sm:$0xff]
    %v5576 = vld [vmem:[%s5558 + $0x88] sm:$0xff]
    %v5577 = vld [vmem:[%s5558 + $0x90] sm:$0xff]
    %v5578 = vld [vmem:[%s5558 + $0x98] sm:$0xff]
    %v5579 = vld [vmem:[%s5558 + $0xa0] sm:$0xff]
    %v5580 = vld [vmem:[%s5558 + $0xa8] sm:$0xff]
    %v5581 = vld [vmem:[%s5558 + $0xb0] sm:$0xff]
    %v5582 = vld [vmem:[%s5558 + $0xb8] sm:$0xff]
    %v5583 = vld [vmem:[%s5558 + $0xc0] sm:$0xff]
    %v5584 = vld [vmem:[%s5558 + $0xc8] sm:$0xff]
    %v5585 = vld [vmem:[%s5558 + $0xd0] sm:$0xff]
    %v5586 = vld [vmem:[%s5558 + $0xd8] sm:$0xff]
    %v5587 = vld [vmem:[%s5558 + $0xe0] sm:$0xff]
    %v5588 = vld [vmem:[%s5558 + $0xe8] sm:$0xff]
    %v5589 = vld [vmem:[%s5558 + $0xf0] sm:$0xff]
    %v5590 = vld [vmem:[%s5558 + $0xf8] sm:$0xff]
    %v5591 = vld [vmem:[%s5558 + $0x100] sm:$0xff]
    %v5592 = vld [vmem:[%s5558 + $0x108] sm:$0xff]
    %v5593 = vld [vmem:[%s5558 + $0x110] sm:$0xff]
    %v5594 = vld [vmem:[%s5558 + $0x118] sm:$0xff]
    %v5595 = vld [vmem:[%s5558 + $0x120] sm:$0xff]
    %v5596 = vld [vmem:[%s5558 + $0x128] sm:$0xff]
    %v5597 = vld [vmem:[%s5558 + $0x130] sm:$0xff]
    %v5598 = vld [vmem:[%s5558 + $0x138] sm:$0xff]
    %v5599 = vld [vmem:[%s5558 + $0x140] sm:$0xff]
    %v5600 = vld [vmem:[%s5558 + $0x148] sm:$0xff]
    %v5601 = vld [vmem:[%s5558 + $0x150] sm:$0xff]
    %v5602 = vld [vmem:[%s5558 + $0x158] sm:$0xff]
    %v5603 = vld [vmem:[%s5558 + $0x160] sm:$0xff]
    %v5604 = vld [vmem:[%s5558 + $0x168] sm:$0xff]
    %v5605 = vld [vmem:[%s5558 + $0x170] sm:$0xff]
    %v5606 = vld [vmem:[%s5558 + $0x178] sm:$0xff]
    %v5655 = vunpack.c.l.b16 %v5559
    %v5656 = vunpack.c.h.b16 %v5559
    %v5657 = vunpack.c.l.b16 %v5560
    %v5658 = vunpack.c.h.b16 %v5560
    %v5659 = vunpack.c.l.b16 %v5561
    %v5660 = vunpack.c.h.b16 %v5561
    %v5661 = vunpack.c.l.b16 %v5562
    %v5662 = vunpack.c.h.b16 %v5562
    %v5663 = vunpack.c.l.b16 %v5563
    %v5664 = vunpack.c.h.b16 %v5563
    %v5665 = vunpack.c.l.b16 %v5564
    %v5666 = vunpack.c.h.b16 %v5564
    %v5667 = vunpack.c.l.b16 %v5565
    %v5668 = vunpack.c.h.b16 %v5565
    %v5669 = vunpack.c.l.b16 %v5566
    %v5670 = vunpack.c.h.b16 %v5566
    %v5671 = vunpack.c.l.b16 %v5567
    %v5672 = vunpack.c.h.b16 %v5567
    %v5673 = vunpack.c.l.b16 %v5568
    %v5674 = vunpack.c.h.b16 %v5568
    %v5675 = vunpack.c.l.b16 %v5569
    %v5676 = vunpack.c.h.b16 %v5569
    %v5677 = vunpack.c.l.b16 %v5570
    %v5678 = vunpack.c.h.b16 %v5570
    %v5679 = vunpack.c.l.b16 %v5571
    %v5680 = vunpack.c.h.b16 %v5571
    %v5681 = vunpack.c.l.b16 %v5572
    %v5682 = vunpack.c.h.b16 %v5572
    %v5683 = vunpack.c.l.b16 %v5573
    %v5684 = vunpack.c.h.b16 %v5573
    %v5685 = vunpack.c.l.b16 %v5574
    %v5686 = vunpack.c.h.b16 %v5574
    %v5687 = vunpack.c.l.b16 %v5575
    %v5688 = vunpack.c.h.b16 %v5575
    %v5689 = vunpack.c.l.b16 %v5576
    %v5690 = vunpack.c.h.b16 %v5576
    %v5691 = vunpack.c.l.b16 %v5577
    %v5692 = vunpack.c.h.b16 %v5577
    %v5693 = vunpack.c.l.b16 %v5578
    %v5694 = vunpack.c.h.b16 %v5578
    %v5695 = vunpack.c.l.b16 %v5579
    %v5696 = vunpack.c.h.b16 %v5579
    %v5697 = vunpack.c.l.b16 %v5580
    %v5698 = vunpack.c.h.b16 %v5580
    %v5699 = vunpack.c.l.b16 %v5581
    %v5700 = vunpack.c.h.b16 %v5581
    %v5701 = vunpack.c.l.b16 %v5582
    %v5702 = vunpack.c.h.b16 %v5582
    %v5703 = vunpack.c.l.b16 %v5583
    %v5704 = vunpack.c.h.b16 %v5583
    %v5705 = vunpack.c.l.b16 %v5584
    %v5706 = vunpack.c.h.b16 %v5584
    %v5707 = vunpack.c.l.b16 %v5585
    %v5708 = vunpack.c.h.b16 %v5585
    %v5709 = vunpack.c.l.b16 %v5586
    %v5710 = vunpack.c.h.b16 %v5586
    %v5711 = vunpack.c.l.b16 %v5587
    %v5712 = vunpack.c.h.b16 %v5587
    %v5713 = vunpack.c.l.b16 %v5588
    %v5714 = vunpack.c.h.b16 %v5588
    %v5715 = vunpack.c.l.b16 %v5589
    %v5716 = vunpack.c.h.b16 %v5589
    %v5717 = vunpack.c.l.b16 %v5590
    %v5718 = vunpack.c.h.b16 %v5590
    %v5719 = vunpack.c.l.b16 %v5591
    %v5720 = vunpack.c.h.b16 %v5591
    %v5721 = vunpack.c.l.b16 %v5592
    %v5722 = vunpack.c.h.b16 %v5592
    %v5723 = vunpack.c.l.b16 %v5593
    %v5724 = vunpack.c.h.b16 %v5593
    %v5725 = vunpack.c.l.b16 %v5594
    %v5726 = vunpack.c.h.b16 %v5594
    %v5727 = vunpack.c.l.b16 %v5595
    %v5728 = vunpack.c.h.b16 %v5595
    %v5729 = vunpack.c.l.b16 %v5596
    %v5730 = vunpack.c.h.b16 %v5596
    %v5731 = vunpack.c.l.b16 %v5597
    %v5732 = vunpack.c.h.b16 %v5597
    %v5733 = vunpack.c.l.b16 %v5598
    %v5734 = vunpack.c.h.b16 %v5598
    %v5735 = vunpack.c.l.b16 %v5599
    %v5736 = vunpack.c.h.b16 %v5599
    %v5737 = vunpack.c.l.b16 %v5600
    %v5738 = vunpack.c.h.b16 %v5600
    %v5739 = vunpack.c.l.b16 %v5601
    %v5740 = vunpack.c.h.b16 %v5601
    %v5741 = vunpack.c.l.b16 %v5602
    %v5742 = vunpack.c.h.b16 %v5602
    %v5743 = vunpack.c.l.b16 %v5603
    %v5744 = vunpack.c.h.b16 %v5603
    %v5745 = vunpack.c.l.b16 %v5604
    %v5746 = vunpack.c.h.b16 %v5604
    %v5747 = vunpack.c.l.b16 %v5605
    %v5748 = vunpack.c.h.b16 %v5605
    %v5749 = vunpack.c.l.b16 %v5606
    %v5750 = vunpack.c.h.b16 %v5606
    %v5751 = vpack.c.b16 %v5661, %v5655
    %v5752 = vpack.c.b16 %v5662, %v5656
    %v5753 = vpack.c.b16 %v5663, %v5657
    %v5754 = vpack.c.b16 %v5664, %v5658
    %v5755 = vpack.c.b16 %v5665, %v5659
    %v5756 = vpack.c.b16 %v5666, %v5660
    %v5757 = vpack.c.b16 %v5673, %v5667
    %v5758 = vpack.c.b16 %v5674, %v5668
    %v5759 = vpack.c.b16 %v5675, %v5669
    %v5760 = vpack.c.b16 %v5676, %v5670
    %v5761 = vpack.c.b16 %v5677, %v5671
    %v5762 = vpack.c.b16 %v5678, %v5672
    %v5763 = vpack.c.b16 %v5685, %v5679
    %v5764 = vpack.c.b16 %v5686, %v5680
    %v5765 = vpack.c.b16 %v5687, %v5681
    %v5766 = vpack.c.b16 %v5688, %v5682
    %v5767 = vpack.c.b16 %v5689, %v5683
    %v5768 = vpack.c.b16 %v5690, %v5684
    %v5769 = vpack.c.b16 %v5697, %v5691
    %v5770 = vpack.c.b16 %v5698, %v5692
    %v5771 = vpack.c.b16 %v5699, %v5693
    %v5772 = vpack.c.b16 %v5700, %v5694
    %v5773 = vpack.c.b16 %v5701, %v5695
    %v5774 = vpack.c.b16 %v5702, %v5696
    %v5775 = vpack.c.b16 %v5709, %v5703
    %v5776 = vpack.c.b16 %v5710, %v5704
    %v5777 = vpack.c.b16 %v5711, %v5705
    %v5778 = vpack.c.b16 %v5712, %v5706
    %v5779 = vpack.c.b16 %v5713, %v5707
    %v5780 = vpack.c.b16 %v5714, %v5708
    %v5781 = vpack.c.b16 %v5721, %v5715
    %v5782 = vpack.c.b16 %v5722, %v5716
    %v5783 = vpack.c.b16 %v5723, %v5717
    %v5784 = vpack.c.b16 %v5724, %v5718
    %v5785 = vpack.c.b16 %v5725, %v5719
    %v5786 = vpack.c.b16 %v5726, %v5720
    %v5787 = vpack.c.b16 %v5733, %v5727
    %v5788 = vpack.c.b16 %v5734, %v5728
    %v5789 = vpack.c.b16 %v5735, %v5729
    %v5790 = vpack.c.b16 %v5736, %v5730
    %v5791 = vpack.c.b16 %v5737, %v5731
    %v5792 = vpack.c.b16 %v5738, %v5732
    %v5793 = vpack.c.b16 %v5745, %v5739
    %v5794 = vpack.c.b16 %v5746, %v5740
    %v5795 = vpack.c.b16 %v5747, %v5741
    %v5796 = vpack.c.b16 %v5748, %v5742
    %v5797 = vpack.c.b16 %v5749, %v5743
    %v5798 = vpack.c.b16 %v5750, %v5744
    %5847 = vmatpush.bf16.msra.mxu0 %v5793
    %5848 = vmatpush.bf16.msra.mxu0 %v5787
    %5849 = vmatpush.bf16.msra.mxu0 %v5781
    %5850 = vmatpush.bf16.msra.mxu0 %v5775
    %5851 = vmatpush.bf16.msra.mxu0 %v5769
    %5852 = vmatpush.bf16.msra.mxu0 %v5763
    %5853 = vmatpush.bf16.msra.mxu0 %v5757
    %5854 = vmatpush.bf16.msra.mxu0 %v5751
    %5855 = vmatmul.bf16.gmra.mxu0 %v5557
    %v5856 = vpop.f32.mrf.mxu0
    %v5857 = vadd.f32 0.0, %v5856
    %v5858 = vpop.f32.mrf.mxu0
    %5859 = vdwg.mxu0
    %5860 = vmatpush.bf16.msra.mxu0 %v5794
    %5861 = vmatpush.bf16.msra.mxu0 %v5788
    %5862 = vmatpush.bf16.msra.mxu0 %v5782
    %5863 = vmatpush.bf16.msra.mxu0 %v5776
    %5864 = vmatpush.bf16.msra.mxu0 %v5770
    %5865 = vmatpush.bf16.msra.mxu0 %v5764
    %5866 = vmatpush.bf16.msra.mxu0 %v5758
    %5867 = vmatpush.bf16.msra.mxu0 %v5752
    %5868 = vmatmul.bf16.gmra.mxu0 %v5557
    %v5869 = vpop.f32.mrf.mxu0
    %v5870 = vadd.f32 0.0, %v5869
    %v5871 = vpop.f32.mrf.mxu0
    %5872 = vdwg.mxu0
    %5873 = vmatpush.bf16.msra.mxu0 %v5795
    %5874 = vmatpush.bf16.msra.mxu0 %v5789
    %5875 = vmatpush.bf16.msra.mxu0 %v5783
    %5876 = vmatpush.bf16.msra.mxu0 %v5777
    %5877 = vmatpush.bf16.msra.mxu0 %v5771
    %5878 = vmatpush.bf16.msra.mxu0 %v5765
    %5879 = vmatpush.bf16.msra.mxu0 %v5759
    %5880 = vmatpush.bf16.msra.mxu0 %v5753
    %5881 = vmatmul.bf16.gmra.mxu0 %v5557
    %v5882 = vpop.f32.mrf.mxu0
    %v5883 = vadd.f32 0.0, %v5882
    %v5884 = vpop.f32.mrf.mxu0
    %5885 = vdwg.mxu0
    %5886 = vmatpush.bf16.msra.mxu0 %v5796
    %5887 = vmatpush.bf16.msra.mxu0 %v5790
    %5888 = vmatpush.bf16.msra.mxu0 %v5784
    %5889 = vmatpush.bf16.msra.mxu0 %v5778
    %5890 = vmatpush.bf16.msra.mxu0 %v5772
    %5891 = vmatpush.bf16.msra.mxu0 %v5766
    %5892 = vmatpush.bf16.msra.mxu0 %v5760
    %5893 = vmatpush.bf16.msra.mxu0 %v5754
    %5894 = vmatmul.bf16.gmra.mxu0 %v5557
    %v5895 = vpop.f32.mrf.mxu0
    %v5896 = vadd.f32 0.0, %v5895
    %v5897 = vpop.f32.mrf.mxu0
    %5898 = vdwg.mxu0
    %5899 = vmatpush.bf16.msra.mxu0 %v5797
    %5900 = vmatpush.bf16.msra.mxu0 %v5791
    %5901 = vmatpush.bf16.msra.mxu0 %v5785
    %5902 = vmatpush.bf16.msra.mxu0 %v5779
    %5903 = vmatpush.bf16.msra.mxu0 %v5773
    %5904 = vmatpush.bf16.msra.mxu0 %v5767
    %5905 = vmatpush.bf16.msra.mxu0 %v5761
    %5906 = vmatpush.bf16.msra.mxu0 %v5755
    %5907 = vmatmul.bf16.gmra.mxu0 %v5557
    %v5908 = vpop.f32.mrf.mxu0
    %v5909 = vadd.f32 0.0, %v5908
    %v5910 = vpop.f32.mrf.mxu0
    %5911 = vdwg.mxu0
    %5912 = vmatpush.bf16.msra.mxu0 %v5798
    %5913 = vmatpush.bf16.msra.mxu0 %v5792
    %5914 = vmatpush.bf16.msra.mxu0 %v5786
    %5915 = vmatpush.bf16.msra.mxu0 %v5780
    %5916 = vmatpush.bf16.msra.mxu0 %v5774
    %5917 = vmatpush.bf16.msra.mxu0 %v5768
    %5918 = vmatpush.bf16.msra.mxu0 %v5762
    %5919 = vmatpush.bf16.msra.mxu0 %v5756
    %5920 = vmatmul.bf16.gmra.mxu0 %v5557
    %v5921 = vpop.f32.mrf.mxu0
    %v5922 = vadd.f32 0.0, %v5921
    %v5923 = vpop.f32.mrf.mxu0
    %5924 = vdwg.mxu0
    %v5925 = vadd.f32 %v5549, %v5857
    %v5926 = vadd.f32 %v5550, %v5870
    %v5927 = vadd.f32 %v5551, %v5883
    %v5928 = vadd.f32 %v5552, %v5896
    %v5929 = vadd.f32 %v5553, %v5909
    %v5930 = vadd.f32 %v5554, %v5922
    %s5931 = scalar_lea.vmem [#allocation3], 14
    %v5932 = vld [vmem:[%s5931] ss:$25 sm:$0x3]
    %v5933 = vpack.c.bf16 %v5932, %v5932
    %s5934 = scalar_lea.vmem [#allocation10], 5376
    %v5935 = vld [vmem:[%s5934] sm:$0xff]
    %v5936 = vld [vmem:[%s5934 + $0x8] sm:$0xff]
    %v5937 = vld [vmem:[%s5934 + $0x10] sm:$0xff]
    %v5938 = vld [vmem:[%s5934 + $0x18] sm:$0xff]
    %v5939 = vld [vmem:[%s5934 + $0x20] sm:$0xff]
    %v5940 = vld [vmem:[%s5934 + $0x28] sm:$0xff]
    %v5941 = vld [vmem:[%s5934 + $0x30] sm:$0xff]
    %v5942 = vld [vmem:[%s5934 + $0x38] sm:$0xff]
    %v5943 = vld [vmem:[%s5934 + $0x40] sm:$0xff]
    %v5944 = vld [vmem:[%s5934 + $0x48] sm:$0xff]
    %v5945 = vld [vmem:[%s5934 + $0x50] sm:$0xff]
    %v5946 = vld [vmem:[%s5934 + $0x58] sm:$0xff]
    %v5947 = vld [vmem:[%s5934 + $0x60] sm:$0xff]
    %v5948 = vld [vmem:[%s5934 + $0x68] sm:$0xff]
    %v5949 = vld [vmem:[%s5934 + $0x70] sm:$0xff]
    %v5950 = vld [vmem:[%s5934 + $0x78] sm:$0xff]
    %v5951 = vld [vmem:[%s5934 + $0x80] sm:$0xff]
    %v5952 = vld [vmem:[%s5934 + $0x88] sm:$0xff]
    %v5953 = vld [vmem:[%s5934 + $0x90] sm:$0xff]
    %v5954 = vld [vmem:[%s5934 + $0x98] sm:$0xff]
    %v5955 = vld [vmem:[%s5934 + $0xa0] sm:$0xff]
    %v5956 = vld [vmem:[%s5934 + $0xa8] sm:$0xff]
    %v5957 = vld [vmem:[%s5934 + $0xb0] sm:$0xff]
    %v5958 = vld [vmem:[%s5934 + $0xb8] sm:$0xff]
    %v5959 = vld [vmem:[%s5934 + $0xc0] sm:$0xff]
    %v5960 = vld [vmem:[%s5934 + $0xc8] sm:$0xff]
    %v5961 = vld [vmem:[%s5934 + $0xd0] sm:$0xff]
    %v5962 = vld [vmem:[%s5934 + $0xd8] sm:$0xff]
    %v5963 = vld [vmem:[%s5934 + $0xe0] sm:$0xff]
    %v5964 = vld [vmem:[%s5934 + $0xe8] sm:$0xff]
    %v5965 = vld [vmem:[%s5934 + $0xf0] sm:$0xff]
    %v5966 = vld [vmem:[%s5934 + $0xf8] sm:$0xff]
    %v5967 = vld [vmem:[%s5934 + $0x100] sm:$0xff]
    %v5968 = vld [vmem:[%s5934 + $0x108] sm:$0xff]
    %v5969 = vld [vmem:[%s5934 + $0x110] sm:$0xff]
    %v5970 = vld [vmem:[%s5934 + $0x118] sm:$0xff]
    %v5971 = vld [vmem:[%s5934 + $0x120] sm:$0xff]
    %v5972 = vld [vmem:[%s5934 + $0x128] sm:$0xff]
    %v5973 = vld [vmem:[%s5934 + $0x130] sm:$0xff]
    %v5974 = vld [vmem:[%s5934 + $0x138] sm:$0xff]
    %v5975 = vld [vmem:[%s5934 + $0x140] sm:$0xff]
    %v5976 = vld [vmem:[%s5934 + $0x148] sm:$0xff]
    %v5977 = vld [vmem:[%s5934 + $0x150] sm:$0xff]
    %v5978 = vld [vmem:[%s5934 + $0x158] sm:$0xff]
    %v5979 = vld [vmem:[%s5934 + $0x160] sm:$0xff]
    %v5980 = vld [vmem:[%s5934 + $0x168] sm:$0xff]
    %v5981 = vld [vmem:[%s5934 + $0x170] sm:$0xff]
    %v5982 = vld [vmem:[%s5934 + $0x178] sm:$0xff]
    %v6031 = vunpack.c.l.b16 %v5935
    %v6032 = vunpack.c.h.b16 %v5935
    %v6033 = vunpack.c.l.b16 %v5936
    %v6034 = vunpack.c.h.b16 %v5936
    %v6035 = vunpack.c.l.b16 %v5937
    %v6036 = vunpack.c.h.b16 %v5937
    %v6037 = vunpack.c.l.b16 %v5938
    %v6038 = vunpack.c.h.b16 %v5938
    %v6039 = vunpack.c.l.b16 %v5939
    %v6040 = vunpack.c.h.b16 %v5939
    %v6041 = vunpack.c.l.b16 %v5940
    %v6042 = vunpack.c.h.b16 %v5940
    %v6043 = vunpack.c.l.b16 %v5941
    %v6044 = vunpack.c.h.b16 %v5941
    %v6045 = vunpack.c.l.b16 %v5942
    %v6046 = vunpack.c.h.b16 %v5942
    %v6047 = vunpack.c.l.b16 %v5943
    %v6048 = vunpack.c.h.b16 %v5943
    %v6049 = vunpack.c.l.b16 %v5944
    %v6050 = vunpack.c.h.b16 %v5944
    %v6051 = vunpack.c.l.b16 %v5945
    %v6052 = vunpack.c.h.b16 %v5945
    %v6053 = vunpack.c.l.b16 %v5946
    %v6054 = vunpack.c.h.b16 %v5946
    %v6055 = vunpack.c.l.b16 %v5947
    %v6056 = vunpack.c.h.b16 %v5947
    %v6057 = vunpack.c.l.b16 %v5948
    %v6058 = vunpack.c.h.b16 %v5948
    %v6059 = vunpack.c.l.b16 %v5949
    %v6060 = vunpack.c.h.b16 %v5949
    %v6061 = vunpack.c.l.b16 %v5950
    %v6062 = vunpack.c.h.b16 %v5950
    %v6063 = vunpack.c.l.b16 %v5951
    %v6064 = vunpack.c.h.b16 %v5951
    %v6065 = vunpack.c.l.b16 %v5952
    %v6066 = vunpack.c.h.b16 %v5952
    %v6067 = vunpack.c.l.b16 %v5953
    %v6068 = vunpack.c.h.b16 %v5953
    %v6069 = vunpack.c.l.b16 %v5954
    %v6070 = vunpack.c.h.b16 %v5954
    %v6071 = vunpack.c.l.b16 %v5955
    %v6072 = vunpack.c.h.b16 %v5955
    %v6073 = vunpack.c.l.b16 %v5956
    %v6074 = vunpack.c.h.b16 %v5956
    %v6075 = vunpack.c.l.b16 %v5957
    %v6076 = vunpack.c.h.b16 %v5957
    %v6077 = vunpack.c.l.b16 %v5958
    %v6078 = vunpack.c.h.b16 %v5958
    %v6079 = vunpack.c.l.b16 %v5959
    %v6080 = vunpack.c.h.b16 %v5959
    %v6081 = vunpack.c.l.b16 %v5960
    %v6082 = vunpack.c.h.b16 %v5960
    %v6083 = vunpack.c.l.b16 %v5961
    %v6084 = vunpack.c.h.b16 %v5961
    %v6085 = vunpack.c.l.b16 %v5962
    %v6086 = vunpack.c.h.b16 %v5962
    %v6087 = vunpack.c.l.b16 %v5963
    %v6088 = vunpack.c.h.b16 %v5963
    %v6089 = vunpack.c.l.b16 %v5964
    %v6090 = vunpack.c.h.b16 %v5964
    %v6091 = vunpack.c.l.b16 %v5965
    %v6092 = vunpack.c.h.b16 %v5965
    %v6093 = vunpack.c.l.b16 %v5966
    %v6094 = vunpack.c.h.b16 %v5966
    %v6095 = vunpack.c.l.b16 %v5967
    %v6096 = vunpack.c.h.b16 %v5967
    %v6097 = vunpack.c.l.b16 %v5968
    %v6098 = vunpack.c.h.b16 %v5968
    %v6099 = vunpack.c.l.b16 %v5969
    %v6100 = vunpack.c.h.b16 %v5969
    %v6101 = vunpack.c.l.b16 %v5970
    %v6102 = vunpack.c.h.b16 %v5970
    %v6103 = vunpack.c.l.b16 %v5971
    %v6104 = vunpack.c.h.b16 %v5971
    %v6105 = vunpack.c.l.b16 %v5972
    %v6106 = vunpack.c.h.b16 %v5972
    %v6107 = vunpack.c.l.b16 %v5973
    %v6108 = vunpack.c.h.b16 %v5973
    %v6109 = vunpack.c.l.b16 %v5974
    %v6110 = vunpack.c.h.b16 %v5974
    %v6111 = vunpack.c.l.b16 %v5975
    %v6112 = vunpack.c.h.b16 %v5975
    %v6113 = vunpack.c.l.b16 %v5976
    %v6114 = vunpack.c.h.b16 %v5976
    %v6115 = vunpack.c.l.b16 %v5977
    %v6116 = vunpack.c.h.b16 %v5977
    %v6117 = vunpack.c.l.b16 %v5978
    %v6118 = vunpack.c.h.b16 %v5978
    %v6119 = vunpack.c.l.b16 %v5979
    %v6120 = vunpack.c.h.b16 %v5979
    %v6121 = vunpack.c.l.b16 %v5980
    %v6122 = vunpack.c.h.b16 %v5980
    %v6123 = vunpack.c.l.b16 %v5981
    %v6124 = vunpack.c.h.b16 %v5981
    %v6125 = vunpack.c.l.b16 %v5982
    %v6126 = vunpack.c.h.b16 %v5982
    %v6127 = vpack.c.b16 %v6037, %v6031
    %v6128 = vpack.c.b16 %v6038, %v6032
    %v6129 = vpack.c.b16 %v6039, %v6033
    %v6130 = vpack.c.b16 %v6040, %v6034
    %v6131 = vpack.c.b16 %v6041, %v6035
    %v6132 = vpack.c.b16 %v6042, %v6036
    %v6133 = vpack.c.b16 %v6049, %v6043
    %v6134 = vpack.c.b16 %v6050, %v6044
    %v6135 = vpack.c.b16 %v6051, %v6045
    %v6136 = vpack.c.b16 %v6052, %v6046
    %v6137 = vpack.c.b16 %v6053, %v6047
    %v6138 = vpack.c.b16 %v6054, %v6048
    %v6139 = vpack.c.b16 %v6061, %v6055
    %v6140 = vpack.c.b16 %v6062, %v6056
    %v6141 = vpack.c.b16 %v6063, %v6057
    %v6142 = vpack.c.b16 %v6064, %v6058
    %v6143 = vpack.c.b16 %v6065, %v6059
    %v6144 = vpack.c.b16 %v6066, %v6060
    %v6145 = vpack.c.b16 %v6073, %v6067
    %v6146 = vpack.c.b16 %v6074, %v6068
    %v6147 = vpack.c.b16 %v6075, %v6069
    %v6148 = vpack.c.b16 %v6076, %v6070
    %v6149 = vpack.c.b16 %v6077, %v6071
    %v6150 = vpack.c.b16 %v6078, %v6072
    %v6151 = vpack.c.b16 %v6085, %v6079
    %v6152 = vpack.c.b16 %v6086, %v6080
    %v6153 = vpack.c.b16 %v6087, %v6081
    %v6154 = vpack.c.b16 %v6088, %v6082
    %v6155 = vpack.c.b16 %v6089, %v6083
    %v6156 = vpack.c.b16 %v6090, %v6084
    %v6157 = vpack.c.b16 %v6097, %v6091
    %v6158 = vpack.c.b16 %v6098, %v6092
    %v6159 = vpack.c.b16 %v6099, %v6093
    %v6160 = vpack.c.b16 %v6100, %v6094
    %v6161 = vpack.c.b16 %v6101, %v6095
    %v6162 = vpack.c.b16 %v6102, %v6096
    %v6163 = vpack.c.b16 %v6109, %v6103
    %v6164 = vpack.c.b16 %v6110, %v6104
    %v6165 = vpack.c.b16 %v6111, %v6105
    %v6166 = vpack.c.b16 %v6112, %v6106
    %v6167 = vpack.c.b16 %v6113, %v6107
    %v6168 = vpack.c.b16 %v6114, %v6108
    %v6169 = vpack.c.b16 %v6121, %v6115
    %v6170 = vpack.c.b16 %v6122, %v6116
    %v6171 = vpack.c.b16 %v6123, %v6117
    %v6172 = vpack.c.b16 %v6124, %v6118
    %v6173 = vpack.c.b16 %v6125, %v6119
    %v6174 = vpack.c.b16 %v6126, %v6120
    %6223 = vmatpush.bf16.msra.mxu0 %v6169
    %6224 = vmatpush.bf16.msra.mxu0 %v6163
    %6225 = vmatpush.bf16.msra.mxu0 %v6157
    %6226 = vmatpush.bf16.msra.mxu0 %v6151
    %6227 = vmatpush.bf16.msra.mxu0 %v6145
    %6228 = vmatpush.bf16.msra.mxu0 %v6139
    %6229 = vmatpush.bf16.msra.mxu0 %v6133
    %6230 = vmatpush.bf16.msra.mxu0 %v6127
    %6231 = vmatmul.bf16.gmra.mxu0 %v5933
    %v6232 = vpop.f32.mrf.mxu0
    %v6233 = vadd.f32 0.0, %v6232
    %v6234 = vpop.f32.mrf.mxu0
    %6235 = vdwg.mxu0
    %6236 = vmatpush.bf16.msra.mxu0 %v6170
    %6237 = vmatpush.bf16.msra.mxu0 %v6164
    %6238 = vmatpush.bf16.msra.mxu0 %v6158
    %6239 = vmatpush.bf16.msra.mxu0 %v6152
    %6240 = vmatpush.bf16.msra.mxu0 %v6146
    %6241 = vmatpush.bf16.msra.mxu0 %v6140
    %6242 = vmatpush.bf16.msra.mxu0 %v6134
    %6243 = vmatpush.bf16.msra.mxu0 %v6128
    %6244 = vmatmul.bf16.gmra.mxu0 %v5933
    %v6245 = vpop.f32.mrf.mxu0
    %v6246 = vadd.f32 0.0, %v6245
    %v6247 = vpop.f32.mrf.mxu0
    %6248 = vdwg.mxu0
    %6249 = vmatpush.bf16.msra.mxu0 %v6171
    %6250 = vmatpush.bf16.msra.mxu0 %v6165
    %6251 = vmatpush.bf16.msra.mxu0 %v6159
    %6252 = vmatpush.bf16.msra.mxu0 %v6153
    %6253 = vmatpush.bf16.msra.mxu0 %v6147
    %6254 = vmatpush.bf16.msra.mxu0 %v6141
    %6255 = vmatpush.bf16.msra.mxu0 %v6135
    %6256 = vmatpush.bf16.msra.mxu0 %v6129
    %6257 = vmatmul.bf16.gmra.mxu0 %v5933
    %v6258 = vpop.f32.mrf.mxu0
    %v6259 = vadd.f32 0.0, %v6258
    %v6260 = vpop.f32.mrf.mxu0
    %6261 = vdwg.mxu0
    %6262 = vmatpush.bf16.msra.mxu0 %v6172
    %6263 = vmatpush.bf16.msra.mxu0 %v6166
    %6264 = vmatpush.bf16.msra.mxu0 %v6160
    %6265 = vmatpush.bf16.msra.mxu0 %v6154
    %6266 = vmatpush.bf16.msra.mxu0 %v6148
    %6267 = vmatpush.bf16.msra.mxu0 %v6142
    %6268 = vmatpush.bf16.msra.mxu0 %v6136
    %6269 = vmatpush.bf16.msra.mxu0 %v6130
    %6270 = vmatmul.bf16.gmra.mxu0 %v5933
    %v6271 = vpop.f32.mrf.mxu0
    %v6272 = vadd.f32 0.0, %v6271
    %v6273 = vpop.f32.mrf.mxu0
    %6274 = vdwg.mxu0
    %6275 = vmatpush.bf16.msra.mxu0 %v6173
    %6276 = vmatpush.bf16.msra.mxu0 %v6167
    %6277 = vmatpush.bf16.msra.mxu0 %v6161
    %6278 = vmatpush.bf16.msra.mxu0 %v6155
    %6279 = vmatpush.bf16.msra.mxu0 %v6149
    %6280 = vmatpush.bf16.msra.mxu0 %v6143
    %6281 = vmatpush.bf16.msra.mxu0 %v6137
    %6282 = vmatpush.bf16.msra.mxu0 %v6131
    %6283 = vmatmul.bf16.gmra.mxu0 %v5933
    %v6284 = vpop.f32.mrf.mxu0
    %v6285 = vadd.f32 0.0, %v6284
    %v6286 = vpop.f32.mrf.mxu0
    %6287 = vdwg.mxu0
    %6288 = vmatpush.bf16.msra.mxu0 %v6174
    %6289 = vmatpush.bf16.msra.mxu0 %v6168
    %6290 = vmatpush.bf16.msra.mxu0 %v6162
    %6291 = vmatpush.bf16.msra.mxu0 %v6156
    %6292 = vmatpush.bf16.msra.mxu0 %v6150
    %6293 = vmatpush.bf16.msra.mxu0 %v6144
    %6294 = vmatpush.bf16.msra.mxu0 %v6138
    %6295 = vmatpush.bf16.msra.mxu0 %v6132
    %6296 = vmatmul.bf16.gmra.mxu0 %v5933
    %v6297 = vpop.f32.mrf.mxu0
    %v6298 = vadd.f32 0.0, %v6297
    %v6299 = vpop.f32.mrf.mxu0
    %6300 = vdwg.mxu0
    %v6301 = vadd.f32 %v5925, %v6233
    %v6302 = vadd.f32 %v5926, %v6246
    %v6303 = vadd.f32 %v5927, %v6259
    %v6304 = vadd.f32 %v5928, %v6272
    %v6305 = vadd.f32 %v5929, %v6285
    %v6306 = vadd.f32 %v5930, %v6298
    %s6307 = scalar_lea.vmem [#allocation3], 15
    %v6308 = vld [vmem:[%s6307] ss:$25 sm:$0x3]
    %v6309 = vpack.c.bf16 %v6308, %v6308
    %s6310 = scalar_lea.vmem [#allocation10], 5760
    %v6311 = vld [vmem:[%s6310] sm:$0xff]
    %v6312 = vld [vmem:[%s6310 + $0x8] sm:$0xff]
    %v6313 = vld [vmem:[%s6310 + $0x10] sm:$0xff]
    %v6314 = vld [vmem:[%s6310 + $0x18] sm:$0xff]
    %v6315 = vld [vmem:[%s6310 + $0x20] sm:$0xff]
    %v6316 = vld [vmem:[%s6310 + $0x28] sm:$0xff]
    %v6317 = vld [vmem:[%s6310 + $0x30] sm:$0xff]
    %v6318 = vld [vmem:[%s6310 + $0x38] sm:$0xff]
    %v6319 = vld [vmem:[%s6310 + $0x40] sm:$0xff]
    %v6320 = vld [vmem:[%s6310 + $0x48] sm:$0xff]
    %v6321 = vld [vmem:[%s6310 + $0x50] sm:$0xff]
    %v6322 = vld [vmem:[%s6310 + $0x58] sm:$0xff]
    %v6323 = vld [vmem:[%s6310 + $0x60] sm:$0xff]
    %v6324 = vld [vmem:[%s6310 + $0x68] sm:$0xff]
    %v6325 = vld [vmem:[%s6310 + $0x70] sm:$0xff]
    %v6326 = vld [vmem:[%s6310 + $0x78] sm:$0xff]
    %v6327 = vld [vmem:[%s6310 + $0x80] sm:$0xff]
    %v6328 = vld [vmem:[%s6310 + $0x88] sm:$0xff]
    %v6329 = vld [vmem:[%s6310 + $0x90] sm:$0xff]
    %v6330 = vld [vmem:[%s6310 + $0x98] sm:$0xff]
    %v6331 = vld [vmem:[%s6310 + $0xa0] sm:$0xff]
    %v6332 = vld [vmem:[%s6310 + $0xa8] sm:$0xff]
    %v6333 = vld [vmem:[%s6310 + $0xb0] sm:$0xff]
    %v6334 = vld [vmem:[%s6310 + $0xb8] sm:$0xff]
    %v6335 = vld [vmem:[%s6310 + $0xc0] sm:$0xff]
    %v6336 = vld [vmem:[%s6310 + $0xc8] sm:$0xff]
    %v6337 = vld [vmem:[%s6310 + $0xd0] sm:$0xff]
    %v6338 = vld [vmem:[%s6310 + $0xd8] sm:$0xff]
    %v6339 = vld [vmem:[%s6310 + $0xe0] sm:$0xff]
    %v6340 = vld [vmem:[%s6310 + $0xe8] sm:$0xff]
    %v6341 = vld [vmem:[%s6310 + $0xf0] sm:$0xff]
    %v6342 = vld [vmem:[%s6310 + $0xf8] sm:$0xff]
    %v6343 = vld [vmem:[%s6310 + $0x100] sm:$0xff]
    %v6344 = vld [vmem:[%s6310 + $0x108] sm:$0xff]
    %v6345 = vld [vmem:[%s6310 + $0x110] sm:$0xff]
    %v6346 = vld [vmem:[%s6310 + $0x118] sm:$0xff]
    %v6347 = vld [vmem:[%s6310 + $0x120] sm:$0xff]
    %v6348 = vld [vmem:[%s6310 + $0x128] sm:$0xff]
    %v6349 = vld [vmem:[%s6310 + $0x130] sm:$0xff]
    %v6350 = vld [vmem:[%s6310 + $0x138] sm:$0xff]
    %v6351 = vld [vmem:[%s6310 + $0x140] sm:$0xff]
    %v6352 = vld [vmem:[%s6310 + $0x148] sm:$0xff]
    %v6353 = vld [vmem:[%s6310 + $0x150] sm:$0xff]
    %v6354 = vld [vmem:[%s6310 + $0x158] sm:$0xff]
    %v6355 = vld [vmem:[%s6310 + $0x160] sm:$0xff]
    %v6356 = vld [vmem:[%s6310 + $0x168] sm:$0xff]
    %v6357 = vld [vmem:[%s6310 + $0x170] sm:$0xff]
    %v6358 = vld [vmem:[%s6310 + $0x178] sm:$0xff]
    %v6407 = vunpack.c.l.b16 %v6311
    %v6408 = vunpack.c.h.b16 %v6311
    %v6409 = vunpack.c.l.b16 %v6312
    %v6410 = vunpack.c.h.b16 %v6312
    %v6411 = vunpack.c.l.b16 %v6313
    %v6412 = vunpack.c.h.b16 %v6313
    %v6413 = vunpack.c.l.b16 %v6314
    %v6414 = vunpack.c.h.b16 %v6314
    %v6415 = vunpack.c.l.b16 %v6315
    %v6416 = vunpack.c.h.b16 %v6315
    %v6417 = vunpack.c.l.b16 %v6316
    %v6418 = vunpack.c.h.b16 %v6316
    %v6419 = vunpack.c.l.b16 %v6317
    %v6420 = vunpack.c.h.b16 %v6317
    %v6421 = vunpack.c.l.b16 %v6318
    %v6422 = vunpack.c.h.b16 %v6318
    %v6423 = vunpack.c.l.b16 %v6319
    %v6424 = vunpack.c.h.b16 %v6319
    %v6425 = vunpack.c.l.b16 %v6320
    %v6426 = vunpack.c.h.b16 %v6320
    %v6427 = vunpack.c.l.b16 %v6321
    %v6428 = vunpack.c.h.b16 %v6321
    %v6429 = vunpack.c.l.b16 %v6322
    %v6430 = vunpack.c.h.b16 %v6322
    %v6431 = vunpack.c.l.b16 %v6323
    %v6432 = vunpack.c.h.b16 %v6323
    %v6433 = vunpack.c.l.b16 %v6324
    %v6434 = vunpack.c.h.b16 %v6324
    %v6435 = vunpack.c.l.b16 %v6325
    %v6436 = vunpack.c.h.b16 %v6325
    %v6437 = vunpack.c.l.b16 %v6326
    %v6438 = vunpack.c.h.b16 %v6326
    %v6439 = vunpack.c.l.b16 %v6327
    %v6440 = vunpack.c.h.b16 %v6327
    %v6441 = vunpack.c.l.b16 %v6328
    %v6442 = vunpack.c.h.b16 %v6328
    %v6443 = vunpack.c.l.b16 %v6329
    %v6444 = vunpack.c.h.b16 %v6329
    %v6445 = vunpack.c.l.b16 %v6330
    %v6446 = vunpack.c.h.b16 %v6330
    %v6447 = vunpack.c.l.b16 %v6331
    %v6448 = vunpack.c.h.b16 %v6331
    %v6449 = vunpack.c.l.b16 %v6332
    %v6450 = vunpack.c.h.b16 %v6332
    %v6451 = vunpack.c.l.b16 %v6333
    %v6452 = vunpack.c.h.b16 %v6333
    %v6453 = vunpack.c.l.b16 %v6334
    %v6454 = vunpack.c.h.b16 %v6334
    %v6455 = vunpack.c.l.b16 %v6335
    %v6456 = vunpack.c.h.b16 %v6335
    %v6457 = vunpack.c.l.b16 %v6336
    %v6458 = vunpack.c.h.b16 %v6336
    %v6459 = vunpack.c.l.b16 %v6337
    %v6460 = vunpack.c.h.b16 %v6337
    %v6461 = vunpack.c.l.b16 %v6338
    %v6462 = vunpack.c.h.b16 %v6338
    %v6463 = vunpack.c.l.b16 %v6339
    %v6464 = vunpack.c.h.b16 %v6339
    %v6465 = vunpack.c.l.b16 %v6340
    %v6466 = vunpack.c.h.b16 %v6340
    %v6467 = vunpack.c.l.b16 %v6341
    %v6468 = vunpack.c.h.b16 %v6341
    %v6469 = vunpack.c.l.b16 %v6342
    %v6470 = vunpack.c.h.b16 %v6342
    %v6471 = vunpack.c.l.b16 %v6343
    %v6472 = vunpack.c.h.b16 %v6343
    %v6473 = vunpack.c.l.b16 %v6344
    %v6474 = vunpack.c.h.b16 %v6344
    %v6475 = vunpack.c.l.b16 %v6345
    %v6476 = vunpack.c.h.b16 %v6345
    %v6477 = vunpack.c.l.b16 %v6346
    %v6478 = vunpack.c.h.b16 %v6346
    %v6479 = vunpack.c.l.b16 %v6347
    %v6480 = vunpack.c.h.b16 %v6347
    %v6481 = vunpack.c.l.b16 %v6348
    %v6482 = vunpack.c.h.b16 %v6348
    %v6483 = vunpack.c.l.b16 %v6349
    %v6484 = vunpack.c.h.b16 %v6349
    %v6485 = vunpack.c.l.b16 %v6350
    %v6486 = vunpack.c.h.b16 %v6350
    %v6487 = vunpack.c.l.b16 %v6351
    %v6488 = vunpack.c.h.b16 %v6351
    %v6489 = vunpack.c.l.b16 %v6352
    %v6490 = vunpack.c.h.b16 %v6352
    %v6491 = vunpack.c.l.b16 %v6353
    %v6492 = vunpack.c.h.b16 %v6353
    %v6493 = vunpack.c.l.b16 %v6354
    %v6494 = vunpack.c.h.b16 %v6354
    %v6495 = vunpack.c.l.b16 %v6355
    %v6496 = vunpack.c.h.b16 %v6355
    %v6497 = vunpack.c.l.b16 %v6356
    %v6498 = vunpack.c.h.b16 %v6356
    %v6499 = vunpack.c.l.b16 %v6357
    %v6500 = vunpack.c.h.b16 %v6357
    %v6501 = vunpack.c.l.b16 %v6358
    %v6502 = vunpack.c.h.b16 %v6358
    %v6503 = vpack.c.b16 %v6413, %v6407
    %v6504 = vpack.c.b16 %v6414, %v6408
    %v6505 = vpack.c.b16 %v6415, %v6409
    %v6506 = vpack.c.b16 %v6416, %v6410
    %v6507 = vpack.c.b16 %v6417, %v6411
    %v6508 = vpack.c.b16 %v6418, %v6412
    %v6509 = vpack.c.b16 %v6425, %v6419
    %v6510 = vpack.c.b16 %v6426, %v6420
    %v6511 = vpack.c.b16 %v6427, %v6421
    %v6512 = vpack.c.b16 %v6428, %v6422
    %v6513 = vpack.c.b16 %v6429, %v6423
    %v6514 = vpack.c.b16 %v6430, %v6424
    %v6515 = vpack.c.b16 %v6437, %v6431
    %v6516 = vpack.c.b16 %v6438, %v6432
    %v6517 = vpack.c.b16 %v6439, %v6433
    %v6518 = vpack.c.b16 %v6440, %v6434
    %v6519 = vpack.c.b16 %v6441, %v6435
    %v6520 = vpack.c.b16 %v6442, %v6436
    %v6521 = vpack.c.b16 %v6449, %v6443
    %v6522 = vpack.c.b16 %v6450, %v6444
    %v6523 = vpack.c.b16 %v6451, %v6445
    %v6524 = vpack.c.b16 %v6452, %v6446
    %v6525 = vpack.c.b16 %v6453, %v6447
    %v6526 = vpack.c.b16 %v6454, %v6448
    %v6527 = vpack.c.b16 %v6461, %v6455
    %v6528 = vpack.c.b16 %v6462, %v6456
    %v6529 = vpack.c.b16 %v6463, %v6457
    %v6530 = vpack.c.b16 %v6464, %v6458
    %v6531 = vpack.c.b16 %v6465, %v6459
    %v6532 = vpack.c.b16 %v6466, %v6460
    %v6533 = vpack.c.b16 %v6473, %v6467
    %v6534 = vpack.c.b16 %v6474, %v6468
    %v6535 = vpack.c.b16 %v6475, %v6469
    %v6536 = vpack.c.b16 %v6476, %v6470
    %v6537 = vpack.c.b16 %v6477, %v6471
    %v6538 = vpack.c.b16 %v6478, %v6472
    %v6539 = vpack.c.b16 %v6485, %v6479
    %v6540 = vpack.c.b16 %v6486, %v6480
    %v6541 = vpack.c.b16 %v6487, %v6481
    %v6542 = vpack.c.b16 %v6488, %v6482
    %v6543 = vpack.c.b16 %v6489, %v6483
    %v6544 = vpack.c.b16 %v6490, %v6484
    %v6545 = vpack.c.b16 %v6497, %v6491
    %v6546 = vpack.c.b16 %v6498, %v6492
    %v6547 = vpack.c.b16 %v6499, %v6493
    %v6548 = vpack.c.b16 %v6500, %v6494
    %v6549 = vpack.c.b16 %v6501, %v6495
    %v6550 = vpack.c.b16 %v6502, %v6496
    %6599 = vmatpush.bf16.msra.mxu0 %v6545
    %6600 = vmatpush.bf16.msra.mxu0 %v6539
    %6601 = vmatpush.bf16.msra.mxu0 %v6533
    %6602 = vmatpush.bf16.msra.mxu0 %v6527
    %6603 = vmatpush.bf16.msra.mxu0 %v6521
    %6604 = vmatpush.bf16.msra.mxu0 %v6515
    %6605 = vmatpush.bf16.msra.mxu0 %v6509
    %6606 = vmatpush.bf16.msra.mxu0 %v6503
    %6607 = vmatmul.bf16.gmra.mxu0 %v6309
    %v6608 = vpop.f32.mrf.mxu0
    %v6609 = vadd.f32 0.0, %v6608
    %v6610 = vpop.f32.mrf.mxu0
    %6611 = vdwg.mxu0
    %6612 = vmatpush.bf16.msra.mxu0 %v6546
    %6613 = vmatpush.bf16.msra.mxu0 %v6540
    %6614 = vmatpush.bf16.msra.mxu0 %v6534
    %6615 = vmatpush.bf16.msra.mxu0 %v6528
    %6616 = vmatpush.bf16.msra.mxu0 %v6522
    %6617 = vmatpush.bf16.msra.mxu0 %v6516
    %6618 = vmatpush.bf16.msra.mxu0 %v6510
    %6619 = vmatpush.bf16.msra.mxu0 %v6504
    %6620 = vmatmul.bf16.gmra.mxu0 %v6309
    %v6621 = vpop.f32.mrf.mxu0
    %v6622 = vadd.f32 0.0, %v6621
    %v6623 = vpop.f32.mrf.mxu0
    %6624 = vdwg.mxu0
    %6625 = vmatpush.bf16.msra.mxu0 %v6547
    %6626 = vmatpush.bf16.msra.mxu0 %v6541
    %6627 = vmatpush.bf16.msra.mxu0 %v6535
    %6628 = vmatpush.bf16.msra.mxu0 %v6529
    %6629 = vmatpush.bf16.msra.mxu0 %v6523
    %6630 = vmatpush.bf16.msra.mxu0 %v6517
    %6631 = vmatpush.bf16.msra.mxu0 %v6511
    %6632 = vmatpush.bf16.msra.mxu0 %v6505
    %6633 = vmatmul.bf16.gmra.mxu0 %v6309
    %v6634 = vpop.f32.mrf.mxu0
    %v6635 = vadd.f32 0.0, %v6634
    %v6636 = vpop.f32.mrf.mxu0
    %6637 = vdwg.mxu0
    %6638 = vmatpush.bf16.msra.mxu0 %v6548
    %6639 = vmatpush.bf16.msra.mxu0 %v6542
    %6640 = vmatpush.bf16.msra.mxu0 %v6536
    %6641 = vmatpush.bf16.msra.mxu0 %v6530
    %6642 = vmatpush.bf16.msra.mxu0 %v6524
    %6643 = vmatpush.bf16.msra.mxu0 %v6518
    %6644 = vmatpush.bf16.msra.mxu0 %v6512
    %6645 = vmatpush.bf16.msra.mxu0 %v6506
    %6646 = vmatmul.bf16.gmra.mxu0 %v6309
    %v6647 = vpop.f32.mrf.mxu0
    %v6648 = vadd.f32 0.0, %v6647
    %v6649 = vpop.f32.mrf.mxu0
    %6650 = vdwg.mxu0
    %6651 = vmatpush.bf16.msra.mxu0 %v6549
    %6652 = vmatpush.bf16.msra.mxu0 %v6543
    %6653 = vmatpush.bf16.msra.mxu0 %v6537
    %6654 = vmatpush.bf16.msra.mxu0 %v6531
    %6655 = vmatpush.bf16.msra.mxu0 %v6525
    %6656 = vmatpush.bf16.msra.mxu0 %v6519
    %6657 = vmatpush.bf16.msra.mxu0 %v6513
    %6658 = vmatpush.bf16.msra.mxu0 %v6507
    %6659 = vmatmul.bf16.gmra.mxu0 %v6309
    %v6660 = vpop.f32.mrf.mxu0
    %v6661 = vadd.f32 0.0, %v6660
    %v6662 = vpop.f32.mrf.mxu0
    %6663 = vdwg.mxu0
    %6664 = vmatpush.bf16.msra.mxu0 %v6550
    %6665 = vmatpush.bf16.msra.mxu0 %v6544
    %6666 = vmatpush.bf16.msra.mxu0 %v6538
    %6667 = vmatpush.bf16.msra.mxu0 %v6532
    %6668 = vmatpush.bf16.msra.mxu0 %v6526
    %6669 = vmatpush.bf16.msra.mxu0 %v6520
    %6670 = vmatpush.bf16.msra.mxu0 %v6514
    %6671 = vmatpush.bf16.msra.mxu0 %v6508
    %6672 = vmatmul.bf16.gmra.mxu0 %v6309
    %v6673 = vpop.f32.mrf.mxu0
    %v6674 = vadd.f32 0.0, %v6673
    %v6675 = vpop.f32.mrf.mxu0
    %6676 = vdwg.mxu0
    %v6677 = vadd.f32 %v6301, %v6609
    %v6678 = vadd.f32 %v6302, %v6622
    %v6679 = vadd.f32 %v6303, %v6635
    %v6680 = vadd.f32 %v6304, %v6648
    %v6681 = vadd.f32 %v6305, %v6661
    %v6682 = vadd.f32 %v6306, %v6674
    %s6683 = scalar_lea.vmem [#allocation3], 16
    %v6684 = vld [vmem:[%s6683] ss:$25 sm:$0x3]
    %v6685 = vpack.c.bf16 %v6684, %v6684
    %s6686 = scalar_lea.vmem [#allocation10], 6144
    %v6687 = vld [vmem:[%s6686] sm:$0xff]
    %v6688 = vld [vmem:[%s6686 + $0x8] sm:$0xff]
    %v6689 = vld [vmem:[%s6686 + $0x10] sm:$0xff]
    %v6690 = vld [vmem:[%s6686 + $0x18] sm:$0xff]
    %v6691 = vld [vmem:[%s6686 + $0x20] sm:$0xff]
    %v6692 = vld [vmem:[%s6686 + $0x28] sm:$0xff]
    %v6693 = vld [vmem:[%s6686 + $0x30] sm:$0xff]
    %v6694 = vld [vmem:[%s6686 + $0x38] sm:$0xff]
    %v6695 = vld [vmem:[%s6686 + $0x40] sm:$0xff]
    %v6696 = vld [vmem:[%s6686 + $0x48] sm:$0xff]
    %v6697 = vld [vmem:[%s6686 + $0x50] sm:$0xff]
    %v6698 = vld [vmem:[%s6686 + $0x58] sm:$0xff]
    %v6699 = vld [vmem:[%s6686 + $0x60] sm:$0xff]
    %v6700 = vld [vmem:[%s6686 + $0x68] sm:$0xff]
    %v6701 = vld [vmem:[%s6686 + $0x70] sm:$0xff]
    %v6702 = vld [vmem:[%s6686 + $0x78] sm:$0xff]
    %v6703 = vld [vmem:[%s6686 + $0x80] sm:$0xff]
    %v6704 = vld [vmem:[%s6686 + $0x88] sm:$0xff]
    %v6705 = vld [vmem:[%s6686 + $0x90] sm:$0xff]
    %v6706 = vld [vmem:[%s6686 + $0x98] sm:$0xff]
    %v6707 = vld [vmem:[%s6686 + $0xa0] sm:$0xff]
    %v6708 = vld [vmem:[%s6686 + $0xa8] sm:$0xff]
    %v6709 = vld [vmem:[%s6686 + $0xb0] sm:$0xff]
    %v6710 = vld [vmem:[%s6686 + $0xb8] sm:$0xff]
    %v6711 = vld [vmem:[%s6686 + $0xc0] sm:$0xff]
    %v6712 = vld [vmem:[%s6686 + $0xc8] sm:$0xff]
    %v6713 = vld [vmem:[%s6686 + $0xd0] sm:$0xff]
    %v6714 = vld [vmem:[%s6686 + $0xd8] sm:$0xff]
    %v6715 = vld [vmem:[%s6686 + $0xe0] sm:$0xff]
    %v6716 = vld [vmem:[%s6686 + $0xe8] sm:$0xff]
    %v6717 = vld [vmem:[%s6686 + $0xf0] sm:$0xff]
    %v6718 = vld [vmem:[%s6686 + $0xf8] sm:$0xff]
    %v6719 = vld [vmem:[%s6686 + $0x100] sm:$0xff]
    %v6720 = vld [vmem:[%s6686 + $0x108] sm:$0xff]
    %v6721 = vld [vmem:[%s6686 + $0x110] sm:$0xff]
    %v6722 = vld [vmem:[%s6686 + $0x118] sm:$0xff]
    %v6723 = vld [vmem:[%s6686 + $0x120] sm:$0xff]
    %v6724 = vld [vmem:[%s6686 + $0x128] sm:$0xff]
    %v6725 = vld [vmem:[%s6686 + $0x130] sm:$0xff]
    %v6726 = vld [vmem:[%s6686 + $0x138] sm:$0xff]
    %v6727 = vld [vmem:[%s6686 + $0x140] sm:$0xff]
    %v6728 = vld [vmem:[%s6686 + $0x148] sm:$0xff]
    %v6729 = vld [vmem:[%s6686 + $0x150] sm:$0xff]
    %v6730 = vld [vmem:[%s6686 + $0x158] sm:$0xff]
    %v6731 = vld [vmem:[%s6686 + $0x160] sm:$0xff]
    %v6732 = vld [vmem:[%s6686 + $0x168] sm:$0xff]
    %v6733 = vld [vmem:[%s6686 + $0x170] sm:$0xff]
    %v6734 = vld [vmem:[%s6686 + $0x178] sm:$0xff]
    %v6783 = vunpack.c.l.b16 %v6687
    %v6784 = vunpack.c.h.b16 %v6687
    %v6785 = vunpack.c.l.b16 %v6688
    %v6786 = vunpack.c.h.b16 %v6688
    %v6787 = vunpack.c.l.b16 %v6689
    %v6788 = vunpack.c.h.b16 %v6689
    %v6789 = vunpack.c.l.b16 %v6690
    %v6790 = vunpack.c.h.b16 %v6690
    %v6791 = vunpack.c.l.b16 %v6691
    %v6792 = vunpack.c.h.b16 %v6691
    %v6793 = vunpack.c.l.b16 %v6692
    %v6794 = vunpack.c.h.b16 %v6692
    %v6795 = vunpack.c.l.b16 %v6693
    %v6796 = vunpack.c.h.b16 %v6693
    %v6797 = vunpack.c.l.b16 %v6694
    %v6798 = vunpack.c.h.b16 %v6694
    %v6799 = vunpack.c.l.b16 %v6695
    %v6800 = vunpack.c.h.b16 %v6695
    %v6801 = vunpack.c.l.b16 %v6696
    %v6802 = vunpack.c.h.b16 %v6696
    %v6803 = vunpack.c.l.b16 %v6697
    %v6804 = vunpack.c.h.b16 %v6697
    %v6805 = vunpack.c.l.b16 %v6698
    %v6806 = vunpack.c.h.b16 %v6698
    %v6807 = vunpack.c.l.b16 %v6699
    %v6808 = vunpack.c.h.b16 %v6699
    %v6809 = vunpack.c.l.b16 %v6700
    %v6810 = vunpack.c.h.b16 %v6700
    %v6811 = vunpack.c.l.b16 %v6701
    %v6812 = vunpack.c.h.b16 %v6701
    %v6813 = vunpack.c.l.b16 %v6702
    %v6814 = vunpack.c.h.b16 %v6702
    %v6815 = vunpack.c.l.b16 %v6703
    %v6816 = vunpack.c.h.b16 %v6703
    %v6817 = vunpack.c.l.b16 %v6704
    %v6818 = vunpack.c.h.b16 %v6704
    %v6819 = vunpack.c.l.b16 %v6705
    %v6820 = vunpack.c.h.b16 %v6705
    %v6821 = vunpack.c.l.b16 %v6706
    %v6822 = vunpack.c.h.b16 %v6706
    %v6823 = vunpack.c.l.b16 %v6707
    %v6824 = vunpack.c.h.b16 %v6707
    %v6825 = vunpack.c.l.b16 %v6708
    %v6826 = vunpack.c.h.b16 %v6708
    %v6827 = vunpack.c.l.b16 %v6709
    %v6828 = vunpack.c.h.b16 %v6709
    %v6829 = vunpack.c.l.b16 %v6710
    %v6830 = vunpack.c.h.b16 %v6710
    %v6831 = vunpack.c.l.b16 %v6711
    %v6832 = vunpack.c.h.b16 %v6711
    %v6833 = vunpack.c.l.b16 %v6712
    %v6834 = vunpack.c.h.b16 %v6712
    %v6835 = vunpack.c.l.b16 %v6713
    %v6836 = vunpack.c.h.b16 %v6713
    %v6837 = vunpack.c.l.b16 %v6714
    %v6838 = vunpack.c.h.b16 %v6714
    %v6839 = vunpack.c.l.b16 %v6715
    %v6840 = vunpack.c.h.b16 %v6715
    %v6841 = vunpack.c.l.b16 %v6716
    %v6842 = vunpack.c.h.b16 %v6716
    %v6843 = vunpack.c.l.b16 %v6717
    %v6844 = vunpack.c.h.b16 %v6717
    %v6845 = vunpack.c.l.b16 %v6718
    %v6846 = vunpack.c.h.b16 %v6718
    %v6847 = vunpack.c.l.b16 %v6719
    %v6848 = vunpack.c.h.b16 %v6719
    %v6849 = vunpack.c.l.b16 %v6720
    %v6850 = vunpack.c.h.b16 %v6720
    %v6851 = vunpack.c.l.b16 %v6721
    %v6852 = vunpack.c.h.b16 %v6721
    %v6853 = vunpack.c.l.b16 %v6722
    %v6854 = vunpack.c.h.b16 %v6722
    %v6855 = vunpack.c.l.b16 %v6723
    %v6856 = vunpack.c.h.b16 %v6723
    %v6857 = vunpack.c.l.b16 %v6724
    %v6858 = vunpack.c.h.b16 %v6724
    %v6859 = vunpack.c.l.b16 %v6725
    %v6860 = vunpack.c.h.b16 %v6725
    %v6861 = vunpack.c.l.b16 %v6726
    %v6862 = vunpack.c.h.b16 %v6726
    %v6863 = vunpack.c.l.b16 %v6727
    %v6864 = vunpack.c.h.b16 %v6727
    %v6865 = vunpack.c.l.b16 %v6728
    %v6866 = vunpack.c.h.b16 %v6728
    %v6867 = vunpack.c.l.b16 %v6729
    %v6868 = vunpack.c.h.b16 %v6729
    %v6869 = vunpack.c.l.b16 %v6730
    %v6870 = vunpack.c.h.b16 %v6730
    %v6871 = vunpack.c.l.b16 %v6731
    %v6872 = vunpack.c.h.b16 %v6731
    %v6873 = vunpack.c.l.b16 %v6732
    %v6874 = vunpack.c.h.b16 %v6732
    %v6875 = vunpack.c.l.b16 %v6733
    %v6876 = vunpack.c.h.b16 %v6733
    %v6877 = vunpack.c.l.b16 %v6734
    %v6878 = vunpack.c.h.b16 %v6734
    %v6879 = vpack.c.b16 %v6789, %v6783
    %v6880 = vpack.c.b16 %v6790, %v6784
    %v6881 = vpack.c.b16 %v6791, %v6785
    %v6882 = vpack.c.b16 %v6792, %v6786
    %v6883 = vpack.c.b16 %v6793, %v6787
    %v6884 = vpack.c.b16 %v6794, %v6788
    %v6885 = vpack.c.b16 %v6801, %v6795
    %v6886 = vpack.c.b16 %v6802, %v6796
    %v6887 = vpack.c.b16 %v6803, %v6797
    %v6888 = vpack.c.b16 %v6804, %v6798
    %v6889 = vpack.c.b16 %v6805, %v6799
    %v6890 = vpack.c.b16 %v6806, %v6800
    %v6891 = vpack.c.b16 %v6813, %v6807
    %v6892 = vpack.c.b16 %v6814, %v6808
    %v6893 = vpack.c.b16 %v6815, %v6809
    %v6894 = vpack.c.b16 %v6816, %v6810
    %v6895 = vpack.c.b16 %v6817, %v6811
    %v6896 = vpack.c.b16 %v6818, %v6812
    %v6897 = vpack.c.b16 %v6825, %v6819
    %v6898 = vpack.c.b16 %v6826, %v6820
    %v6899 = vpack.c.b16 %v6827, %v6821
    %v6900 = vpack.c.b16 %v6828, %v6822
    %v6901 = vpack.c.b16 %v6829, %v6823
    %v6902 = vpack.c.b16 %v6830, %v6824
    %v6903 = vpack.c.b16 %v6837, %v6831
    %v6904 = vpack.c.b16 %v6838, %v6832
    %v6905 = vpack.c.b16 %v6839, %v6833
    %v6906 = vpack.c.b16 %v6840, %v6834
    %v6907 = vpack.c.b16 %v6841, %v6835
    %v6908 = vpack.c.b16 %v6842, %v6836
    %v6909 = vpack.c.b16 %v6849, %v6843
    %v6910 = vpack.c.b16 %v6850, %v6844
    %v6911 = vpack.c.b16 %v6851, %v6845
    %v6912 = vpack.c.b16 %v6852, %v6846
    %v6913 = vpack.c.b16 %v6853, %v6847
    %v6914 = vpack.c.b16 %v6854, %v6848
    %v6915 = vpack.c.b16 %v6861, %v6855
    %v6916 = vpack.c.b16 %v6862, %v6856
    %v6917 = vpack.c.b16 %v6863, %v6857
    %v6918 = vpack.c.b16 %v6864, %v6858
    %v6919 = vpack.c.b16 %v6865, %v6859
    %v6920 = vpack.c.b16 %v6866, %v6860
    %v6921 = vpack.c.b16 %v6873, %v6867
    %v6922 = vpack.c.b16 %v6874, %v6868
    %v6923 = vpack.c.b16 %v6875, %v6869
    %v6924 = vpack.c.b16 %v6876, %v6870
    %v6925 = vpack.c.b16 %v6877, %v6871
    %v6926 = vpack.c.b16 %v6878, %v6872
    %6975 = vmatpush.bf16.msra.mxu0 %v6921
    %6976 = vmatpush.bf16.msra.mxu0 %v6915
    %6977 = vmatpush.bf16.msra.mxu0 %v6909
    %6978 = vmatpush.bf16.msra.mxu0 %v6903
    %6979 = vmatpush.bf16.msra.mxu0 %v6897
    %6980 = vmatpush.bf16.msra.mxu0 %v6891
    %6981 = vmatpush.bf16.msra.mxu0 %v6885
    %6982 = vmatpush.bf16.msra.mxu0 %v6879
    %6983 = vmatmul.bf16.gmra.mxu0 %v6685
    %v6984 = vpop.f32.mrf.mxu0
    %v6985 = vadd.f32 0.0, %v6984
    %v6986 = vpop.f32.mrf.mxu0
    %6987 = vdwg.mxu0
    %6988 = vmatpush.bf16.msra.mxu0 %v6922
    %6989 = vmatpush.bf16.msra.mxu0 %v6916
    %6990 = vmatpush.bf16.msra.mxu0 %v6910
    %6991 = vmatpush.bf16.msra.mxu0 %v6904
    %6992 = vmatpush.bf16.msra.mxu0 %v6898
    %6993 = vmatpush.bf16.msra.mxu0 %v6892
    %6994 = vmatpush.bf16.msra.mxu0 %v6886
    %6995 = vmatpush.bf16.msra.mxu0 %v6880
    %6996 = vmatmul.bf16.gmra.mxu0 %v6685
    %v6997 = vpop.f32.mrf.mxu0
    %v6998 = vadd.f32 0.0, %v6997
    %v6999 = vpop.f32.mrf.mxu0
    %7000 = vdwg.mxu0
    %7001 = vmatpush.bf16.msra.mxu0 %v6923
    %7002 = vmatpush.bf16.msra.mxu0 %v6917
    %7003 = vmatpush.bf16.msra.mxu0 %v6911
    %7004 = vmatpush.bf16.msra.mxu0 %v6905
    %7005 = vmatpush.bf16.msra.mxu0 %v6899
    %7006 = vmatpush.bf16.msra.mxu0 %v6893
    %7007 = vmatpush.bf16.msra.mxu0 %v6887
    %7008 = vmatpush.bf16.msra.mxu0 %v6881
    %7009 = vmatmul.bf16.gmra.mxu0 %v6685
    %v7010 = vpop.f32.mrf.mxu0
    %v7011 = vadd.f32 0.0, %v7010
    %v7012 = vpop.f32.mrf.mxu0
    %7013 = vdwg.mxu0
    %7014 = vmatpush.bf16.msra.mxu0 %v6924
    %7015 = vmatpush.bf16.msra.mxu0 %v6918
    %7016 = vmatpush.bf16.msra.mxu0 %v6912
    %7017 = vmatpush.bf16.msra.mxu0 %v6906
    %7018 = vmatpush.bf16.msra.mxu0 %v6900
    %7019 = vmatpush.bf16.msra.mxu0 %v6894
    %7020 = vmatpush.bf16.msra.mxu0 %v6888
    %7021 = vmatpush.bf16.msra.mxu0 %v6882
    %7022 = vmatmul.bf16.gmra.mxu0 %v6685
    %v7023 = vpop.f32.mrf.mxu0
    %v7024 = vadd.f32 0.0, %v7023
    %v7025 = vpop.f32.mrf.mxu0
    %7026 = vdwg.mxu0
    %7027 = vmatpush.bf16.msra.mxu0 %v6925
    %7028 = vmatpush.bf16.msra.mxu0 %v6919
    %7029 = vmatpush.bf16.msra.mxu0 %v6913
    %7030 = vmatpush.bf16.msra.mxu0 %v6907
    %7031 = vmatpush.bf16.msra.mxu0 %v6901
    %7032 = vmatpush.bf16.msra.mxu0 %v6895
    %7033 = vmatpush.bf16.msra.mxu0 %v6889
    %7034 = vmatpush.bf16.msra.mxu0 %v6883
    %7035 = vmatmul.bf16.gmra.mxu0 %v6685
    %v7036 = vpop.f32.mrf.mxu0
    %v7037 = vadd.f32 0.0, %v7036
    %v7038 = vpop.f32.mrf.mxu0
    %7039 = vdwg.mxu0
    %7040 = vmatpush.bf16.msra.mxu0 %v6926
    %7041 = vmatpush.bf16.msra.mxu0 %v6920
    %7042 = vmatpush.bf16.msra.mxu0 %v6914
    %7043 = vmatpush.bf16.msra.mxu0 %v6908
    %7044 = vmatpush.bf16.msra.mxu0 %v6902
    %7045 = vmatpush.bf16.msra.mxu0 %v6896
    %7046 = vmatpush.bf16.msra.mxu0 %v6890
    %7047 = vmatpush.bf16.msra.mxu0 %v6884
    %7048 = vmatmul.bf16.gmra.mxu0 %v6685
    %v7049 = vpop.f32.mrf.mxu0
    %v7050 = vadd.f32 0.0, %v7049
    %v7051 = vpop.f32.mrf.mxu0
    %7052 = vdwg.mxu0
    %v7053 = vadd.f32 %v6677, %v6985
    %v7054 = vadd.f32 %v6678, %v6998
    %v7055 = vadd.f32 %v6679, %v7011
    %v7056 = vadd.f32 %v6680, %v7024
    %v7057 = vadd.f32 %v6681, %v7037
    %v7058 = vadd.f32 %v6682, %v7050
    %s7059 = scalar_lea.vmem [#allocation3], 17
    %v7060 = vld [vmem:[%s7059] ss:$25 sm:$0x3]
    %v7061 = vpack.c.bf16 %v7060, %v7060
    %s7062 = scalar_lea.vmem [#allocation10], 6528
    %v7063 = vld [vmem:[%s7062] sm:$0xff]
    %v7064 = vld [vmem:[%s7062 + $0x8] sm:$0xff]
    %v7065 = vld [vmem:[%s7062 + $0x10] sm:$0xff]
    %v7066 = vld [vmem:[%s7062 + $0x18] sm:$0xff]
    %v7067 = vld [vmem:[%s7062 + $0x20] sm:$0xff]
    %v7068 = vld [vmem:[%s7062 + $0x28] sm:$0xff]
    %v7069 = vld [vmem:[%s7062 + $0x30] sm:$0xff]
    %v7070 = vld [vmem:[%s7062 + $0x38] sm:$0xff]
    %v7071 = vld [vmem:[%s7062 + $0x40] sm:$0xff]
    %v7072 = vld [vmem:[%s7062 + $0x48] sm:$0xff]
    %v7073 = vld [vmem:[%s7062 + $0x50] sm:$0xff]
    %v7074 = vld [vmem:[%s7062 + $0x58] sm:$0xff]
    %v7075 = vld [vmem:[%s7062 + $0x60] sm:$0xff]
    %v7076 = vld [vmem:[%s7062 + $0x68] sm:$0xff]
    %v7077 = vld [vmem:[%s7062 + $0x70] sm:$0xff]
    %v7078 = vld [vmem:[%s7062 + $0x78] sm:$0xff]
    %v7079 = vld [vmem:[%s7062 + $0x80] sm:$0xff]
    %v7080 = vld [vmem:[%s7062 + $0x88] sm:$0xff]
    %v7081 = vld [vmem:[%s7062 + $0x90] sm:$0xff]
    %v7082 = vld [vmem:[%s7062 + $0x98] sm:$0xff]
    %v7083 = vld [vmem:[%s7062 + $0xa0] sm:$0xff]
    %v7084 = vld [vmem:[%s7062 + $0xa8] sm:$0xff]
    %v7085 = vld [vmem:[%s7062 + $0xb0] sm:$0xff]
    %v7086 = vld [vmem:[%s7062 + $0xb8] sm:$0xff]
    %v7087 = vld [vmem:[%s7062 + $0xc0] sm:$0xff]
    %v7088 = vld [vmem:[%s7062 + $0xc8] sm:$0xff]
    %v7089 = vld [vmem:[%s7062 + $0xd0] sm:$0xff]
    %v7090 = vld [vmem:[%s7062 + $0xd8] sm:$0xff]
    %v7091 = vld [vmem:[%s7062 + $0xe0] sm:$0xff]
    %v7092 = vld [vmem:[%s7062 + $0xe8] sm:$0xff]
    %v7093 = vld [vmem:[%s7062 + $0xf0] sm:$0xff]
    %v7094 = vld [vmem:[%s7062 + $0xf8] sm:$0xff]
    %v7095 = vld [vmem:[%s7062 + $0x100] sm:$0xff]
    %v7096 = vld [vmem:[%s7062 + $0x108] sm:$0xff]
    %v7097 = vld [vmem:[%s7062 + $0x110] sm:$0xff]
    %v7098 = vld [vmem:[%s7062 + $0x118] sm:$0xff]
    %v7099 = vld [vmem:[%s7062 + $0x120] sm:$0xff]
    %v7100 = vld [vmem:[%s7062 + $0x128] sm:$0xff]
    %v7101 = vld [vmem:[%s7062 + $0x130] sm:$0xff]
    %v7102 = vld [vmem:[%s7062 + $0x138] sm:$0xff]
    %v7103 = vld [vmem:[%s7062 + $0x140] sm:$0xff]
    %v7104 = vld [vmem:[%s7062 + $0x148] sm:$0xff]
    %v7105 = vld [vmem:[%s7062 + $0x150] sm:$0xff]
    %v7106 = vld [vmem:[%s7062 + $0x158] sm:$0xff]
    %v7107 = vld [vmem:[%s7062 + $0x160] sm:$0xff]
    %v7108 = vld [vmem:[%s7062 + $0x168] sm:$0xff]
    %v7109 = vld [vmem:[%s7062 + $0x170] sm:$0xff]
    %v7110 = vld [vmem:[%s7062 + $0x178] sm:$0xff]
    %v7159 = vunpack.c.l.b16 %v7063
    %v7160 = vunpack.c.h.b16 %v7063
    %v7161 = vunpack.c.l.b16 %v7064
    %v7162 = vunpack.c.h.b16 %v7064
    %v7163 = vunpack.c.l.b16 %v7065
    %v7164 = vunpack.c.h.b16 %v7065
    %v7165 = vunpack.c.l.b16 %v7066
    %v7166 = vunpack.c.h.b16 %v7066
    %v7167 = vunpack.c.l.b16 %v7067
    %v7168 = vunpack.c.h.b16 %v7067
    %v7169 = vunpack.c.l.b16 %v7068
    %v7170 = vunpack.c.h.b16 %v7068
    %v7171 = vunpack.c.l.b16 %v7069
    %v7172 = vunpack.c.h.b16 %v7069
    %v7173 = vunpack.c.l.b16 %v7070
    %v7174 = vunpack.c.h.b16 %v7070
    %v7175 = vunpack.c.l.b16 %v7071
    %v7176 = vunpack.c.h.b16 %v7071
    %v7177 = vunpack.c.l.b16 %v7072
    %v7178 = vunpack.c.h.b16 %v7072
    %v7179 = vunpack.c.l.b16 %v7073
    %v7180 = vunpack.c.h.b16 %v7073
    %v7181 = vunpack.c.l.b16 %v7074
    %v7182 = vunpack.c.h.b16 %v7074
    %v7183 = vunpack.c.l.b16 %v7075
    %v7184 = vunpack.c.h.b16 %v7075
    %v7185 = vunpack.c.l.b16 %v7076
    %v7186 = vunpack.c.h.b16 %v7076
    %v7187 = vunpack.c.l.b16 %v7077
    %v7188 = vunpack.c.h.b16 %v7077
    %v7189 = vunpack.c.l.b16 %v7078
    %v7190 = vunpack.c.h.b16 %v7078
    %v7191 = vunpack.c.l.b16 %v7079
    %v7192 = vunpack.c.h.b16 %v7079
    %v7193 = vunpack.c.l.b16 %v7080
    %v7194 = vunpack.c.h.b16 %v7080
    %v7195 = vunpack.c.l.b16 %v7081
    %v7196 = vunpack.c.h.b16 %v7081
    %v7197 = vunpack.c.l.b16 %v7082
    %v7198 = vunpack.c.h.b16 %v7082
    %v7199 = vunpack.c.l.b16 %v7083
    %v7200 = vunpack.c.h.b16 %v7083
    %v7201 = vunpack.c.l.b16 %v7084
    %v7202 = vunpack.c.h.b16 %v7084
    %v7203 = vunpack.c.l.b16 %v7085
    %v7204 = vunpack.c.h.b16 %v7085
    %v7205 = vunpack.c.l.b16 %v7086
    %v7206 = vunpack.c.h.b16 %v7086
    %v7207 = vunpack.c.l.b16 %v7087
    %v7208 = vunpack.c.h.b16 %v7087
    %v7209 = vunpack.c.l.b16 %v7088
    %v7210 = vunpack.c.h.b16 %v7088
    %v7211 = vunpack.c.l.b16 %v7089
    %v7212 = vunpack.c.h.b16 %v7089
    %v7213 = vunpack.c.l.b16 %v7090
    %v7214 = vunpack.c.h.b16 %v7090
    %v7215 = vunpack.c.l.b16 %v7091
    %v7216 = vunpack.c.h.b16 %v7091
    %v7217 = vunpack.c.l.b16 %v7092
    %v7218 = vunpack.c.h.b16 %v7092
    %v7219 = vunpack.c.l.b16 %v7093
    %v7220 = vunpack.c.h.b16 %v7093
    %v7221 = vunpack.c.l.b16 %v7094
    %v7222 = vunpack.c.h.b16 %v7094
    %v7223 = vunpack.c.l.b16 %v7095
    %v7224 = vunpack.c.h.b16 %v7095
    %v7225 = vunpack.c.l.b16 %v7096
    %v7226 = vunpack.c.h.b16 %v7096
    %v7227 = vunpack.c.l.b16 %v7097
    %v7228 = vunpack.c.h.b16 %v7097
    %v7229 = vunpack.c.l.b16 %v7098
    %v7230 = vunpack.c.h.b16 %v7098
    %v7231 = vunpack.c.l.b16 %v7099
    %v7232 = vunpack.c.h.b16 %v7099
    %v7233 = vunpack.c.l.b16 %v7100
    %v7234 = vunpack.c.h.b16 %v7100
    %v7235 = vunpack.c.l.b16 %v7101
    %v7236 = vunpack.c.h.b16 %v7101
    %v7237 = vunpack.c.l.b16 %v7102
    %v7238 = vunpack.c.h.b16 %v7102
    %v7239 = vunpack.c.l.b16 %v7103
    %v7240 = vunpack.c.h.b16 %v7103
    %v7241 = vunpack.c.l.b16 %v7104
    %v7242 = vunpack.c.h.b16 %v7104
    %v7243 = vunpack.c.l.b16 %v7105
    %v7244 = vunpack.c.h.b16 %v7105
    %v7245 = vunpack.c.l.b16 %v7106
    %v7246 = vunpack.c.h.b16 %v7106
    %v7247 = vunpack.c.l.b16 %v7107
    %v7248 = vunpack.c.h.b16 %v7107
    %v7249 = vunpack.c.l.b16 %v7108
    %v7250 = vunpack.c.h.b16 %v7108
    %v7251 = vunpack.c.l.b16 %v7109
    %v7252 = vunpack.c.h.b16 %v7109
    %v7253 = vunpack.c.l.b16 %v7110
    %v7254 = vunpack.c.h.b16 %v7110
    %v7255 = vpack.c.b16 %v7165, %v7159
    %v7256 = vpack.c.b16 %v7166, %v7160
    %v7257 = vpack.c.b16 %v7167, %v7161
    %v7258 = vpack.c.b16 %v7168, %v7162
    %v7259 = vpack.c.b16 %v7169, %v7163
    %v7260 = vpack.c.b16 %v7170, %v7164
    %v7261 = vpack.c.b16 %v7177, %v7171
    %v7262 = vpack.c.b16 %v7178, %v7172
    %v7263 = vpack.c.b16 %v7179, %v7173
    %v7264 = vpack.c.b16 %v7180, %v7174
    %v7265 = vpack.c.b16 %v7181, %v7175
    %v7266 = vpack.c.b16 %v7182, %v7176
    %v7267 = vpack.c.b16 %v7189, %v7183
    %v7268 = vpack.c.b16 %v7190, %v7184
    %v7269 = vpack.c.b16 %v7191, %v7185
    %v7270 = vpack.c.b16 %v7192, %v7186
    %v7271 = vpack.c.b16 %v7193, %v7187
    %v7272 = vpack.c.b16 %v7194, %v7188
    %v7273 = vpack.c.b16 %v7201, %v7195
    %v7274 = vpack.c.b16 %v7202, %v7196
    %v7275 = vpack.c.b16 %v7203, %v7197
    %v7276 = vpack.c.b16 %v7204, %v7198
    %v7277 = vpack.c.b16 %v7205, %v7199
    %v7278 = vpack.c.b16 %v7206, %v7200
    %v7279 = vpack.c.b16 %v7213, %v7207
    %v7280 = vpack.c.b16 %v7214, %v7208
    %v7281 = vpack.c.b16 %v7215, %v7209
    %v7282 = vpack.c.b16 %v7216, %v7210
    %v7283 = vpack.c.b16 %v7217, %v7211
    %v7284 = vpack.c.b16 %v7218, %v7212
    %v7285 = vpack.c.b16 %v7225, %v7219
    %v7286 = vpack.c.b16 %v7226, %v7220
    %v7287 = vpack.c.b16 %v7227, %v7221
    %v7288 = vpack.c.b16 %v7228, %v7222
    %v7289 = vpack.c.b16 %v7229, %v7223
    %v7290 = vpack.c.b16 %v7230, %v7224
    %v7291 = vpack.c.b16 %v7237, %v7231
    %v7292 = vpack.c.b16 %v7238, %v7232
    %v7293 = vpack.c.b16 %v7239, %v7233
    %v7294 = vpack.c.b16 %v7240, %v7234
    %v7295 = vpack.c.b16 %v7241, %v7235
    %v7296 = vpack.c.b16 %v7242, %v7236
    %v7297 = vpack.c.b16 %v7249, %v7243
    %v7298 = vpack.c.b16 %v7250, %v7244
    %v7299 = vpack.c.b16 %v7251, %v7245
    %v7300 = vpack.c.b16 %v7252, %v7246
    %v7301 = vpack.c.b16 %v7253, %v7247
    %v7302 = vpack.c.b16 %v7254, %v7248
    %7351 = vmatpush.bf16.msra.mxu0 %v7297
    %7352 = vmatpush.bf16.msra.mxu0 %v7291
    %7353 = vmatpush.bf16.msra.mxu0 %v7285
    %7354 = vmatpush.bf16.msra.mxu0 %v7279
    %7355 = vmatpush.bf16.msra.mxu0 %v7273
    %7356 = vmatpush.bf16.msra.mxu0 %v7267
    %7357 = vmatpush.bf16.msra.mxu0 %v7261
    %7358 = vmatpush.bf16.msra.mxu0 %v7255
    %7359 = vmatmul.bf16.gmra.mxu0 %v7061
    %v7360 = vpop.f32.mrf.mxu0
    %v7361 = vadd.f32 0.0, %v7360
    %v7362 = vpop.f32.mrf.mxu0
    %7363 = vdwg.mxu0
    %7364 = vmatpush.bf16.msra.mxu0 %v7298
    %7365 = vmatpush.bf16.msra.mxu0 %v7292
    %7366 = vmatpush.bf16.msra.mxu0 %v7286
    %7367 = vmatpush.bf16.msra.mxu0 %v7280
    %7368 = vmatpush.bf16.msra.mxu0 %v7274
    %7369 = vmatpush.bf16.msra.mxu0 %v7268
    %7370 = vmatpush.bf16.msra.mxu0 %v7262
    %7371 = vmatpush.bf16.msra.mxu0 %v7256
    %7372 = vmatmul.bf16.gmra.mxu0 %v7061
    %v7373 = vpop.f32.mrf.mxu0
    %v7374 = vadd.f32 0.0, %v7373
    %v7375 = vpop.f32.mrf.mxu0
    %7376 = vdwg.mxu0
    %7377 = vmatpush.bf16.msra.mxu0 %v7299
    %7378 = vmatpush.bf16.msra.mxu0 %v7293
    %7379 = vmatpush.bf16.msra.mxu0 %v7287
    %7380 = vmatpush.bf16.msra.mxu0 %v7281
    %7381 = vmatpush.bf16.msra.mxu0 %v7275
    %7382 = vmatpush.bf16.msra.mxu0 %v7269
    %7383 = vmatpush.bf16.msra.mxu0 %v7263
    %7384 = vmatpush.bf16.msra.mxu0 %v7257
    %7385 = vmatmul.bf16.gmra.mxu0 %v7061
    %v7386 = vpop.f32.mrf.mxu0
    %v7387 = vadd.f32 0.0, %v7386
    %v7388 = vpop.f32.mrf.mxu0
    %7389 = vdwg.mxu0
    %7390 = vmatpush.bf16.msra.mxu0 %v7300
    %7391 = vmatpush.bf16.msra.mxu0 %v7294
    %7392 = vmatpush.bf16.msra.mxu0 %v7288
    %7393 = vmatpush.bf16.msra.mxu0 %v7282
    %7394 = vmatpush.bf16.msra.mxu0 %v7276
    %7395 = vmatpush.bf16.msra.mxu0 %v7270
    %7396 = vmatpush.bf16.msra.mxu0 %v7264
    %7397 = vmatpush.bf16.msra.mxu0 %v7258
    %7398 = vmatmul.bf16.gmra.mxu0 %v7061
    %v7399 = vpop.f32.mrf.mxu0
    %v7400 = vadd.f32 0.0, %v7399
    %v7401 = vpop.f32.mrf.mxu0
    %7402 = vdwg.mxu0
    %7403 = vmatpush.bf16.msra.mxu0 %v7301
    %7404 = vmatpush.bf16.msra.mxu0 %v7295
    %7405 = vmatpush.bf16.msra.mxu0 %v7289
    %7406 = vmatpush.bf16.msra.mxu0 %v7283
    %7407 = vmatpush.bf16.msra.mxu0 %v7277
    %7408 = vmatpush.bf16.msra.mxu0 %v7271
    %7409 = vmatpush.bf16.msra.mxu0 %v7265
    %7410 = vmatpush.bf16.msra.mxu0 %v7259
    %7411 = vmatmul.bf16.gmra.mxu0 %v7061
    %v7412 = vpop.f32.mrf.mxu0
    %v7413 = vadd.f32 0.0, %v7412
    %v7414 = vpop.f32.mrf.mxu0
    %7415 = vdwg.mxu0
    %7416 = vmatpush.bf16.msra.mxu0 %v7302
    %7417 = vmatpush.bf16.msra.mxu0 %v7296
    %7418 = vmatpush.bf16.msra.mxu0 %v7290
    %7419 = vmatpush.bf16.msra.mxu0 %v7284
    %7420 = vmatpush.bf16.msra.mxu0 %v7278
    %7421 = vmatpush.bf16.msra.mxu0 %v7272
    %7422 = vmatpush.bf16.msra.mxu0 %v7266
    %7423 = vmatpush.bf16.msra.mxu0 %v7260
    %7424 = vmatmul.bf16.gmra.mxu0 %v7061
    %v7425 = vpop.f32.mrf.mxu0
    %v7426 = vadd.f32 0.0, %v7425
    %v7427 = vpop.f32.mrf.mxu0
    %7428 = vdwg.mxu0
    %v7429 = vadd.f32 %v7053, %v7361
    %v7430 = vadd.f32 %v7054, %v7374
    %v7431 = vadd.f32 %v7055, %v7387
    %v7432 = vadd.f32 %v7056, %v7400
    %v7433 = vadd.f32 %v7057, %v7413
    %v7434 = vadd.f32 %v7058, %v7426
    %s7435 = scalar_lea.vmem [#allocation3], 18
    %v7436 = vld [vmem:[%s7435] ss:$25 sm:$0x3]
    %v7437 = vpack.c.bf16 %v7436, %v7436
    %s7438 = scalar_lea.vmem [#allocation10], 6912
    %v7439 = vld [vmem:[%s7438] sm:$0xff]
    %v7440 = vld [vmem:[%s7438 + $0x8] sm:$0xff]
    %v7441 = vld [vmem:[%s7438 + $0x10] sm:$0xff]
    %v7442 = vld [vmem:[%s7438 + $0x18] sm:$0xff]
    %v7443 = vld [vmem:[%s7438 + $0x20] sm:$0xff]
    %v7444 = vld [vmem:[%s7438 + $0x28] sm:$0xff]
    %v7445 = vld [vmem:[%s7438 + $0x30] sm:$0xff]
    %v7446 = vld [vmem:[%s7438 + $0x38] sm:$0xff]
    %v7447 = vld [vmem:[%s7438 + $0x40] sm:$0xff]
    %v7448 = vld [vmem:[%s7438 + $0x48] sm:$0xff]
    %v7449 = vld [vmem:[%s7438 + $0x50] sm:$0xff]
    %v7450 = vld [vmem:[%s7438 + $0x58] sm:$0xff]
    %v7451 = vld [vmem:[%s7438 + $0x60] sm:$0xff]
    %v7452 = vld [vmem:[%s7438 + $0x68] sm:$0xff]
    %v7453 = vld [vmem:[%s7438 + $0x70] sm:$0xff]
    %v7454 = vld [vmem:[%s7438 + $0x78] sm:$0xff]
    %v7455 = vld [vmem:[%s7438 + $0x80] sm:$0xff]
    %v7456 = vld [vmem:[%s7438 + $0x88] sm:$0xff]
    %v7457 = vld [vmem:[%s7438 + $0x90] sm:$0xff]
    %v7458 = vld [vmem:[%s7438 + $0x98] sm:$0xff]
    %v7459 = vld [vmem:[%s7438 + $0xa0] sm:$0xff]
    %v7460 = vld [vmem:[%s7438 + $0xa8] sm:$0xff]
    %v7461 = vld [vmem:[%s7438 + $0xb0] sm:$0xff]
    %v7462 = vld [vmem:[%s7438 + $0xb8] sm:$0xff]
    %v7463 = vld [vmem:[%s7438 + $0xc0] sm:$0xff]
    %v7464 = vld [vmem:[%s7438 + $0xc8] sm:$0xff]
    %v7465 = vld [vmem:[%s7438 + $0xd0] sm:$0xff]
    %v7466 = vld [vmem:[%s7438 + $0xd8] sm:$0xff]
    %v7467 = vld [vmem:[%s7438 + $0xe0] sm:$0xff]
    %v7468 = vld [vmem:[%s7438 + $0xe8] sm:$0xff]
    %v7469 = vld [vmem:[%s7438 + $0xf0] sm:$0xff]
    %v7470 = vld [vmem:[%s7438 + $0xf8] sm:$0xff]
    %v7471 = vld [vmem:[%s7438 + $0x100] sm:$0xff]
    %v7472 = vld [vmem:[%s7438 + $0x108] sm:$0xff]
    %v7473 = vld [vmem:[%s7438 + $0x110] sm:$0xff]
    %v7474 = vld [vmem:[%s7438 + $0x118] sm:$0xff]
    %v7475 = vld [vmem:[%s7438 + $0x120] sm:$0xff]
    %v7476 = vld [vmem:[%s7438 + $0x128] sm:$0xff]
    %v7477 = vld [vmem:[%s7438 + $0x130] sm:$0xff]
    %v7478 = vld [vmem:[%s7438 + $0x138] sm:$0xff]
    %v7479 = vld [vmem:[%s7438 + $0x140] sm:$0xff]
    %v7480 = vld [vmem:[%s7438 + $0x148] sm:$0xff]
    %v7481 = vld [vmem:[%s7438 + $0x150] sm:$0xff]
    %v7482 = vld [vmem:[%s7438 + $0x158] sm:$0xff]
    %v7483 = vld [vmem:[%s7438 + $0x160] sm:$0xff]
    %v7484 = vld [vmem:[%s7438 + $0x168] sm:$0xff]
    %v7485 = vld [vmem:[%s7438 + $0x170] sm:$0xff]
    %v7486 = vld [vmem:[%s7438 + $0x178] sm:$0xff]
    %v7535 = vunpack.c.l.b16 %v7439
    %v7536 = vunpack.c.h.b16 %v7439
    %v7537 = vunpack.c.l.b16 %v7440
    %v7538 = vunpack.c.h.b16 %v7440
    %v7539 = vunpack.c.l.b16 %v7441
    %v7540 = vunpack.c.h.b16 %v7441
    %v7541 = vunpack.c.l.b16 %v7442
    %v7542 = vunpack.c.h.b16 %v7442
    %v7543 = vunpack.c.l.b16 %v7443
    %v7544 = vunpack.c.h.b16 %v7443
    %v7545 = vunpack.c.l.b16 %v7444
    %v7546 = vunpack.c.h.b16 %v7444
    %v7547 = vunpack.c.l.b16 %v7445
    %v7548 = vunpack.c.h.b16 %v7445
    %v7549 = vunpack.c.l.b16 %v7446
    %v7550 = vunpack.c.h.b16 %v7446
    %v7551 = vunpack.c.l.b16 %v7447
    %v7552 = vunpack.c.h.b16 %v7447
    %v7553 = vunpack.c.l.b16 %v7448
    %v7554 = vunpack.c.h.b16 %v7448
    %v7555 = vunpack.c.l.b16 %v7449
    %v7556 = vunpack.c.h.b16 %v7449
    %v7557 = vunpack.c.l.b16 %v7450
    %v7558 = vunpack.c.h.b16 %v7450
    %v7559 = vunpack.c.l.b16 %v7451
    %v7560 = vunpack.c.h.b16 %v7451
    %v7561 = vunpack.c.l.b16 %v7452
    %v7562 = vunpack.c.h.b16 %v7452
    %v7563 = vunpack.c.l.b16 %v7453
    %v7564 = vunpack.c.h.b16 %v7453
    %v7565 = vunpack.c.l.b16 %v7454
    %v7566 = vunpack.c.h.b16 %v7454
    %v7567 = vunpack.c.l.b16 %v7455
    %v7568 = vunpack.c.h.b16 %v7455
    %v7569 = vunpack.c.l.b16 %v7456
    %v7570 = vunpack.c.h.b16 %v7456
    %v7571 = vunpack.c.l.b16 %v7457
    %v7572 = vunpack.c.h.b16 %v7457
    %v7573 = vunpack.c.l.b16 %v7458
    %v7574 = vunpack.c.h.b16 %v7458
    %v7575 = vunpack.c.l.b16 %v7459
    %v7576 = vunpack.c.h.b16 %v7459
    %v7577 = vunpack.c.l.b16 %v7460
    %v7578 = vunpack.c.h.b16 %v7460
    %v7579 = vunpack.c.l.b16 %v7461
    %v7580 = vunpack.c.h.b16 %v7461
    %v7581 = vunpack.c.l.b16 %v7462
    %v7582 = vunpack.c.h.b16 %v7462
    %v7583 = vunpack.c.l.b16 %v7463
    %v7584 = vunpack.c.h.b16 %v7463
    %v7585 = vunpack.c.l.b16 %v7464
    %v7586 = vunpack.c.h.b16 %v7464
    %v7587 = vunpack.c.l.b16 %v7465
    %v7588 = vunpack.c.h.b16 %v7465
    %v7589 = vunpack.c.l.b16 %v7466
    %v7590 = vunpack.c.h.b16 %v7466
    %v7591 = vunpack.c.l.b16 %v7467
    %v7592 = vunpack.c.h.b16 %v7467
    %v7593 = vunpack.c.l.b16 %v7468
    %v7594 = vunpack.c.h.b16 %v7468
    %v7595 = vunpack.c.l.b16 %v7469
    %v7596 = vunpack.c.h.b16 %v7469
    %v7597 = vunpack.c.l.b16 %v7470
    %v7598 = vunpack.c.h.b16 %v7470
    %v7599 = vunpack.c.l.b16 %v7471
    %v7600 = vunpack.c.h.b16 %v7471
    %v7601 = vunpack.c.l.b16 %v7472
    %v7602 = vunpack.c.h.b16 %v7472
    %v7603 = vunpack.c.l.b16 %v7473
    %v7604 = vunpack.c.h.b16 %v7473
    %v7605 = vunpack.c.l.b16 %v7474
    %v7606 = vunpack.c.h.b16 %v7474
    %v7607 = vunpack.c.l.b16 %v7475
    %v7608 = vunpack.c.h.b16 %v7475
    %v7609 = vunpack.c.l.b16 %v7476
    %v7610 = vunpack.c.h.b16 %v7476
    %v7611 = vunpack.c.l.b16 %v7477
    %v7612 = vunpack.c.h.b16 %v7477
    %v7613 = vunpack.c.l.b16 %v7478
    %v7614 = vunpack.c.h.b16 %v7478
    %v7615 = vunpack.c.l.b16 %v7479
    %v7616 = vunpack.c.h.b16 %v7479
    %v7617 = vunpack.c.l.b16 %v7480
    %v7618 = vunpack.c.h.b16 %v7480
    %v7619 = vunpack.c.l.b16 %v7481
    %v7620 = vunpack.c.h.b16 %v7481
    %v7621 = vunpack.c.l.b16 %v7482
    %v7622 = vunpack.c.h.b16 %v7482
    %v7623 = vunpack.c.l.b16 %v7483
    %v7624 = vunpack.c.h.b16 %v7483
    %v7625 = vunpack.c.l.b16 %v7484
    %v7626 = vunpack.c.h.b16 %v7484
    %v7627 = vunpack.c.l.b16 %v7485
    %v7628 = vunpack.c.h.b16 %v7485
    %v7629 = vunpack.c.l.b16 %v7486
    %v7630 = vunpack.c.h.b16 %v7486
    %v7631 = vpack.c.b16 %v7541, %v7535
    %v7632 = vpack.c.b16 %v7542, %v7536
    %v7633 = vpack.c.b16 %v7543, %v7537
    %v7634 = vpack.c.b16 %v7544, %v7538
    %v7635 = vpack.c.b16 %v7545, %v7539
    %v7636 = vpack.c.b16 %v7546, %v7540
    %v7637 = vpack.c.b16 %v7553, %v7547
    %v7638 = vpack.c.b16 %v7554, %v7548
    %v7639 = vpack.c.b16 %v7555, %v7549
    %v7640 = vpack.c.b16 %v7556, %v7550
    %v7641 = vpack.c.b16 %v7557, %v7551
    %v7642 = vpack.c.b16 %v7558, %v7552
    %v7643 = vpack.c.b16 %v7565, %v7559
    %v7644 = vpack.c.b16 %v7566, %v7560
    %v7645 = vpack.c.b16 %v7567, %v7561
    %v7646 = vpack.c.b16 %v7568, %v7562
    %v7647 = vpack.c.b16 %v7569, %v7563
    %v7648 = vpack.c.b16 %v7570, %v7564
    %v7649 = vpack.c.b16 %v7577, %v7571
    %v7650 = vpack.c.b16 %v7578, %v7572
    %v7651 = vpack.c.b16 %v7579, %v7573
    %v7652 = vpack.c.b16 %v7580, %v7574
    %v7653 = vpack.c.b16 %v7581, %v7575
    %v7654 = vpack.c.b16 %v7582, %v7576
    %v7655 = vpack.c.b16 %v7589, %v7583
    %v7656 = vpack.c.b16 %v7590, %v7584
    %v7657 = vpack.c.b16 %v7591, %v7585
    %v7658 = vpack.c.b16 %v7592, %v7586
    %v7659 = vpack.c.b16 %v7593, %v7587
    %v7660 = vpack.c.b16 %v7594, %v7588
    %v7661 = vpack.c.b16 %v7601, %v7595
    %v7662 = vpack.c.b16 %v7602, %v7596
    %v7663 = vpack.c.b16 %v7603, %v7597
    %v7664 = vpack.c.b16 %v7604, %v7598
    %v7665 = vpack.c.b16 %v7605, %v7599
    %v7666 = vpack.c.b16 %v7606, %v7600
    %v7667 = vpack.c.b16 %v7613, %v7607
    %v7668 = vpack.c.b16 %v7614, %v7608
    %v7669 = vpack.c.b16 %v7615, %v7609
    %v7670 = vpack.c.b16 %v7616, %v7610
    %v7671 = vpack.c.b16 %v7617, %v7611
    %v7672 = vpack.c.b16 %v7618, %v7612
    %v7673 = vpack.c.b16 %v7625, %v7619
    %v7674 = vpack.c.b16 %v7626, %v7620
    %v7675 = vpack.c.b16 %v7627, %v7621
    %v7676 = vpack.c.b16 %v7628, %v7622
    %v7677 = vpack.c.b16 %v7629, %v7623
    %v7678 = vpack.c.b16 %v7630, %v7624
    %7727 = vmatpush.bf16.msra.mxu0 %v7673
    %7728 = vmatpush.bf16.msra.mxu0 %v7667
    %7729 = vmatpush.bf16.msra.mxu0 %v7661
    %7730 = vmatpush.bf16.msra.mxu0 %v7655
    %7731 = vmatpush.bf16.msra.mxu0 %v7649
    %7732 = vmatpush.bf16.msra.mxu0 %v7643
    %7733 = vmatpush.bf16.msra.mxu0 %v7637
    %7734 = vmatpush.bf16.msra.mxu0 %v7631
    %7735 = vmatmul.bf16.gmra.mxu0 %v7437
    %v7736 = vpop.f32.mrf.mxu0
    %v7737 = vadd.f32 0.0, %v7736
    %v7738 = vpop.f32.mrf.mxu0
    %7739 = vdwg.mxu0
    %7740 = vmatpush.bf16.msra.mxu0 %v7674
    %7741 = vmatpush.bf16.msra.mxu0 %v7668
    %7742 = vmatpush.bf16.msra.mxu0 %v7662
    %7743 = vmatpush.bf16.msra.mxu0 %v7656
    %7744 = vmatpush.bf16.msra.mxu0 %v7650
    %7745 = vmatpush.bf16.msra.mxu0 %v7644
    %7746 = vmatpush.bf16.msra.mxu0 %v7638
    %7747 = vmatpush.bf16.msra.mxu0 %v7632
    %7748 = vmatmul.bf16.gmra.mxu0 %v7437
    %v7749 = vpop.f32.mrf.mxu0
    %v7750 = vadd.f32 0.0, %v7749
    %v7751 = vpop.f32.mrf.mxu0
    %7752 = vdwg.mxu0
    %7753 = vmatpush.bf16.msra.mxu0 %v7675
    %7754 = vmatpush.bf16.msra.mxu0 %v7669
    %7755 = vmatpush.bf16.msra.mxu0 %v7663
    %7756 = vmatpush.bf16.msra.mxu0 %v7657
    %7757 = vmatpush.bf16.msra.mxu0 %v7651
    %7758 = vmatpush.bf16.msra.mxu0 %v7645
    %7759 = vmatpush.bf16.msra.mxu0 %v7639
    %7760 = vmatpush.bf16.msra.mxu0 %v7633
    %7761 = vmatmul.bf16.gmra.mxu0 %v7437
    %v7762 = vpop.f32.mrf.mxu0
    %v7763 = vadd.f32 0.0, %v7762
    %v7764 = vpop.f32.mrf.mxu0
    %7765 = vdwg.mxu0
    %7766 = vmatpush.bf16.msra.mxu0 %v7676
    %7767 = vmatpush.bf16.msra.mxu0 %v7670
    %7768 = vmatpush.bf16.msra.mxu0 %v7664
    %7769 = vmatpush.bf16.msra.mxu0 %v7658
    %7770 = vmatpush.bf16.msra.mxu0 %v7652
    %7771 = vmatpush.bf16.msra.mxu0 %v7646
    %7772 = vmatpush.bf16.msra.mxu0 %v7640
    %7773 = vmatpush.bf16.msra.mxu0 %v7634
    %7774 = vmatmul.bf16.gmra.mxu0 %v7437
    %v7775 = vpop.f32.mrf.mxu0
    %v7776 = vadd.f32 0.0, %v7775
    %v7777 = vpop.f32.mrf.mxu0
    %7778 = vdwg.mxu0
    %7779 = vmatpush.bf16.msra.mxu0 %v7677
    %7780 = vmatpush.bf16.msra.mxu0 %v7671
    %7781 = vmatpush.bf16.msra.mxu0 %v7665
    %7782 = vmatpush.bf16.msra.mxu0 %v7659
    %7783 = vmatpush.bf16.msra.mxu0 %v7653
    %7784 = vmatpush.bf16.msra.mxu0 %v7647
    %7785 = vmatpush.bf16.msra.mxu0 %v7641
    %7786 = vmatpush.bf16.msra.mxu0 %v7635
    %7787 = vmatmul.bf16.gmra.mxu0 %v7437
    %v7788 = vpop.f32.mrf.mxu0
    %v7789 = vadd.f32 0.0, %v7788
    %v7790 = vpop.f32.mrf.mxu0
    %7791 = vdwg.mxu0
    %7792 = vmatpush.bf16.msra.mxu0 %v7678
    %7793 = vmatpush.bf16.msra.mxu0 %v7672
    %7794 = vmatpush.bf16.msra.mxu0 %v7666
    %7795 = vmatpush.bf16.msra.mxu0 %v7660
    %7796 = vmatpush.bf16.msra.mxu0 %v7654
    %7797 = vmatpush.bf16.msra.mxu0 %v7648
    %7798 = vmatpush.bf16.msra.mxu0 %v7642
    %7799 = vmatpush.bf16.msra.mxu0 %v7636
    %7800 = vmatmul.bf16.gmra.mxu0 %v7437
    %v7801 = vpop.f32.mrf.mxu0
    %v7802 = vadd.f32 0.0, %v7801
    %v7803 = vpop.f32.mrf.mxu0
    %7804 = vdwg.mxu0
    %v7805 = vadd.f32 %v7429, %v7737
    %v7806 = vadd.f32 %v7430, %v7750
    %v7807 = vadd.f32 %v7431, %v7763
    %v7808 = vadd.f32 %v7432, %v7776
    %v7809 = vadd.f32 %v7433, %v7789
    %v7810 = vadd.f32 %v7434, %v7802
    %s7811 = scalar_lea.vmem [#allocation3], 19
    %v7812 = vld [vmem:[%s7811] ss:$25 sm:$0x3]
    %v7813 = vpack.c.bf16 %v7812, %v7812
    %s7814 = scalar_lea.vmem [#allocation10], 7296
    %v7815 = vld [vmem:[%s7814] sm:$0xff]
    %v7816 = vld [vmem:[%s7814 + $0x8] sm:$0xff]
    %v7817 = vld [vmem:[%s7814 + $0x10] sm:$0xff]
    %v7818 = vld [vmem:[%s7814 + $0x18] sm:$0xff]
    %v7819 = vld [vmem:[%s7814 + $0x20] sm:$0xff]
    %v7820 = vld [vmem:[%s7814 + $0x28] sm:$0xff]
    %v7821 = vld [vmem:[%s7814 + $0x30] sm:$0xff]
    %v7822 = vld [vmem:[%s7814 + $0x38] sm:$0xff]
    %v7823 = vld [vmem:[%s7814 + $0x40] sm:$0xff]
    %v7824 = vld [vmem:[%s7814 + $0x48] sm:$0xff]
    %v7825 = vld [vmem:[%s7814 + $0x50] sm:$0xff]
    %v7826 = vld [vmem:[%s7814 + $0x58] sm:$0xff]
    %v7827 = vld [vmem:[%s7814 + $0x60] sm:$0xff]
    %v7828 = vld [vmem:[%s7814 + $0x68] sm:$0xff]
    %v7829 = vld [vmem:[%s7814 + $0x70] sm:$0xff]
    %v7830 = vld [vmem:[%s7814 + $0x78] sm:$0xff]
    %v7831 = vld [vmem:[%s7814 + $0x80] sm:$0xff]
    %v7832 = vld [vmem:[%s7814 + $0x88] sm:$0xff]
    %v7833 = vld [vmem:[%s7814 + $0x90] sm:$0xff]
    %v7834 = vld [vmem:[%s7814 + $0x98] sm:$0xff]
    %v7835 = vld [vmem:[%s7814 + $0xa0] sm:$0xff]
    %v7836 = vld [vmem:[%s7814 + $0xa8] sm:$0xff]
    %v7837 = vld [vmem:[%s7814 + $0xb0] sm:$0xff]
    %v7838 = vld [vmem:[%s7814 + $0xb8] sm:$0xff]
    %v7839 = vld [vmem:[%s7814 + $0xc0] sm:$0xff]
    %v7840 = vld [vmem:[%s7814 + $0xc8] sm:$0xff]
    %v7841 = vld [vmem:[%s7814 + $0xd0] sm:$0xff]
    %v7842 = vld [vmem:[%s7814 + $0xd8] sm:$0xff]
    %v7843 = vld [vmem:[%s7814 + $0xe0] sm:$0xff]
    %v7844 = vld [vmem:[%s7814 + $0xe8] sm:$0xff]
    %v7845 = vld [vmem:[%s7814 + $0xf0] sm:$0xff]
    %v7846 = vld [vmem:[%s7814 + $0xf8] sm:$0xff]
    %v7847 = vld [vmem:[%s7814 + $0x100] sm:$0xff]
    %v7848 = vld [vmem:[%s7814 + $0x108] sm:$0xff]
    %v7849 = vld [vmem:[%s7814 + $0x110] sm:$0xff]
    %v7850 = vld [vmem:[%s7814 + $0x118] sm:$0xff]
    %v7851 = vld [vmem:[%s7814 + $0x120] sm:$0xff]
    %v7852 = vld [vmem:[%s7814 + $0x128] sm:$0xff]
    %v7853 = vld [vmem:[%s7814 + $0x130] sm:$0xff]
    %v7854 = vld [vmem:[%s7814 + $0x138] sm:$0xff]
    %v7855 = vld [vmem:[%s7814 + $0x140] sm:$0xff]
    %v7856 = vld [vmem:[%s7814 + $0x148] sm:$0xff]
    %v7857 = vld [vmem:[%s7814 + $0x150] sm:$0xff]
    %v7858 = vld [vmem:[%s7814 + $0x158] sm:$0xff]
    %v7859 = vld [vmem:[%s7814 + $0x160] sm:$0xff]
    %v7860 = vld [vmem:[%s7814 + $0x168] sm:$0xff]
    %v7861 = vld [vmem:[%s7814 + $0x170] sm:$0xff]
    %v7862 = vld [vmem:[%s7814 + $0x178] sm:$0xff]
    %v7911 = vunpack.c.l.b16 %v7815
    %v7912 = vunpack.c.h.b16 %v7815
    %v7913 = vunpack.c.l.b16 %v7816
    %v7914 = vunpack.c.h.b16 %v7816
    %v7915 = vunpack.c.l.b16 %v7817
    %v7916 = vunpack.c.h.b16 %v7817
    %v7917 = vunpack.c.l.b16 %v7818
    %v7918 = vunpack.c.h.b16 %v7818
    %v7919 = vunpack.c.l.b16 %v7819
    %v7920 = vunpack.c.h.b16 %v7819
    %v7921 = vunpack.c.l.b16 %v7820
    %v7922 = vunpack.c.h.b16 %v7820
    %v7923 = vunpack.c.l.b16 %v7821
    %v7924 = vunpack.c.h.b16 %v7821
    %v7925 = vunpack.c.l.b16 %v7822
    %v7926 = vunpack.c.h.b16 %v7822
    %v7927 = vunpack.c.l.b16 %v7823
    %v7928 = vunpack.c.h.b16 %v7823
    %v7929 = vunpack.c.l.b16 %v7824
    %v7930 = vunpack.c.h.b16 %v7824
    %v7931 = vunpack.c.l.b16 %v7825
    %v7932 = vunpack.c.h.b16 %v7825
    %v7933 = vunpack.c.l.b16 %v7826
    %v7934 = vunpack.c.h.b16 %v7826
    %v7935 = vunpack.c.l.b16 %v7827
    %v7936 = vunpack.c.h.b16 %v7827
    %v7937 = vunpack.c.l.b16 %v7828
    %v7938 = vunpack.c.h.b16 %v7828
    %v7939 = vunpack.c.l.b16 %v7829
    %v7940 = vunpack.c.h.b16 %v7829
    %v7941 = vunpack.c.l.b16 %v7830
    %v7942 = vunpack.c.h.b16 %v7830
    %v7943 = vunpack.c.l.b16 %v7831
    %v7944 = vunpack.c.h.b16 %v7831
    %v7945 = vunpack.c.l.b16 %v7832
    %v7946 = vunpack.c.h.b16 %v7832
    %v7947 = vunpack.c.l.b16 %v7833
    %v7948 = vunpack.c.h.b16 %v7833
    %v7949 = vunpack.c.l.b16 %v7834
    %v7950 = vunpack.c.h.b16 %v7834
    %v7951 = vunpack.c.l.b16 %v7835
    %v7952 = vunpack.c.h.b16 %v7835
    %v7953 = vunpack.c.l.b16 %v7836
    %v7954 = vunpack.c.h.b16 %v7836
    %v7955 = vunpack.c.l.b16 %v7837
    %v7956 = vunpack.c.h.b16 %v7837
    %v7957 = vunpack.c.l.b16 %v7838
    %v7958 = vunpack.c.h.b16 %v7838
    %v7959 = vunpack.c.l.b16 %v7839
    %v7960 = vunpack.c.h.b16 %v7839
    %v7961 = vunpack.c.l.b16 %v7840
    %v7962 = vunpack.c.h.b16 %v7840
    %v7963 = vunpack.c.l.b16 %v7841
    %v7964 = vunpack.c.h.b16 %v7841
    %v7965 = vunpack.c.l.b16 %v7842
    %v7966 = vunpack.c.h.b16 %v7842
    %v7967 = vunpack.c.l.b16 %v7843
    %v7968 = vunpack.c.h.b16 %v7843
    %v7969 = vunpack.c.l.b16 %v7844
    %v7970 = vunpack.c.h.b16 %v7844
    %v7971 = vunpack.c.l.b16 %v7845
    %v7972 = vunpack.c.h.b16 %v7845
    %v7973 = vunpack.c.l.b16 %v7846
    %v7974 = vunpack.c.h.b16 %v7846
    %v7975 = vunpack.c.l.b16 %v7847
    %v7976 = vunpack.c.h.b16 %v7847
    %v7977 = vunpack.c.l.b16 %v7848
    %v7978 = vunpack.c.h.b16 %v7848
    %v7979 = vunpack.c.l.b16 %v7849
    %v7980 = vunpack.c.h.b16 %v7849
    %v7981 = vunpack.c.l.b16 %v7850
    %v7982 = vunpack.c.h.b16 %v7850
    %v7983 = vunpack.c.l.b16 %v7851
    %v7984 = vunpack.c.h.b16 %v7851
    %v7985 = vunpack.c.l.b16 %v7852
    %v7986 = vunpack.c.h.b16 %v7852
    %v7987 = vunpack.c.l.b16 %v7853
    %v7988 = vunpack.c.h.b16 %v7853
    %v7989 = vunpack.c.l.b16 %v7854
    %v7990 = vunpack.c.h.b16 %v7854
    %v7991 = vunpack.c.l.b16 %v7855
    %v7992 = vunpack.c.h.b16 %v7855
    %v7993 = vunpack.c.l.b16 %v7856
    %v7994 = vunpack.c.h.b16 %v7856
    %v7995 = vunpack.c.l.b16 %v7857
    %v7996 = vunpack.c.h.b16 %v7857
    %v7997 = vunpack.c.l.b16 %v7858
    %v7998 = vunpack.c.h.b16 %v7858
    %v7999 = vunpack.c.l.b16 %v7859
    %v8000 = vunpack.c.h.b16 %v7859
    %v8001 = vunpack.c.l.b16 %v7860
    %v8002 = vunpack.c.h.b16 %v7860
    %v8003 = vunpack.c.l.b16 %v7861
    %v8004 = vunpack.c.h.b16 %v7861
    %v8005 = vunpack.c.l.b16 %v7862
    %v8006 = vunpack.c.h.b16 %v7862
    %v8007 = vpack.c.b16 %v7917, %v7911
    %v8008 = vpack.c.b16 %v7918, %v7912
    %v8009 = vpack.c.b16 %v7919, %v7913
    %v8010 = vpack.c.b16 %v7920, %v7914
    %v8011 = vpack.c.b16 %v7921, %v7915
    %v8012 = vpack.c.b16 %v7922, %v7916
    %v8013 = vpack.c.b16 %v7929, %v7923
    %v8014 = vpack.c.b16 %v7930, %v7924
    %v8015 = vpack.c.b16 %v7931, %v7925
    %v8016 = vpack.c.b16 %v7932, %v7926
    %v8017 = vpack.c.b16 %v7933, %v7927
    %v8018 = vpack.c.b16 %v7934, %v7928
    %v8019 = vpack.c.b16 %v7941, %v7935
    %v8020 = vpack.c.b16 %v7942, %v7936
    %v8021 = vpack.c.b16 %v7943, %v7937
    %v8022 = vpack.c.b16 %v7944, %v7938
    %v8023 = vpack.c.b16 %v7945, %v7939
    %v8024 = vpack.c.b16 %v7946, %v7940
    %v8025 = vpack.c.b16 %v7953, %v7947
    %v8026 = vpack.c.b16 %v7954, %v7948
    %v8027 = vpack.c.b16 %v7955, %v7949
    %v8028 = vpack.c.b16 %v7956, %v7950
    %v8029 = vpack.c.b16 %v7957, %v7951
    %v8030 = vpack.c.b16 %v7958, %v7952
    %v8031 = vpack.c.b16 %v7965, %v7959
    %v8032 = vpack.c.b16 %v7966, %v7960
    %v8033 = vpack.c.b16 %v7967, %v7961
    %v8034 = vpack.c.b16 %v7968, %v7962
    %v8035 = vpack.c.b16 %v7969, %v7963
    %v8036 = vpack.c.b16 %v7970, %v7964
    %v8037 = vpack.c.b16 %v7977, %v7971
    %v8038 = vpack.c.b16 %v7978, %v7972
    %v8039 = vpack.c.b16 %v7979, %v7973
    %v8040 = vpack.c.b16 %v7980, %v7974
    %v8041 = vpack.c.b16 %v7981, %v7975
    %v8042 = vpack.c.b16 %v7982, %v7976
    %v8043 = vpack.c.b16 %v7989, %v7983
    %v8044 = vpack.c.b16 %v7990, %v7984
    %v8045 = vpack.c.b16 %v7991, %v7985
    %v8046 = vpack.c.b16 %v7992, %v7986
    %v8047 = vpack.c.b16 %v7993, %v7987
    %v8048 = vpack.c.b16 %v7994, %v7988
    %v8049 = vpack.c.b16 %v8001, %v7995
    %v8050 = vpack.c.b16 %v8002, %v7996
    %v8051 = vpack.c.b16 %v8003, %v7997
    %v8052 = vpack.c.b16 %v8004, %v7998
    %v8053 = vpack.c.b16 %v8005, %v7999
    %v8054 = vpack.c.b16 %v8006, %v8000
    %8103 = vmatpush.bf16.msra.mxu0 %v8049
    %8104 = vmatpush.bf16.msra.mxu0 %v8043
    %8105 = vmatpush.bf16.msra.mxu0 %v8037
    %8106 = vmatpush.bf16.msra.mxu0 %v8031
    %8107 = vmatpush.bf16.msra.mxu0 %v8025
    %8108 = vmatpush.bf16.msra.mxu0 %v8019
    %8109 = vmatpush.bf16.msra.mxu0 %v8013
    %8110 = vmatpush.bf16.msra.mxu0 %v8007
    %8111 = vmatmul.bf16.gmra.mxu0 %v7813
    %v8112 = vpop.f32.mrf.mxu0
    %v8113 = vadd.f32 0.0, %v8112
    %v8114 = vpop.f32.mrf.mxu0
    %8115 = vdwg.mxu0
    %8116 = vmatpush.bf16.msra.mxu0 %v8050
    %8117 = vmatpush.bf16.msra.mxu0 %v8044
    %8118 = vmatpush.bf16.msra.mxu0 %v8038
    %8119 = vmatpush.bf16.msra.mxu0 %v8032
    %8120 = vmatpush.bf16.msra.mxu0 %v8026
    %8121 = vmatpush.bf16.msra.mxu0 %v8020
    %8122 = vmatpush.bf16.msra.mxu0 %v8014
    %8123 = vmatpush.bf16.msra.mxu0 %v8008
    %8124 = vmatmul.bf16.gmra.mxu0 %v7813
    %v8125 = vpop.f32.mrf.mxu0
    %v8126 = vadd.f32 0.0, %v8125
    %v8127 = vpop.f32.mrf.mxu0
    %8128 = vdwg.mxu0
    %8129 = vmatpush.bf16.msra.mxu0 %v8051
    %8130 = vmatpush.bf16.msra.mxu0 %v8045
    %8131 = vmatpush.bf16.msra.mxu0 %v8039
    %8132 = vmatpush.bf16.msra.mxu0 %v8033
    %8133 = vmatpush.bf16.msra.mxu0 %v8027
    %8134 = vmatpush.bf16.msra.mxu0 %v8021
    %8135 = vmatpush.bf16.msra.mxu0 %v8015
    %8136 = vmatpush.bf16.msra.mxu0 %v8009
    %8137 = vmatmul.bf16.gmra.mxu0 %v7813
    %v8138 = vpop.f32.mrf.mxu0
    %v8139 = vadd.f32 0.0, %v8138
    %v8140 = vpop.f32.mrf.mxu0
    %8141 = vdwg.mxu0
    %8142 = vmatpush.bf16.msra.mxu0 %v8052
    %8143 = vmatpush.bf16.msra.mxu0 %v8046
    %8144 = vmatpush.bf16.msra.mxu0 %v8040
    %8145 = vmatpush.bf16.msra.mxu0 %v8034
    %8146 = vmatpush.bf16.msra.mxu0 %v8028
    %8147 = vmatpush.bf16.msra.mxu0 %v8022
    %8148 = vmatpush.bf16.msra.mxu0 %v8016
    %8149 = vmatpush.bf16.msra.mxu0 %v8010
    %8150 = vmatmul.bf16.gmra.mxu0 %v7813
    %v8151 = vpop.f32.mrf.mxu0
    %v8152 = vadd.f32 0.0, %v8151
    %v8153 = vpop.f32.mrf.mxu0
    %8154 = vdwg.mxu0
    %8155 = vmatpush.bf16.msra.mxu0 %v8053
    %8156 = vmatpush.bf16.msra.mxu0 %v8047
    %8157 = vmatpush.bf16.msra.mxu0 %v8041
    %8158 = vmatpush.bf16.msra.mxu0 %v8035
    %8159 = vmatpush.bf16.msra.mxu0 %v8029
    %8160 = vmatpush.bf16.msra.mxu0 %v8023
    %8161 = vmatpush.bf16.msra.mxu0 %v8017
    %8162 = vmatpush.bf16.msra.mxu0 %v8011
    %8163 = vmatmul.bf16.gmra.mxu0 %v7813
    %v8164 = vpop.f32.mrf.mxu0
    %v8165 = vadd.f32 0.0, %v8164
    %v8166 = vpop.f32.mrf.mxu0
    %8167 = vdwg.mxu0
    %8168 = vmatpush.bf16.msra.mxu0 %v8054
    %8169 = vmatpush.bf16.msra.mxu0 %v8048
    %8170 = vmatpush.bf16.msra.mxu0 %v8042
    %8171 = vmatpush.bf16.msra.mxu0 %v8036
    %8172 = vmatpush.bf16.msra.mxu0 %v8030
    %8173 = vmatpush.bf16.msra.mxu0 %v8024
    %8174 = vmatpush.bf16.msra.mxu0 %v8018
    %8175 = vmatpush.bf16.msra.mxu0 %v8012
    %8176 = vmatmul.bf16.gmra.mxu0 %v7813
    %v8177 = vpop.f32.mrf.mxu0
    %v8178 = vadd.f32 0.0, %v8177
    %v8179 = vpop.f32.mrf.mxu0
    %8180 = vdwg.mxu0
    %v8181 = vadd.f32 %v7805, %v8113
    %v8182 = vadd.f32 %v7806, %v8126
    %v8183 = vadd.f32 %v7807, %v8139
    %v8184 = vadd.f32 %v7808, %v8152
    %v8185 = vadd.f32 %v7809, %v8165
    %v8186 = vadd.f32 %v7810, %v8178
    %s8187 = scalar_lea.vmem [#allocation3], 20
    %v8188 = vld [vmem:[%s8187] ss:$25 sm:$0x3]
    %v8189 = vpack.c.bf16 %v8188, %v8188
    %s8190 = scalar_lea.vmem [#allocation10], 7680
    %v8191 = vld [vmem:[%s8190] sm:$0xff]
    %v8192 = vld [vmem:[%s8190 + $0x8] sm:$0xff]
    %v8193 = vld [vmem:[%s8190 + $0x10] sm:$0xff]
    %v8194 = vld [vmem:[%s8190 + $0x18] sm:$0xff]
    %v8195 = vld [vmem:[%s8190 + $0x20] sm:$0xff]
    %v8196 = vld [vmem:[%s8190 + $0x28] sm:$0xff]
    %v8197 = vld [vmem:[%s8190 + $0x30] sm:$0xff]
    %v8198 = vld [vmem:[%s8190 + $0x38] sm:$0xff]
    %v8199 = vld [vmem:[%s8190 + $0x40] sm:$0xff]
    %v8200 = vld [vmem:[%s8190 + $0x48] sm:$0xff]
    %v8201 = vld [vmem:[%s8190 + $0x50] sm:$0xff]
    %v8202 = vld [vmem:[%s8190 + $0x58] sm:$0xff]
    %v8203 = vld [vmem:[%s8190 + $0x60] sm:$0xff]
    %v8204 = vld [vmem:[%s8190 + $0x68] sm:$0xff]
    %v8205 = vld [vmem:[%s8190 + $0x70] sm:$0xff]
    %v8206 = vld [vmem:[%s8190 + $0x78] sm:$0xff]
    %v8207 = vld [vmem:[%s8190 + $0x80] sm:$0xff]
    %v8208 = vld [vmem:[%s8190 + $0x88] sm:$0xff]
    %v8209 = vld [vmem:[%s8190 + $0x90] sm:$0xff]
    %v8210 = vld [vmem:[%s8190 + $0x98] sm:$0xff]
    %v8211 = vld [vmem:[%s8190 + $0xa0] sm:$0xff]
    %v8212 = vld [vmem:[%s8190 + $0xa8] sm:$0xff]
    %v8213 = vld [vmem:[%s8190 + $0xb0] sm:$0xff]
    %v8214 = vld [vmem:[%s8190 + $0xb8] sm:$0xff]
    %v8215 = vld [vmem:[%s8190 + $0xc0] sm:$0xff]
    %v8216 = vld [vmem:[%s8190 + $0xc8] sm:$0xff]
    %v8217 = vld [vmem:[%s8190 + $0xd0] sm:$0xff]
    %v8218 = vld [vmem:[%s8190 + $0xd8] sm:$0xff]
    %v8219 = vld [vmem:[%s8190 + $0xe0] sm:$0xff]
    %v8220 = vld [vmem:[%s8190 + $0xe8] sm:$0xff]
    %v8221 = vld [vmem:[%s8190 + $0xf0] sm:$0xff]
    %v8222 = vld [vmem:[%s8190 + $0xf8] sm:$0xff]
    %v8223 = vld [vmem:[%s8190 + $0x100] sm:$0xff]
    %v8224 = vld [vmem:[%s8190 + $0x108] sm:$0xff]
    %v8225 = vld [vmem:[%s8190 + $0x110] sm:$0xff]
    %v8226 = vld [vmem:[%s8190 + $0x118] sm:$0xff]
    %v8227 = vld [vmem:[%s8190 + $0x120] sm:$0xff]
    %v8228 = vld [vmem:[%s8190 + $0x128] sm:$0xff]
    %v8229 = vld [vmem:[%s8190 + $0x130] sm:$0xff]
    %v8230 = vld [vmem:[%s8190 + $0x138] sm:$0xff]
    %v8231 = vld [vmem:[%s8190 + $0x140] sm:$0xff]
    %v8232 = vld [vmem:[%s8190 + $0x148] sm:$0xff]
    %v8233 = vld [vmem:[%s8190 + $0x150] sm:$0xff]
    %v8234 = vld [vmem:[%s8190 + $0x158] sm:$0xff]
    %v8235 = vld [vmem:[%s8190 + $0x160] sm:$0xff]
    %v8236 = vld [vmem:[%s8190 + $0x168] sm:$0xff]
    %v8237 = vld [vmem:[%s8190 + $0x170] sm:$0xff]
    %v8238 = vld [vmem:[%s8190 + $0x178] sm:$0xff]
    %v8287 = vunpack.c.l.b16 %v8191
    %v8288 = vunpack.c.h.b16 %v8191
    %v8289 = vunpack.c.l.b16 %v8192
    %v8290 = vunpack.c.h.b16 %v8192
    %v8291 = vunpack.c.l.b16 %v8193
    %v8292 = vunpack.c.h.b16 %v8193
    %v8293 = vunpack.c.l.b16 %v8194
    %v8294 = vunpack.c.h.b16 %v8194
    %v8295 = vunpack.c.l.b16 %v8195
    %v8296 = vunpack.c.h.b16 %v8195
    %v8297 = vunpack.c.l.b16 %v8196
    %v8298 = vunpack.c.h.b16 %v8196
    %v8299 = vunpack.c.l.b16 %v8197
    %v8300 = vunpack.c.h.b16 %v8197
    %v8301 = vunpack.c.l.b16 %v8198
    %v8302 = vunpack.c.h.b16 %v8198
    %v8303 = vunpack.c.l.b16 %v8199
    %v8304 = vunpack.c.h.b16 %v8199
    %v8305 = vunpack.c.l.b16 %v8200
    %v8306 = vunpack.c.h.b16 %v8200
    %v8307 = vunpack.c.l.b16 %v8201
    %v8308 = vunpack.c.h.b16 %v8201
    %v8309 = vunpack.c.l.b16 %v8202
    %v8310 = vunpack.c.h.b16 %v8202
    %v8311 = vunpack.c.l.b16 %v8203
    %v8312 = vunpack.c.h.b16 %v8203
    %v8313 = vunpack.c.l.b16 %v8204
    %v8314 = vunpack.c.h.b16 %v8204
    %v8315 = vunpack.c.l.b16 %v8205
    %v8316 = vunpack.c.h.b16 %v8205
    %v8317 = vunpack.c.l.b16 %v8206
    %v8318 = vunpack.c.h.b16 %v8206
    %v8319 = vunpack.c.l.b16 %v8207
    %v8320 = vunpack.c.h.b16 %v8207
    %v8321 = vunpack.c.l.b16 %v8208
    %v8322 = vunpack.c.h.b16 %v8208
    %v8323 = vunpack.c.l.b16 %v8209
    %v8324 = vunpack.c.h.b16 %v8209
    %v8325 = vunpack.c.l.b16 %v8210
    %v8326 = vunpack.c.h.b16 %v8210
    %v8327 = vunpack.c.l.b16 %v8211
    %v8328 = vunpack.c.h.b16 %v8211
    %v8329 = vunpack.c.l.b16 %v8212
    %v8330 = vunpack.c.h.b16 %v8212
    %v8331 = vunpack.c.l.b16 %v8213
    %v8332 = vunpack.c.h.b16 %v8213
    %v8333 = vunpack.c.l.b16 %v8214
    %v8334 = vunpack.c.h.b16 %v8214
    %v8335 = vunpack.c.l.b16 %v8215
    %v8336 = vunpack.c.h.b16 %v8215
    %v8337 = vunpack.c.l.b16 %v8216
    %v8338 = vunpack.c.h.b16 %v8216
    %v8339 = vunpack.c.l.b16 %v8217
    %v8340 = vunpack.c.h.b16 %v8217
    %v8341 = vunpack.c.l.b16 %v8218
    %v8342 = vunpack.c.h.b16 %v8218
    %v8343 = vunpack.c.l.b16 %v8219
    %v8344 = vunpack.c.h.b16 %v8219
    %v8345 = vunpack.c.l.b16 %v8220
    %v8346 = vunpack.c.h.b16 %v8220
    %v8347 = vunpack.c.l.b16 %v8221
    %v8348 = vunpack.c.h.b16 %v8221
    %v8349 = vunpack.c.l.b16 %v8222
    %v8350 = vunpack.c.h.b16 %v8222
    %v8351 = vunpack.c.l.b16 %v8223
    %v8352 = vunpack.c.h.b16 %v8223
    %v8353 = vunpack.c.l.b16 %v8224
    %v8354 = vunpack.c.h.b16 %v8224
    %v8355 = vunpack.c.l.b16 %v8225
    %v8356 = vunpack.c.h.b16 %v8225
    %v8357 = vunpack.c.l.b16 %v8226
    %v8358 = vunpack.c.h.b16 %v8226
    %v8359 = vunpack.c.l.b16 %v8227
    %v8360 = vunpack.c.h.b16 %v8227
    %v8361 = vunpack.c.l.b16 %v8228
    %v8362 = vunpack.c.h.b16 %v8228
    %v8363 = vunpack.c.l.b16 %v8229
    %v8364 = vunpack.c.h.b16 %v8229
    %v8365 = vunpack.c.l.b16 %v8230
    %v8366 = vunpack.c.h.b16 %v8230
    %v8367 = vunpack.c.l.b16 %v8231
    %v8368 = vunpack.c.h.b16 %v8231
    %v8369 = vunpack.c.l.b16 %v8232
    %v8370 = vunpack.c.h.b16 %v8232
    %v8371 = vunpack.c.l.b16 %v8233
    %v8372 = vunpack.c.h.b16 %v8233
    %v8373 = vunpack.c.l.b16 %v8234
    %v8374 = vunpack.c.h.b16 %v8234
    %v8375 = vunpack.c.l.b16 %v8235
    %v8376 = vunpack.c.h.b16 %v8235
    %v8377 = vunpack.c.l.b16 %v8236
    %v8378 = vunpack.c.h.b16 %v8236
    %v8379 = vunpack.c.l.b16 %v8237
    %v8380 = vunpack.c.h.b16 %v8237
    %v8381 = vunpack.c.l.b16 %v8238
    %v8382 = vunpack.c.h.b16 %v8238
    %v8383 = vpack.c.b16 %v8293, %v8287
    %v8384 = vpack.c.b16 %v8294, %v8288
    %v8385 = vpack.c.b16 %v8295, %v8289
    %v8386 = vpack.c.b16 %v8296, %v8290
    %v8387 = vpack.c.b16 %v8297, %v8291
    %v8388 = vpack.c.b16 %v8298, %v8292
    %v8389 = vpack.c.b16 %v8305, %v8299
    %v8390 = vpack.c.b16 %v8306, %v8300
    %v8391 = vpack.c.b16 %v8307, %v8301
    %v8392 = vpack.c.b16 %v8308, %v8302
    %v8393 = vpack.c.b16 %v8309, %v8303
    %v8394 = vpack.c.b16 %v8310, %v8304
    %v8395 = vpack.c.b16 %v8317, %v8311
    %v8396 = vpack.c.b16 %v8318, %v8312
    %v8397 = vpack.c.b16 %v8319, %v8313
    %v8398 = vpack.c.b16 %v8320, %v8314
    %v8399 = vpack.c.b16 %v8321, %v8315
    %v8400 = vpack.c.b16 %v8322, %v8316
    %v8401 = vpack.c.b16 %v8329, %v8323
    %v8402 = vpack.c.b16 %v8330, %v8324
    %v8403 = vpack.c.b16 %v8331, %v8325
    %v8404 = vpack.c.b16 %v8332, %v8326
    %v8405 = vpack.c.b16 %v8333, %v8327
    %v8406 = vpack.c.b16 %v8334, %v8328
    %v8407 = vpack.c.b16 %v8341, %v8335
    %v8408 = vpack.c.b16 %v8342, %v8336
    %v8409 = vpack.c.b16 %v8343, %v8337
    %v8410 = vpack.c.b16 %v8344, %v8338
    %v8411 = vpack.c.b16 %v8345, %v8339
    %v8412 = vpack.c.b16 %v8346, %v8340
    %v8413 = vpack.c.b16 %v8353, %v8347
    %v8414 = vpack.c.b16 %v8354, %v8348
    %v8415 = vpack.c.b16 %v8355, %v8349
    %v8416 = vpack.c.b16 %v8356, %v8350
    %v8417 = vpack.c.b16 %v8357, %v8351
    %v8418 = vpack.c.b16 %v8358, %v8352
    %v8419 = vpack.c.b16 %v8365, %v8359
    %v8420 = vpack.c.b16 %v8366, %v8360
    %v8421 = vpack.c.b16 %v8367, %v8361
    %v8422 = vpack.c.b16 %v8368, %v8362
    %v8423 = vpack.c.b16 %v8369, %v8363
    %v8424 = vpack.c.b16 %v8370, %v8364
    %v8425 = vpack.c.b16 %v8377, %v8371
    %v8426 = vpack.c.b16 %v8378, %v8372
    %v8427 = vpack.c.b16 %v8379, %v8373
    %v8428 = vpack.c.b16 %v8380, %v8374
    %v8429 = vpack.c.b16 %v8381, %v8375
    %v8430 = vpack.c.b16 %v8382, %v8376
    %8479 = vmatpush.bf16.msra.mxu0 %v8425
    %8480 = vmatpush.bf16.msra.mxu0 %v8419
    %8481 = vmatpush.bf16.msra.mxu0 %v8413
    %8482 = vmatpush.bf16.msra.mxu0 %v8407
    %8483 = vmatpush.bf16.msra.mxu0 %v8401
    %8484 = vmatpush.bf16.msra.mxu0 %v8395
    %8485 = vmatpush.bf16.msra.mxu0 %v8389
    %8486 = vmatpush.bf16.msra.mxu0 %v8383
    %8487 = vmatmul.bf16.gmra.mxu0 %v8189
    %v8488 = vpop.f32.mrf.mxu0
    %v8489 = vadd.f32 0.0, %v8488
    %v8490 = vpop.f32.mrf.mxu0
    %8491 = vdwg.mxu0
    %8492 = vmatpush.bf16.msra.mxu0 %v8426
    %8493 = vmatpush.bf16.msra.mxu0 %v8420
    %8494 = vmatpush.bf16.msra.mxu0 %v8414
    %8495 = vmatpush.bf16.msra.mxu0 %v8408
    %8496 = vmatpush.bf16.msra.mxu0 %v8402
    %8497 = vmatpush.bf16.msra.mxu0 %v8396
    %8498 = vmatpush.bf16.msra.mxu0 %v8390
    %8499 = vmatpush.bf16.msra.mxu0 %v8384
    %8500 = vmatmul.bf16.gmra.mxu0 %v8189
    %v8501 = vpop.f32.mrf.mxu0
    %v8502 = vadd.f32 0.0, %v8501
    %v8503 = vpop.f32.mrf.mxu0
    %8504 = vdwg.mxu0
    %8505 = vmatpush.bf16.msra.mxu0 %v8427
    %8506 = vmatpush.bf16.msra.mxu0 %v8421
    %8507 = vmatpush.bf16.msra.mxu0 %v8415
    %8508 = vmatpush.bf16.msra.mxu0 %v8409
    %8509 = vmatpush.bf16.msra.mxu0 %v8403
    %8510 = vmatpush.bf16.msra.mxu0 %v8397
    %8511 = vmatpush.bf16.msra.mxu0 %v8391
    %8512 = vmatpush.bf16.msra.mxu0 %v8385
    %8513 = vmatmul.bf16.gmra.mxu0 %v8189
    %v8514 = vpop.f32.mrf.mxu0
    %v8515 = vadd.f32 0.0, %v8514
    %v8516 = vpop.f32.mrf.mxu0
    %8517 = vdwg.mxu0
    %8518 = vmatpush.bf16.msra.mxu0 %v8428
    %8519 = vmatpush.bf16.msra.mxu0 %v8422
    %8520 = vmatpush.bf16.msra.mxu0 %v8416
    %8521 = vmatpush.bf16.msra.mxu0 %v8410
    %8522 = vmatpush.bf16.msra.mxu0 %v8404
    %8523 = vmatpush.bf16.msra.mxu0 %v8398
    %8524 = vmatpush.bf16.msra.mxu0 %v8392
    %8525 = vmatpush.bf16.msra.mxu0 %v8386
    %8526 = vmatmul.bf16.gmra.mxu0 %v8189
    %v8527 = vpop.f32.mrf.mxu0
    %v8528 = vadd.f32 0.0, %v8527
    %v8529 = vpop.f32.mrf.mxu0
    %8530 = vdwg.mxu0
    %8531 = vmatpush.bf16.msra.mxu0 %v8429
    %8532 = vmatpush.bf16.msra.mxu0 %v8423
    %8533 = vmatpush.bf16.msra.mxu0 %v8417
    %8534 = vmatpush.bf16.msra.mxu0 %v8411
    %8535 = vmatpush.bf16.msra.mxu0 %v8405
    %8536 = vmatpush.bf16.msra.mxu0 %v8399
    %8537 = vmatpush.bf16.msra.mxu0 %v8393
    %8538 = vmatpush.bf16.msra.mxu0 %v8387
    %8539 = vmatmul.bf16.gmra.mxu0 %v8189
    %v8540 = vpop.f32.mrf.mxu0
    %v8541 = vadd.f32 0.0, %v8540
    %v8542 = vpop.f32.mrf.mxu0
    %8543 = vdwg.mxu0
    %8544 = vmatpush.bf16.msra.mxu0 %v8430
    %8545 = vmatpush.bf16.msra.mxu0 %v8424
    %8546 = vmatpush.bf16.msra.mxu0 %v8418
    %8547 = vmatpush.bf16.msra.mxu0 %v8412
    %8548 = vmatpush.bf16.msra.mxu0 %v8406
    %8549 = vmatpush.bf16.msra.mxu0 %v8400
    %8550 = vmatpush.bf16.msra.mxu0 %v8394
    %8551 = vmatpush.bf16.msra.mxu0 %v8388
    %8552 = vmatmul.bf16.gmra.mxu0 %v8189
    %v8553 = vpop.f32.mrf.mxu0
    %v8554 = vadd.f32 0.0, %v8553
    %v8555 = vpop.f32.mrf.mxu0
    %8556 = vdwg.mxu0
    %v8557 = vadd.f32 %v8181, %v8489
    %v8558 = vadd.f32 %v8182, %v8502
    %v8559 = vadd.f32 %v8183, %v8515
    %v8560 = vadd.f32 %v8184, %v8528
    %v8561 = vadd.f32 %v8185, %v8541
    %v8562 = vadd.f32 %v8186, %v8554
    %s8563 = scalar_lea.vmem [#allocation3], 21
    %v8564 = vld [vmem:[%s8563] ss:$25 sm:$0x3]
    %v8565 = vpack.c.bf16 %v8564, %v8564
    %s8566 = scalar_lea.vmem [#allocation10], 8064
    %v8567 = vld [vmem:[%s8566] sm:$0xff]
    %v8568 = vld [vmem:[%s8566 + $0x8] sm:$0xff]
    %v8569 = vld [vmem:[%s8566 + $0x10] sm:$0xff]
    %v8570 = vld [vmem:[%s8566 + $0x18] sm:$0xff]
    %v8571 = vld [vmem:[%s8566 + $0x20] sm:$0xff]
    %v8572 = vld [vmem:[%s8566 + $0x28] sm:$0xff]
    %v8573 = vld [vmem:[%s8566 + $0x30] sm:$0xff]
    %v8574 = vld [vmem:[%s8566 + $0x38] sm:$0xff]
    %v8575 = vld [vmem:[%s8566 + $0x40] sm:$0xff]
    %v8576 = vld [vmem:[%s8566 + $0x48] sm:$0xff]
    %v8577 = vld [vmem:[%s8566 + $0x50] sm:$0xff]
    %v8578 = vld [vmem:[%s8566 + $0x58] sm:$0xff]
    %v8579 = vld [vmem:[%s8566 + $0x60] sm:$0xff]
    %v8580 = vld [vmem:[%s8566 + $0x68] sm:$0xff]
    %v8581 = vld [vmem:[%s8566 + $0x70] sm:$0xff]
    %v8582 = vld [vmem:[%s8566 + $0x78] sm:$0xff]
    %v8583 = vld [vmem:[%s8566 + $0x80] sm:$0xff]
    %v8584 = vld [vmem:[%s8566 + $0x88] sm:$0xff]
    %v8585 = vld [vmem:[%s8566 + $0x90] sm:$0xff]
    %v8586 = vld [vmem:[%s8566 + $0x98] sm:$0xff]
    %v8587 = vld [vmem:[%s8566 + $0xa0] sm:$0xff]
    %v8588 = vld [vmem:[%s8566 + $0xa8] sm:$0xff]
    %v8589 = vld [vmem:[%s8566 + $0xb0] sm:$0xff]
    %v8590 = vld [vmem:[%s8566 + $0xb8] sm:$0xff]
    %v8591 = vld [vmem:[%s8566 + $0xc0] sm:$0xff]
    %v8592 = vld [vmem:[%s8566 + $0xc8] sm:$0xff]
    %v8593 = vld [vmem:[%s8566 + $0xd0] sm:$0xff]
    %v8594 = vld [vmem:[%s8566 + $0xd8] sm:$0xff]
    %v8595 = vld [vmem:[%s8566 + $0xe0] sm:$0xff]
    %v8596 = vld [vmem:[%s8566 + $0xe8] sm:$0xff]
    %v8597 = vld [vmem:[%s8566 + $0xf0] sm:$0xff]
    %v8598 = vld [vmem:[%s8566 + $0xf8] sm:$0xff]
    %v8599 = vld [vmem:[%s8566 + $0x100] sm:$0xff]
    %v8600 = vld [vmem:[%s8566 + $0x108] sm:$0xff]
    %v8601 = vld [vmem:[%s8566 + $0x110] sm:$0xff]
    %v8602 = vld [vmem:[%s8566 + $0x118] sm:$0xff]
    %v8603 = vld [vmem:[%s8566 + $0x120] sm:$0xff]
    %v8604 = vld [vmem:[%s8566 + $0x128] sm:$0xff]
    %v8605 = vld [vmem:[%s8566 + $0x130] sm:$0xff]
    %v8606 = vld [vmem:[%s8566 + $0x138] sm:$0xff]
    %v8607 = vld [vmem:[%s8566 + $0x140] sm:$0xff]
    %v8608 = vld [vmem:[%s8566 + $0x148] sm:$0xff]
    %v8609 = vld [vmem:[%s8566 + $0x150] sm:$0xff]
    %v8610 = vld [vmem:[%s8566 + $0x158] sm:$0xff]
    %v8611 = vld [vmem:[%s8566 + $0x160] sm:$0xff]
    %v8612 = vld [vmem:[%s8566 + $0x168] sm:$0xff]
    %v8613 = vld [vmem:[%s8566 + $0x170] sm:$0xff]
    %v8614 = vld [vmem:[%s8566 + $0x178] sm:$0xff]
    %v8663 = vunpack.c.l.b16 %v8567
    %v8664 = vunpack.c.h.b16 %v8567
    %v8665 = vunpack.c.l.b16 %v8568
    %v8666 = vunpack.c.h.b16 %v8568
    %v8667 = vunpack.c.l.b16 %v8569
    %v8668 = vunpack.c.h.b16 %v8569
    %v8669 = vunpack.c.l.b16 %v8570
    %v8670 = vunpack.c.h.b16 %v8570
    %v8671 = vunpack.c.l.b16 %v8571
    %v8672 = vunpack.c.h.b16 %v8571
    %v8673 = vunpack.c.l.b16 %v8572
    %v8674 = vunpack.c.h.b16 %v8572
    %v8675 = vunpack.c.l.b16 %v8573
    %v8676 = vunpack.c.h.b16 %v8573
    %v8677 = vunpack.c.l.b16 %v8574
    %v8678 = vunpack.c.h.b16 %v8574
    %v8679 = vunpack.c.l.b16 %v8575
    %v8680 = vunpack.c.h.b16 %v8575
    %v8681 = vunpack.c.l.b16 %v8576
    %v8682 = vunpack.c.h.b16 %v8576
    %v8683 = vunpack.c.l.b16 %v8577
    %v8684 = vunpack.c.h.b16 %v8577
    %v8685 = vunpack.c.l.b16 %v8578
    %v8686 = vunpack.c.h.b16 %v8578
    %v8687 = vunpack.c.l.b16 %v8579
    %v8688 = vunpack.c.h.b16 %v8579
    %v8689 = vunpack.c.l.b16 %v8580
    %v8690 = vunpack.c.h.b16 %v8580
    %v8691 = vunpack.c.l.b16 %v8581
    %v8692 = vunpack.c.h.b16 %v8581
    %v8693 = vunpack.c.l.b16 %v8582
    %v8694 = vunpack.c.h.b16 %v8582
    %v8695 = vunpack.c.l.b16 %v8583
    %v8696 = vunpack.c.h.b16 %v8583
    %v8697 = vunpack.c.l.b16 %v8584
    %v8698 = vunpack.c.h.b16 %v8584
    %v8699 = vunpack.c.l.b16 %v8585
    %v8700 = vunpack.c.h.b16 %v8585
    %v8701 = vunpack.c.l.b16 %v8586
    %v8702 = vunpack.c.h.b16 %v8586
    %v8703 = vunpack.c.l.b16 %v8587
    %v8704 = vunpack.c.h.b16 %v8587
    %v8705 = vunpack.c.l.b16 %v8588
    %v8706 = vunpack.c.h.b16 %v8588
    %v8707 = vunpack.c.l.b16 %v8589
    %v8708 = vunpack.c.h.b16 %v8589
    %v8709 = vunpack.c.l.b16 %v8590
    %v8710 = vunpack.c.h.b16 %v8590
    %v8711 = vunpack.c.l.b16 %v8591
    %v8712 = vunpack.c.h.b16 %v8591
    %v8713 = vunpack.c.l.b16 %v8592
    %v8714 = vunpack.c.h.b16 %v8592
    %v8715 = vunpack.c.l.b16 %v8593
    %v8716 = vunpack.c.h.b16 %v8593
    %v8717 = vunpack.c.l.b16 %v8594
    %v8718 = vunpack.c.h.b16 %v8594
    %v8719 = vunpack.c.l.b16 %v8595
    %v8720 = vunpack.c.h.b16 %v8595
    %v8721 = vunpack.c.l.b16 %v8596
    %v8722 = vunpack.c.h.b16 %v8596
    %v8723 = vunpack.c.l.b16 %v8597
    %v8724 = vunpack.c.h.b16 %v8597
    %v8725 = vunpack.c.l.b16 %v8598
    %v8726 = vunpack.c.h.b16 %v8598
    %v8727 = vunpack.c.l.b16 %v8599
    %v8728 = vunpack.c.h.b16 %v8599
    %v8729 = vunpack.c.l.b16 %v8600
    %v8730 = vunpack.c.h.b16 %v8600
    %v8731 = vunpack.c.l.b16 %v8601
    %v8732 = vunpack.c.h.b16 %v8601
    %v8733 = vunpack.c.l.b16 %v8602
    %v8734 = vunpack.c.h.b16 %v8602
    %v8735 = vunpack.c.l.b16 %v8603
    %v8736 = vunpack.c.h.b16 %v8603
    %v8737 = vunpack.c.l.b16 %v8604
    %v8738 = vunpack.c.h.b16 %v8604
    %v8739 = vunpack.c.l.b16 %v8605
    %v8740 = vunpack.c.h.b16 %v8605
    %v8741 = vunpack.c.l.b16 %v8606
    %v8742 = vunpack.c.h.b16 %v8606
    %v8743 = vunpack.c.l.b16 %v8607
    %v8744 = vunpack.c.h.b16 %v8607
    %v8745 = vunpack.c.l.b16 %v8608
    %v8746 = vunpack.c.h.b16 %v8608
    %v8747 = vunpack.c.l.b16 %v8609
    %v8748 = vunpack.c.h.b16 %v8609
    %v8749 = vunpack.c.l.b16 %v8610
    %v8750 = vunpack.c.h.b16 %v8610
    %v8751 = vunpack.c.l.b16 %v8611
    %v8752 = vunpack.c.h.b16 %v8611
    %v8753 = vunpack.c.l.b16 %v8612
    %v8754 = vunpack.c.h.b16 %v8612
    %v8755 = vunpack.c.l.b16 %v8613
    %v8756 = vunpack.c.h.b16 %v8613
    %v8757 = vunpack.c.l.b16 %v8614
    %v8758 = vunpack.c.h.b16 %v8614
    %v8759 = vpack.c.b16 %v8669, %v8663
    %v8760 = vpack.c.b16 %v8670, %v8664
    %v8761 = vpack.c.b16 %v8671, %v8665
    %v8762 = vpack.c.b16 %v8672, %v8666
    %v8763 = vpack.c.b16 %v8673, %v8667
    %v8764 = vpack.c.b16 %v8674, %v8668
    %v8765 = vpack.c.b16 %v8681, %v8675
    %v8766 = vpack.c.b16 %v8682, %v8676
    %v8767 = vpack.c.b16 %v8683, %v8677
    %v8768 = vpack.c.b16 %v8684, %v8678
    %v8769 = vpack.c.b16 %v8685, %v8679
    %v8770 = vpack.c.b16 %v8686, %v8680
    %v8771 = vpack.c.b16 %v8693, %v8687
    %v8772 = vpack.c.b16 %v8694, %v8688
    %v8773 = vpack.c.b16 %v8695, %v8689
    %v8774 = vpack.c.b16 %v8696, %v8690
    %v8775 = vpack.c.b16 %v8697, %v8691
    %v8776 = vpack.c.b16 %v8698, %v8692
    %v8777 = vpack.c.b16 %v8705, %v8699
    %v8778 = vpack.c.b16 %v8706, %v8700
    %v8779 = vpack.c.b16 %v8707, %v8701
    %v8780 = vpack.c.b16 %v8708, %v8702
    %v8781 = vpack.c.b16 %v8709, %v8703
    %v8782 = vpack.c.b16 %v8710, %v8704
    %v8783 = vpack.c.b16 %v8717, %v8711
    %v8784 = vpack.c.b16 %v8718, %v8712
    %v8785 = vpack.c.b16 %v8719, %v8713
    %v8786 = vpack.c.b16 %v8720, %v8714
    %v8787 = vpack.c.b16 %v8721, %v8715
    %v8788 = vpack.c.b16 %v8722, %v8716
    %v8789 = vpack.c.b16 %v8729, %v8723
    %v8790 = vpack.c.b16 %v8730, %v8724
    %v8791 = vpack.c.b16 %v8731, %v8725
    %v8792 = vpack.c.b16 %v8732, %v8726
    %v8793 = vpack.c.b16 %v8733, %v8727
    %v8794 = vpack.c.b16 %v8734, %v8728
    %v8795 = vpack.c.b16 %v8741, %v8735
    %v8796 = vpack.c.b16 %v8742, %v8736
    %v8797 = vpack.c.b16 %v8743, %v8737
    %v8798 = vpack.c.b16 %v8744, %v8738
    %v8799 = vpack.c.b16 %v8745, %v8739
    %v8800 = vpack.c.b16 %v8746, %v8740
    %v8801 = vpack.c.b16 %v8753, %v8747
    %v8802 = vpack.c.b16 %v8754, %v8748
    %v8803 = vpack.c.b16 %v8755, %v8749
    %v8804 = vpack.c.b16 %v8756, %v8750
    %v8805 = vpack.c.b16 %v8757, %v8751
    %v8806 = vpack.c.b16 %v8758, %v8752
    %8855 = vmatpush.bf16.msra.mxu0 %v8801
    %8856 = vmatpush.bf16.msra.mxu0 %v8795
    %8857 = vmatpush.bf16.msra.mxu0 %v8789
    %8858 = vmatpush.bf16.msra.mxu0 %v8783
    %8859 = vmatpush.bf16.msra.mxu0 %v8777
    %8860 = vmatpush.bf16.msra.mxu0 %v8771
    %8861 = vmatpush.bf16.msra.mxu0 %v8765
    %8862 = vmatpush.bf16.msra.mxu0 %v8759
    %8863 = vmatmul.bf16.gmra.mxu0 %v8565
    %v8864 = vpop.f32.mrf.mxu0
    %v8865 = vadd.f32 0.0, %v8864
    %v8866 = vpop.f32.mrf.mxu0
    %8867 = vdwg.mxu0
    %8868 = vmatpush.bf16.msra.mxu0 %v8802
    %8869 = vmatpush.bf16.msra.mxu0 %v8796
    %8870 = vmatpush.bf16.msra.mxu0 %v8790
    %8871 = vmatpush.bf16.msra.mxu0 %v8784
    %8872 = vmatpush.bf16.msra.mxu0 %v8778
    %8873 = vmatpush.bf16.msra.mxu0 %v8772
    %8874 = vmatpush.bf16.msra.mxu0 %v8766
    %8875 = vmatpush.bf16.msra.mxu0 %v8760
    %8876 = vmatmul.bf16.gmra.mxu0 %v8565
    %v8877 = vpop.f32.mrf.mxu0
    %v8878 = vadd.f32 0.0, %v8877
    %v8879 = vpop.f32.mrf.mxu0
    %8880 = vdwg.mxu0
    %8881 = vmatpush.bf16.msra.mxu0 %v8803
    %8882 = vmatpush.bf16.msra.mxu0 %v8797
    %8883 = vmatpush.bf16.msra.mxu0 %v8791
    %8884 = vmatpush.bf16.msra.mxu0 %v8785
    %8885 = vmatpush.bf16.msra.mxu0 %v8779
    %8886 = vmatpush.bf16.msra.mxu0 %v8773
    %8887 = vmatpush.bf16.msra.mxu0 %v8767
    %8888 = vmatpush.bf16.msra.mxu0 %v8761
    %8889 = vmatmul.bf16.gmra.mxu0 %v8565
    %v8890 = vpop.f32.mrf.mxu0
    %v8891 = vadd.f32 0.0, %v8890
    %v8892 = vpop.f32.mrf.mxu0
    %8893 = vdwg.mxu0
    %8894 = vmatpush.bf16.msra.mxu0 %v8804
    %8895 = vmatpush.bf16.msra.mxu0 %v8798
    %8896 = vmatpush.bf16.msra.mxu0 %v8792
    %8897 = vmatpush.bf16.msra.mxu0 %v8786
    %8898 = vmatpush.bf16.msra.mxu0 %v8780
    %8899 = vmatpush.bf16.msra.mxu0 %v8774
    %8900 = vmatpush.bf16.msra.mxu0 %v8768
    %8901 = vmatpush.bf16.msra.mxu0 %v8762
    %8902 = vmatmul.bf16.gmra.mxu0 %v8565
    %v8903 = vpop.f32.mrf.mxu0
    %v8904 = vadd.f32 0.0, %v8903
    %v8905 = vpop.f32.mrf.mxu0
    %8906 = vdwg.mxu0
    %8907 = vmatpush.bf16.msra.mxu0 %v8805
    %8908 = vmatpush.bf16.msra.mxu0 %v8799
    %8909 = vmatpush.bf16.msra.mxu0 %v8793
    %8910 = vmatpush.bf16.msra.mxu0 %v8787
    %8911 = vmatpush.bf16.msra.mxu0 %v8781
    %8912 = vmatpush.bf16.msra.mxu0 %v8775
    %8913 = vmatpush.bf16.msra.mxu0 %v8769
    %8914 = vmatpush.bf16.msra.mxu0 %v8763
    %8915 = vmatmul.bf16.gmra.mxu0 %v8565
    %v8916 = vpop.f32.mrf.mxu0
    %v8917 = vadd.f32 0.0, %v8916
    %v8918 = vpop.f32.mrf.mxu0
    %8919 = vdwg.mxu0
    %8920 = vmatpush.bf16.msra.mxu0 %v8806
    %8921 = vmatpush.bf16.msra.mxu0 %v8800
    %8922 = vmatpush.bf16.msra.mxu0 %v8794
    %8923 = vmatpush.bf16.msra.mxu0 %v8788
    %8924 = vmatpush.bf16.msra.mxu0 %v8782
    %8925 = vmatpush.bf16.msra.mxu0 %v8776
    %8926 = vmatpush.bf16.msra.mxu0 %v8770
    %8927 = vmatpush.bf16.msra.mxu0 %v8764
    %8928 = vmatmul.bf16.gmra.mxu0 %v8565
    %v8929 = vpop.f32.mrf.mxu0
    %v8930 = vadd.f32 0.0, %v8929
    %v8931 = vpop.f32.mrf.mxu0
    %8932 = vdwg.mxu0
    %v8933 = vadd.f32 %v8557, %v8865
    %v8934 = vadd.f32 %v8558, %v8878
    %v8935 = vadd.f32 %v8559, %v8891
    %v8936 = vadd.f32 %v8560, %v8904
    %v8937 = vadd.f32 %v8561, %v8917
    %v8938 = vadd.f32 %v8562, %v8930
    %s8939 = scalar_lea.vmem [#allocation3], 22
    %v8940 = vld [vmem:[%s8939] ss:$25 sm:$0x3]
    %v8941 = vpack.c.bf16 %v8940, %v8940
    %s8942 = scalar_lea.vmem [#allocation10], 8448
    %v8943 = vld [vmem:[%s8942] sm:$0xff]
    %v8944 = vld [vmem:[%s8942 + $0x8] sm:$0xff]
    %v8945 = vld [vmem:[%s8942 + $0x10] sm:$0xff]
    %v8946 = vld [vmem:[%s8942 + $0x18] sm:$0xff]
    %v8947 = vld [vmem:[%s8942 + $0x20] sm:$0xff]
    %v8948 = vld [vmem:[%s8942 + $0x28] sm:$0xff]
    %v8949 = vld [vmem:[%s8942 + $0x30] sm:$0xff]
    %v8950 = vld [vmem:[%s8942 + $0x38] sm:$0xff]
    %v8951 = vld [vmem:[%s8942 + $0x40] sm:$0xff]
    %v8952 = vld [vmem:[%s8942 + $0x48] sm:$0xff]
    %v8953 = vld [vmem:[%s8942 + $0x50] sm:$0xff]
    %v8954 = vld [vmem:[%s8942 + $0x58] sm:$0xff]
    %v8955 = vld [vmem:[%s8942 + $0x60] sm:$0xff]
    %v8956 = vld [vmem:[%s8942 + $0x68] sm:$0xff]
    %v8957 = vld [vmem:[%s8942 + $0x70] sm:$0xff]
    %v8958 = vld [vmem:[%s8942 + $0x78] sm:$0xff]
    %v8959 = vld [vmem:[%s8942 + $0x80] sm:$0xff]
    %v8960 = vld [vmem:[%s8942 + $0x88] sm:$0xff]
    %v8961 = vld [vmem:[%s8942 + $0x90] sm:$0xff]
    %v8962 = vld [vmem:[%s8942 + $0x98] sm:$0xff]
    %v8963 = vld [vmem:[%s8942 + $0xa0] sm:$0xff]
    %v8964 = vld [vmem:[%s8942 + $0xa8] sm:$0xff]
    %v8965 = vld [vmem:[%s8942 + $0xb0] sm:$0xff]
    %v8966 = vld [vmem:[%s8942 + $0xb8] sm:$0xff]
    %v8967 = vld [vmem:[%s8942 + $0xc0] sm:$0xff]
    %v8968 = vld [vmem:[%s8942 + $0xc8] sm:$0xff]
    %v8969 = vld [vmem:[%s8942 + $0xd0] sm:$0xff]
    %v8970 = vld [vmem:[%s8942 + $0xd8] sm:$0xff]
    %v8971 = vld [vmem:[%s8942 + $0xe0] sm:$0xff]
    %v8972 = vld [vmem:[%s8942 + $0xe8] sm:$0xff]
    %v8973 = vld [vmem:[%s8942 + $0xf0] sm:$0xff]
    %v8974 = vld [vmem:[%s8942 + $0xf8] sm:$0xff]
    %v8975 = vld [vmem:[%s8942 + $0x100] sm:$0xff]
    %v8976 = vld [vmem:[%s8942 + $0x108] sm:$0xff]
    %v8977 = vld [vmem:[%s8942 + $0x110] sm:$0xff]
    %v8978 = vld [vmem:[%s8942 + $0x118] sm:$0xff]
    %v8979 = vld [vmem:[%s8942 + $0x120] sm:$0xff]
    %v8980 = vld [vmem:[%s8942 + $0x128] sm:$0xff]
    %v8981 = vld [vmem:[%s8942 + $0x130] sm:$0xff]
    %v8982 = vld [vmem:[%s8942 + $0x138] sm:$0xff]
    %v8983 = vld [vmem:[%s8942 + $0x140] sm:$0xff]
    %v8984 = vld [vmem:[%s8942 + $0x148] sm:$0xff]
    %v8985 = vld [vmem:[%s8942 + $0x150] sm:$0xff]
    %v8986 = vld [vmem:[%s8942 + $0x158] sm:$0xff]
    %v8987 = vld [vmem:[%s8942 + $0x160] sm:$0xff]
    %v8988 = vld [vmem:[%s8942 + $0x168] sm:$0xff]
    %v8989 = vld [vmem:[%s8942 + $0x170] sm:$0xff]
    %v8990 = vld [vmem:[%s8942 + $0x178] sm:$0xff]
    %v9039 = vunpack.c.l.b16 %v8943
    %v9040 = vunpack.c.h.b16 %v8943
    %v9041 = vunpack.c.l.b16 %v8944
    %v9042 = vunpack.c.h.b16 %v8944
    %v9043 = vunpack.c.l.b16 %v8945
    %v9044 = vunpack.c.h.b16 %v8945
    %v9045 = vunpack.c.l.b16 %v8946
    %v9046 = vunpack.c.h.b16 %v8946
    %v9047 = vunpack.c.l.b16 %v8947
    %v9048 = vunpack.c.h.b16 %v8947
    %v9049 = vunpack.c.l.b16 %v8948
    %v9050 = vunpack.c.h.b16 %v8948
    %v9051 = vunpack.c.l.b16 %v8949
    %v9052 = vunpack.c.h.b16 %v8949
    %v9053 = vunpack.c.l.b16 %v8950
    %v9054 = vunpack.c.h.b16 %v8950
    %v9055 = vunpack.c.l.b16 %v8951
    %v9056 = vunpack.c.h.b16 %v8951
    %v9057 = vunpack.c.l.b16 %v8952
    %v9058 = vunpack.c.h.b16 %v8952
    %v9059 = vunpack.c.l.b16 %v8953
    %v9060 = vunpack.c.h.b16 %v8953
    %v9061 = vunpack.c.l.b16 %v8954
    %v9062 = vunpack.c.h.b16 %v8954
    %v9063 = vunpack.c.l.b16 %v8955
    %v9064 = vunpack.c.h.b16 %v8955
    %v9065 = vunpack.c.l.b16 %v8956
    %v9066 = vunpack.c.h.b16 %v8956
    %v9067 = vunpack.c.l.b16 %v8957
    %v9068 = vunpack.c.h.b16 %v8957
    %v9069 = vunpack.c.l.b16 %v8958
    %v9070 = vunpack.c.h.b16 %v8958
    %v9071 = vunpack.c.l.b16 %v8959
    %v9072 = vunpack.c.h.b16 %v8959
    %v9073 = vunpack.c.l.b16 %v8960
    %v9074 = vunpack.c.h.b16 %v8960
    %v9075 = vunpack.c.l.b16 %v8961
    %v9076 = vunpack.c.h.b16 %v8961
    %v9077 = vunpack.c.l.b16 %v8962
    %v9078 = vunpack.c.h.b16 %v8962
    %v9079 = vunpack.c.l.b16 %v8963
    %v9080 = vunpack.c.h.b16 %v8963
    %v9081 = vunpack.c.l.b16 %v8964
    %v9082 = vunpack.c.h.b16 %v8964
    %v9083 = vunpack.c.l.b16 %v8965
    %v9084 = vunpack.c.h.b16 %v8965
    %v9085 = vunpack.c.l.b16 %v8966
    %v9086 = vunpack.c.h.b16 %v8966
    %v9087 = vunpack.c.l.b16 %v8967
    %v9088 = vunpack.c.h.b16 %v8967
    %v9089 = vunpack.c.l.b16 %v8968
    %v9090 = vunpack.c.h.b16 %v8968
    %v9091 = vunpack.c.l.b16 %v8969
    %v9092 = vunpack.c.h.b16 %v8969
    %v9093 = vunpack.c.l.b16 %v8970
    %v9094 = vunpack.c.h.b16 %v8970
    %v9095 = vunpack.c.l.b16 %v8971
    %v9096 = vunpack.c.h.b16 %v8971
    %v9097 = vunpack.c.l.b16 %v8972
    %v9098 = vunpack.c.h.b16 %v8972
    %v9099 = vunpack.c.l.b16 %v8973
    %v9100 = vunpack.c.h.b16 %v8973
    %v9101 = vunpack.c.l.b16 %v8974
    %v9102 = vunpack.c.h.b16 %v8974
    %v9103 = vunpack.c.l.b16 %v8975
    %v9104 = vunpack.c.h.b16 %v8975
    %v9105 = vunpack.c.l.b16 %v8976
    %v9106 = vunpack.c.h.b16 %v8976
    %v9107 = vunpack.c.l.b16 %v8977
    %v9108 = vunpack.c.h.b16 %v8977
    %v9109 = vunpack.c.l.b16 %v8978
    %v9110 = vunpack.c.h.b16 %v8978
    %v9111 = vunpack.c.l.b16 %v8979
    %v9112 = vunpack.c.h.b16 %v8979
    %v9113 = vunpack.c.l.b16 %v8980
    %v9114 = vunpack.c.h.b16 %v8980
    %v9115 = vunpack.c.l.b16 %v8981
    %v9116 = vunpack.c.h.b16 %v8981
    %v9117 = vunpack.c.l.b16 %v8982
    %v9118 = vunpack.c.h.b16 %v8982
    %v9119 = vunpack.c.l.b16 %v8983
    %v9120 = vunpack.c.h.b16 %v8983
    %v9121 = vunpack.c.l.b16 %v8984
    %v9122 = vunpack.c.h.b16 %v8984
    %v9123 = vunpack.c.l.b16 %v8985
    %v9124 = vunpack.c.h.b16 %v8985
    %v9125 = vunpack.c.l.b16 %v8986
    %v9126 = vunpack.c.h.b16 %v8986
    %v9127 = vunpack.c.l.b16 %v8987
    %v9128 = vunpack.c.h.b16 %v8987
    %v9129 = vunpack.c.l.b16 %v8988
    %v9130 = vunpack.c.h.b16 %v8988
    %v9131 = vunpack.c.l.b16 %v8989
    %v9132 = vunpack.c.h.b16 %v8989
    %v9133 = vunpack.c.l.b16 %v8990
    %v9134 = vunpack.c.h.b16 %v8990
    %v9135 = vpack.c.b16 %v9045, %v9039
    %v9136 = vpack.c.b16 %v9046, %v9040
    %v9137 = vpack.c.b16 %v9047, %v9041
    %v9138 = vpack.c.b16 %v9048, %v9042
    %v9139 = vpack.c.b16 %v9049, %v9043
    %v9140 = vpack.c.b16 %v9050, %v9044
    %v9141 = vpack.c.b16 %v9057, %v9051
    %v9142 = vpack.c.b16 %v9058, %v9052
    %v9143 = vpack.c.b16 %v9059, %v9053
    %v9144 = vpack.c.b16 %v9060, %v9054
    %v9145 = vpack.c.b16 %v9061, %v9055
    %v9146 = vpack.c.b16 %v9062, %v9056
    %v9147 = vpack.c.b16 %v9069, %v9063
    %v9148 = vpack.c.b16 %v9070, %v9064
    %v9149 = vpack.c.b16 %v9071, %v9065
    %v9150 = vpack.c.b16 %v9072, %v9066
    %v9151 = vpack.c.b16 %v9073, %v9067
    %v9152 = vpack.c.b16 %v9074, %v9068
    %v9153 = vpack.c.b16 %v9081, %v9075
    %v9154 = vpack.c.b16 %v9082, %v9076
    %v9155 = vpack.c.b16 %v9083, %v9077
    %v9156 = vpack.c.b16 %v9084, %v9078
    %v9157 = vpack.c.b16 %v9085, %v9079
    %v9158 = vpack.c.b16 %v9086, %v9080
    %v9159 = vpack.c.b16 %v9093, %v9087
    %v9160 = vpack.c.b16 %v9094, %v9088
    %v9161 = vpack.c.b16 %v9095, %v9089
    %v9162 = vpack.c.b16 %v9096, %v9090
    %v9163 = vpack.c.b16 %v9097, %v9091
    %v9164 = vpack.c.b16 %v9098, %v9092
    %v9165 = vpack.c.b16 %v9105, %v9099
    %v9166 = vpack.c.b16 %v9106, %v9100
    %v9167 = vpack.c.b16 %v9107, %v9101
    %v9168 = vpack.c.b16 %v9108, %v9102
    %v9169 = vpack.c.b16 %v9109, %v9103
    %v9170 = vpack.c.b16 %v9110, %v9104
    %v9171 = vpack.c.b16 %v9117, %v9111
    %v9172 = vpack.c.b16 %v9118, %v9112
    %v9173 = vpack.c.b16 %v9119, %v9113
    %v9174 = vpack.c.b16 %v9120, %v9114
    %v9175 = vpack.c.b16 %v9121, %v9115
    %v9176 = vpack.c.b16 %v9122, %v9116
    %v9177 = vpack.c.b16 %v9129, %v9123
    %v9178 = vpack.c.b16 %v9130, %v9124
    %v9179 = vpack.c.b16 %v9131, %v9125
    %v9180 = vpack.c.b16 %v9132, %v9126
    %v9181 = vpack.c.b16 %v9133, %v9127
    %v9182 = vpack.c.b16 %v9134, %v9128
    %9231 = vmatpush.bf16.msra.mxu0 %v9177
    %9232 = vmatpush.bf16.msra.mxu0 %v9171
    %9233 = vmatpush.bf16.msra.mxu0 %v9165
    %9234 = vmatpush.bf16.msra.mxu0 %v9159
    %9235 = vmatpush.bf16.msra.mxu0 %v9153
    %9236 = vmatpush.bf16.msra.mxu0 %v9147
    %9237 = vmatpush.bf16.msra.mxu0 %v9141
    %9238 = vmatpush.bf16.msra.mxu0 %v9135
    %9239 = vmatmul.bf16.gmra.mxu0 %v8941
    %v9240 = vpop.f32.mrf.mxu0
    %v9241 = vadd.f32 0.0, %v9240
    %v9242 = vpop.f32.mrf.mxu0
    %9243 = vdwg.mxu0
    %9244 = vmatpush.bf16.msra.mxu0 %v9178
    %9245 = vmatpush.bf16.msra.mxu0 %v9172
    %9246 = vmatpush.bf16.msra.mxu0 %v9166
    %9247 = vmatpush.bf16.msra.mxu0 %v9160
    %9248 = vmatpush.bf16.msra.mxu0 %v9154
    %9249 = vmatpush.bf16.msra.mxu0 %v9148
    %9250 = vmatpush.bf16.msra.mxu0 %v9142
    %9251 = vmatpush.bf16.msra.mxu0 %v9136
    %9252 = vmatmul.bf16.gmra.mxu0 %v8941
    %v9253 = vpop.f32.mrf.mxu0
    %v9254 = vadd.f32 0.0, %v9253
    %v9255 = vpop.f32.mrf.mxu0
    %9256 = vdwg.mxu0
    %9257 = vmatpush.bf16.msra.mxu0 %v9179
    %9258 = vmatpush.bf16.msra.mxu0 %v9173
    %9259 = vmatpush.bf16.msra.mxu0 %v9167
    %9260 = vmatpush.bf16.msra.mxu0 %v9161
    %9261 = vmatpush.bf16.msra.mxu0 %v9155
    %9262 = vmatpush.bf16.msra.mxu0 %v9149
    %9263 = vmatpush.bf16.msra.mxu0 %v9143
    %9264 = vmatpush.bf16.msra.mxu0 %v9137
    %9265 = vmatmul.bf16.gmra.mxu0 %v8941
    %v9266 = vpop.f32.mrf.mxu0
    %v9267 = vadd.f32 0.0, %v9266
    %v9268 = vpop.f32.mrf.mxu0
    %9269 = vdwg.mxu0
    %9270 = vmatpush.bf16.msra.mxu0 %v9180
    %9271 = vmatpush.bf16.msra.mxu0 %v9174
    %9272 = vmatpush.bf16.msra.mxu0 %v9168
    %9273 = vmatpush.bf16.msra.mxu0 %v9162
    %9274 = vmatpush.bf16.msra.mxu0 %v9156
    %9275 = vmatpush.bf16.msra.mxu0 %v9150
    %9276 = vmatpush.bf16.msra.mxu0 %v9144
    %9277 = vmatpush.bf16.msra.mxu0 %v9138
    %9278 = vmatmul.bf16.gmra.mxu0 %v8941
    %v9279 = vpop.f32.mrf.mxu0
    %v9280 = vadd.f32 0.0, %v9279
    %v9281 = vpop.f32.mrf.mxu0
    %9282 = vdwg.mxu0
    %9283 = vmatpush.bf16.msra.mxu0 %v9181
    %9284 = vmatpush.bf16.msra.mxu0 %v9175
    %9285 = vmatpush.bf16.msra.mxu0 %v9169
    %9286 = vmatpush.bf16.msra.mxu0 %v9163
    %9287 = vmatpush.bf16.msra.mxu0 %v9157
    %9288 = vmatpush.bf16.msra.mxu0 %v9151
    %9289 = vmatpush.bf16.msra.mxu0 %v9145
    %9290 = vmatpush.bf16.msra.mxu0 %v9139
    %9291 = vmatmul.bf16.gmra.mxu0 %v8941
    %v9292 = vpop.f32.mrf.mxu0
    %v9293 = vadd.f32 0.0, %v9292
    %v9294 = vpop.f32.mrf.mxu0
    %9295 = vdwg.mxu0
    %9296 = vmatpush.bf16.msra.mxu0 %v9182
    %9297 = vmatpush.bf16.msra.mxu0 %v9176
    %9298 = vmatpush.bf16.msra.mxu0 %v9170
    %9299 = vmatpush.bf16.msra.mxu0 %v9164
    %9300 = vmatpush.bf16.msra.mxu0 %v9158
    %9301 = vmatpush.bf16.msra.mxu0 %v9152
    %9302 = vmatpush.bf16.msra.mxu0 %v9146
    %9303 = vmatpush.bf16.msra.mxu0 %v9140
    %9304 = vmatmul.bf16.gmra.mxu0 %v8941
    %v9305 = vpop.f32.mrf.mxu0
    %v9306 = vadd.f32 0.0, %v9305
    %v9307 = vpop.f32.mrf.mxu0
    %9308 = vdwg.mxu0
    %v9309 = vadd.f32 %v8933, %v9241
    %v9310 = vadd.f32 %v8934, %v9254
    %v9311 = vadd.f32 %v8935, %v9267
    %v9312 = vadd.f32 %v8936, %v9280
    %v9313 = vadd.f32 %v8937, %v9293
    %v9314 = vadd.f32 %v8938, %v9306
    %s9315 = scalar_lea.vmem [#allocation3], 23
    %v9316 = vld [vmem:[%s9315] ss:$25 sm:$0x3]
    %v9317 = vpack.c.bf16 %v9316, %v9316
    %s9318 = scalar_lea.vmem [#allocation10], 8832
    %v9319 = vld [vmem:[%s9318] sm:$0xff]
    %v9320 = vld [vmem:[%s9318 + $0x8] sm:$0xff]
    %v9321 = vld [vmem:[%s9318 + $0x10] sm:$0xff]
    %v9322 = vld [vmem:[%s9318 + $0x18] sm:$0xff]
    %v9323 = vld [vmem:[%s9318 + $0x20] sm:$0xff]
    %v9324 = vld [vmem:[%s9318 + $0x28] sm:$0xff]
    %v9325 = vld [vmem:[%s9318 + $0x30] sm:$0xff]
    %v9326 = vld [vmem:[%s9318 + $0x38] sm:$0xff]
    %v9327 = vld [vmem:[%s9318 + $0x40] sm:$0xff]
    %v9328 = vld [vmem:[%s9318 + $0x48] sm:$0xff]
    %v9329 = vld [vmem:[%s9318 + $0x50] sm:$0xff]
    %v9330 = vld [vmem:[%s9318 + $0x58] sm:$0xff]
    %v9331 = vld [vmem:[%s9318 + $0x60] sm:$0xff]
    %v9332 = vld [vmem:[%s9318 + $0x68] sm:$0xff]
    %v9333 = vld [vmem:[%s9318 + $0x70] sm:$0xff]
    %v9334 = vld [vmem:[%s9318 + $0x78] sm:$0xff]
    %v9335 = vld [vmem:[%s9318 + $0x80] sm:$0xff]
    %v9336 = vld [vmem:[%s9318 + $0x88] sm:$0xff]
    %v9337 = vld [vmem:[%s9318 + $0x90] sm:$0xff]
    %v9338 = vld [vmem:[%s9318 + $0x98] sm:$0xff]
    %v9339 = vld [vmem:[%s9318 + $0xa0] sm:$0xff]
    %v9340 = vld [vmem:[%s9318 + $0xa8] sm:$0xff]
    %v9341 = vld [vmem:[%s9318 + $0xb0] sm:$0xff]
    %v9342 = vld [vmem:[%s9318 + $0xb8] sm:$0xff]
    %v9343 = vld [vmem:[%s9318 + $0xc0] sm:$0xff]
    %v9344 = vld [vmem:[%s9318 + $0xc8] sm:$0xff]
    %v9345 = vld [vmem:[%s9318 + $0xd0] sm:$0xff]
    %v9346 = vld [vmem:[%s9318 + $0xd8] sm:$0xff]
    %v9347 = vld [vmem:[%s9318 + $0xe0] sm:$0xff]
    %v9348 = vld [vmem:[%s9318 + $0xe8] sm:$0xff]
    %v9349 = vld [vmem:[%s9318 + $0xf0] sm:$0xff]
    %v9350 = vld [vmem:[%s9318 + $0xf8] sm:$0xff]
    %v9351 = vld [vmem:[%s9318 + $0x100] sm:$0xff]
    %v9352 = vld [vmem:[%s9318 + $0x108] sm:$0xff]
    %v9353 = vld [vmem:[%s9318 + $0x110] sm:$0xff]
    %v9354 = vld [vmem:[%s9318 + $0x118] sm:$0xff]
    %v9355 = vld [vmem:[%s9318 + $0x120] sm:$0xff]
    %v9356 = vld [vmem:[%s9318 + $0x128] sm:$0xff]
    %v9357 = vld [vmem:[%s9318 + $0x130] sm:$0xff]
    %v9358 = vld [vmem:[%s9318 + $0x138] sm:$0xff]
    %v9359 = vld [vmem:[%s9318 + $0x140] sm:$0xff]
    %v9360 = vld [vmem:[%s9318 + $0x148] sm:$0xff]
    %v9361 = vld [vmem:[%s9318 + $0x150] sm:$0xff]
    %v9362 = vld [vmem:[%s9318 + $0x158] sm:$0xff]
    %v9363 = vld [vmem:[%s9318 + $0x160] sm:$0xff]
    %v9364 = vld [vmem:[%s9318 + $0x168] sm:$0xff]
    %v9365 = vld [vmem:[%s9318 + $0x170] sm:$0xff]
    %v9366 = vld [vmem:[%s9318 + $0x178] sm:$0xff]
    %v9415 = vunpack.c.l.b16 %v9319
    %v9416 = vunpack.c.h.b16 %v9319
    %v9417 = vunpack.c.l.b16 %v9320
    %v9418 = vunpack.c.h.b16 %v9320
    %v9419 = vunpack.c.l.b16 %v9321
    %v9420 = vunpack.c.h.b16 %v9321
    %v9421 = vunpack.c.l.b16 %v9322
    %v9422 = vunpack.c.h.b16 %v9322
    %v9423 = vunpack.c.l.b16 %v9323
    %v9424 = vunpack.c.h.b16 %v9323
    %v9425 = vunpack.c.l.b16 %v9324
    %v9426 = vunpack.c.h.b16 %v9324
    %v9427 = vunpack.c.l.b16 %v9325
    %v9428 = vunpack.c.h.b16 %v9325
    %v9429 = vunpack.c.l.b16 %v9326
    %v9430 = vunpack.c.h.b16 %v9326
    %v9431 = vunpack.c.l.b16 %v9327
    %v9432 = vunpack.c.h.b16 %v9327
    %v9433 = vunpack.c.l.b16 %v9328
    %v9434 = vunpack.c.h.b16 %v9328
    %v9435 = vunpack.c.l.b16 %v9329
    %v9436 = vunpack.c.h.b16 %v9329
    %v9437 = vunpack.c.l.b16 %v9330
    %v9438 = vunpack.c.h.b16 %v9330
    %v9439 = vunpack.c.l.b16 %v9331
    %v9440 = vunpack.c.h.b16 %v9331
    %v9441 = vunpack.c.l.b16 %v9332
    %v9442 = vunpack.c.h.b16 %v9332
    %v9443 = vunpack.c.l.b16 %v9333
    %v9444 = vunpack.c.h.b16 %v9333
    %v9445 = vunpack.c.l.b16 %v9334
    %v9446 = vunpack.c.h.b16 %v9334
    %v9447 = vunpack.c.l.b16 %v9335
    %v9448 = vunpack.c.h.b16 %v9335
    %v9449 = vunpack.c.l.b16 %v9336
    %v9450 = vunpack.c.h.b16 %v9336
    %v9451 = vunpack.c.l.b16 %v9337
    %v9452 = vunpack.c.h.b16 %v9337
    %v9453 = vunpack.c.l.b16 %v9338
    %v9454 = vunpack.c.h.b16 %v9338
    %v9455 = vunpack.c.l.b16 %v9339
    %v9456 = vunpack.c.h.b16 %v9339
    %v9457 = vunpack.c.l.b16 %v9340
    %v9458 = vunpack.c.h.b16 %v9340
    %v9459 = vunpack.c.l.b16 %v9341
    %v9460 = vunpack.c.h.b16 %v9341
    %v9461 = vunpack.c.l.b16 %v9342
    %v9462 = vunpack.c.h.b16 %v9342
    %v9463 = vunpack.c.l.b16 %v9343
    %v9464 = vunpack.c.h.b16 %v9343
    %v9465 = vunpack.c.l.b16 %v9344
    %v9466 = vunpack.c.h.b16 %v9344
    %v9467 = vunpack.c.l.b16 %v9345
    %v9468 = vunpack.c.h.b16 %v9345
    %v9469 = vunpack.c.l.b16 %v9346
    %v9470 = vunpack.c.h.b16 %v9346
    %v9471 = vunpack.c.l.b16 %v9347
    %v9472 = vunpack.c.h.b16 %v9347
    %v9473 = vunpack.c.l.b16 %v9348
    %v9474 = vunpack.c.h.b16 %v9348
    %v9475 = vunpack.c.l.b16 %v9349
    %v9476 = vunpack.c.h.b16 %v9349
    %v9477 = vunpack.c.l.b16 %v9350
    %v9478 = vunpack.c.h.b16 %v9350
    %v9479 = vunpack.c.l.b16 %v9351
    %v9480 = vunpack.c.h.b16 %v9351
    %v9481 = vunpack.c.l.b16 %v9352
    %v9482 = vunpack.c.h.b16 %v9352
    %v9483 = vunpack.c.l.b16 %v9353
    %v9484 = vunpack.c.h.b16 %v9353
    %v9485 = vunpack.c.l.b16 %v9354
    %v9486 = vunpack.c.h.b16 %v9354
    %v9487 = vunpack.c.l.b16 %v9355
    %v9488 = vunpack.c.h.b16 %v9355
    %v9489 = vunpack.c.l.b16 %v9356
    %v9490 = vunpack.c.h.b16 %v9356
    %v9491 = vunpack.c.l.b16 %v9357
    %v9492 = vunpack.c.h.b16 %v9357
    %v9493 = vunpack.c.l.b16 %v9358
    %v9494 = vunpack.c.h.b16 %v9358
    %v9495 = vunpack.c.l.b16 %v9359
    %v9496 = vunpack.c.h.b16 %v9359
    %v9497 = vunpack.c.l.b16 %v9360
    %v9498 = vunpack.c.h.b16 %v9360
    %v9499 = vunpack.c.l.b16 %v9361
    %v9500 = vunpack.c.h.b16 %v9361
    %v9501 = vunpack.c.l.b16 %v9362
    %v9502 = vunpack.c.h.b16 %v9362
    %v9503 = vunpack.c.l.b16 %v9363
    %v9504 = vunpack.c.h.b16 %v9363
    %v9505 = vunpack.c.l.b16 %v9364
    %v9506 = vunpack.c.h.b16 %v9364
    %v9507 = vunpack.c.l.b16 %v9365
    %v9508 = vunpack.c.h.b16 %v9365
    %v9509 = vunpack.c.l.b16 %v9366
    %v9510 = vunpack.c.h.b16 %v9366
    %v9511 = vpack.c.b16 %v9421, %v9415
    %v9512 = vpack.c.b16 %v9422, %v9416
    %v9513 = vpack.c.b16 %v9423, %v9417
    %v9514 = vpack.c.b16 %v9424, %v9418
    %v9515 = vpack.c.b16 %v9425, %v9419
    %v9516 = vpack.c.b16 %v9426, %v9420
    %v9517 = vpack.c.b16 %v9433, %v9427
    %v9518 = vpack.c.b16 %v9434, %v9428
    %v9519 = vpack.c.b16 %v9435, %v9429
    %v9520 = vpack.c.b16 %v9436, %v9430
    %v9521 = vpack.c.b16 %v9437, %v9431
    %v9522 = vpack.c.b16 %v9438, %v9432
    %v9523 = vpack.c.b16 %v9445, %v9439
    %v9524 = vpack.c.b16 %v9446, %v9440
    %v9525 = vpack.c.b16 %v9447, %v9441
    %v9526 = vpack.c.b16 %v9448, %v9442
    %v9527 = vpack.c.b16 %v9449, %v9443
    %v9528 = vpack.c.b16 %v9450, %v9444
    %v9529 = vpack.c.b16 %v9457, %v9451
    %v9530 = vpack.c.b16 %v9458, %v9452
    %v9531 = vpack.c.b16 %v9459, %v9453
    %v9532 = vpack.c.b16 %v9460, %v9454
    %v9533 = vpack.c.b16 %v9461, %v9455
    %v9534 = vpack.c.b16 %v9462, %v9456
    %v9535 = vpack.c.b16 %v9469, %v9463
    %v9536 = vpack.c.b16 %v9470, %v9464
    %v9537 = vpack.c.b16 %v9471, %v9465
    %v9538 = vpack.c.b16 %v9472, %v9466
    %v9539 = vpack.c.b16 %v9473, %v9467
    %v9540 = vpack.c.b16 %v9474, %v9468
    %v9541 = vpack.c.b16 %v9481, %v9475
    %v9542 = vpack.c.b16 %v9482, %v9476
    %v9543 = vpack.c.b16 %v9483, %v9477
    %v9544 = vpack.c.b16 %v9484, %v9478
    %v9545 = vpack.c.b16 %v9485, %v9479
    %v9546 = vpack.c.b16 %v9486, %v9480
    %v9547 = vpack.c.b16 %v9493, %v9487
    %v9548 = vpack.c.b16 %v9494, %v9488
    %v9549 = vpack.c.b16 %v9495, %v9489
    %v9550 = vpack.c.b16 %v9496, %v9490
    %v9551 = vpack.c.b16 %v9497, %v9491
    %v9552 = vpack.c.b16 %v9498, %v9492
    %v9553 = vpack.c.b16 %v9505, %v9499
    %v9554 = vpack.c.b16 %v9506, %v9500
    %v9555 = vpack.c.b16 %v9507, %v9501
    %v9556 = vpack.c.b16 %v9508, %v9502
    %v9557 = vpack.c.b16 %v9509, %v9503
    %v9558 = vpack.c.b16 %v9510, %v9504
    %9607 = vmatpush.bf16.msra.mxu0 %v9553
    %9608 = vmatpush.bf16.msra.mxu0 %v9547
    %9609 = vmatpush.bf16.msra.mxu0 %v9541
    %9610 = vmatpush.bf16.msra.mxu0 %v9535
    %9611 = vmatpush.bf16.msra.mxu0 %v9529
    %9612 = vmatpush.bf16.msra.mxu0 %v9523
    %9613 = vmatpush.bf16.msra.mxu0 %v9517
    %9614 = vmatpush.bf16.msra.mxu0 %v9511
    %9615 = vmatmul.bf16.gmra.mxu0 %v9317
    %v9616 = vpop.f32.mrf.mxu0
    %v9617 = vadd.f32 0.0, %v9616
    %v9618 = vpop.f32.mrf.mxu0
    %9619 = vdwg.mxu0
    %9620 = vmatpush.bf16.msra.mxu0 %v9554
    %9621 = vmatpush.bf16.msra.mxu0 %v9548
    %9622 = vmatpush.bf16.msra.mxu0 %v9542
    %9623 = vmatpush.bf16.msra.mxu0 %v9536
    %9624 = vmatpush.bf16.msra.mxu0 %v9530
    %9625 = vmatpush.bf16.msra.mxu0 %v9524
    %9626 = vmatpush.bf16.msra.mxu0 %v9518
    %9627 = vmatpush.bf16.msra.mxu0 %v9512
    %9628 = vmatmul.bf16.gmra.mxu0 %v9317
    %v9629 = vpop.f32.mrf.mxu0
    %v9630 = vadd.f32 0.0, %v9629
    %v9631 = vpop.f32.mrf.mxu0
    %9632 = vdwg.mxu0
    %9633 = vmatpush.bf16.msra.mxu0 %v9555
    %9634 = vmatpush.bf16.msra.mxu0 %v9549
    %9635 = vmatpush.bf16.msra.mxu0 %v9543
    %9636 = vmatpush.bf16.msra.mxu0 %v9537
    %9637 = vmatpush.bf16.msra.mxu0 %v9531
    %9638 = vmatpush.bf16.msra.mxu0 %v9525
    %9639 = vmatpush.bf16.msra.mxu0 %v9519
    %9640 = vmatpush.bf16.msra.mxu0 %v9513
    %9641 = vmatmul.bf16.gmra.mxu0 %v9317
    %v9642 = vpop.f32.mrf.mxu0
    %v9643 = vadd.f32 0.0, %v9642
    %v9644 = vpop.f32.mrf.mxu0
    %9645 = vdwg.mxu0
    %9646 = vmatpush.bf16.msra.mxu0 %v9556
    %9647 = vmatpush.bf16.msra.mxu0 %v9550
    %9648 = vmatpush.bf16.msra.mxu0 %v9544
    %9649 = vmatpush.bf16.msra.mxu0 %v9538
    %9650 = vmatpush.bf16.msra.mxu0 %v9532
    %9651 = vmatpush.bf16.msra.mxu0 %v9526
    %9652 = vmatpush.bf16.msra.mxu0 %v9520
    %9653 = vmatpush.bf16.msra.mxu0 %v9514
    %9654 = vmatmul.bf16.gmra.mxu0 %v9317
    %v9655 = vpop.f32.mrf.mxu0
    %v9656 = vadd.f32 0.0, %v9655
    %v9657 = vpop.f32.mrf.mxu0
    %9658 = vdwg.mxu0
    %9659 = vmatpush.bf16.msra.mxu0 %v9557
    %9660 = vmatpush.bf16.msra.mxu0 %v9551
    %9661 = vmatpush.bf16.msra.mxu0 %v9545
    %9662 = vmatpush.bf16.msra.mxu0 %v9539
    %9663 = vmatpush.bf16.msra.mxu0 %v9533
    %9664 = vmatpush.bf16.msra.mxu0 %v9527
    %9665 = vmatpush.bf16.msra.mxu0 %v9521
    %9666 = vmatpush.bf16.msra.mxu0 %v9515
    %9667 = vmatmul.bf16.gmra.mxu0 %v9317
    %v9668 = vpop.f32.mrf.mxu0
    %v9669 = vadd.f32 0.0, %v9668
    %v9670 = vpop.f32.mrf.mxu0
    %9671 = vdwg.mxu0
    %9672 = vmatpush.bf16.msra.mxu0 %v9558
    %9673 = vmatpush.bf16.msra.mxu0 %v9552
    %9674 = vmatpush.bf16.msra.mxu0 %v9546
    %9675 = vmatpush.bf16.msra.mxu0 %v9540
    %9676 = vmatpush.bf16.msra.mxu0 %v9534
    %9677 = vmatpush.bf16.msra.mxu0 %v9528
    %9678 = vmatpush.bf16.msra.mxu0 %v9522
    %9679 = vmatpush.bf16.msra.mxu0 %v9516
    %9680 = vmatmul.bf16.gmra.mxu0 %v9317
    %v9681 = vpop.f32.mrf.mxu0
    %v9682 = vadd.f32 0.0, %v9681
    %v9683 = vpop.f32.mrf.mxu0
    %9684 = vdwg.mxu0
    %v9685 = vadd.f32 %v9309, %v9617
    %v9686 = vadd.f32 %v9310, %v9630
    %v9687 = vadd.f32 %v9311, %v9643
    %v9688 = vadd.f32 %v9312, %v9656
    %v9689 = vadd.f32 %v9313, %v9669
    %v9690 = vadd.f32 %v9314, %v9682
    %s9691 = scalar_lea.vmem [#allocation3], 24
    %v9692 = vld [vmem:[%s9691] ss:$25 sm:$0x3]
    %v9693 = vpack.c.bf16 %v9692, %v9692
    %s9694 = scalar_lea.vmem [#allocation10], 9216
    %v9695 = vld [vmem:[%s9694] sm:$0xff]
    %v9696 = vld [vmem:[%s9694 + $0x8] sm:$0xff]
    %v9697 = vld [vmem:[%s9694 + $0x10] sm:$0xff]
    %v9698 = vld [vmem:[%s9694 + $0x18] sm:$0xff]
    %v9699 = vld [vmem:[%s9694 + $0x20] sm:$0xff]
    %v9700 = vld [vmem:[%s9694 + $0x28] sm:$0xff]
    %v9701 = vld [vmem:[%s9694 + $0x30] sm:$0xff]
    %v9702 = vld [vmem:[%s9694 + $0x38] sm:$0xff]
    %v9703 = vld [vmem:[%s9694 + $0x40] sm:$0xff]
    %v9704 = vld [vmem:[%s9694 + $0x48] sm:$0xff]
    %v9705 = vld [vmem:[%s9694 + $0x50] sm:$0xff]
    %v9706 = vld [vmem:[%s9694 + $0x58] sm:$0xff]
    %v9707 = vld [vmem:[%s9694 + $0x60] sm:$0xff]
    %v9708 = vld [vmem:[%s9694 + $0x68] sm:$0xff]
    %v9709 = vld [vmem:[%s9694 + $0x70] sm:$0xff]
    %v9710 = vld [vmem:[%s9694 + $0x78] sm:$0xff]
    %v9711 = vld [vmem:[%s9694 + $0x80] sm:$0xff]
    %v9712 = vld [vmem:[%s9694 + $0x88] sm:$0xff]
    %v9713 = vld [vmem:[%s9694 + $0x90] sm:$0xff]
    %v9714 = vld [vmem:[%s9694 + $0x98] sm:$0xff]
    %v9715 = vld [vmem:[%s9694 + $0xa0] sm:$0xff]
    %v9716 = vld [vmem:[%s9694 + $0xa8] sm:$0xff]
    %v9717 = vld [vmem:[%s9694 + $0xb0] sm:$0xff]
    %v9718 = vld [vmem:[%s9694 + $0xb8] sm:$0xff]
    %v9719 = vld [vmem:[%s9694 + $0xc0] sm:$0xff]
    %v9720 = vld [vmem:[%s9694 + $0xc8] sm:$0xff]
    %v9721 = vld [vmem:[%s9694 + $0xd0] sm:$0xff]
    %v9722 = vld [vmem:[%s9694 + $0xd8] sm:$0xff]
    %v9723 = vld [vmem:[%s9694 + $0xe0] sm:$0xff]
    %v9724 = vld [vmem:[%s9694 + $0xe8] sm:$0xff]
    %v9725 = vld [vmem:[%s9694 + $0xf0] sm:$0xff]
    %v9726 = vld [vmem:[%s9694 + $0xf8] sm:$0xff]
    %v9727 = vld [vmem:[%s9694 + $0x100] sm:$0xff]
    %v9728 = vld [vmem:[%s9694 + $0x108] sm:$0xff]
    %v9729 = vld [vmem:[%s9694 + $0x110] sm:$0xff]
    %v9730 = vld [vmem:[%s9694 + $0x118] sm:$0xff]
    %v9731 = vld [vmem:[%s9694 + $0x120] sm:$0xff]
    %v9732 = vld [vmem:[%s9694 + $0x128] sm:$0xff]
    %v9733 = vld [vmem:[%s9694 + $0x130] sm:$0xff]
    %v9734 = vld [vmem:[%s9694 + $0x138] sm:$0xff]
    %v9735 = vld [vmem:[%s9694 + $0x140] sm:$0xff]
    %v9736 = vld [vmem:[%s9694 + $0x148] sm:$0xff]
    %v9737 = vld [vmem:[%s9694 + $0x150] sm:$0xff]
    %v9738 = vld [vmem:[%s9694 + $0x158] sm:$0xff]
    %v9739 = vld [vmem:[%s9694 + $0x160] sm:$0xff]
    %v9740 = vld [vmem:[%s9694 + $0x168] sm:$0xff]
    %v9741 = vld [vmem:[%s9694 + $0x170] sm:$0xff]
    %v9742 = vld [vmem:[%s9694 + $0x178] sm:$0xff]
    %v9791 = vunpack.c.l.b16 %v9695
    %v9792 = vunpack.c.h.b16 %v9695
    %v9793 = vunpack.c.l.b16 %v9696
    %v9794 = vunpack.c.h.b16 %v9696
    %v9795 = vunpack.c.l.b16 %v9697
    %v9796 = vunpack.c.h.b16 %v9697
    %v9797 = vunpack.c.l.b16 %v9698
    %v9798 = vunpack.c.h.b16 %v9698
    %v9799 = vunpack.c.l.b16 %v9699
    %v9800 = vunpack.c.h.b16 %v9699
    %v9801 = vunpack.c.l.b16 %v9700
    %v9802 = vunpack.c.h.b16 %v9700
    %v9803 = vunpack.c.l.b16 %v9701
    %v9804 = vunpack.c.h.b16 %v9701
    %v9805 = vunpack.c.l.b16 %v9702
    %v9806 = vunpack.c.h.b16 %v9702
    %v9807 = vunpack.c.l.b16 %v9703
    %v9808 = vunpack.c.h.b16 %v9703
    %v9809 = vunpack.c.l.b16 %v9704
    %v9810 = vunpack.c.h.b16 %v9704
    %v9811 = vunpack.c.l.b16 %v9705
    %v9812 = vunpack.c.h.b16 %v9705
    %v9813 = vunpack.c.l.b16 %v9706
    %v9814 = vunpack.c.h.b16 %v9706
    %v9815 = vunpack.c.l.b16 %v9707
    %v9816 = vunpack.c.h.b16 %v9707
    %v9817 = vunpack.c.l.b16 %v9708
    %v9818 = vunpack.c.h.b16 %v9708
    %v9819 = vunpack.c.l.b16 %v9709
    %v9820 = vunpack.c.h.b16 %v9709
    %v9821 = vunpack.c.l.b16 %v9710
    %v9822 = vunpack.c.h.b16 %v9710
    %v9823 = vunpack.c.l.b16 %v9711
    %v9824 = vunpack.c.h.b16 %v9711
    %v9825 = vunpack.c.l.b16 %v9712
    %v9826 = vunpack.c.h.b16 %v9712
    %v9827 = vunpack.c.l.b16 %v9713
    %v9828 = vunpack.c.h.b16 %v9713
    %v9829 = vunpack.c.l.b16 %v9714
    %v9830 = vunpack.c.h.b16 %v9714
    %v9831 = vunpack.c.l.b16 %v9715
    %v9832 = vunpack.c.h.b16 %v9715
    %v9833 = vunpack.c.l.b16 %v9716
    %v9834 = vunpack.c.h.b16 %v9716
    %v9835 = vunpack.c.l.b16 %v9717
    %v9836 = vunpack.c.h.b16 %v9717
    %v9837 = vunpack.c.l.b16 %v9718
    %v9838 = vunpack.c.h.b16 %v9718
    %v9839 = vunpack.c.l.b16 %v9719
    %v9840 = vunpack.c.h.b16 %v9719
    %v9841 = vunpack.c.l.b16 %v9720
    %v9842 = vunpack.c.h.b16 %v9720
    %v9843 = vunpack.c.l.b16 %v9721
    %v9844 = vunpack.c.h.b16 %v9721
    %v9845 = vunpack.c.l.b16 %v9722
    %v9846 = vunpack.c.h.b16 %v9722
    %v9847 = vunpack.c.l.b16 %v9723
    %v9848 = vunpack.c.h.b16 %v9723
    %v9849 = vunpack.c.l.b16 %v9724
    %v9850 = vunpack.c.h.b16 %v9724
    %v9851 = vunpack.c.l.b16 %v9725
    %v9852 = vunpack.c.h.b16 %v9725
    %v9853 = vunpack.c.l.b16 %v9726
    %v9854 = vunpack.c.h.b16 %v9726
    %v9855 = vunpack.c.l.b16 %v9727
    %v9856 = vunpack.c.h.b16 %v9727
    %v9857 = vunpack.c.l.b16 %v9728
    %v9858 = vunpack.c.h.b16 %v9728
    %v9859 = vunpack.c.l.b16 %v9729
    %v9860 = vunpack.c.h.b16 %v9729
    %v9861 = vunpack.c.l.b16 %v9730
    %v9862 = vunpack.c.h.b16 %v9730
    %v9863 = vunpack.c.l.b16 %v9731
    %v9864 = vunpack.c.h.b16 %v9731
    %v9865 = vunpack.c.l.b16 %v9732
    %v9866 = vunpack.c.h.b16 %v9732
    %v9867 = vunpack.c.l.b16 %v9733
    %v9868 = vunpack.c.h.b16 %v9733
    %v9869 = vunpack.c.l.b16 %v9734
    %v9870 = vunpack.c.h.b16 %v9734
    %v9871 = vunpack.c.l.b16 %v9735
    %v9872 = vunpack.c.h.b16 %v9735
    %v9873 = vunpack.c.l.b16 %v9736
    %v9874 = vunpack.c.h.b16 %v9736
    %v9875 = vunpack.c.l.b16 %v9737
    %v9876 = vunpack.c.h.b16 %v9737
    %v9877 = vunpack.c.l.b16 %v9738
    %v9878 = vunpack.c.h.b16 %v9738
    %v9879 = vunpack.c.l.b16 %v9739
    %v9880 = vunpack.c.h.b16 %v9739
    %v9881 = vunpack.c.l.b16 %v9740
    %v9882 = vunpack.c.h.b16 %v9740
    %v9883 = vunpack.c.l.b16 %v9741
    %v9884 = vunpack.c.h.b16 %v9741
    %v9885 = vunpack.c.l.b16 %v9742
    %v9886 = vunpack.c.h.b16 %v9742
    %v9887 = vpack.c.b16 %v9797, %v9791
    %v9888 = vpack.c.b16 %v9798, %v9792
    %v9889 = vpack.c.b16 %v9799, %v9793
    %v9890 = vpack.c.b16 %v9800, %v9794
    %v9891 = vpack.c.b16 %v9801, %v9795
    %v9892 = vpack.c.b16 %v9802, %v9796
    %v9893 = vpack.c.b16 %v9809, %v9803
    %v9894 = vpack.c.b16 %v9810, %v9804
    %v9895 = vpack.c.b16 %v9811, %v9805
    %v9896 = vpack.c.b16 %v9812, %v9806
    %v9897 = vpack.c.b16 %v9813, %v9807
    %v9898 = vpack.c.b16 %v9814, %v9808
    %v9899 = vpack.c.b16 %v9821, %v9815
    %v9900 = vpack.c.b16 %v9822, %v9816
    %v9901 = vpack.c.b16 %v9823, %v9817
    %v9902 = vpack.c.b16 %v9824, %v9818
    %v9903 = vpack.c.b16 %v9825, %v9819
    %v9904 = vpack.c.b16 %v9826, %v9820
    %v9905 = vpack.c.b16 %v9833, %v9827
    %v9906 = vpack.c.b16 %v9834, %v9828
    %v9907 = vpack.c.b16 %v9835, %v9829
    %v9908 = vpack.c.b16 %v9836, %v9830
    %v9909 = vpack.c.b16 %v9837, %v9831
    %v9910 = vpack.c.b16 %v9838, %v9832
    %v9911 = vpack.c.b16 %v9845, %v9839
    %v9912 = vpack.c.b16 %v9846, %v9840
    %v9913 = vpack.c.b16 %v9847, %v9841
    %v9914 = vpack.c.b16 %v9848, %v9842
    %v9915 = vpack.c.b16 %v9849, %v9843
    %v9916 = vpack.c.b16 %v9850, %v9844
    %v9917 = vpack.c.b16 %v9857, %v9851
    %v9918 = vpack.c.b16 %v9858, %v9852
    %v9919 = vpack.c.b16 %v9859, %v9853
    %v9920 = vpack.c.b16 %v9860, %v9854
    %v9921 = vpack.c.b16 %v9861, %v9855
    %v9922 = vpack.c.b16 %v9862, %v9856
    %v9923 = vpack.c.b16 %v9869, %v9863
    %v9924 = vpack.c.b16 %v9870, %v9864
    %v9925 = vpack.c.b16 %v9871, %v9865
    %v9926 = vpack.c.b16 %v9872, %v9866
    %v9927 = vpack.c.b16 %v9873, %v9867
    %v9928 = vpack.c.b16 %v9874, %v9868
    %v9929 = vpack.c.b16 %v9881, %v9875
    %v9930 = vpack.c.b16 %v9882, %v9876
    %v9931 = vpack.c.b16 %v9883, %v9877
    %v9932 = vpack.c.b16 %v9884, %v9878
    %v9933 = vpack.c.b16 %v9885, %v9879
    %v9934 = vpack.c.b16 %v9886, %v9880
    %9983 = vmatpush.bf16.msra.mxu0 %v9929
    %9984 = vmatpush.bf16.msra.mxu0 %v9923
    %9985 = vmatpush.bf16.msra.mxu0 %v9917
    %9986 = vmatpush.bf16.msra.mxu0 %v9911
    %9987 = vmatpush.bf16.msra.mxu0 %v9905
    %9988 = vmatpush.bf16.msra.mxu0 %v9899
    %9989 = vmatpush.bf16.msra.mxu0 %v9893
    %9990 = vmatpush.bf16.msra.mxu0 %v9887
    %9991 = vmatmul.bf16.gmra.mxu0 %v9693
    %v9992 = vpop.f32.mrf.mxu0
    %v9993 = vadd.f32 0.0, %v9992
    %v9994 = vpop.f32.mrf.mxu0
    %9995 = vdwg.mxu0
    %9996 = vmatpush.bf16.msra.mxu0 %v9930
    %9997 = vmatpush.bf16.msra.mxu0 %v9924
    %9998 = vmatpush.bf16.msra.mxu0 %v9918
    %9999 = vmatpush.bf16.msra.mxu0 %v9912
    %10000 = vmatpush.bf16.msra.mxu0 %v9906
    %10001 = vmatpush.bf16.msra.mxu0 %v9900
    %10002 = vmatpush.bf16.msra.mxu0 %v9894
    %10003 = vmatpush.bf16.msra.mxu0 %v9888
    %10004 = vmatmul.bf16.gmra.mxu0 %v9693
    %v10005 = vpop.f32.mrf.mxu0
    %v10006 = vadd.f32 0.0, %v10005
    %v10007 = vpop.f32.mrf.mxu0
    %10008 = vdwg.mxu0
    %10009 = vmatpush.bf16.msra.mxu0 %v9931
    %10010 = vmatpush.bf16.msra.mxu0 %v9925
    %10011 = vmatpush.bf16.msra.mxu0 %v9919
    %10012 = vmatpush.bf16.msra.mxu0 %v9913
    %10013 = vmatpush.bf16.msra.mxu0 %v9907
    %10014 = vmatpush.bf16.msra.mxu0 %v9901
    %10015 = vmatpush.bf16.msra.mxu0 %v9895
    %10016 = vmatpush.bf16.msra.mxu0 %v9889
    %10017 = vmatmul.bf16.gmra.mxu0 %v9693
    %v10018 = vpop.f32.mrf.mxu0
    %v10019 = vadd.f32 0.0, %v10018
    %v10020 = vpop.f32.mrf.mxu0
    %10021 = vdwg.mxu0
    %10022 = vmatpush.bf16.msra.mxu0 %v9932
    %10023 = vmatpush.bf16.msra.mxu0 %v9926
    %10024 = vmatpush.bf16.msra.mxu0 %v9920
    %10025 = vmatpush.bf16.msra.mxu0 %v9914
    %10026 = vmatpush.bf16.msra.mxu0 %v9908
    %10027 = vmatpush.bf16.msra.mxu0 %v9902
    %10028 = vmatpush.bf16.msra.mxu0 %v9896
    %10029 = vmatpush.bf16.msra.mxu0 %v9890
    %10030 = vmatmul.bf16.gmra.mxu0 %v9693
    %v10031 = vpop.f32.mrf.mxu0
    %v10032 = vadd.f32 0.0, %v10031
    %v10033 = vpop.f32.mrf.mxu0
    %10034 = vdwg.mxu0
    %10035 = vmatpush.bf16.msra.mxu0 %v9933
    %10036 = vmatpush.bf16.msra.mxu0 %v9927
    %10037 = vmatpush.bf16.msra.mxu0 %v9921
    %10038 = vmatpush.bf16.msra.mxu0 %v9915
    %10039 = vmatpush.bf16.msra.mxu0 %v9909
    %10040 = vmatpush.bf16.msra.mxu0 %v9903
    %10041 = vmatpush.bf16.msra.mxu0 %v9897
    %10042 = vmatpush.bf16.msra.mxu0 %v9891
    %10043 = vmatmul.bf16.gmra.mxu0 %v9693
    %v10044 = vpop.f32.mrf.mxu0
    %v10045 = vadd.f32 0.0, %v10044
    %v10046 = vpop.f32.mrf.mxu0
    %10047 = vdwg.mxu0
    %10048 = vmatpush.bf16.msra.mxu0 %v9934
    %10049 = vmatpush.bf16.msra.mxu0 %v9928
    %10050 = vmatpush.bf16.msra.mxu0 %v9922
    %10051 = vmatpush.bf16.msra.mxu0 %v9916
    %10052 = vmatpush.bf16.msra.mxu0 %v9910
    %10053 = vmatpush.bf16.msra.mxu0 %v9904
    %10054 = vmatpush.bf16.msra.mxu0 %v9898
    %10055 = vmatpush.bf16.msra.mxu0 %v9892
    %10056 = vmatmul.bf16.gmra.mxu0 %v9693
    %v10057 = vpop.f32.mrf.mxu0
    %v10058 = vadd.f32 0.0, %v10057
    %v10059 = vpop.f32.mrf.mxu0
    %10060 = vdwg.mxu0
    %v10061 = vadd.f32 %v9685, %v9993
    %v10062 = vadd.f32 %v9686, %v10006
    %v10063 = vadd.f32 %v9687, %v10019
    %v10064 = vadd.f32 %v9688, %v10032
    %v10065 = vadd.f32 %v9689, %v10045
    %v10066 = vadd.f32 %v9690, %v10058
    %v10067 = vld [vmem:[#allocation12] sm:$0x3f]
    %v10069 = vperm.slane %v10067, 0
    %v10070 = vperm.slane %v10067, 1
    %v10071 = vperm.slane %v10067, 2
    %v10072 = vperm.slane %v10067, 3
    %v10073 = vperm.slane %v10067, 4
    %v10074 = vperm.slane %v10067, 5
    %v10081 = vadd.f32 %v10061, %v10069
    %v10082 = vadd.f32 %v10062, %v10070
    %v10083 = vadd.f32 %v10063, %v10071
    %v10084 = vadd.f32 %v10064, %v10072
    %v10085 = vadd.f32 %v10065, %v10073
    %v10086 = vadd.f32 %v10066, %v10074
    %v10087 = vmax.f32 %v10081, 0.0
    %v10088 = vmax.f32 %v10082, 0.0
    %v10089 = vmax.f32 %v10083, 0.0
    %v10090 = vmax.f32 %v10084, 0.0
    %v10091 = vmax.f32 %v10085, 0.0
    %v10092 = vmax.f32 %v10086, 0.0
    %v10093 = vpack.c.bf16 %v10087, %v10087
    %v10094 = vpack.c.bf16 %v10088, %v10088
    %v10095 = vpack.c.bf16 %v10089, %v10089
    %v10096 = vpack.c.bf16 %v10090, %v10090
    %v10097 = vpack.c.bf16 %v10091, %v10091
    %v10098 = vpack.c.bf16 %v10092, %v10092
    %v10099 = vld [vmem:[#allocation13] sm:$0xf]
    %v10100 = vld [vmem:[#allocation13 + $0x4] sm:$0xf]
    %v10101 = vld [vmem:[#allocation13 + $0x8] sm:$0xf]
    %v10102 = vld [vmem:[#allocation13 + $0xc] sm:$0xf]
    %v10103 = vld [vmem:[#allocation13 + $0x10] sm:$0xf]
    %v10104 = vld [vmem:[#allocation13 + $0x14] sm:$0xf]
    %v10105 = vld [vmem:[#allocation13 + $0x18] sm:$0xf]
    %v10106 = vld [vmem:[#allocation13 + $0x1c] sm:$0xf]
    %v10107 = vld [vmem:[#allocation13 + $0x20] sm:$0xf]
    %v10108 = vld [vmem:[#allocation13 + $0x24] sm:$0xf]
    %v10109 = vld [vmem:[#allocation13 + $0x28] sm:$0xf]
    %v10110 = vld [vmem:[#allocation13 + $0x2c] sm:$0xf]
    %v10111 = vld [vmem:[#allocation13 + $0x30] sm:$0xf]
    %v10112 = vld [vmem:[#allocation13 + $0x34] sm:$0xf]
    %v10113 = vld [vmem:[#allocation13 + $0x38] sm:$0xf]
    %v10114 = vld [vmem:[#allocation13 + $0x3c] sm:$0xf]
    %v10115 = vld [vmem:[#allocation13 + $0x40] sm:$0xf]
    %v10116 = vld [vmem:[#allocation13 + $0x44] sm:$0xf]
    %v10117 = vld [vmem:[#allocation13 + $0x48] sm:$0xf]
    %v10118 = vld [vmem:[#allocation13 + $0x4c] sm:$0xf]
    %v10119 = vld [vmem:[#allocation13 + $0x50] sm:$0xf]
    %v10120 = vld [vmem:[#allocation13 + $0x54] sm:$0xf]
    %v10121 = vld [vmem:[#allocation13 + $0x58] sm:$0xf]
    %v10122 = vld [vmem:[#allocation13 + $0x5c] sm:$0xf]
    %v10123 = vld [vmem:[#allocation13 + $0x60] sm:$0xf]
    %v10124 = vld [vmem:[#allocation13 + $0x64] sm:$0xf]
    %v10125 = vld [vmem:[#allocation13 + $0x68] sm:$0xf]
    %v10126 = vld [vmem:[#allocation13 + $0x6c] sm:$0xf]
    %v10127 = vld [vmem:[#allocation13 + $0x70] sm:$0xf]
    %v10128 = vld [vmem:[#allocation13 + $0x74] sm:$0xf]
    %v10129 = vld [vmem:[#allocation13 + $0x78] sm:$0xf]
    %v10130 = vld [vmem:[#allocation13 + $0x7c] sm:$0xf]
    %v10131 = vld [vmem:[#allocation13 + $0x80] sm:$0xf]
    %v10132 = vld [vmem:[#allocation13 + $0x84] sm:$0xf]
    %v10133 = vld [vmem:[#allocation13 + $0x88] sm:$0xf]
    %v10134 = vld [vmem:[#allocation13 + $0x8c] sm:$0xf]
    %v10135 = vld [vmem:[#allocation13 + $0x90] sm:$0xf]
    %v10136 = vld [vmem:[#allocation13 + $0x94] sm:$0xf]
    %v10137 = vld [vmem:[#allocation13 + $0x98] sm:$0xf]
    %v10138 = vld [vmem:[#allocation13 + $0x9c] sm:$0xf]
    %v10139 = vld [vmem:[#allocation13 + $0xa0] sm:$0xf]
    %v10140 = vld [vmem:[#allocation13 + $0xa4] sm:$0xf]
    %v10141 = vld [vmem:[#allocation13 + $0xa8] sm:$0xf]
    %v10142 = vld [vmem:[#allocation13 + $0xac] sm:$0xf]
    %v10143 = vld [vmem:[#allocation13 + $0xb0] sm:$0xf]
    %v10144 = vld [vmem:[#allocation13 + $0xb4] sm:$0xf]
    %v10145 = vld [vmem:[#allocation13 + $0xb8] sm:$0xf]
    %v10146 = vld [vmem:[#allocation13 + $0xbc] sm:$0xf]
    %v10147 = vld [vmem:[#allocation13 + $0xc0] sm:$0xf]
    %v10148 = vld [vmem:[#allocation13 + $0xc4] sm:$0xf]
    %v10149 = vld [vmem:[#allocation13 + $0xc8] sm:$0xf]
    %v10150 = vld [vmem:[#allocation13 + $0xcc] sm:$0xf]
    %v10151 = vld [vmem:[#allocation13 + $0xd0] sm:$0xf]
    %v10152 = vld [vmem:[#allocation13 + $0xd4] sm:$0xf]
    %v10153 = vld [vmem:[#allocation13 + $0xd8] sm:$0xf]
    %v10154 = vld [vmem:[#allocation13 + $0xdc] sm:$0xf]
    %v10155 = vld [vmem:[#allocation13 + $0xe0] sm:$0xf]
    %v10156 = vld [vmem:[#allocation13 + $0xe4] sm:$0xf]
    %v10157 = vld [vmem:[#allocation13 + $0xe8] sm:$0xf]
    %v10158 = vld [vmem:[#allocation13 + $0xec] sm:$0xf]
    %v10159 = vld [vmem:[#allocation13 + $0xf0] sm:$0xf]
    %v10160 = vld [vmem:[#allocation13 + $0xf4] sm:$0xf]
    %v10161 = vld [vmem:[#allocation13 + $0xf8] sm:$0xf]
    %v10162 = vld [vmem:[#allocation13 + $0xfc] sm:$0xf]
    %v10163 = vld [vmem:[#allocation13 + $0x100] sm:$0xf]
    %v10164 = vld [vmem:[#allocation13 + $0x104] sm:$0xf]
    %v10165 = vld [vmem:[#allocation13 + $0x108] sm:$0xf]
    %v10166 = vld [vmem:[#allocation13 + $0x10c] sm:$0xf]
    %v10167 = vld [vmem:[#allocation13 + $0x110] sm:$0xf]
    %v10168 = vld [vmem:[#allocation13 + $0x114] sm:$0xf]
    %v10169 = vld [vmem:[#allocation13 + $0x118] sm:$0xf]
    %v10170 = vld [vmem:[#allocation13 + $0x11c] sm:$0xf]
    %v10171 = vld [vmem:[#allocation13 + $0x120] sm:$0xf]
    %v10172 = vld [vmem:[#allocation13 + $0x124] sm:$0xf]
    %v10173 = vld [vmem:[#allocation13 + $0x128] sm:$0xf]
    %v10174 = vld [vmem:[#allocation13 + $0x12c] sm:$0xf]
    %v10175 = vld [vmem:[#allocation13 + $0x130] sm:$0xf]
    %v10176 = vld [vmem:[#allocation13 + $0x134] sm:$0xf]
    %v10177 = vld [vmem:[#allocation13 + $0x138] sm:$0xf]
    %v10178 = vld [vmem:[#allocation13 + $0x13c] sm:$0xf]
    %v10179 = vld [vmem:[#allocation13 + $0x140] sm:$0xf]
    %v10180 = vld [vmem:[#allocation13 + $0x144] sm:$0xf]
    %v10181 = vld [vmem:[#allocation13 + $0x148] sm:$0xf]
    %v10182 = vld [vmem:[#allocation13 + $0x14c] sm:$0xf]
    %v10183 = vld [vmem:[#allocation13 + $0x150] sm:$0xf]
    %v10184 = vld [vmem:[#allocation13 + $0x154] sm:$0xf]
    %v10185 = vld [vmem:[#allocation13 + $0x158] sm:$0xf]
    %v10186 = vld [vmem:[#allocation13 + $0x15c] sm:$0xf]
    %v10187 = vld [vmem:[#allocation13 + $0x160] sm:$0xf]
    %v10188 = vld [vmem:[#allocation13 + $0x164] sm:$0xf]
    %v10189 = vld [vmem:[#allocation13 + $0x168] sm:$0xf]
    %v10190 = vld [vmem:[#allocation13 + $0x16c] sm:$0xf]
    %v10191 = vld [vmem:[#allocation13 + $0x170] sm:$0xf]
    %v10192 = vld [vmem:[#allocation13 + $0x174] sm:$0xf]
    %v10193 = vld [vmem:[#allocation13 + $0x178] sm:$0xf]
    %v10194 = vld [vmem:[#allocation13 + $0x17c] sm:$0xf]
    %v10195 = vld [vmem:[#allocation15] sm:$0x1]
    %v10197 = vperm.slane %v10195, 0
    %v10295 = vunpack.c.l.b16 %v10099
    %v10296 = vunpack.c.l.b16 %v10100
    %v10297 = vunpack.c.l.b16 %v10101
    %v10298 = vunpack.c.l.b16 %v10102
    %v10299 = vunpack.c.l.b16 %v10103
    %v10300 = vunpack.c.l.b16 %v10104
    %v10301 = vunpack.c.l.b16 %v10105
    %v10302 = vunpack.c.l.b16 %v10106
    %v10303 = vunpack.c.l.b16 %v10107
    %v10304 = vunpack.c.l.b16 %v10108
    %v10305 = vunpack.c.l.b16 %v10109
    %v10306 = vunpack.c.l.b16 %v10110
    %v10307 = vunpack.c.l.b16 %v10111
    %v10308 = vunpack.c.l.b16 %v10112
    %v10309 = vunpack.c.l.b16 %v10113
    %v10310 = vunpack.c.l.b16 %v10114
    %v10311 = vunpack.c.l.b16 %v10115
    %v10312 = vunpack.c.l.b16 %v10116
    %v10313 = vunpack.c.l.b16 %v10117
    %v10314 = vunpack.c.l.b16 %v10118
    %v10315 = vunpack.c.l.b16 %v10119
    %v10316 = vunpack.c.l.b16 %v10120
    %v10317 = vunpack.c.l.b16 %v10121
    %v10318 = vunpack.c.l.b16 %v10122
    %v10319 = vunpack.c.l.b16 %v10123
    %v10320 = vunpack.c.l.b16 %v10124
    %v10321 = vunpack.c.l.b16 %v10125
    %v10322 = vunpack.c.l.b16 %v10126
    %v10323 = vunpack.c.l.b16 %v10127
    %v10324 = vunpack.c.l.b16 %v10128
    %v10325 = vunpack.c.l.b16 %v10129
    %v10326 = vunpack.c.l.b16 %v10130
    %v10327 = vunpack.c.l.b16 %v10131
    %v10328 = vunpack.c.l.b16 %v10132
    %v10329 = vunpack.c.l.b16 %v10133
    %v10330 = vunpack.c.l.b16 %v10134
    %v10331 = vunpack.c.l.b16 %v10135
    %v10332 = vunpack.c.l.b16 %v10136
    %v10333 = vunpack.c.l.b16 %v10137
    %v10334 = vunpack.c.l.b16 %v10138
    %v10335 = vunpack.c.l.b16 %v10139
    %v10336 = vunpack.c.l.b16 %v10140
    %v10337 = vunpack.c.l.b16 %v10141
    %v10338 = vunpack.c.l.b16 %v10142
    %v10339 = vunpack.c.l.b16 %v10143
    %v10340 = vunpack.c.l.b16 %v10144
    %v10341 = vunpack.c.l.b16 %v10145
    %v10342 = vunpack.c.l.b16 %v10146
    %v10343 = vunpack.c.l.b16 %v10147
    %v10344 = vunpack.c.l.b16 %v10148
    %v10345 = vunpack.c.l.b16 %v10149
    %v10346 = vunpack.c.l.b16 %v10150
    %v10347 = vunpack.c.l.b16 %v10151
    %v10348 = vunpack.c.l.b16 %v10152
    %v10349 = vunpack.c.l.b16 %v10153
    %v10350 = vunpack.c.l.b16 %v10154
    %v10351 = vunpack.c.l.b16 %v10155
    %v10352 = vunpack.c.l.b16 %v10156
    %v10353 = vunpack.c.l.b16 %v10157
    %v10354 = vunpack.c.l.b16 %v10158
    %v10355 = vunpack.c.l.b16 %v10159
    %v10356 = vunpack.c.l.b16 %v10160
    %v10357 = vunpack.c.l.b16 %v10161
    %v10358 = vunpack.c.l.b16 %v10162
    %v10359 = vunpack.c.l.b16 %v10163
    %v10360 = vunpack.c.l.b16 %v10164
    %v10361 = vunpack.c.l.b16 %v10165
    %v10362 = vunpack.c.l.b16 %v10166
    %v10363 = vunpack.c.l.b16 %v10167
    %v10364 = vunpack.c.l.b16 %v10168
    %v10365 = vunpack.c.l.b16 %v10169
    %v10366 = vunpack.c.l.b16 %v10170
    %v10367 = vunpack.c.l.b16 %v10171
    %v10368 = vunpack.c.l.b16 %v10172
    %v10369 = vunpack.c.l.b16 %v10173
    %v10370 = vunpack.c.l.b16 %v10174
    %v10371 = vunpack.c.l.b16 %v10175
    %v10372 = vunpack.c.l.b16 %v10176
    %v10373 = vunpack.c.l.b16 %v10177
    %v10374 = vunpack.c.l.b16 %v10178
    %v10375 = vunpack.c.l.b16 %v10179
    %v10376 = vunpack.c.l.b16 %v10180
    %v10377 = vunpack.c.l.b16 %v10181
    %v10378 = vunpack.c.l.b16 %v10182
    %v10379 = vunpack.c.l.b16 %v10183
    %v10380 = vunpack.c.l.b16 %v10184
    %v10381 = vunpack.c.l.b16 %v10185
    %v10382 = vunpack.c.l.b16 %v10186
    %v10383 = vunpack.c.l.b16 %v10187
    %v10384 = vunpack.c.l.b16 %v10188
    %v10385 = vunpack.c.l.b16 %v10189
    %v10386 = vunpack.c.l.b16 %v10190
    %v10387 = vunpack.c.l.b16 %v10191
    %v10388 = vunpack.c.l.b16 %v10192
    %v10389 = vunpack.c.l.b16 %v10193
    %v10390 = vunpack.c.l.b16 %v10194
    %v10391 = vpack.c.b16 %v10296, %v10295
    %v10392 = vpack.c.b16 %v10298, %v10297
    %v10393 = vpack.c.b16 %v10300, %v10299
    %v10394 = vpack.c.b16 %v10302, %v10301
    %v10395 = vpack.c.b16 %v10304, %v10303
    %v10396 = vpack.c.b16 %v10306, %v10305
    %v10397 = vpack.c.b16 %v10308, %v10307
    %v10398 = vpack.c.b16 %v10310, %v10309
    %v10399 = vpack.c.b16 %v10312, %v10311
    %v10400 = vpack.c.b16 %v10314, %v10313
    %v10401 = vpack.c.b16 %v10316, %v10315
    %v10402 = vpack.c.b16 %v10318, %v10317
    %v10403 = vpack.c.b16 %v10320, %v10319
    %v10404 = vpack.c.b16 %v10322, %v10321
    %v10405 = vpack.c.b16 %v10324, %v10323
    %v10406 = vpack.c.b16 %v10326, %v10325
    %v10407 = vpack.c.b16 %v10328, %v10327
    %v10408 = vpack.c.b16 %v10330, %v10329
    %v10409 = vpack.c.b16 %v10332, %v10331
    %v10410 = vpack.c.b16 %v10334, %v10333
    %v10411 = vpack.c.b16 %v10336, %v10335
    %v10412 = vpack.c.b16 %v10338, %v10337
    %v10413 = vpack.c.b16 %v10340, %v10339
    %v10414 = vpack.c.b16 %v10342, %v10341
    %v10415 = vpack.c.b16 %v10344, %v10343
    %v10416 = vpack.c.b16 %v10346, %v10345
    %v10417 = vpack.c.b16 %v10348, %v10347
    %v10418 = vpack.c.b16 %v10350, %v10349
    %v10419 = vpack.c.b16 %v10352, %v10351
    %v10420 = vpack.c.b16 %v10354, %v10353
    %v10421 = vpack.c.b16 %v10356, %v10355
    %v10422 = vpack.c.b16 %v10358, %v10357
    %v10423 = vpack.c.b16 %v10360, %v10359
    %v10424 = vpack.c.b16 %v10362, %v10361
    %v10425 = vpack.c.b16 %v10364, %v10363
    %v10426 = vpack.c.b16 %v10366, %v10365
    %v10427 = vpack.c.b16 %v10368, %v10367
    %v10428 = vpack.c.b16 %v10370, %v10369
    %v10429 = vpack.c.b16 %v10372, %v10371
    %v10430 = vpack.c.b16 %v10374, %v10373
    %v10431 = vpack.c.b16 %v10376, %v10375
    %v10432 = vpack.c.b16 %v10378, %v10377
    %v10433 = vpack.c.b16 %v10380, %v10379
    %v10434 = vpack.c.b16 %v10382, %v10381
    %v10435 = vpack.c.b16 %v10384, %v10383
    %v10436 = vpack.c.b16 %v10386, %v10385
    %v10437 = vpack.c.b16 %v10388, %v10387
    %v10438 = vpack.c.b16 %v10390, %v10389
    %10487 = vmatpush.bf16.msra.mxu0 %v10398
    %10488 = vmatpush.bf16.msra.mxu0 %v10397
    %10489 = vmatpush.bf16.msra.mxu0 %v10396
    %10490 = vmatpush.bf16.msra.mxu0 %v10395
    %10491 = vmatpush.bf16.msra.mxu0 %v10394
    %10492 = vmatpush.bf16.msra.mxu0 %v10393
    %10493 = vmatpush.bf16.msra.mxu0 %v10392
    %10494 = vmatpush.bf16.msra.mxu0 %v10391
    %10495 = vmatmul.bf16.gmra.mxu0 %v10093
    %v10496 = vpop.f32.mrf.mxu0
    %v10497 = vadd.f32 %v10197, %v10496
    %v10498 = vpop.f32.mrf.mxu0
    %10499 = vdwg.mxu0
    %10500 = vmatpush.bf16.msra.mxu0 %v10406
    %10501 = vmatpush.bf16.msra.mxu0 %v10405
    %10502 = vmatpush.bf16.msra.mxu0 %v10404
    %10503 = vmatpush.bf16.msra.mxu0 %v10403
    %10504 = vmatpush.bf16.msra.mxu0 %v10402
    %10505 = vmatpush.bf16.msra.mxu0 %v10401
    %10506 = vmatpush.bf16.msra.mxu0 %v10400
    %10507 = vmatpush.bf16.msra.mxu0 %v10399
    %10508 = vmatmul.bf16.gmra.mxu0 %v10094
    %v10509 = vpop.f32.mrf.mxu0
    %v10510 = vadd.f32 %v10497, %v10509
    %v10511 = vpop.f32.mrf.mxu0
    %10512 = vdwg.mxu0
    %10513 = vmatpush.bf16.msra.mxu0 %v10414
    %10514 = vmatpush.bf16.msra.mxu0 %v10413
    %10515 = vmatpush.bf16.msra.mxu0 %v10412
    %10516 = vmatpush.bf16.msra.mxu0 %v10411
    %10517 = vmatpush.bf16.msra.mxu0 %v10410
    %10518 = vmatpush.bf16.msra.mxu0 %v10409
    %10519 = vmatpush.bf16.msra.mxu0 %v10408
    %10520 = vmatpush.bf16.msra.mxu0 %v10407
    %10521 = vmatmul.bf16.gmra.mxu0 %v10095
    %v10522 = vpop.f32.mrf.mxu0
    %v10523 = vadd.f32 %v10510, %v10522
    %v10524 = vpop.f32.mrf.mxu0
    %10525 = vdwg.mxu0
    %10526 = vmatpush.bf16.msra.mxu0 %v10422
    %10527 = vmatpush.bf16.msra.mxu0 %v10421
    %10528 = vmatpush.bf16.msra.mxu0 %v10420
    %10529 = vmatpush.bf16.msra.mxu0 %v10419
    %10530 = vmatpush.bf16.msra.mxu0 %v10418
    %10531 = vmatpush.bf16.msra.mxu0 %v10417
    %10532 = vmatpush.bf16.msra.mxu0 %v10416
    %10533 = vmatpush.bf16.msra.mxu0 %v10415
    %10534 = vmatmul.bf16.gmra.mxu0 %v10096
    %v10535 = vpop.f32.mrf.mxu0
    %v10536 = vadd.f32 %v10523, %v10535
    %v10537 = vpop.f32.mrf.mxu0
    %10538 = vdwg.mxu0
    %10539 = vmatpush.bf16.msra.mxu0 %v10430
    %10540 = vmatpush.bf16.msra.mxu0 %v10429
    %10541 = vmatpush.bf16.msra.mxu0 %v10428
    %10542 = vmatpush.bf16.msra.mxu0 %v10427
    %10543 = vmatpush.bf16.msra.mxu0 %v10426
    %10544 = vmatpush.bf16.msra.mxu0 %v10425
    %10545 = vmatpush.bf16.msra.mxu0 %v10424
    %10546 = vmatpush.bf16.msra.mxu0 %v10423
    %10547 = vmatmul.bf16.gmra.mxu0 %v10097
    %v10548 = vpop.f32.mrf.mxu0
    %v10549 = vadd.f32 %v10536, %v10548
    %v10550 = vpop.f32.mrf.mxu0
    %10551 = vdwg.mxu0
    %10552 = vmatpush.bf16.msra.mxu0 %v10438
    %10553 = vmatpush.bf16.msra.mxu0 %v10437
    %10554 = vmatpush.bf16.msra.mxu0 %v10436
    %10555 = vmatpush.bf16.msra.mxu0 %v10435
    %10556 = vmatpush.bf16.msra.mxu0 %v10434
    %10557 = vmatpush.bf16.msra.mxu0 %v10433
    %10558 = vmatpush.bf16.msra.mxu0 %v10432
    %10559 = vmatpush.bf16.msra.mxu0 %v10431
    %10560 = vmatmul.bf16.gmra.mxu0 %v10098
    %v10561 = vpop.f32.mrf.mxu0
    %v10562 = vadd.f32 %v10549, %v10561
    %v10563 = vpop.f32.mrf.mxu0
    %10564 = vdwg.mxu0
    %10565 = vst [vmem:[#allocation16] sm:$0x3] %v10562
    // Predicated region
    $region62: #{inception_aux_forward.1} parent=1 // pred_check
      _
    $region63: #{inception_aux_forward.1} parent=1 // pred_check_branch
      %10567 = sbr.rel (0) target = $region65
    $region64: #{inception_aux_forward.1} parent=1 // pred_region
      %10569 = vsyncadd [#allocation6], 0
      %s10571 = sshll.u32 [#allocation16], 4
      %s10572 = int_to_ptr.vmem [resolvable:$true] %s10571
      %s10573 = sshll.u32 %s8, 4
      %s10574 = int_to_ptr.hbm [resolvable:$true] %s10573
      %10576 = dma.vmem_to_hbm [thread:$0]  %s10572, 32, %s10574, [#allocation6]
    $region65: #{inception_aux_forward.1} parent=1 // pred_fallthru
      _
    // Predicated region
    $region66: #{inception_aux_forward.1} parent=1 // pred_check
      _
    $region67: #{inception_aux_forward.1} parent=1 // pred_check_branch
      %10578 = sbr.rel (0) target = $region69
    $region68: #{inception_aux_forward.1} parent=1 // pred_region
      %10580 = dma.done [#allocation6], 32
    $region69: #{inception_aux_forward.1} parent=1 // pred_fallthru
      _
    %10581 = vsyncpa [#allocation5], 1
    %10582 = vsyncpa [#allocation8], 1
    %10583 = vsyncpa [#allocation11], 1
    %10584 = vsyncpa [#allocation14], 1
    %10585 = vsyncpa [#allocation6], 1

</llo_original>
